<compile_context>
chip_gen: v6e
topology: v6e:2x2x1
jax: 0.10.0
libtpu: 0.0.40
codegen_flags: <defaults>
</compile_context>

<pallas_src>
import jax
import jax.numpy as jnp
from jax.experimental import pallas as pl
from jax.experimental.pallas import tpu as pltpu


def _make_conv_kernel(KH, KW, stride, row_tile, Wo, Cin, Cout_p, fused):
    M = row_tile * Wo

    def tap_patch(x_ref, i, kh, kw):
        # x_ref: (stride*stride, Hq, Wq, Cin) phase-decomposed padded image (bf16)
        phase = (kh % stride) * stride + (kw % stride)
        return x_ref[phase,
                     pl.ds(i * row_tile + kh // stride, row_tile),
                     pl.ds(kw // stride, Wo),
                     :].reshape(M, Cin)                       # (M, Cin)

    def kernel(x_ref, w_ref, b_ref, o_ref):
        # w_ref: (KH*KW*Cin, Cout_p) bf16 fused-tap weights
        # b_ref: (1, Cout_p) f32
        # o_ref: (row_tile*Wo, Cout_p) flat output tile (batch dim squeezed)
        i = pl.program_id(1)
        if fused:
            # Build the fused-K LHS in VMEM: 9 shifted patches concatenated on the
            # lane axis -> single MXU matmul with K = KH*KW*Cin, no cross-tap f32
            # accumulator to spill, no per-tap result-FIFO drains.
            taps = [tap_patch(x_ref, i, kh, kw)
                    for kh in range(KH) for kw in range(KW)]
            lhs = jnp.concatenate(taps, axis=-1)              # (M, KH*KW*Cin) bf16
            out = jnp.dot(lhs, w_ref[...],
                          preferred_element_type=jnp.float32) + b_ref[...]
        else:
            # Fallback (used only if this jax/Mosaic version cannot lower the
            # unaligned lane-dim concatenate): per-tap accumulation with the
            # bias-initialized accumulator; row_tile is capped so the accumulator
            # stays within the vreg file.
            out = jnp.broadcast_to(b_ref[...], (M, Cout_p))
            order = [(kh, kw) for kh in range(KH) for kw in range(KW)]
            for t, (kh, kw) in enumerate(order):
                out = out + jnp.dot(tap_patch(x_ref, i, kh, kw),
                                    w_ref[pl.ds(t * Cin, Cin), :],
                                    preferred_element_type=jnp.float32)
        o_ref[...] = out.astype(o_ref.dtype)

    return kernel


def _pick_row_tile(Ho, Wo, Cin, Cout_p, KH, KW,
                   acc_budget=128 << 10, lhs_budget=128 << 10):
    """Largest row tile such that the f32 matmul result and the bf16 fused LHS each
    stay within ~half the 256 KiB vreg file (no spill traffic), with a sublane-dense
    (multiple-of-8) flattened M unless the tile is the whole image."""
    cands = [t for t in range(1, Ho + 1)
             if Ho % t == 0 and ((t * Wo) % 8 == 0 or t == Ho)]
    fits = [t for t in cands
            if t * Wo * Cout_p * 4 <= acc_budget
            and t * Wo * KH * KW * Cin * 2 <= lhs_budget]
    return max(fits) if fits else min(cands)


def _vmem_limit(est_bytes):
    # Generation-aware clamp: ~40 MiB on v7x (64 MiB / TC), 48 MiB on v5e/v6e (128 MiB).
    try:
        cap = getattr(pltpu.get_tpu_info(), "vmem_capacity_bytes", 128 << 20)
    except Exception:
        cap = 128 << 20
    clamp = min(48 << 20, (int(cap) * 5) // 8)
    return int(min(clamp, max(est_bytes, 16 << 20)))


def conv_block_forward(x_nchw, weight, bias, *, down=False, row_tile=None):
    """Forward of conv_block: 3x3 conv, pad=1, dilation=1, stride=2 if down else 1."""
    # TODO(synk): generator_conv's body (any norm/activation after the Conv2d) is not
    # given in the source; only the Conv2d(in, out, 3, stride, 1, 1) is implemented.
    stride = 2 if down else 1
    N, Cin, H, W = x_nchw.shape
    Cout, _, KH, KW = weight.shape
    pad = 1
    Ho = (H + 2 * pad - KH) // stride + 1
    Wo = (W + 2 * pad - KW) // stride + 1

    # ---- wrapper-side layout prep (cheap XLA glue; no 9x HBM im2col) ----
    # TODO(synk): keep activations NHWC end-to-end across generator layers to drop
    # these NCHW<->NHWC transposes entirely.
    x = jnp.transpose(x_nchw, (0, 2, 3, 1)).astype(jnp.bfloat16)   # NHWC, bf16 MXU feed

    # Phase decomposition: phase (rh, rw) holds padded[rh::stride, rw::stride] so all
    # in-kernel slicing is unit-stride.  For stride=1 this is a pure reshape (no copy).
    # TODO(synk): for down=True the jnp.stack below is one extra HBM pass over the
    # padded input; fold the phase split into the producing layer (or strided
    # in-kernel DMA) if a down block becomes the memory-bound path.
    Hq = Ho + (KH - 1) // stride
    Wq = Wo + (KW - 1) // stride
    Hp_need, Wp_need = stride * Hq, stride * Wq
    xp = jnp.pad(x, ((0, 0), (pad, Hp_need - H - pad), (pad, Wp_need - W - pad), (0, 0)))
    if stride == 1:
        phases = xp.reshape(N, Hq, Wq, Cin)                        # no copy
    else:
        ph = [xp[:, rh::stride, rw::stride, :]
              for rh in range(stride) for rw in range(stride)]
        phases = jnp.stack(ph, axis=1).reshape(N * stride * stride, Hq, Wq, Cin)

    # Weights fused over taps: (Cout, Cin, KH, KW) -> (KH*KW*Cin, Cout_p); K order is
    # (kh, kw, cin) to match the in-kernel LHS concat; Cout padded to a multiple of
    # 128 so output stores are lane-dense and the MXU N-dim is full width.
    Cout_p = ((Cout + 127) // 128) * 128
    w = jnp.transpose(weight, (2, 3, 1, 0)).reshape(KH * KW * Cin, Cout)
    w = jnp.pad(w, ((0, 0), (0, Cout_p - Cout))).astype(jnp.bfloat16)
    b = jnp.pad(bias, (0, Cout_p - Cout)).astype(jnp.float32).reshape(1, Cout_p)

    out_dtype = x_nchw.dtype
    out_itemsize = jnp.dtype(out_dtype).itemsize
    if row_tile is None:
        row_tile = _pick_row_tile(Ho, Wo, Cin, Cout_p, KH, KW)
    assert Ho % row_tile == 0, (Ho, row_tile)
    assert (row_tile * Wo) % 8 == 0 or row_tile == Ho, (row_tile, Wo)
    s2 = stride * stride
    M = row_tile * Wo

    # VMEM budget: double-buffered operands + in-kernel fused LHS / f32 result + slack.
    # TODO(synk): if 2 * s2*Hq*Wq*Cin*2 (double-buffered whole image) ever exceeds
    # ~24 MiB (huge generator feature maps on v7x's 64 MiB VMEM), switch the
    # activation from whole-image residency to halo'd row-band tiling.
    est = (2 * s2 * Hq * Wq * Cin * 2            # activation block (bf16, x2 buffers)
           + 2 * KH * KW * Cin * Cout_p * 2      # weights (x2 buffers)
           + 2 * Cout_p * 4                      # bias
           + 2 * M * Cout_p * out_itemsize       # output tile (x2 buffers)
           + M * (KH * KW * Cin * 2 + Cout_p * 4)  # in-kernel LHS + f32 result
           + (2 << 20))                          # compiler scratch slack
    vmem_limit = _vmem_limit(est)

    cost = pl.CostEstimate(
        flops=int(2 * N * Ho * Wo * KH * KW * Cin * Cout_p),
        transcendentals=0,
        bytes_accessed=int(phases.size * 2 + w.size * 2 + b.size * 4
                           + N * Ho * Wo * Cout_p * out_itemsize),
    )

    def _call(fused):
        kernel = _make_conv_kernel(KH, KW, stride, row_tile, Wo, Cin, Cout_p, fused)
        # Weights/bias have a constant block index -> DMA'd once per call; the
        # activation block index changes only on the n axis -> DMA'd once per image
        # and VMEM-resident across row tiles.  (Single-buffering the constant
        # weight/bias blocks via pipeline_mode=pl.Buffered(1) would reclaim one
        # extra copy on large Cin*Cout layers.)
        return pl.pallas_call(
            kernel,
            out_shape=jax.ShapeDtypeStruct((N, Ho * Wo, Cout_p), out_dtype),
            grid_spec=pltpu.PrefetchScalarGridSpec(
                num_scalar_prefetch=0,
                grid=(N, Ho // row_tile),
                in_specs=[
                    pl.BlockSpec((s2, Hq, Wq, Cin), lambda n, i: (n, 0, 0, 0)),
                    pl.BlockSpec((KH * KW * Cin, Cout_p), lambda n, i: (0, 0)),
                    pl.BlockSpec((1, Cout_p), lambda n, i: (0, 0)),
                ],
                # Flat 2-D (M, Cout_p) output block: lane- and sublane-dense stores,
                # no in-kernel 2D->3D reshape.
                out_specs=pl.BlockSpec(
                    (pl.Squeezed(), M, Cout_p), lambda n, i: (n, i, 0)),
            ),
            compiler_params=pltpu.CompilerParams(
                dimension_semantics=("parallel", "parallel"),
                vmem_limit_bytes=vmem_limit,
            ),
            cost_estimate=cost,
        )(phases, w, b)

    try:
        out = jax.block_until_ready(_call(fused=True))
    except Exception:
        # Older Mosaic versions may reject the unaligned lane-dim concatenate used to
        # build the fused-K LHS; fall back to per-tap accumulation (same numerics).
        out = jax.block_until_ready(_call(fused=False))

    # drop channel padding, split (Ho, Wo), back to NCHW (see TODO about staying NHWC)
    out = out.reshape(N, Ho, Wo, Cout_p)[..., :Cout]
    return jnp.transpose(out, (0, 3, 1, 2))


if __name__ == "__main__":
    key = jax.random.PRNGKey(0)
    k1, k2, k3 = jax.random.split(key, 3)

    N, Cin, H, W, Cout = 2, 4, 16, 16, 8
    x = jax.random.normal(k1, (N, Cin, H, W), jnp.float32)

    # Deterministic synthetic parameters (Conv2d(Cin, Cout, 3, stride, 1, 1) shapes)
    fan_in = Cin * 3 * 3
    weight = jax.random.normal(k2, (Cout, Cin, 3, 3), jnp.float32) * (1.0 / fan_in) ** 0.5
    bias = jax.random.normal(k3, (Cout,), jnp.float32) * 0.01

    # reference uses the same bf16-quantized activations/weights the kernel feeds the MXU
    xq = x.astype(jnp.bfloat16).astype(jnp.float32)
    wq = weight.astype(jnp.bfloat16).astype(jnp.float32)

    for down in (False, True):
        stride = 2 if down else 1
        ref = jax.lax.conv_general_dilated(
            xq, wq, window_strides=(stride, stride), padding=((1, 1), (1, 1)),
            dimension_numbers=("NCHW", "OIHW", "NCHW"),
            precision=jax.lax.Precision.HIGHEST,
        ) + bias[None, :, None, None]
        Ho = (H + 2 - 3) // stride + 1

        for rt in (None, 4):   # auto (vreg-budgeted) row tile + explicit multi-tile grid
            y = conv_block_forward(x, weight, bias, down=down, row_tile=rt)
            y = jax.block_until_ready(y)
            assert y.shape == (N, Cout, Ho, Ho), (down, rt, y.shape)
            max_err = float(jnp.max(jnp.abs(y - ref)))
            assert jnp.allclose(y, ref, atol=2e-2, rtol=2e-2), (down, rt, max_err)

    print("KERNEL_OK")
</pallas_src>

<mosaic_0001>
module attributes {stable_mosaic.version = 11 : i64} {
  func.func @kernel(%arg0: i32, %arg1: i32, %arg2: memref<1x18x18x4xbf16, #tpu.memory_space<vmem>>, %arg3: memref<36x128xbf16, #tpu.memory_space<vmem>>, %arg4: memref<1x128xf32, #tpu.memory_space<vmem>>, %arg5: memref<1x256x128xf32, #tpu.memory_space<vmem>>) attributes {dimension_semantics = [#tpu.dimension_semantics<parallel>, #tpu.dimension_semantics<parallel>], iteration_bounds = array<i64: 2, 1>, scalar_prefetch = 0 : i64, scratch_operands = 0 : i64, tpu.core_type = #tpu.core_type<tc>, window_params = [{transform_indices = @transform_0, window_bounds = array<i64: 1, 18, 18, 4>}, {pipeline_mode = #tpu.pipeline_mode<synchronous>, transform_indices = @transform_1, window_bounds = array<i64: 36, 128>}, {pipeline_mode = #tpu.pipeline_mode<synchronous>, transform_indices = @transform_2, window_bounds = array<i64: 1, 128>}, {transform_indices = @transform_3, window_bounds = array<i64: 1, 256, 128>}]} {
    %c16_i32 = arith.constant 16 : i32
    %0 = arith.muli %arg1, %c16_i32 : i32
    %c0_i32 = arith.constant 0 : i32
    %1 = arith.addi %0, %c0_i32 : i32
    %c0 = arith.constant 0 : index
    %2 = arith.index_cast %1 : i32 to index
    %c0_0 = arith.constant 0 : index
    %c0_1 = arith.constant 0 : index
    %3 = vector.load %arg2[%c0, %2, %c0_0, %c0_1] : memref<1x18x18x4xbf16, #tpu.memory_space<vmem>>, vector<1x16x16x4xbf16>
    %4 = vector.shape_cast %3 : vector<1x16x16x4xbf16> to vector<16x16x4xbf16>
    %5 = vector.shape_cast %4 : vector<16x16x4xbf16> to vector<256x4xbf16>
    %c16_i32_2 = arith.constant 16 : i32
    %6 = arith.muli %arg1, %c16_i32_2 : i32
    %c0_i32_3 = arith.constant 0 : i32
    %7 = arith.addi %6, %c0_i32_3 : i32
    %c0_4 = arith.constant 0 : index
    %8 = arith.index_cast %7 : i32 to index
    %c1 = arith.constant 1 : index
    %c0_5 = arith.constant 0 : index
    %9 = vector.load %arg2[%c0_4, %8, %c1, %c0_5] : memref<1x18x18x4xbf16, #tpu.memory_space<vmem>>, vector<1x16x16x4xbf16>
    %10 = vector.shape_cast %9 : vector<1x16x16x4xbf16> to vector<16x16x4xbf16>
    %11 = vector.shape_cast %10 : vector<16x16x4xbf16> to vector<256x4xbf16>
    %c16_i32_6 = arith.constant 16 : i32
    %12 = arith.muli %arg1, %c16_i32_6 : i32
    %c0_i32_7 = arith.constant 0 : i32
    %13 = arith.addi %12, %c0_i32_7 : i32
    %c0_8 = arith.constant 0 : index
    %14 = arith.index_cast %13 : i32 to index
    %c2 = arith.constant 2 : index
    %c0_9 = arith.constant 0 : index
    %15 = vector.load %arg2[%c0_8, %14, %c2, %c0_9] : memref<1x18x18x4xbf16, #tpu.memory_space<vmem>>, vector<1x16x16x4xbf16>
    %16 = vector.shape_cast %15 : vector<1x16x16x4xbf16> to vector<16x16x4xbf16>
    %17 = vector.shape_cast %16 : vector<16x16x4xbf16> to vector<256x4xbf16>
    %c16_i32_10 = arith.constant 16 : i32
    %18 = arith.muli %arg1, %c16_i32_10 : i32
    %c1_i32 = arith.constant 1 : i32
    %19 = arith.addi %18, %c1_i32 : i32
    %c0_11 = arith.constant 0 : index
    %20 = arith.index_cast %19 : i32 to index
    %c0_12 = arith.constant 0 : index
    %c0_13 = arith.constant 0 : index
    %21 = vector.load %arg2[%c0_11, %20, %c0_12, %c0_13] : memref<1x18x18x4xbf16, #tpu.memory_space<vmem>>, vector<1x16x16x4xbf16>
    %22 = vector.shape_cast %21 : vector<1x16x16x4xbf16> to vector<16x16x4xbf16>
    %23 = vector.shape_cast %22 : vector<16x16x4xbf16> to vector<256x4xbf16>
    %c16_i32_14 = arith.constant 16 : i32
    %24 = arith.muli %arg1, %c16_i32_14 : i32
    %c1_i32_15 = arith.constant 1 : i32
    %25 = arith.addi %24, %c1_i32_15 : i32
    %c0_16 = arith.constant 0 : index
    %26 = arith.index_cast %25 : i32 to index
    %c1_17 = arith.constant 1 : index
    %c0_18 = arith.constant 0 : index
    %27 = vector.load %arg2[%c0_16, %26, %c1_17, %c0_18] : memref<1x18x18x4xbf16, #tpu.memory_space<vmem>>, vector<1x16x16x4xbf16>
    %28 = vector.shape_cast %27 : vector<1x16x16x4xbf16> to vector<16x16x4xbf16>
    %29 = vector.shape_cast %28 : vector<16x16x4xbf16> to vector<256x4xbf16>
    %c16_i32_19 = arith.constant 16 : i32
    %30 = arith.muli %arg1, %c16_i32_19 : i32
    %c1_i32_20 = arith.constant 1 : i32
    %31 = arith.addi %30, %c1_i32_20 : i32
    %c0_21 = arith.constant 0 : index
    %32 = arith.index_cast %31 : i32 to index
    %c2_22 = arith.constant 2 : index
    %c0_23 = arith.constant 0 : index
    %33 = vector.load %arg2[%c0_21, %32, %c2_22, %c0_23] : memref<1x18x18x4xbf16, #tpu.memory_space<vmem>>, vector<1x16x16x4xbf16>
    %34 = vector.shape_cast %33 : vector<1x16x16x4xbf16> to vector<16x16x4xbf16>
    %35 = vector.shape_cast %34 : vector<16x16x4xbf16> to vector<256x4xbf16>
    %c16_i32_24 = arith.constant 16 : i32
    %36 = arith.muli %arg1, %c16_i32_24 : i32
    %c2_i32 = arith.constant 2 : i32
    %37 = arith.addi %36, %c2_i32 : i32
    %c0_25 = arith.constant 0 : index
    %38 = arith.index_cast %37 : i32 to index
    %c0_26 = arith.constant 0 : index
    %c0_27 = arith.constant 0 : index
    %39 = vector.load %arg2[%c0_25, %38, %c0_26, %c0_27] : memref<1x18x18x4xbf16, #tpu.memory_space<vmem>>, vector<1x16x16x4xbf16>
    %40 = vector.shape_cast %39 : vector<1x16x16x4xbf16> to vector<16x16x4xbf16>
    %41 = vector.shape_cast %40 : vector<16x16x4xbf16> to vector<256x4xbf16>
    %c16_i32_28 = arith.constant 16 : i32
    %42 = arith.muli %arg1, %c16_i32_28 : i32
    %c2_i32_29 = arith.constant 2 : i32
    %43 = arith.addi %42, %c2_i32_29 : i32
    %c0_30 = arith.constant 0 : index
    %44 = arith.index_cast %43 : i32 to index
    %c1_31 = arith.constant 1 : index
    %c0_32 = arith.constant 0 : index
    %45 = vector.load %arg2[%c0_30, %44, %c1_31, %c0_32] : memref<1x18x18x4xbf16, #tpu.memory_space<vmem>>, vector<1x16x16x4xbf16>
    %46 = vector.shape_cast %45 : vector<1x16x16x4xbf16> to vector<16x16x4xbf16>
    %47 = vector.shape_cast %46 : vector<16x16x4xbf16> to vector<256x4xbf16>
    %c16_i32_33 = arith.constant 16 : i32
    %48 = arith.muli %arg1, %c16_i32_33 : i32
    %c2_i32_34 = arith.constant 2 : i32
    %49 = arith.addi %48, %c2_i32_34 : i32
    %c0_35 = arith.constant 0 : index
    %50 = arith.index_cast %49 : i32 to index
    %c2_36 = arith.constant 2 : index
    %c0_37 = arith.constant 0 : index
    %51 = vector.load %arg2[%c0_35, %50, %c2_36, %c0_37] : memref<1x18x18x4xbf16, #tpu.memory_space<vmem>>, vector<1x16x16x4xbf16>
    %52 = vector.shape_cast %51 : vector<1x16x16x4xbf16> to vector<16x16x4xbf16>
    %53 = vector.shape_cast %52 : vector<16x16x4xbf16> to vector<256x4xbf16>
    %54 = tpu.concatenate %5, %11, %17, %23, %29, %35, %41, %47, %53 in 1 : vector<256x4xbf16>, vector<256x4xbf16>, vector<256x4xbf16>, vector<256x4xbf16>, vector<256x4xbf16>, vector<256x4xbf16>, vector<256x4xbf16>, vector<256x4xbf16>, vector<256x4xbf16> -> vector<256x36xbf16>
    %c0_38 = arith.constant 0 : index
    %c0_39 = arith.constant 0 : index
    %55 = vector.load %arg3[%c0_38, %c0_39] : memref<36x128xbf16, #tpu.memory_space<vmem>>, vector<36x128xbf16>
    %cst = arith.constant dense<0.000000e+00> : vector<256x128xf32>
    %56 = tpu.matmul %54, %55, %cst {dimension_numbers = #tpu.dot_dimension_numbers<[1], [0], [0], [1], [0, 0, 1, 1], [], []>} : vector<256x36xbf16>, vector<36x128xbf16>, vector<256x128xf32> -> vector<256x128xf32>
    %c0_40 = arith.constant 0 : index
    %c0_41 = arith.constant 0 : index
    %57 = vector.load %arg4[%c0_40, %c0_41] : memref<1x128xf32, #tpu.memory_space<vmem>>, vector<1x128xf32>
    %58 = vector.broadcast %57 : vector<1x128xf32> to vector<256x128xf32>
    %59 = arith.addf %56, %58 : vector<256x128xf32>
    %c0_42 = arith.constant 0 : index
    %c0_43 = arith.constant 0 : index
    %c0_44 = arith.constant 0 : index
    %60 = vector.load %arg5[%c0_42, %c0_43, %c0_44] : memref<1x256x128xf32, #tpu.memory_space<vmem>>, vector<1x256x128xf32>
    %61 = vector.shape_cast %60 : vector<1x256x128xf32> to vector<256x128xf32>
    %62 = vector.shape_cast %59 : vector<256x128xf32> to vector<1x256x128xf32>
    tpu.vector_store %arg5[%c0_42, %c0_43, %c0_44], %62 {strides = array<i32>} : memref<1x256x128xf32, #tpu.memory_space<vmem>>, vector<1x256x128xf32>,
    return
  }
  func.func @transform_0(%arg0: i32, %arg1: i32) -> (i32, i32, i32, i32) {
    %c0_i32 = arith.constant 0 : i32
    %c0_i32_0 = arith.constant 0 : i32
    %c0_i32_1 = arith.constant 0 : i32
    %c0_i32_2 = arith.constant 0 : i32
    return %arg0, %c0_i32, %c0_i32_0, %c0_i32_1 : i32, i32, i32, i32
  }
  func.func @transform_1(%arg0: i32, %arg1: i32) -> (i32, i32) {
    %c0_i32 = arith.constant 0 : i32
    %c0_i32_0 = arith.constant 0 : i32
    %c0_i32_1 = arith.constant 0 : i32
    return %c0_i32, %c0_i32_0 : i32, i32
  }
  func.func @transform_2(%arg0: i32, %arg1: i32) -> (i32, i32) {
    %c0_i32 = arith.constant 0 : i32
    %c0_i32_0 = arith.constant 0 : i32
    %c0_i32_1 = arith.constant 0 : i32
    return %c0_i32, %c0_i32_0 : i32, i32
  }
  func.func @transform_3(%arg0: i32, %arg1: i32) -> (i32, i32, i32) {
    %c0_i32 = arith.constant 0 : i32
    %c0_i32_0 = arith.constant 0 : i32
    return %arg0, %arg1, %c0_i32 : i32, i32, i32
  }
}

module attributes {stable_mosaic.version = 11 : i64} {
  func.func @kernel(%arg0: i32, %arg1: i32, %arg2: memref<1x18x18x4xbf16, #tpu.memory_space<vmem>>, %arg3: memref<36x128xbf16, #tpu.memory_space<vmem>>, %arg4: memref<1x128xf32, #tpu.memory_space<vmem>>, %arg5: memref<1x256x128xf32, #tpu.memory_space<vmem>>) attributes {dimension_semantics = [#tpu.dimension_semantics<parallel>, #tpu.dimension_semantics<parallel>], iteration_bounds = array<i64: 2, 1>, scalar_prefetch = 0 : i64, scratch_operands = 0 : i64, tpu.core_type = #tpu.core_type<tc>, window_params = [{transform_indices = @transform_0, window_bounds = array<i64: 1, 18, 18, 4>}, {pipeline_mode = #tpu.pipeline_mode<synchronous>, transform_indices = @transform_1, window_bounds = array<i64: 36, 128>}, {pipeline_mode = #tpu.pipeline_mode<synchronous>, transform_indices = @transform_2, window_bounds = array<i64: 1, 128>}, {transform_indices = @transform_3, window_bounds = array<i64: 1, 256, 128>}]} {
    %c0 = arith.constant 0 : index
    %c0_0 = arith.constant 0 : index
    %0 = vector.load %arg4[%c0, %c0_0] : memref<1x128xf32, #tpu.memory_space<vmem>>, vector<1x128xf32>
    %1 = vector.shape_cast %0 : vector<1x128xf32> to vector<1x128xf32>
    %2 = vector.broadcast %1 : vector<1x128xf32> to vector<256x128xf32>
    %c16_i32 = arith.constant 16 : i32
    %3 = arith.muli %arg1, %c16_i32 : i32
    %c0_i32 = arith.constant 0 : i32
    %4 = arith.addi %3, %c0_i32 : i32
    %c0_1 = arith.constant 0 : index
    %5 = arith.index_cast %4 : i32 to index
    %c0_2 = arith.constant 0 : index
    %c0_3 = arith.constant 0 : index
    %6 = vector.load %arg2[%c0_1, %5, %c0_2, %c0_3] : memref<1x18x18x4xbf16, #tpu.memory_space<vmem>>, vector<1x16x16x4xbf16>
    %7 = vector.shape_cast %6 : vector<1x16x16x4xbf16> to vector<16x16x4xbf16>
    %8 = vector.shape_cast %7 : vector<16x16x4xbf16> to vector<256x4xbf16>
    %c0_4 = arith.constant 0 : index
    %c0_5 = arith.constant 0 : index
    %9 = vector.load %arg3[%c0_4, %c0_5] : memref<36x128xbf16, #tpu.memory_space<vmem>>, vector<4x128xbf16>
    %cst = arith.constant dense<0.000000e+00> : vector<256x128xf32>
    %10 = tpu.matmul %8, %9, %cst {dimension_numbers = #tpu.dot_dimension_numbers<[1], [0], [0], [1], [0, 0, 1, 1], [], []>} : vector<256x4xbf16>, vector<4x128xbf16>, vector<256x128xf32> -> vector<256x128xf32>
    %11 = arith.addf %2, %10 : vector<256x128xf32>
    %c16_i32_6 = arith.constant 16 : i32
    %12 = arith.muli %arg1, %c16_i32_6 : i32
    %c0_i32_7 = arith.constant 0 : i32
    %13 = arith.addi %12, %c0_i32_7 : i32
    %c0_8 = arith.constant 0 : index
    %14 = arith.index_cast %13 : i32 to index
    %c1 = arith.constant 1 : index
    %c0_9 = arith.constant 0 : index
    %15 = vector.load %arg2[%c0_8, %14, %c1, %c0_9] : memref<1x18x18x4xbf16, #tpu.memory_space<vmem>>, vector<1x16x16x4xbf16>
    %16 = vector.shape_cast %15 : vector<1x16x16x4xbf16> to vector<16x16x4xbf16>
    %17 = vector.shape_cast %16 : vector<16x16x4xbf16> to vector<256x4xbf16>
    %c4 = arith.constant 4 : index
    %c0_10 = arith.constant 0 : index
    %18 = vector.load %arg3[%c4, %c0_10] : memref<36x128xbf16, #tpu.memory_space<vmem>>, vector<4x128xbf16>
    %cst_11 = arith.constant dense<0.000000e+00> : vector<256x128xf32>
    %19 = tpu.matmul %17, %18, %cst_11 {dimension_numbers = #tpu.dot_dimension_numbers<[1], [0], [0], [1], [0, 0, 1, 1], [], []>} : vector<256x4xbf16>, vector<4x128xbf16>, vector<256x128xf32> -> vector<256x128xf32>
    %20 = arith.addf %11, %19 : vector<256x128xf32>
    %c16_i32_12 = arith.constant 16 : i32
    %21 = arith.muli %arg1, %c16_i32_12 : i32
    %c0_i32_13 = arith.constant 0 : i32
    %22 = arith.addi %21, %c0_i32_13 : i32
    %c0_14 = arith.constant 0 : index
    %23 = arith.index_cast %22 : i32 to index
    %c2 = arith.constant 2 : index
    %c0_15 = arith.constant 0 : index
    %24 = vector.load %arg2[%c0_14, %23, %c2, %c0_15] : memref<1x18x18x4xbf16, #tpu.memory_space<vmem>>, vector<1x16x16x4xbf16>
    %25 = vector.shape_cast %24 : vector<1x16x16x4xbf16> to vector<16x16x4xbf16>
    %26 = vector.shape_cast %25 : vector<16x16x4xbf16> to vector<256x4xbf16>
    %c8 = arith.constant 8 : index
    %c0_16 = arith.constant 0 : index
    %27 = vector.load %arg3[%c8, %c0_16] : memref<36x128xbf16, #tpu.memory_space<vmem>>, vector<4x128xbf16>
    %cst_17 = arith.constant dense<0.000000e+00> : vector<256x128xf32>
    %28 = tpu.matmul %26, %27, %cst_17 {dimension_numbers = #tpu.dot_dimension_numbers<[1], [0], [0], [1], [0, 0, 1, 1], [], []>} : vector<256x4xbf16>, vector<4x128xbf16>, vector<256x128xf32> -> vector<256x128xf32>
    %29 = arith.addf %20, %28 : vector<256x128xf32>
    %c16_i32_18 = arith.constant 16 : i32
    %30 = arith.muli %arg1, %c16_i32_18 : i32
    %c1_i32 = arith.constant 1 : i32
    %31 = arith.addi %30, %c1_i32 : i32
    %c0_19 = arith.constant 0 : index
    %32 = arith.index_cast %31 : i32 to index
    %c0_20 = arith.constant 0 : index
    %c0_21 = arith.constant 0 : index
    %33 = vector.load %arg2[%c0_19, %32, %c0_20, %c0_21] : memref<1x18x18x4xbf16, #tpu.memory_space<vmem>>, vector<1x16x16x4xbf16>
    %34 = vector.shape_cast %33 : vector<1x16x16x4xbf16> to vector<16x16x4xbf16>
    %35 = vector.shape_cast %34 : vector<16x16x4xbf16> to vector<256x4xbf16>
    %c12 = arith.constant 12 : index
    %c0_22 = arith.constant 0 : index
    %36 = vector.load %arg3[%c12, %c0_22] : memref<36x128xbf16, #tpu.memory_space<vmem>>, vector<4x128xbf16>
    %cst_23 = arith.constant dense<0.000000e+00> : vector<256x128xf32>
    %37 = tpu.matmul %35, %36, %cst_23 {dimension_numbers = #tpu.dot_dimension_numbers<[1], [0], [0], [1], [0, 0, 1, 1], [], []>} : vector<256x4xbf16>, vector<4x128xbf16>, vector<256x128xf32> -> vector<256x128xf32>
    %38 = arith.addf %29, %37 : vector<256x128xf32>
    %c16_i32_24 = arith.constant 16 : i32
    %39 = arith.muli %arg1, %c16_i32_24 : i32
    %c1_i32_25 = arith.constant 1 : i32
    %40 = arith.addi %39, %c1_i32_25 : i32
    %c0_26 = arith.constant 0 : index
    %41 = arith.index_cast %40 : i32 to index
    %c1_27 = arith.constant 1 : index
    %c0_28 = arith.constant 0 : index
    %42 = vector.load %arg2[%c0_26, %41, %c1_27, %c0_28] : memref<1x18x18x4xbf16, #tpu.memory_space<vmem>>, vector<1x16x16x4xbf16>
    %43 = vector.shape_cast %42 : vector<1x16x16x4xbf16> to vector<16x16x4xbf16>
    %44 = vector.shape_cast %43 : vector<16x16x4xbf16> to vector<256x4xbf16>
    %c16 = arith.constant 16 : index
    %c0_29 = arith.constant 0 : index
    %45 = vector.load %arg3[%c16, %c0_29] : memref<36x128xbf16, #tpu.memory_space<vmem>>, vector<4x128xbf16>
    %cst_30 = arith.constant dense<0.000000e+00> : vector<256x128xf32>
    %46 = tpu.matmul %44, %45, %cst_30 {dimension_numbers = #tpu.dot_dimension_numbers<[1], [0], [0], [1], [0, 0, 1, 1], [], []>} : vector<256x4xbf16>, vector<4x128xbf16>, vector<256x128xf32> -> vector<256x128xf32>
    %47 = arith.addf %38, %46 : vector<256x128xf32>
    %c16_i32_31 = arith.constant 16 : i32
    %48 = arith.muli %arg1, %c16_i32_31 : i32
    %c1_i32_32 = arith.constant 1 : i32
    %49 = arith.addi %48, %c1_i32_32 : i32
    %c0_33 = arith.constant 0 : index
    %50 = arith.index_cast %49 : i32 to index
    %c2_34 = arith.constant 2 : index
    %c0_35 = arith.constant 0 : index
    %51 = vector.load %arg2[%c0_33, %50, %c2_34, %c0_35] : memref<1x18x18x4xbf16, #tpu.memory_space<vmem>>, vector<1x16x16x4xbf16>
    %52 = vector.shape_cast %51 : vector<1x16x16x4xbf16> to vector<16x16x4xbf16>
    %53 = vector.shape_cast %52 : vector<16x16x4xbf16> to vector<256x4xbf16>
    %c20 = arith.constant 20 : index
    %c0_36 = arith.constant 0 : index
    %54 = vector.load %arg3[%c20, %c0_36] : memref<36x128xbf16, #tpu.memory_space<vmem>>, vector<4x128xbf16>
    %cst_37 = arith.constant dense<0.000000e+00> : vector<256x128xf32>
    %55 = tpu.matmul %53, %54, %cst_37 {dimension_numbers = #tpu.dot_dimension_numbers<[1], [0], [0], [1], [0, 0, 1, 1], [], []>} : vector<256x4xbf16>, vector<4x128xbf16>, vector<256x128xf32> -> vector<256x128xf32>
    %56 = arith.addf %47, %55 : vector<256x128xf32>
    %c16_i32_38 = arith.constant 16 : i32
    %57 = arith.muli %arg1, %c16_i32_38 : i32
    %c2_i32 = arith.constant 2 : i32
    %58 = arith.addi %57, %c2_i32 : i32
    %c0_39 = arith.constant 0 : index
    %59 = arith.index_cast %58 : i32 to index
    %c0_40 = arith.constant 0 : index
    %c0_41 = arith.constant 0 : index
    %60 = vector.load %arg2[%c0_39, %59, %c0_40, %c0_41] : memref<1x18x18x4xbf16, #tpu.memory_space<vmem>>, vector<1x16x16x4xbf16>
    %61 = vector.shape_cast %60 : vector<1x16x16x4xbf16> to vector<16x16x4xbf16>
    %62 = vector.shape_cast %61 : vector<16x16x4xbf16> to vector<256x4xbf16>
    %c24 = arith.constant 24 : index
    %c0_42 = arith.constant 0 : index
    %63 = vector.load %arg3[%c24, %c0_42] : memref<36x128xbf16, #tpu.memory_space<vmem>>, vector<4x128xbf16>
    %cst_43 = arith.constant dense<0.000000e+00> : vector<256x128xf32>
    %64 = tpu.matmul %62, %63, %cst_43 {dimension_numbers = #tpu.dot_dimension_numbers<[1], [0], [0], [1], [0, 0, 1, 1], [], []>} : vector<256x4xbf16>, vector<4x128xbf16>, vector<256x128xf32> -> vector<256x128xf32>
    %65 = arith.addf %56, %64 : vector<256x128xf32>
    %c16_i32_44 = arith.constant 16 : i32
    %66 = arith.muli %arg1, %c16_i32_44 : i32
    %c2_i32_45 = arith.constant 2 : i32
    %67 = arith.addi %66, %c2_i32_45 : i32
    %c0_46 = arith.constant 0 : index
    %68 = arith.index_cast %67 : i32 to index
    %c1_47 = arith.constant 1 : index
    %c0_48 = arith.constant 0 : index
    %69 = vector.load %arg2[%c0_46, %68, %c1_47, %c0_48] : memref<1x18x18x4xbf16, #tpu.memory_space<vmem>>, vector<1x16x16x4xbf16>
    %70 = vector.shape_cast %69 : vector<1x16x16x4xbf16> to vector<16x16x4xbf16>
    %71 = vector.shape_cast %70 : vector<16x16x4xbf16> to vector<256x4xbf16>
    %c28 = arith.constant 28 : index
    %c0_49 = arith.constant 0 : index
    %72 = vector.load %arg3[%c28, %c0_49] : memref<36x128xbf16, #tpu.memory_space<vmem>>, vector<4x128xbf16>
    %cst_50 = arith.constant dense<0.000000e+00> : vector<256x128xf32>
    %73 = tpu.matmul %71, %72, %cst_50 {dimension_numbers = #tpu.dot_dimension_numbers<[1], [0], [0], [1], [0, 0, 1, 1], [], []>} : vector<256x4xbf16>, vector<4x128xbf16>, vector<256x128xf32> -> vector<256x128xf32>
    %74 = arith.addf %65, %73 : vector<256x128xf32>
    %c16_i32_51 = arith.constant 16 : i32
    %75 = arith.muli %arg1, %c16_i32_51 : i32
    %c2_i32_52 = arith.constant 2 : i32
    %76 = arith.addi %75, %c2_i32_52 : i32
    %c0_53 = arith.constant 0 : index
    %77 = arith.index_cast %76 : i32 to index
    %c2_54 = arith.constant 2 : index
    %c0_55 = arith.constant 0 : index
    %78 = vector.load %arg2[%c0_53, %77, %c2_54, %c0_55] : memref<1x18x18x4xbf16, #tpu.memory_space<vmem>>, vector<1x16x16x4xbf16>
    %79 = vector.shape_cast %78 : vector<1x16x16x4xbf16> to vector<16x16x4xbf16>
    %80 = vector.shape_cast %79 : vector<16x16x4xbf16> to vector<256x4xbf16>
    %c32 = arith.constant 32 : index
    %c0_56 = arith.constant 0 : index
    %81 = vector.load %arg3[%c32, %c0_56] : memref<36x128xbf16, #tpu.memory_space<vmem>>, vector<4x128xbf16>
    %cst_57 = arith.constant dense<0.000000e+00> : vector<256x128xf32>
    %82 = tpu.matmul %80, %81, %cst_57 {dimension_numbers = #tpu.dot_dimension_numbers<[1], [0], [0], [1], [0, 0, 1, 1], [], []>} : vector<256x4xbf16>, vector<4x128xbf16>, vector<256x128xf32> -> vector<256x128xf32>
    %83 = arith.addf %74, %82 : vector<256x128xf32>
    %c0_58 = arith.constant 0 : index
    %c0_59 = arith.constant 0 : index
    %c0_60 = arith.constant 0 : index
    %84 = vector.load %arg5[%c0_58, %c0_59, %c0_60] : memref<1x256x128xf32, #tpu.memory_space<vmem>>, vector<1x256x128xf32>
    %85 = vector.shape_cast %84 : vector<1x256x128xf32> to vector<256x128xf32>
    %86 = vector.shape_cast %83 : vector<256x128xf32> to vector<1x256x128xf32>
    tpu.vector_store %arg5[%c0_58, %c0_59, %c0_60], %86 {strides = array<i32>} : memref<1x256x128xf32, #tpu.memory_space<vmem>>, vector<1x256x128xf32>,
    return
  }
  func.func @transform_0(%arg0: i32, %arg1: i32) -> (i32, i32, i32, i32) {
    %c0_i32 = arith.constant 0 : i32
    %c0_i32_0 = arith.constant 0 : i32
    %c0_i32_1 = arith.constant 0 : i32
    %c0_i32_2 = arith.constant 0 : i32
    return %arg0, %c0_i32, %c0_i32_0, %c0_i32_1 : i32, i32, i32, i32
  }
  func.func @transform_1(%arg0: i32, %arg1: i32) -> (i32, i32) {
    %c0_i32 = arith.constant 0 : i32
    %c0_i32_0 = arith.constant 0 : i32
    %c0_i32_1 = arith.constant 0 : i32
    return %c0_i32, %c0_i32_0 : i32, i32
  }
  func.func @transform_2(%arg0: i32, %arg1: i32) -> (i32, i32) {
    %c0_i32 = arith.constant 0 : i32
    %c0_i32_0 = arith.constant 0 : i32
    %c0_i32_1 = arith.constant 0 : i32
    return %c0_i32, %c0_i32_0 : i32, i32
  }
  func.func @transform_3(%arg0: i32, %arg1: i32) -> (i32, i32, i32) {
    %c0_i32 = arith.constant 0 : i32
    %c0_i32_0 = arith.constant 0 : i32
    return %arg0, %arg1, %c0_i32 : i32, i32, i32
  }
}

</mosaic_0001>

<llo_original>
// kernel: tpu_custom_call.1
$region0: #{tpu_custom_call.1}
  #allocation0 [shape = 'u32[]', space=smem, size = 0x4, offset = 0x4, fixed_abs, tag = 'smem constant byte address 0x4 - core index']
  #allocation1 [shape = 'u32[144,128]{1,0:T(1,128)}', space=vmem, size = 0x12000, scoped, tag = 'internal scratch']
  %s0 = inlined_call_operand.vmem [shape: bf16[2,18,18,4], index: 0, kind: input, shape index: {}]
  %s1 = inlined_call_operand.vmem [shape: bf16[36,128], index: 1, kind: input, shape index: {}]
  %s2 = inlined_call_operand.vmem [shape: f32[1,128], index: 2, kind: input, shape index: {}]
  %s3 = inlined_call_operand.hbm [shape: f32[2,256,128], index: 3, kind: output, shape index: {}]
  %s4 = sld [smem:[#allocation0]]
  $region45: #{tpu_custom_call.1} parent=0
    _
  %s6 = ssub.s32 1, %s4
  %s7 = scalar_select 0, %s6, %s4
  $region1: #{tpu_custom_call.1} parent=0
    #allocation2 [shape = 'u8[262144]{0}', space=vmem, size = 0x40000, scoped, tag = 'output window, operand 0']
    #allocation3 [shape = 's32[2]{0}', space=sflag, size = 0x8, scoped, tag = 'scoped memory for tpu_custom_call.1']
    %8 = vsyncpa [#allocation3], 0
    %s9 = scalar_lea.sflag [#allocation3], 1
    %10 = vsyncpa %s9, 0
    loop: start=0, step=1, limit=4
    $region2: #{tpu_custom_call.1} parent=1 // loop_pre_header
      _
    $region3: #{tpu_custom_call.1} parent=1 // loop_header
      %s12 = sphi 0, %s16
      %p13 = scmp.ge.s32.totalorder %s12, 4
      %s19 = sphi 0, %s31
      %s20 = sphi 0, %s27
      %s21 = sphi 0, %s19
      %s22 = sphi 0, %s20
      %s23 = sphi 0, %s21
      %s24 = sphi 0, %s22
      %s34 = sphi 0, %s36
      %s37 = sphi 0, %s34
      %s38 = sphi 0, %s37
      %s54 = sphi 0, %s38
      %s58 = sphi 0, %s58
      %s60 = sphi 0, %s58
      %s61 = sphi 0, %s60
      %s75 = sphi 0, %s61
      %s79 = sphi 0, %s79
      %s81 = sphi 0, %s79
      %s82 = sphi 0, %s81
      %s96 = sphi 0, %s82
      %s104 = sphi 0, %s106
      %s107 = sphi 0, %s104
      %s108 = sphi 0, %s107
      %s124 = sphi 0, %s108
    $region4: #{tpu_custom_call.1} parent=1 // loop_header_branch
      %15 = sbr.rel (%p13) target = $region8
    $region5: #{tpu_custom_call.1} parent=1 // loop_body
      %s17 = ssub.s32 %s12, 1
      %s18 = ssub.s32 %s12, 2
      %s25 = sadd.s32 1, %s20
      %p26 = scmp.ge.s32.totalorder %s25, 1
      %s27 = scalar_select %p26, 0, %s25
      %s28 = sadd.s32 1, %s19
      %s29 = scalar_select %p26, %s28, %s19
      %p30 = scmp.ge.s32.totalorder %s29, 2
      %s31 = scalar_select %p30, 0, %s29
      %s32 = ssub.s32 %s19, %s31
      %p33 = scmp.eq.s32.totalorder %s32, 0
      %s35 = sadd.s32 %s34, 1
      %s36 = scalar_select %p33, %s34, %s35
      %p39 = pneg %p33
      %p40 = scmp.eq.s32.totalorder %s12, 1
      %p41 = por %p39, %p40
      %p42 = scmp.ne.s32.totalorder %s34, %s37
      %p43 = scmp.eq.s32.totalorder %s12, 0
      %p44 = por %p42, %p43
      %p45 = scmp.ne.s32.totalorder %s34, %s37
      %p46 = scmp.eq.s32.totalorder %s17, 1
      %p47 = por %p45, %p46
      %p48 = scmp.ne.s32.totalorder %s37, %s38
      %p49 = scmp.eq.s32.totalorder %s17, 0
      %p50 = por %p48, %p49
      %p51 = scmp.ne.s32.totalorder %s37, %s38
      %p52 = scmp.eq.s32.totalorder %s18, 1
      %p53 = por %p51, %p52
      %p55 = scmp.ne.s32.totalorder %s38, %s54
      %p56 = scmp.eq.s32.totalorder %s18, 0
      %p57 = por %p55, %p56
      %s59 = sadd.s32 %s58, 1
      %p62 = scmp.eq.s32.totalorder %s12, 1
      %p63 = scmp.ne.s32.totalorder %s58, %s60
      %p64 = scmp.eq.s32.totalorder %s12, 0
      %p65 = por %p63, %p64
      %p66 = scmp.ne.s32.totalorder %s58, %s60
      %p67 = scmp.eq.s32.totalorder %s17, 1
      %p68 = por %p66, %p67
      %p69 = scmp.ne.s32.totalorder %s60, %s61
      %p70 = scmp.eq.s32.totalorder %s17, 0
      %p71 = por %p69, %p70
      %p72 = scmp.ne.s32.totalorder %s60, %s61
      %p73 = scmp.eq.s32.totalorder %s18, 1
      %p74 = por %p72, %p73
      %p76 = scmp.ne.s32.totalorder %s61, %s75
      %p77 = scmp.eq.s32.totalorder %s18, 0
      %p78 = por %p76, %p77
      %s80 = sadd.s32 %s79, 1
      %p83 = scmp.eq.s32.totalorder %s12, 1
      %p84 = scmp.ne.s32.totalorder %s79, %s81
      %p85 = scmp.eq.s32.totalorder %s12, 0
      %p86 = por %p84, %p85
      %p87 = scmp.ne.s32.totalorder %s79, %s81
      %p88 = scmp.eq.s32.totalorder %s17, 1
      %p89 = por %p87, %p88
      %p90 = scmp.ne.s32.totalorder %s81, %s82
      %p91 = scmp.eq.s32.totalorder %s17, 0
      %p92 = por %p90, %p91
      %p93 = scmp.ne.s32.totalorder %s81, %s82
      %p94 = scmp.eq.s32.totalorder %s18, 1
      %p95 = por %p93, %p94
      %p97 = scmp.ne.s32.totalorder %s82, %s96
      %p98 = scmp.eq.s32.totalorder %s18, 0
      %p99 = por %p97, %p98
      %s100 = ssub.s32 %s19, %s31
      %s101 = ssub.s32 %s20, %s27
      %s102 = sor.u32 %s100, %s101
      %p103 = scmp.eq.s32.totalorder %s102, 0
      %s105 = sadd.s32 %s104, 1
      %s106 = scalar_select %p103, %s104, %s105
      %p109 = pneg %p103
      %p110 = scmp.eq.s32.totalorder %s12, 1
      %p111 = por %p109, %p110
      %p112 = scmp.ne.s32.totalorder %s104, %s107
      %p113 = scmp.eq.s32.totalorder %s12, 0
      %p114 = por %p112, %p113
      %p115 = scmp.ne.s32.totalorder %s104, %s107
      %p116 = scmp.eq.s32.totalorder %s17, 1
      %p117 = por %p115, %p116
      %p118 = scmp.ne.s32.totalorder %s107, %s108
      %p119 = scmp.eq.s32.totalorder %s17, 0
      %p120 = por %p118, %p119
      %p121 = scmp.ne.s32.totalorder %s107, %s108
      %p122 = scmp.eq.s32.totalorder %s18, 1
      %p123 = por %p121, %p122
      %p125 = scmp.ne.s32.totalorder %s108, %s124
      %p126 = scmp.eq.s32.totalorder %s18, 0
      %p127 = por %p125, %p126
      %p128 = scmp.le.s32.totalorder 1, %s12
      %p129 = scmp.lt.s32.totalorder %s12, 3
      %p130 = pnand %p128, %p129
      %p131 = pneg %p130
      // Predicated region
      $region9: #{tpu_custom_call.1} parent=5 // pred_check
        _
      $region10: #{tpu_custom_call.1} parent=5 // pred_check_branch
        %133 = sbr.rel (%p130) target = $region12
      $region11: #{tpu_custom_call.1} parent=5 // pred_region
        %s134 = ssub.s32 %s12, 1
        // Predicated region
        $region13: #{tpu_custom_call.1} parent=11 // pred_check
          %p135 = pneg %p71
        $region14: #{tpu_custom_call.1} parent=11 // pred_check_branch
          %137 = sbr.rel (%p135) target = $region16
        $region15: #{tpu_custom_call.1} parent=11 // pred_region
          _
        $region16: #{tpu_custom_call.1} parent=11 // pred_fallthru
          _
        // Predicated region
        $region17: #{tpu_custom_call.1} parent=11 // pred_check
          %p138 = pneg %p92
        $region18: #{tpu_custom_call.1} parent=11 // pred_check_branch
          %140 = sbr.rel (%p138) target = $region20
        $region19: #{tpu_custom_call.1} parent=11 // pred_region
          _
        $region20: #{tpu_custom_call.1} parent=11 // pred_fallthru
          _
      $region12: #{tpu_custom_call.1} parent=5 // pred_fallthru
        _
      %p141 = scmp.lt.s32.totalorder %s12, 2
      // Predicated region
      $region21: #{tpu_custom_call.1} parent=5 // pred_check
        %p142 = pneg %p141
      $region22: #{tpu_custom_call.1} parent=5 // pred_check_branch
        %144 = sbr.rel (%p142) target = $region24
      $region23: #{tpu_custom_call.1} parent=5 // pred_region
        // Predicated region
        $region25: #{tpu_custom_call.1} parent=23 // pred_check
          %p145 = pneg %p44
        $region26: #{tpu_custom_call.1} parent=23 // pred_check_branch
          %147 = sbr.rel (%p145) target = $region28
        $region27: #{tpu_custom_call.1} parent=23 // pred_region
          %p148 = scmp.lt.s32.totalorder %s19, 1
          %s149 = scalar_select %p148, %s19, 1
          %s150 = smul.addr %s149, 54
          %s151 = smul.addr %s150, 4
          %s152 = scalar_lea.vmem %s0, %s151
        $region28: #{tpu_custom_call.1} parent=23 // pred_fallthru
          _
      $region24: #{tpu_custom_call.1} parent=5 // pred_fallthru
        _
      %p153 = scmp.le.s32.totalorder 1, %s12
      %p154 = scmp.lt.s32.totalorder %s12, 3
      %p155 = pnand %p153, %p154
      %p156 = pneg %p155
      // Predicated region
      $region29: #{tpu_custom_call.1} parent=5 // pred_check
        _
      $region30: #{tpu_custom_call.1} parent=5 // pred_check_branch
        %158 = sbr.rel (%p155) target = $region32
      $region31: #{tpu_custom_call.1} parent=5 // pred_region
        %s159 = ssub.s32 %s12, 1
        %p160 = scmp.lt.s32.totalorder %s21, 1
        %s161 = scalar_select %p160, %s21, 1
        %s162 = smul.addr %s161, 54
        %s163 = smul.addr %s162, 4
        %s164 = scalar_lea.vmem %s0, %s163
        %p165 = pneg %p50
        %p166 = pneg %p47
        %p167 = pneg %p71
        %p168 = pneg %p68
        %p169 = pneg %p92
        %p170 = pneg %p89
        %p171 = pneg %p120
        %p172 = pneg %p117
        %s173 = sand.u32 %s107, 1
        %s174 = scalar_lea.sflag [#allocation3], %s173
        %s175 = sand.u32 %s107, 1
        %s176 = smul.addr %s175, 256
        %s177 = scalar_lea.vmem [#allocation2], %s176
        %p178 = scmp.lt.s32.totalorder %s21, 1
        %s179 = scalar_select %p178, %s21, 1
        %s180 = smul.addr %s179, 54
        %s181 = smul.addr %s180, 4
        %s182 = scalar_lea.vmem %s0, %s181
        %s183 = smul.u32 32, %s22
        %s185 = smul.u32 %s22, 16
        %s186 = smul.u32 %s185, 3
        %s187 = smul.addr %s186, 4
        %s188 = scalar_lea.vmem %s182, %s187
        %v189 = vld [vmem:[%s188] sm:$0xf]
        %v190 = vld [vmem:[%s188 + $0x4] sm:$0xf]
        %v191 = vld [vmem:[%s188 + $0xc] sm:$0xf]
        %v192 = vld [vmem:[%s188 + $0x10] sm:$0xf]
        %v193 = vld [vmem:[%s188 + $0x18] sm:$0xf]
        %v194 = vld [vmem:[%s188 + $0x1c] sm:$0xf]
        %v195 = vld [vmem:[%s188 + $0x24] sm:$0xf]
        %v196 = vld [vmem:[%s188 + $0x28] sm:$0xf]
        %v197 = vld [vmem:[%s188 + $0x30] sm:$0xf]
        %v198 = vld [vmem:[%s188 + $0x34] sm:$0xf]
        %v199 = vld [vmem:[%s188 + $0x3c] sm:$0xf]
        %v200 = vld [vmem:[%s188 + $0x40] sm:$0xf]
        %v201 = vld [vmem:[%s188 + $0x48] sm:$0xf]
        %v202 = vld [vmem:[%s188 + $0x4c] sm:$0xf]
        %v203 = vld [vmem:[%s188 + $0x54] sm:$0xf]
        %v204 = vld [vmem:[%s188 + $0x58] sm:$0xf]
        %v205 = vld [vmem:[%s188 + $0x60] sm:$0xf]
        %v206 = vld [vmem:[%s188 + $0x64] sm:$0xf]
        %v207 = vld [vmem:[%s188 + $0x6c] sm:$0xf]
        %v208 = vld [vmem:[%s188 + $0x70] sm:$0xf]
        %v209 = vld [vmem:[%s188 + $0x78] sm:$0xf]
        %v210 = vld [vmem:[%s188 + $0x7c] sm:$0xf]
        %v211 = vld [vmem:[%s188 + $0x84] sm:$0xf]
        %v212 = vld [vmem:[%s188 + $0x88] sm:$0xf]
        %v213 = vld [vmem:[%s188 + $0x90] sm:$0xf]
        %v214 = vld [vmem:[%s188 + $0x94] sm:$0xf]
        %v215 = vld [vmem:[%s188 + $0x9c] sm:$0xf]
        %v216 = vld [vmem:[%s188 + $0xa0] sm:$0xf]
        %v217 = vld [vmem:[%s188 + $0xa8] sm:$0xf]
        %v218 = vld [vmem:[%s188 + $0xac] sm:$0xf]
        %v219 = vld [vmem:[%s188 + $0xb4] sm:$0xf]
        %v220 = vld [vmem:[%s188 + $0xb8] sm:$0xf]
        %v221 = vld [vmem:[%s188 + $0x8] sm:$0x1]
        %v222 = vld [vmem:[%s188 + $0x14] sm:$0x1]
        %v223 = vld [vmem:[%s188 + $0x20] sm:$0x1]
        %v224 = vld [vmem:[%s188 + $0x2c] sm:$0x1]
        %v225 = vld [vmem:[%s188 + $0x38] sm:$0x1]
        %v226 = vld [vmem:[%s188 + $0x44] sm:$0x1]
        %v227 = vld [vmem:[%s188 + $0x50] sm:$0x1]
        %v228 = vld [vmem:[%s188 + $0x5c] sm:$0x1]
        %v229 = vld [vmem:[%s188 + $0x68] sm:$0x1]
        %v230 = vld [vmem:[%s188 + $0x74] sm:$0x1]
        %v231 = vld [vmem:[%s188 + $0x80] sm:$0x1]
        %v232 = vld [vmem:[%s188 + $0x8c] sm:$0x1]
        %v233 = vld [vmem:[%s188 + $0x98] sm:$0x1]
        %v234 = vld [vmem:[%s188 + $0xa4] sm:$0x1]
        %v235 = vld [vmem:[%s188 + $0xb0] sm:$0x1]
        %v236 = vld [vmem:[%s188 + $0xbc] sm:$0x1]
        %vm237 = vsmask.f32 3328
        %vm238 = vsmask.f32 7440
        %vm239 = vmor %vm237, %vm238
        %v241 = vshrl.u32 %v189, 16
        %v243 = vrot.slane %v241, 4
        %v244 = vshll.u32 %v189, 16
        %v246 = vrot.slane %v244, 5
        %v247 = vor.u32 %v243, %v246
        %v248 = vrot.slane %v247, 4
        %v250 = vshll.u32 %v190, 16
        %v252 = vrot.slane %v250, 5
        %v253 = vsel %vm239, %v248, %v252
        %v254 = vshrl.u32 %v190, 16
        %v256 = vrot.slane %v254, 4
        %v257 = vor.u32 %v256, %v252
        %v258 = vrot.slane %v257, 4
        %v260 = vshll.u32 %v221, 16
        %v262 = vrot.slane %v260, 5
        %v263 = vsel %vm239, %v258, %v262
        %v265 = vshrl.u32 %v191, 16
        %v267 = vrot.slane %v265, 4
        %v268 = vshll.u32 %v191, 16
        %v270 = vrot.slane %v268, 5
        %v271 = vor.u32 %v267, %v270
        %v272 = vrot.slane %v271, 4
        %v274 = vshll.u32 %v192, 16
        %v276 = vrot.slane %v274, 5
        %v277 = vsel %vm239, %v272, %v276
        %v278 = vshrl.u32 %v192, 16
        %v280 = vrot.slane %v278, 4
        %v281 = vor.u32 %v280, %v276
        %v282 = vrot.slane %v281, 4
        %v284 = vshll.u32 %v222, 16
        %v286 = vrot.slane %v284, 5
        %v287 = vsel %vm239, %v282, %v286
        %v289 = vshrl.u32 %v193, 16
        %v291 = vrot.slane %v289, 4
        %v292 = vshll.u32 %v193, 16
        %v294 = vrot.slane %v292, 5
        %v295 = vor.u32 %v291, %v294
        %v296 = vrot.slane %v295, 4
        %v298 = vshll.u32 %v194, 16
        %v300 = vrot.slane %v298, 5
        %v301 = vsel %vm239, %v296, %v300
        %v302 = vshrl.u32 %v194, 16
        %v304 = vrot.slane %v302, 4
        %v305 = vor.u32 %v304, %v300
        %v306 = vrot.slane %v305, 4
        %v308 = vshll.u32 %v223, 16
        %v310 = vrot.slane %v308, 5
        %v311 = vsel %vm239, %v306, %v310
        %v313 = vshrl.u32 %v195, 16
        %v315 = vrot.slane %v313, 4
        %v316 = vshll.u32 %v195, 16
        %v318 = vrot.slane %v316, 5
        %v319 = vor.u32 %v315, %v318
        %v320 = vrot.slane %v319, 4
        %v322 = vshll.u32 %v196, 16
        %v324 = vrot.slane %v322, 5
        %v325 = vsel %vm239, %v320, %v324
        %v326 = vshrl.u32 %v196, 16
        %v328 = vrot.slane %v326, 4
        %v329 = vor.u32 %v328, %v324
        %v330 = vrot.slane %v329, 4
        %v332 = vshll.u32 %v224, 16
        %v334 = vrot.slane %v332, 5
        %v335 = vsel %vm239, %v330, %v334
        %v337 = vshrl.u32 %v197, 16
        %v339 = vrot.slane %v337, 4
        %v340 = vshll.u32 %v197, 16
        %v342 = vrot.slane %v340, 5
        %v343 = vor.u32 %v339, %v342
        %v344 = vrot.slane %v343, 4
        %v346 = vshll.u32 %v198, 16
        %v348 = vrot.slane %v346, 5
        %v349 = vsel %vm239, %v344, %v348
        %v350 = vshrl.u32 %v198, 16
        %v352 = vrot.slane %v350, 4
        %v353 = vor.u32 %v352, %v348
        %v354 = vrot.slane %v353, 4
        %v356 = vshll.u32 %v225, 16
        %v358 = vrot.slane %v356, 5
        %v359 = vsel %vm239, %v354, %v358
        %v361 = vshrl.u32 %v199, 16
        %v363 = vrot.slane %v361, 4
        %v364 = vshll.u32 %v199, 16
        %v366 = vrot.slane %v364, 5
        %v367 = vor.u32 %v363, %v366
        %v368 = vrot.slane %v367, 4
        %v370 = vshll.u32 %v200, 16
        %v372 = vrot.slane %v370, 5
        %v373 = vsel %vm239, %v368, %v372
        %v374 = vshrl.u32 %v200, 16
        %v376 = vrot.slane %v374, 4
        %v377 = vor.u32 %v376, %v372
        %v378 = vrot.slane %v377, 4
        %v380 = vshll.u32 %v226, 16
        %v382 = vrot.slane %v380, 5
        %v383 = vsel %vm239, %v378, %v382
        %v385 = vshrl.u32 %v201, 16
        %v387 = vrot.slane %v385, 4
        %v388 = vshll.u32 %v201, 16
        %v390 = vrot.slane %v388, 5
        %v391 = vor.u32 %v387, %v390
        %v392 = vrot.slane %v391, 4
        %v394 = vshll.u32 %v202, 16
        %v396 = vrot.slane %v394, 5
        %v397 = vsel %vm239, %v392, %v396
        %v398 = vshrl.u32 %v202, 16
        %v400 = vrot.slane %v398, 4
        %v401 = vor.u32 %v400, %v396
        %v402 = vrot.slane %v401, 4
        %v404 = vshll.u32 %v227, 16
        %v406 = vrot.slane %v404, 5
        %v407 = vsel %vm239, %v402, %v406
        %v409 = vshrl.u32 %v203, 16
        %v411 = vrot.slane %v409, 4
        %v412 = vshll.u32 %v203, 16
        %v414 = vrot.slane %v412, 5
        %v415 = vor.u32 %v411, %v414
        %v416 = vrot.slane %v415, 4
        %v418 = vshll.u32 %v204, 16
        %v420 = vrot.slane %v418, 5
        %v421 = vsel %vm239, %v416, %v420
        %v422 = vshrl.u32 %v204, 16
        %v424 = vrot.slane %v422, 4
        %v425 = vor.u32 %v424, %v420
        %v426 = vrot.slane %v425, 4
        %v428 = vshll.u32 %v228, 16
        %v430 = vrot.slane %v428, 5
        %v431 = vsel %vm239, %v426, %v430
        %v433 = vshrl.u32 %v205, 16
        %v435 = vrot.slane %v433, 4
        %v436 = vshll.u32 %v205, 16
        %v438 = vrot.slane %v436, 5
        %v439 = vor.u32 %v435, %v438
        %v440 = vrot.slane %v439, 4
        %v442 = vshll.u32 %v206, 16
        %v444 = vrot.slane %v442, 5
        %v445 = vsel %vm239, %v440, %v444
        %v446 = vshrl.u32 %v206, 16
        %v448 = vrot.slane %v446, 4
        %v449 = vor.u32 %v448, %v444
        %v450 = vrot.slane %v449, 4
        %v452 = vshll.u32 %v229, 16
        %v454 = vrot.slane %v452, 5
        %v455 = vsel %vm239, %v450, %v454
        %v457 = vshrl.u32 %v207, 16
        %v459 = vrot.slane %v457, 4
        %v460 = vshll.u32 %v207, 16
        %v462 = vrot.slane %v460, 5
        %v463 = vor.u32 %v459, %v462
        %v464 = vrot.slane %v463, 4
        %v466 = vshll.u32 %v208, 16
        %v468 = vrot.slane %v466, 5
        %v469 = vsel %vm239, %v464, %v468
        %v470 = vshrl.u32 %v208, 16
        %v472 = vrot.slane %v470, 4
        %v473 = vor.u32 %v472, %v468
        %v474 = vrot.slane %v473, 4
        %v476 = vshll.u32 %v230, 16
        %v478 = vrot.slane %v476, 5
        %v479 = vsel %vm239, %v474, %v478
        %v481 = vshrl.u32 %v209, 16
        %v483 = vrot.slane %v481, 4
        %v484 = vshll.u32 %v209, 16
        %v486 = vrot.slane %v484, 5
        %v487 = vor.u32 %v483, %v486
        %v488 = vrot.slane %v487, 4
        %v490 = vshll.u32 %v210, 16
        %v492 = vrot.slane %v490, 5
        %v493 = vsel %vm239, %v488, %v492
        %v494 = vshrl.u32 %v210, 16
        %v496 = vrot.slane %v494, 4
        %v497 = vor.u32 %v496, %v492
        %v498 = vrot.slane %v497, 4
        %v500 = vshll.u32 %v231, 16
        %v502 = vrot.slane %v500, 5
        %v503 = vsel %vm239, %v498, %v502
        %v505 = vshrl.u32 %v211, 16
        %v507 = vrot.slane %v505, 4
        %v508 = vshll.u32 %v211, 16
        %v510 = vrot.slane %v508, 5
        %v511 = vor.u32 %v507, %v510
        %v512 = vrot.slane %v511, 4
        %v514 = vshll.u32 %v212, 16
        %v516 = vrot.slane %v514, 5
        %v517 = vsel %vm239, %v512, %v516
        %v518 = vshrl.u32 %v212, 16
        %v520 = vrot.slane %v518, 4
        %v521 = vor.u32 %v520, %v516
        %v522 = vrot.slane %v521, 4
        %v524 = vshll.u32 %v232, 16
        %v526 = vrot.slane %v524, 5
        %v527 = vsel %vm239, %v522, %v526
        %v529 = vshrl.u32 %v213, 16
        %v531 = vrot.slane %v529, 4
        %v532 = vshll.u32 %v213, 16
        %v534 = vrot.slane %v532, 5
        %v535 = vor.u32 %v531, %v534
        %v536 = vrot.slane %v535, 4
        %v538 = vshll.u32 %v214, 16
        %v540 = vrot.slane %v538, 5
        %v541 = vsel %vm239, %v536, %v540
        %v542 = vshrl.u32 %v214, 16
        %v544 = vrot.slane %v542, 4
        %v545 = vor.u32 %v544, %v540
        %v546 = vrot.slane %v545, 4
        %v548 = vshll.u32 %v233, 16
        %v550 = vrot.slane %v548, 5
        %v551 = vsel %vm239, %v546, %v550
        %v553 = vshrl.u32 %v215, 16
        %v555 = vrot.slane %v553, 4
        %v556 = vshll.u32 %v215, 16
        %v558 = vrot.slane %v556, 5
        %v559 = vor.u32 %v555, %v558
        %v560 = vrot.slane %v559, 4
        %v562 = vshll.u32 %v216, 16
        %v564 = vrot.slane %v562, 5
        %v565 = vsel %vm239, %v560, %v564
        %v566 = vshrl.u32 %v216, 16
        %v568 = vrot.slane %v566, 4
        %v569 = vor.u32 %v568, %v564
        %v570 = vrot.slane %v569, 4
        %v572 = vshll.u32 %v234, 16
        %v574 = vrot.slane %v572, 5
        %v575 = vsel %vm239, %v570, %v574
        %v577 = vshrl.u32 %v217, 16
        %v579 = vrot.slane %v577, 4
        %v580 = vshll.u32 %v217, 16
        %v582 = vrot.slane %v580, 5
        %v583 = vor.u32 %v579, %v582
        %v584 = vrot.slane %v583, 4
        %v586 = vshll.u32 %v218, 16
        %v588 = vrot.slane %v586, 5
        %v589 = vsel %vm239, %v584, %v588
        %v590 = vshrl.u32 %v218, 16
        %v592 = vrot.slane %v590, 4
        %v593 = vor.u32 %v592, %v588
        %v594 = vrot.slane %v593, 4
        %v596 = vshll.u32 %v235, 16
        %v598 = vrot.slane %v596, 5
        %v599 = vsel %vm239, %v594, %v598
        %v601 = vshrl.u32 %v219, 16
        %v603 = vrot.slane %v601, 4
        %v604 = vshll.u32 %v219, 16
        %v606 = vrot.slane %v604, 5
        %v607 = vor.u32 %v603, %v606
        %v608 = vrot.slane %v607, 4
        %v610 = vshll.u32 %v220, 16
        %v612 = vrot.slane %v610, 5
        %v613 = vsel %vm239, %v608, %v612
        %v614 = vshrl.u32 %v220, 16
        %v616 = vrot.slane %v614, 4
        %v617 = vor.u32 %v616, %v612
        %v618 = vrot.slane %v617, 4
        %v620 = vshll.u32 %v236, 16
        %v622 = vrot.slane %v620, 5
        %v623 = vsel %vm239, %v618, %v622
        %v624 = vld [vmem:[%s188] sm:$0xe]
        %v625 = vld [vmem:[%s188 + $0xc] sm:$0xe]
        %v626 = vld [vmem:[%s188 + $0x18] sm:$0xe]
        %v627 = vld [vmem:[%s188 + $0x24] sm:$0xe]
        %v628 = vld [vmem:[%s188 + $0x30] sm:$0xe]
        %v629 = vld [vmem:[%s188 + $0x3c] sm:$0xe]
        %v630 = vld [vmem:[%s188 + $0x48] sm:$0xe]
        %v631 = vld [vmem:[%s188 + $0x54] sm:$0xe]
        %v632 = vld [vmem:[%s188 + $0x60] sm:$0xe]
        %v633 = vld [vmem:[%s188 + $0x6c] sm:$0xe]
        %v634 = vld [vmem:[%s188 + $0x78] sm:$0xe]
        %v635 = vld [vmem:[%s188 + $0x84] sm:$0xe]
        %v636 = vld [vmem:[%s188 + $0x90] sm:$0xe]
        %v637 = vld [vmem:[%s188 + $0x9c] sm:$0xe]
        %v638 = vld [vmem:[%s188 + $0xa8] sm:$0xe]
        %v639 = vld [vmem:[%s188 + $0xb4] sm:$0xe]
        %vm688 = vcmask 1042432
        %vm689 = vcmask 1046532
        %vm690 = vmor %vm688, %vm689
        %v691 = vrot.slane %v624, 5
        %v692 = vrot.slane %v691, 4
        %v693 = vrot.slane %v190, 5
        %v694 = vsel %vm690, %v692, %v693
        %v695 = vrot.slane %v693, 4
        %v696 = vrot.slane %v221, 5
        %v697 = vsel %vm690, %v695, %v696
        %v698 = vrot.slane %v625, 5
        %v699 = vrot.slane %v698, 4
        %v700 = vrot.slane %v192, 5
        %v701 = vsel %vm690, %v699, %v700
        %v702 = vrot.slane %v700, 4
        %v703 = vrot.slane %v222, 5
        %v704 = vsel %vm690, %v702, %v703
        %v705 = vrot.slane %v626, 5
        %v706 = vrot.slane %v705, 4
        %v707 = vrot.slane %v194, 5
        %v708 = vsel %vm690, %v706, %v707
        %v709 = vrot.slane %v707, 4
        %v710 = vrot.slane %v223, 5
        %v711 = vsel %vm690, %v709, %v710
        %v712 = vrot.slane %v627, 5
        %v713 = vrot.slane %v712, 4
        %v714 = vrot.slane %v196, 5
        %v715 = vsel %vm690, %v713, %v714
        %v716 = vrot.slane %v714, 4
        %v717 = vrot.slane %v224, 5
        %v718 = vsel %vm690, %v716, %v717
        %v719 = vrot.slane %v628, 5
        %v720 = vrot.slane %v719, 4
        %v721 = vrot.slane %v198, 5
        %v722 = vsel %vm690, %v720, %v721
        %v723 = vrot.slane %v721, 4
        %v724 = vrot.slane %v225, 5
        %v725 = vsel %vm690, %v723, %v724
        %v726 = vrot.slane %v629, 5
        %v727 = vrot.slane %v726, 4
        %v728 = vrot.slane %v200, 5
        %v729 = vsel %vm690, %v727, %v728
        %v730 = vrot.slane %v728, 4
        %v731 = vrot.slane %v226, 5
        %v732 = vsel %vm690, %v730, %v731
        %v733 = vrot.slane %v630, 5
        %v734 = vrot.slane %v733, 4
        %v735 = vrot.slane %v202, 5
        %v736 = vsel %vm690, %v734, %v735
        %v737 = vrot.slane %v735, 4
        %v738 = vrot.slane %v227, 5
        %v739 = vsel %vm690, %v737, %v738
        %v740 = vrot.slane %v631, 5
        %v741 = vrot.slane %v740, 4
        %v742 = vrot.slane %v204, 5
        %v743 = vsel %vm690, %v741, %v742
        %v744 = vrot.slane %v742, 4
        %v745 = vrot.slane %v228, 5
        %v746 = vsel %vm690, %v744, %v745
        %v747 = vrot.slane %v632, 5
        %v748 = vrot.slane %v747, 4
        %v749 = vrot.slane %v206, 5
        %v750 = vsel %vm690, %v748, %v749
        %v751 = vrot.slane %v749, 4
        %v752 = vrot.slane %v229, 5
        %v753 = vsel %vm690, %v751, %v752
        %v754 = vrot.slane %v633, 5
        %v755 = vrot.slane %v754, 4
        %v756 = vrot.slane %v208, 5
        %v757 = vsel %vm690, %v755, %v756
        %v758 = vrot.slane %v756, 4
        %v759 = vrot.slane %v230, 5
        %v760 = vsel %vm690, %v758, %v759
        %v761 = vrot.slane %v634, 5
        %v762 = vrot.slane %v761, 4
        %v763 = vrot.slane %v210, 5
        %v764 = vsel %vm690, %v762, %v763
        %v765 = vrot.slane %v763, 4
        %v766 = vrot.slane %v231, 5
        %v767 = vsel %vm690, %v765, %v766
        %v768 = vrot.slane %v635, 5
        %v769 = vrot.slane %v768, 4
        %v770 = vrot.slane %v212, 5
        %v771 = vsel %vm690, %v769, %v770
        %v772 = vrot.slane %v770, 4
        %v773 = vrot.slane %v232, 5
        %v774 = vsel %vm690, %v772, %v773
        %v775 = vrot.slane %v636, 5
        %v776 = vrot.slane %v775, 4
        %v777 = vrot.slane %v214, 5
        %v778 = vsel %vm690, %v776, %v777
        %v779 = vrot.slane %v777, 4
        %v780 = vrot.slane %v233, 5
        %v781 = vsel %vm690, %v779, %v780
        %v782 = vrot.slane %v637, 5
        %v783 = vrot.slane %v782, 4
        %v784 = vrot.slane %v216, 5
        %v785 = vsel %vm690, %v783, %v784
        %v786 = vrot.slane %v784, 4
        %v787 = vrot.slane %v234, 5
        %v788 = vsel %vm690, %v786, %v787
        %v789 = vrot.slane %v638, 5
        %v790 = vrot.slane %v789, 4
        %v791 = vrot.slane %v218, 5
        %v792 = vsel %vm690, %v790, %v791
        %v793 = vrot.slane %v791, 4
        %v794 = vrot.slane %v235, 5
        %v795 = vsel %vm690, %v793, %v794
        %v796 = vrot.slane %v639, 5
        %v797 = vrot.slane %v796, 4
        %v798 = vrot.slane %v220, 5
        %v799 = vsel %vm690, %v797, %v798
        %v800 = vrot.slane %v798, 4
        %v801 = vrot.slane %v236, 5
        %v802 = vsel %vm690, %v800, %v801
        %s803 = sadd.s32 %s185, 1
        %s804 = smul.u32 %s803, 3
        %s805 = smul.addr %s804, 4
        %s806 = scalar_lea.vmem %s182, %s805
        %v807 = vld [vmem:[%s806] sm:$0xf]
        %v808 = vld [vmem:[%s806 + $0x4] sm:$0xf]
        %v809 = vld [vmem:[%s806 + $0xc] sm:$0xf]
        %v810 = vld [vmem:[%s806 + $0x10] sm:$0xf]
        %v811 = vld [vmem:[%s806 + $0x18] sm:$0xf]
        %v812 = vld [vmem:[%s806 + $0x1c] sm:$0xf]
        %v813 = vld [vmem:[%s806 + $0x24] sm:$0xf]
        %v814 = vld [vmem:[%s806 + $0x28] sm:$0xf]
        %v815 = vld [vmem:[%s806 + $0x30] sm:$0xf]
        %v816 = vld [vmem:[%s806 + $0x34] sm:$0xf]
        %v817 = vld [vmem:[%s806 + $0x3c] sm:$0xf]
        %v818 = vld [vmem:[%s806 + $0x40] sm:$0xf]
        %v819 = vld [vmem:[%s806 + $0x48] sm:$0xf]
        %v820 = vld [vmem:[%s806 + $0x4c] sm:$0xf]
        %v821 = vld [vmem:[%s806 + $0x54] sm:$0xf]
        %v822 = vld [vmem:[%s806 + $0x58] sm:$0xf]
        %v823 = vld [vmem:[%s806 + $0x60] sm:$0xf]
        %v824 = vld [vmem:[%s806 + $0x64] sm:$0xf]
        %v825 = vld [vmem:[%s806 + $0x6c] sm:$0xf]
        %v826 = vld [vmem:[%s806 + $0x70] sm:$0xf]
        %v827 = vld [vmem:[%s806 + $0x78] sm:$0xf]
        %v828 = vld [vmem:[%s806 + $0x7c] sm:$0xf]
        %v829 = vld [vmem:[%s806 + $0x84] sm:$0xf]
        %v830 = vld [vmem:[%s806 + $0x88] sm:$0xf]
        %v831 = vld [vmem:[%s806 + $0x90] sm:$0xf]
        %v832 = vld [vmem:[%s806 + $0x94] sm:$0xf]
        %v833 = vld [vmem:[%s806 + $0x9c] sm:$0xf]
        %v834 = vld [vmem:[%s806 + $0xa0] sm:$0xf]
        %v835 = vld [vmem:[%s806 + $0xa8] sm:$0xf]
        %v836 = vld [vmem:[%s806 + $0xac] sm:$0xf]
        %v837 = vld [vmem:[%s806 + $0xb4] sm:$0xf]
        %v838 = vld [vmem:[%s806 + $0xb8] sm:$0xf]
        %v839 = vld [vmem:[%s806 + $0x8] sm:$0x1]
        %v840 = vld [vmem:[%s806 + $0x14] sm:$0x1]
        %v841 = vld [vmem:[%s806 + $0x20] sm:$0x1]
        %v842 = vld [vmem:[%s806 + $0x2c] sm:$0x1]
        %v843 = vld [vmem:[%s806 + $0x38] sm:$0x1]
        %v844 = vld [vmem:[%s806 + $0x44] sm:$0x1]
        %v845 = vld [vmem:[%s806 + $0x50] sm:$0x1]
        %v846 = vld [vmem:[%s806 + $0x5c] sm:$0x1]
        %v847 = vld [vmem:[%s806 + $0x68] sm:$0x1]
        %v848 = vld [vmem:[%s806 + $0x74] sm:$0x1]
        %v849 = vld [vmem:[%s806 + $0x80] sm:$0x1]
        %v850 = vld [vmem:[%s806 + $0x8c] sm:$0x1]
        %v851 = vld [vmem:[%s806 + $0x98] sm:$0x1]
        %v852 = vld [vmem:[%s806 + $0xa4] sm:$0x1]
        %v853 = vld [vmem:[%s806 + $0xb0] sm:$0x1]
        %v854 = vld [vmem:[%s806 + $0xbc] sm:$0x1]
        %v856 = vshrl.u32 %v807, 16
        %v858 = vrot.slane %v856, 4
        %v859 = vshll.u32 %v807, 16
        %v861 = vrot.slane %v859, 5
        %v862 = vor.u32 %v858, %v861
        %v863 = vrot.slane %v862, 4
        %v865 = vshll.u32 %v808, 16
        %v867 = vrot.slane %v865, 5
        %v868 = vsel %vm239, %v863, %v867
        %v869 = vshrl.u32 %v808, 16
        %v871 = vrot.slane %v869, 4
        %v872 = vor.u32 %v871, %v867
        %v873 = vrot.slane %v872, 4
        %v875 = vshll.u32 %v839, 16
        %v877 = vrot.slane %v875, 5
        %v878 = vsel %vm239, %v873, %v877
        %v880 = vshrl.u32 %v809, 16
        %v882 = vrot.slane %v880, 4
        %v883 = vshll.u32 %v809, 16
        %v885 = vrot.slane %v883, 5
        %v886 = vor.u32 %v882, %v885
        %v887 = vrot.slane %v886, 4
        %v889 = vshll.u32 %v810, 16
        %v891 = vrot.slane %v889, 5
        %v892 = vsel %vm239, %v887, %v891
        %v893 = vshrl.u32 %v810, 16
        %v895 = vrot.slane %v893, 4
        %v896 = vor.u32 %v895, %v891
        %v897 = vrot.slane %v896, 4
        %v899 = vshll.u32 %v840, 16
        %v901 = vrot.slane %v899, 5
        %v902 = vsel %vm239, %v897, %v901
        %v904 = vshrl.u32 %v811, 16
        %v906 = vrot.slane %v904, 4
        %v907 = vshll.u32 %v811, 16
        %v909 = vrot.slane %v907, 5
        %v910 = vor.u32 %v906, %v909
        %v911 = vrot.slane %v910, 4
        %v913 = vshll.u32 %v812, 16
        %v915 = vrot.slane %v913, 5
        %v916 = vsel %vm239, %v911, %v915
        %v917 = vshrl.u32 %v812, 16
        %v919 = vrot.slane %v917, 4
        %v920 = vor.u32 %v919, %v915
        %v921 = vrot.slane %v920, 4
        %v923 = vshll.u32 %v841, 16
        %v925 = vrot.slane %v923, 5
        %v926 = vsel %vm239, %v921, %v925
        %v928 = vshrl.u32 %v813, 16
        %v930 = vrot.slane %v928, 4
        %v931 = vshll.u32 %v813, 16
        %v933 = vrot.slane %v931, 5
        %v934 = vor.u32 %v930, %v933
        %v935 = vrot.slane %v934, 4
        %v937 = vshll.u32 %v814, 16
        %v939 = vrot.slane %v937, 5
        %v940 = vsel %vm239, %v935, %v939
        %v941 = vshrl.u32 %v814, 16
        %v943 = vrot.slane %v941, 4
        %v944 = vor.u32 %v943, %v939
        %v945 = vrot.slane %v944, 4
        %v947 = vshll.u32 %v842, 16
        %v949 = vrot.slane %v947, 5
        %v950 = vsel %vm239, %v945, %v949
        %v952 = vshrl.u32 %v815, 16
        %v954 = vrot.slane %v952, 4
        %v955 = vshll.u32 %v815, 16
        %v957 = vrot.slane %v955, 5
        %v958 = vor.u32 %v954, %v957
        %v959 = vrot.slane %v958, 4
        %v961 = vshll.u32 %v816, 16
        %v963 = vrot.slane %v961, 5
        %v964 = vsel %vm239, %v959, %v963
        %v965 = vshrl.u32 %v816, 16
        %v967 = vrot.slane %v965, 4
        %v968 = vor.u32 %v967, %v963
        %v969 = vrot.slane %v968, 4
        %v971 = vshll.u32 %v843, 16
        %v973 = vrot.slane %v971, 5
        %v974 = vsel %vm239, %v969, %v973
        %v976 = vshrl.u32 %v817, 16
        %v978 = vrot.slane %v976, 4
        %v979 = vshll.u32 %v817, 16
        %v981 = vrot.slane %v979, 5
        %v982 = vor.u32 %v978, %v981
        %v983 = vrot.slane %v982, 4
        %v985 = vshll.u32 %v818, 16
        %v987 = vrot.slane %v985, 5
        %v988 = vsel %vm239, %v983, %v987
        %v989 = vshrl.u32 %v818, 16
        %v991 = vrot.slane %v989, 4
        %v992 = vor.u32 %v991, %v987
        %v993 = vrot.slane %v992, 4
        %v995 = vshll.u32 %v844, 16
        %v997 = vrot.slane %v995, 5
        %v998 = vsel %vm239, %v993, %v997
        %v1000 = vshrl.u32 %v819, 16
        %v1002 = vrot.slane %v1000, 4
        %v1003 = vshll.u32 %v819, 16
        %v1005 = vrot.slane %v1003, 5
        %v1006 = vor.u32 %v1002, %v1005
        %v1007 = vrot.slane %v1006, 4
        %v1009 = vshll.u32 %v820, 16
        %v1011 = vrot.slane %v1009, 5
        %v1012 = vsel %vm239, %v1007, %v1011
        %v1013 = vshrl.u32 %v820, 16
        %v1015 = vrot.slane %v1013, 4
        %v1016 = vor.u32 %v1015, %v1011
        %v1017 = vrot.slane %v1016, 4
        %v1019 = vshll.u32 %v845, 16
        %v1021 = vrot.slane %v1019, 5
        %v1022 = vsel %vm239, %v1017, %v1021
        %v1024 = vshrl.u32 %v821, 16
        %v1026 = vrot.slane %v1024, 4
        %v1027 = vshll.u32 %v821, 16
        %v1029 = vrot.slane %v1027, 5
        %v1030 = vor.u32 %v1026, %v1029
        %v1031 = vrot.slane %v1030, 4
        %v1033 = vshll.u32 %v822, 16
        %v1035 = vrot.slane %v1033, 5
        %v1036 = vsel %vm239, %v1031, %v1035
        %v1037 = vshrl.u32 %v822, 16
        %v1039 = vrot.slane %v1037, 4
        %v1040 = vor.u32 %v1039, %v1035
        %v1041 = vrot.slane %v1040, 4
        %v1043 = vshll.u32 %v846, 16
        %v1045 = vrot.slane %v1043, 5
        %v1046 = vsel %vm239, %v1041, %v1045
        %v1048 = vshrl.u32 %v823, 16
        %v1050 = vrot.slane %v1048, 4
        %v1051 = vshll.u32 %v823, 16
        %v1053 = vrot.slane %v1051, 5
        %v1054 = vor.u32 %v1050, %v1053
        %v1055 = vrot.slane %v1054, 4
        %v1057 = vshll.u32 %v824, 16
        %v1059 = vrot.slane %v1057, 5
        %v1060 = vsel %vm239, %v1055, %v1059
        %v1061 = vshrl.u32 %v824, 16
        %v1063 = vrot.slane %v1061, 4
        %v1064 = vor.u32 %v1063, %v1059
        %v1065 = vrot.slane %v1064, 4
        %v1067 = vshll.u32 %v847, 16
        %v1069 = vrot.slane %v1067, 5
        %v1070 = vsel %vm239, %v1065, %v1069
        %v1072 = vshrl.u32 %v825, 16
        %v1074 = vrot.slane %v1072, 4
        %v1075 = vshll.u32 %v825, 16
        %v1077 = vrot.slane %v1075, 5
        %v1078 = vor.u32 %v1074, %v1077
        %v1079 = vrot.slane %v1078, 4
        %v1081 = vshll.u32 %v826, 16
        %v1083 = vrot.slane %v1081, 5
        %v1084 = vsel %vm239, %v1079, %v1083
        %v1085 = vshrl.u32 %v826, 16
        %v1087 = vrot.slane %v1085, 4
        %v1088 = vor.u32 %v1087, %v1083
        %v1089 = vrot.slane %v1088, 4
        %v1091 = vshll.u32 %v848, 16
        %v1093 = vrot.slane %v1091, 5
        %v1094 = vsel %vm239, %v1089, %v1093
        %v1096 = vshrl.u32 %v827, 16
        %v1098 = vrot.slane %v1096, 4
        %v1099 = vshll.u32 %v827, 16
        %v1101 = vrot.slane %v1099, 5
        %v1102 = vor.u32 %v1098, %v1101
        %v1103 = vrot.slane %v1102, 4
        %v1105 = vshll.u32 %v828, 16
        %v1107 = vrot.slane %v1105, 5
        %v1108 = vsel %vm239, %v1103, %v1107
        %v1109 = vshrl.u32 %v828, 16
        %v1111 = vrot.slane %v1109, 4
        %v1112 = vor.u32 %v1111, %v1107
        %v1113 = vrot.slane %v1112, 4
        %v1115 = vshll.u32 %v849, 16
        %v1117 = vrot.slane %v1115, 5
        %v1118 = vsel %vm239, %v1113, %v1117
        %v1120 = vshrl.u32 %v829, 16
        %v1122 = vrot.slane %v1120, 4
        %v1123 = vshll.u32 %v829, 16
        %v1125 = vrot.slane %v1123, 5
        %v1126 = vor.u32 %v1122, %v1125
        %v1127 = vrot.slane %v1126, 4
        %v1129 = vshll.u32 %v830, 16
        %v1131 = vrot.slane %v1129, 5
        %v1132 = vsel %vm239, %v1127, %v1131
        %v1133 = vshrl.u32 %v830, 16
        %v1135 = vrot.slane %v1133, 4
        %v1136 = vor.u32 %v1135, %v1131
        %v1137 = vrot.slane %v1136, 4
        %v1139 = vshll.u32 %v850, 16
        %v1141 = vrot.slane %v1139, 5
        %v1142 = vsel %vm239, %v1137, %v1141
        %v1144 = vshrl.u32 %v831, 16
        %v1146 = vrot.slane %v1144, 4
        %v1147 = vshll.u32 %v831, 16
        %v1149 = vrot.slane %v1147, 5
        %v1150 = vor.u32 %v1146, %v1149
        %v1151 = vrot.slane %v1150, 4
        %v1153 = vshll.u32 %v832, 16
        %v1155 = vrot.slane %v1153, 5
        %v1156 = vsel %vm239, %v1151, %v1155
        %v1157 = vshrl.u32 %v832, 16
        %v1159 = vrot.slane %v1157, 4
        %v1160 = vor.u32 %v1159, %v1155
        %v1161 = vrot.slane %v1160, 4
        %v1163 = vshll.u32 %v851, 16
        %v1165 = vrot.slane %v1163, 5
        %v1166 = vsel %vm239, %v1161, %v1165
        %v1168 = vshrl.u32 %v833, 16
        %v1170 = vrot.slane %v1168, 4
        %v1171 = vshll.u32 %v833, 16
        %v1173 = vrot.slane %v1171, 5
        %v1174 = vor.u32 %v1170, %v1173
        %v1175 = vrot.slane %v1174, 4
        %v1177 = vshll.u32 %v834, 16
        %v1179 = vrot.slane %v1177, 5
        %v1180 = vsel %vm239, %v1175, %v1179
        %v1181 = vshrl.u32 %v834, 16
        %v1183 = vrot.slane %v1181, 4
        %v1184 = vor.u32 %v1183, %v1179
        %v1185 = vrot.slane %v1184, 4
        %v1187 = vshll.u32 %v852, 16
        %v1189 = vrot.slane %v1187, 5
        %v1190 = vsel %vm239, %v1185, %v1189
        %v1192 = vshrl.u32 %v835, 16
        %v1194 = vrot.slane %v1192, 4
        %v1195 = vshll.u32 %v835, 16
        %v1197 = vrot.slane %v1195, 5
        %v1198 = vor.u32 %v1194, %v1197
        %v1199 = vrot.slane %v1198, 4
        %v1201 = vshll.u32 %v836, 16
        %v1203 = vrot.slane %v1201, 5
        %v1204 = vsel %vm239, %v1199, %v1203
        %v1205 = vshrl.u32 %v836, 16
        %v1207 = vrot.slane %v1205, 4
        %v1208 = vor.u32 %v1207, %v1203
        %v1209 = vrot.slane %v1208, 4
        %v1211 = vshll.u32 %v853, 16
        %v1213 = vrot.slane %v1211, 5
        %v1214 = vsel %vm239, %v1209, %v1213
        %v1216 = vshrl.u32 %v837, 16
        %v1218 = vrot.slane %v1216, 4
        %v1219 = vshll.u32 %v837, 16
        %v1221 = vrot.slane %v1219, 5
        %v1222 = vor.u32 %v1218, %v1221
        %v1223 = vrot.slane %v1222, 4
        %v1225 = vshll.u32 %v838, 16
        %v1227 = vrot.slane %v1225, 5
        %v1228 = vsel %vm239, %v1223, %v1227
        %v1229 = vshrl.u32 %v838, 16
        %v1231 = vrot.slane %v1229, 4
        %v1232 = vor.u32 %v1231, %v1227
        %v1233 = vrot.slane %v1232, 4
        %v1235 = vshll.u32 %v854, 16
        %v1237 = vrot.slane %v1235, 5
        %v1238 = vsel %vm239, %v1233, %v1237
        %v1239 = vld [vmem:[%s806] sm:$0xe]
        %v1240 = vld [vmem:[%s806 + $0xc] sm:$0xe]
        %v1241 = vld [vmem:[%s806 + $0x18] sm:$0xe]
        %v1242 = vld [vmem:[%s806 + $0x24] sm:$0xe]
        %v1243 = vld [vmem:[%s806 + $0x30] sm:$0xe]
        %v1244 = vld [vmem:[%s806 + $0x3c] sm:$0xe]
        %v1245 = vld [vmem:[%s806 + $0x48] sm:$0xe]
        %v1246 = vld [vmem:[%s806 + $0x54] sm:$0xe]
        %v1247 = vld [vmem:[%s806 + $0x60] sm:$0xe]
        %v1248 = vld [vmem:[%s806 + $0x6c] sm:$0xe]
        %v1249 = vld [vmem:[%s806 + $0x78] sm:$0xe]
        %v1250 = vld [vmem:[%s806 + $0x84] sm:$0xe]
        %v1251 = vld [vmem:[%s806 + $0x90] sm:$0xe]
        %v1252 = vld [vmem:[%s806 + $0x9c] sm:$0xe]
        %v1253 = vld [vmem:[%s806 + $0xa8] sm:$0xe]
        %v1254 = vld [vmem:[%s806 + $0xb4] sm:$0xe]
        %v1303 = vrot.slane %v1239, 5
        %v1304 = vrot.slane %v1303, 4
        %v1305 = vrot.slane %v808, 5
        %v1306 = vsel %vm690, %v1304, %v1305
        %v1307 = vrot.slane %v1305, 4
        %v1308 = vrot.slane %v839, 5
        %v1309 = vsel %vm690, %v1307, %v1308
        %v1310 = vrot.slane %v1240, 5
        %v1311 = vrot.slane %v1310, 4
        %v1312 = vrot.slane %v810, 5
        %v1313 = vsel %vm690, %v1311, %v1312
        %v1314 = vrot.slane %v1312, 4
        %v1315 = vrot.slane %v840, 5
        %v1316 = vsel %vm690, %v1314, %v1315
        %v1317 = vrot.slane %v1241, 5
        %v1318 = vrot.slane %v1317, 4
        %v1319 = vrot.slane %v812, 5
        %v1320 = vsel %vm690, %v1318, %v1319
        %v1321 = vrot.slane %v1319, 4
        %v1322 = vrot.slane %v841, 5
        %v1323 = vsel %vm690, %v1321, %v1322
        %v1324 = vrot.slane %v1242, 5
        %v1325 = vrot.slane %v1324, 4
        %v1326 = vrot.slane %v814, 5
        %v1327 = vsel %vm690, %v1325, %v1326
        %v1328 = vrot.slane %v1326, 4
        %v1329 = vrot.slane %v842, 5
        %v1330 = vsel %vm690, %v1328, %v1329
        %v1331 = vrot.slane %v1243, 5
        %v1332 = vrot.slane %v1331, 4
        %v1333 = vrot.slane %v816, 5
        %v1334 = vsel %vm690, %v1332, %v1333
        %v1335 = vrot.slane %v1333, 4
        %v1336 = vrot.slane %v843, 5
        %v1337 = vsel %vm690, %v1335, %v1336
        %v1338 = vrot.slane %v1244, 5
        %v1339 = vrot.slane %v1338, 4
        %v1340 = vrot.slane %v818, 5
        %v1341 = vsel %vm690, %v1339, %v1340
        %v1342 = vrot.slane %v1340, 4
        %v1343 = vrot.slane %v844, 5
        %v1344 = vsel %vm690, %v1342, %v1343
        %v1345 = vrot.slane %v1245, 5
        %v1346 = vrot.slane %v1345, 4
        %v1347 = vrot.slane %v820, 5
        %v1348 = vsel %vm690, %v1346, %v1347
        %v1349 = vrot.slane %v1347, 4
        %v1350 = vrot.slane %v845, 5
        %v1351 = vsel %vm690, %v1349, %v1350
        %v1352 = vrot.slane %v1246, 5
        %v1353 = vrot.slane %v1352, 4
        %v1354 = vrot.slane %v822, 5
        %v1355 = vsel %vm690, %v1353, %v1354
        %v1356 = vrot.slane %v1354, 4
        %v1357 = vrot.slane %v846, 5
        %v1358 = vsel %vm690, %v1356, %v1357
        %v1359 = vrot.slane %v1247, 5
        %v1360 = vrot.slane %v1359, 4
        %v1361 = vrot.slane %v824, 5
        %v1362 = vsel %vm690, %v1360, %v1361
        %v1363 = vrot.slane %v1361, 4
        %v1364 = vrot.slane %v847, 5
        %v1365 = vsel %vm690, %v1363, %v1364
        %v1366 = vrot.slane %v1248, 5
        %v1367 = vrot.slane %v1366, 4
        %v1368 = vrot.slane %v826, 5
        %v1369 = vsel %vm690, %v1367, %v1368
        %v1370 = vrot.slane %v1368, 4
        %v1371 = vrot.slane %v848, 5
        %v1372 = vsel %vm690, %v1370, %v1371
        %v1373 = vrot.slane %v1249, 5
        %v1374 = vrot.slane %v1373, 4
        %v1375 = vrot.slane %v828, 5
        %v1376 = vsel %vm690, %v1374, %v1375
        %v1377 = vrot.slane %v1375, 4
        %v1378 = vrot.slane %v849, 5
        %v1379 = vsel %vm690, %v1377, %v1378
        %v1380 = vrot.slane %v1250, 5
        %v1381 = vrot.slane %v1380, 4
        %v1382 = vrot.slane %v830, 5
        %v1383 = vsel %vm690, %v1381, %v1382
        %v1384 = vrot.slane %v1382, 4
        %v1385 = vrot.slane %v850, 5
        %v1386 = vsel %vm690, %v1384, %v1385
        %v1387 = vrot.slane %v1251, 5
        %v1388 = vrot.slane %v1387, 4
        %v1389 = vrot.slane %v832, 5
        %v1390 = vsel %vm690, %v1388, %v1389
        %v1391 = vrot.slane %v1389, 4
        %v1392 = vrot.slane %v851, 5
        %v1393 = vsel %vm690, %v1391, %v1392
        %v1394 = vrot.slane %v1252, 5
        %v1395 = vrot.slane %v1394, 4
        %v1396 = vrot.slane %v834, 5
        %v1397 = vsel %vm690, %v1395, %v1396
        %v1398 = vrot.slane %v1396, 4
        %v1399 = vrot.slane %v852, 5
        %v1400 = vsel %vm690, %v1398, %v1399
        %v1401 = vrot.slane %v1253, 5
        %v1402 = vrot.slane %v1401, 4
        %v1403 = vrot.slane %v836, 5
        %v1404 = vsel %vm690, %v1402, %v1403
        %v1405 = vrot.slane %v1403, 4
        %v1406 = vrot.slane %v853, 5
        %v1407 = vsel %vm690, %v1405, %v1406
        %v1408 = vrot.slane %v1254, 5
        %v1409 = vrot.slane %v1408, 4
        %v1410 = vrot.slane %v838, 5
        %v1411 = vsel %vm690, %v1409, %v1410
        %v1412 = vrot.slane %v1410, 4
        %v1413 = vrot.slane %v854, 5
        %v1414 = vsel %vm690, %v1412, %v1413
        %s1415 = sadd.s32 %s185, 2
        %s1416 = smul.u32 %s1415, 3
        %s1417 = smul.addr %s1416, 4
        %s1418 = scalar_lea.vmem %s182, %s1417
        %v1419 = vld [vmem:[%s1418] sm:$0xf]
        %v1420 = vld [vmem:[%s1418 + $0x4] sm:$0xf]
        %v1421 = vld [vmem:[%s1418 + $0xc] sm:$0xf]
        %v1422 = vld [vmem:[%s1418 + $0x10] sm:$0xf]
        %v1423 = vld [vmem:[%s1418 + $0x18] sm:$0xf]
        %v1424 = vld [vmem:[%s1418 + $0x1c] sm:$0xf]
        %v1425 = vld [vmem:[%s1418 + $0x24] sm:$0xf]
        %v1426 = vld [vmem:[%s1418 + $0x28] sm:$0xf]
        %v1427 = vld [vmem:[%s1418 + $0x30] sm:$0xf]
        %v1428 = vld [vmem:[%s1418 + $0x34] sm:$0xf]
        %v1429 = vld [vmem:[%s1418 + $0x3c] sm:$0xf]
        %v1430 = vld [vmem:[%s1418 + $0x40] sm:$0xf]
        %v1431 = vld [vmem:[%s1418 + $0x48] sm:$0xf]
        %v1432 = vld [vmem:[%s1418 + $0x4c] sm:$0xf]
        %v1433 = vld [vmem:[%s1418 + $0x54] sm:$0xf]
        %v1434 = vld [vmem:[%s1418 + $0x58] sm:$0xf]
        %v1435 = vld [vmem:[%s1418 + $0x60] sm:$0xf]
        %v1436 = vld [vmem:[%s1418 + $0x64] sm:$0xf]
        %v1437 = vld [vmem:[%s1418 + $0x6c] sm:$0xf]
        %v1438 = vld [vmem:[%s1418 + $0x70] sm:$0xf]
        %v1439 = vld [vmem:[%s1418 + $0x78] sm:$0xf]
        %v1440 = vld [vmem:[%s1418 + $0x7c] sm:$0xf]
        %v1441 = vld [vmem:[%s1418 + $0x84] sm:$0xf]
        %v1442 = vld [vmem:[%s1418 + $0x88] sm:$0xf]
        %v1443 = vld [vmem:[%s1418 + $0x90] sm:$0xf]
        %v1444 = vld [vmem:[%s1418 + $0x94] sm:$0xf]
        %v1445 = vld [vmem:[%s1418 + $0x9c] sm:$0xf]
        %v1446 = vld [vmem:[%s1418 + $0xa0] sm:$0xf]
        %v1447 = vld [vmem:[%s1418 + $0xa8] sm:$0xf]
        %v1448 = vld [vmem:[%s1418 + $0xac] sm:$0xf]
        %v1449 = vld [vmem:[%s1418 + $0xb4] sm:$0xf]
        %v1450 = vld [vmem:[%s1418 + $0xb8] sm:$0xf]
        %v1451 = vld [vmem:[%s1418 + $0x8] sm:$0x1]
        %v1452 = vld [vmem:[%s1418 + $0x14] sm:$0x1]
        %v1453 = vld [vmem:[%s1418 + $0x20] sm:$0x1]
        %v1454 = vld [vmem:[%s1418 + $0x2c] sm:$0x1]
        %v1455 = vld [vmem:[%s1418 + $0x38] sm:$0x1]
        %v1456 = vld [vmem:[%s1418 + $0x44] sm:$0x1]
        %v1457 = vld [vmem:[%s1418 + $0x50] sm:$0x1]
        %v1458 = vld [vmem:[%s1418 + $0x5c] sm:$0x1]
        %v1459 = vld [vmem:[%s1418 + $0x68] sm:$0x1]
        %v1460 = vld [vmem:[%s1418 + $0x74] sm:$0x1]
        %v1461 = vld [vmem:[%s1418 + $0x80] sm:$0x1]
        %v1462 = vld [vmem:[%s1418 + $0x8c] sm:$0x1]
        %v1463 = vld [vmem:[%s1418 + $0x98] sm:$0x1]
        %v1464 = vld [vmem:[%s1418 + $0xa4] sm:$0x1]
        %v1465 = vld [vmem:[%s1418 + $0xb0] sm:$0x1]
        %v1466 = vld [vmem:[%s1418 + $0xbc] sm:$0x1]
        %v1468 = vshrl.u32 %v1419, 16
        %v1470 = vrot.slane %v1468, 4
        %v1471 = vshll.u32 %v1419, 16
        %v1473 = vrot.slane %v1471, 5
        %v1474 = vor.u32 %v1470, %v1473
        %v1475 = vrot.slane %v1474, 4
        %v1477 = vshll.u32 %v1420, 16
        %v1479 = vrot.slane %v1477, 5
        %v1480 = vsel %vm239, %v1475, %v1479
        %v1481 = vshrl.u32 %v1420, 16
        %v1483 = vrot.slane %v1481, 4
        %v1484 = vor.u32 %v1483, %v1479
        %v1485 = vrot.slane %v1484, 4
        %v1487 = vshll.u32 %v1451, 16
        %v1489 = vrot.slane %v1487, 5
        %v1490 = vsel %vm239, %v1485, %v1489
        %v1492 = vshrl.u32 %v1421, 16
        %v1494 = vrot.slane %v1492, 4
        %v1495 = vshll.u32 %v1421, 16
        %v1497 = vrot.slane %v1495, 5
        %v1498 = vor.u32 %v1494, %v1497
        %v1499 = vrot.slane %v1498, 4
        %v1501 = vshll.u32 %v1422, 16
        %v1503 = vrot.slane %v1501, 5
        %v1504 = vsel %vm239, %v1499, %v1503
        %v1505 = vshrl.u32 %v1422, 16
        %v1507 = vrot.slane %v1505, 4
        %v1508 = vor.u32 %v1507, %v1503
        %v1509 = vrot.slane %v1508, 4
        %v1511 = vshll.u32 %v1452, 16
        %v1513 = vrot.slane %v1511, 5
        %v1514 = vsel %vm239, %v1509, %v1513
        %v1516 = vshrl.u32 %v1423, 16
        %v1518 = vrot.slane %v1516, 4
        %v1519 = vshll.u32 %v1423, 16
        %v1521 = vrot.slane %v1519, 5
        %v1522 = vor.u32 %v1518, %v1521
        %v1523 = vrot.slane %v1522, 4
        %v1525 = vshll.u32 %v1424, 16
        %v1527 = vrot.slane %v1525, 5
        %v1528 = vsel %vm239, %v1523, %v1527
        %v1529 = vshrl.u32 %v1424, 16
        %v1531 = vrot.slane %v1529, 4
        %v1532 = vor.u32 %v1531, %v1527
        %v1533 = vrot.slane %v1532, 4
        %v1535 = vshll.u32 %v1453, 16
        %v1537 = vrot.slane %v1535, 5
        %v1538 = vsel %vm239, %v1533, %v1537
        %v1540 = vshrl.u32 %v1425, 16
        %v1542 = vrot.slane %v1540, 4
        %v1543 = vshll.u32 %v1425, 16
        %v1545 = vrot.slane %v1543, 5
        %v1546 = vor.u32 %v1542, %v1545
        %v1547 = vrot.slane %v1546, 4
        %v1549 = vshll.u32 %v1426, 16
        %v1551 = vrot.slane %v1549, 5
        %v1552 = vsel %vm239, %v1547, %v1551
        %v1553 = vshrl.u32 %v1426, 16
        %v1555 = vrot.slane %v1553, 4
        %v1556 = vor.u32 %v1555, %v1551
        %v1557 = vrot.slane %v1556, 4
        %v1559 = vshll.u32 %v1454, 16
        %v1561 = vrot.slane %v1559, 5
        %v1562 = vsel %vm239, %v1557, %v1561
        %v1564 = vshrl.u32 %v1427, 16
        %v1566 = vrot.slane %v1564, 4
        %v1567 = vshll.u32 %v1427, 16
        %v1569 = vrot.slane %v1567, 5
        %v1570 = vor.u32 %v1566, %v1569
        %v1571 = vrot.slane %v1570, 4
        %v1573 = vshll.u32 %v1428, 16
        %v1575 = vrot.slane %v1573, 5
        %v1576 = vsel %vm239, %v1571, %v1575
        %v1577 = vshrl.u32 %v1428, 16
        %v1579 = vrot.slane %v1577, 4
        %v1580 = vor.u32 %v1579, %v1575
        %v1581 = vrot.slane %v1580, 4
        %v1583 = vshll.u32 %v1455, 16
        %v1585 = vrot.slane %v1583, 5
        %v1586 = vsel %vm239, %v1581, %v1585
        %v1588 = vshrl.u32 %v1429, 16
        %v1590 = vrot.slane %v1588, 4
        %v1591 = vshll.u32 %v1429, 16
        %v1593 = vrot.slane %v1591, 5
        %v1594 = vor.u32 %v1590, %v1593
        %v1595 = vrot.slane %v1594, 4
        %v1597 = vshll.u32 %v1430, 16
        %v1599 = vrot.slane %v1597, 5
        %v1600 = vsel %vm239, %v1595, %v1599
        %v1601 = vshrl.u32 %v1430, 16
        %v1603 = vrot.slane %v1601, 4
        %v1604 = vor.u32 %v1603, %v1599
        %v1605 = vrot.slane %v1604, 4
        %v1607 = vshll.u32 %v1456, 16
        %v1609 = vrot.slane %v1607, 5
        %v1610 = vsel %vm239, %v1605, %v1609
        %v1612 = vshrl.u32 %v1431, 16
        %v1614 = vrot.slane %v1612, 4
        %v1615 = vshll.u32 %v1431, 16
        %v1617 = vrot.slane %v1615, 5
        %v1618 = vor.u32 %v1614, %v1617
        %v1619 = vrot.slane %v1618, 4
        %v1621 = vshll.u32 %v1432, 16
        %v1623 = vrot.slane %v1621, 5
        %v1624 = vsel %vm239, %v1619, %v1623
        %v1625 = vshrl.u32 %v1432, 16
        %v1627 = vrot.slane %v1625, 4
        %v1628 = vor.u32 %v1627, %v1623
        %v1629 = vrot.slane %v1628, 4
        %v1631 = vshll.u32 %v1457, 16
        %v1633 = vrot.slane %v1631, 5
        %v1634 = vsel %vm239, %v1629, %v1633
        %v1636 = vshrl.u32 %v1433, 16
        %v1638 = vrot.slane %v1636, 4
        %v1639 = vshll.u32 %v1433, 16
        %v1641 = vrot.slane %v1639, 5
        %v1642 = vor.u32 %v1638, %v1641
        %v1643 = vrot.slane %v1642, 4
        %v1645 = vshll.u32 %v1434, 16
        %v1647 = vrot.slane %v1645, 5
        %v1648 = vsel %vm239, %v1643, %v1647
        %v1649 = vshrl.u32 %v1434, 16
        %v1651 = vrot.slane %v1649, 4
        %v1652 = vor.u32 %v1651, %v1647
        %v1653 = vrot.slane %v1652, 4
        %v1655 = vshll.u32 %v1458, 16
        %v1657 = vrot.slane %v1655, 5
        %v1658 = vsel %vm239, %v1653, %v1657
        %v1660 = vshrl.u32 %v1435, 16
        %v1662 = vrot.slane %v1660, 4
        %v1663 = vshll.u32 %v1435, 16
        %v1665 = vrot.slane %v1663, 5
        %v1666 = vor.u32 %v1662, %v1665
        %v1667 = vrot.slane %v1666, 4
        %v1669 = vshll.u32 %v1436, 16
        %v1671 = vrot.slane %v1669, 5
        %v1672 = vsel %vm239, %v1667, %v1671
        %v1673 = vshrl.u32 %v1436, 16
        %v1675 = vrot.slane %v1673, 4
        %v1676 = vor.u32 %v1675, %v1671
        %v1677 = vrot.slane %v1676, 4
        %v1679 = vshll.u32 %v1459, 16
        %v1681 = vrot.slane %v1679, 5
        %v1682 = vsel %vm239, %v1677, %v1681
        %v1684 = vshrl.u32 %v1437, 16
        %v1686 = vrot.slane %v1684, 4
        %v1687 = vshll.u32 %v1437, 16
        %v1689 = vrot.slane %v1687, 5
        %v1690 = vor.u32 %v1686, %v1689
        %v1691 = vrot.slane %v1690, 4
        %v1693 = vshll.u32 %v1438, 16
        %v1695 = vrot.slane %v1693, 5
        %v1696 = vsel %vm239, %v1691, %v1695
        %v1697 = vshrl.u32 %v1438, 16
        %v1699 = vrot.slane %v1697, 4
        %v1700 = vor.u32 %v1699, %v1695
        %v1701 = vrot.slane %v1700, 4
        %v1703 = vshll.u32 %v1460, 16
        %v1705 = vrot.slane %v1703, 5
        %v1706 = vsel %vm239, %v1701, %v1705
        %v1708 = vshrl.u32 %v1439, 16
        %v1710 = vrot.slane %v1708, 4
        %v1711 = vshll.u32 %v1439, 16
        %v1713 = vrot.slane %v1711, 5
        %v1714 = vor.u32 %v1710, %v1713
        %v1715 = vrot.slane %v1714, 4
        %v1717 = vshll.u32 %v1440, 16
        %v1719 = vrot.slane %v1717, 5
        %v1720 = vsel %vm239, %v1715, %v1719
        %v1721 = vshrl.u32 %v1440, 16
        %v1723 = vrot.slane %v1721, 4
        %v1724 = vor.u32 %v1723, %v1719
        %v1725 = vrot.slane %v1724, 4
        %v1727 = vshll.u32 %v1461, 16
        %v1729 = vrot.slane %v1727, 5
        %v1730 = vsel %vm239, %v1725, %v1729
        %v1732 = vshrl.u32 %v1441, 16
        %v1734 = vrot.slane %v1732, 4
        %v1735 = vshll.u32 %v1441, 16
        %v1737 = vrot.slane %v1735, 5
        %v1738 = vor.u32 %v1734, %v1737
        %v1739 = vrot.slane %v1738, 4
        %v1741 = vshll.u32 %v1442, 16
        %v1743 = vrot.slane %v1741, 5
        %v1744 = vsel %vm239, %v1739, %v1743
        %v1745 = vshrl.u32 %v1442, 16
        %v1747 = vrot.slane %v1745, 4
        %v1748 = vor.u32 %v1747, %v1743
        %v1749 = vrot.slane %v1748, 4
        %v1751 = vshll.u32 %v1462, 16
        %v1753 = vrot.slane %v1751, 5
        %v1754 = vsel %vm239, %v1749, %v1753
        %v1756 = vshrl.u32 %v1443, 16
        %v1758 = vrot.slane %v1756, 4
        %v1759 = vshll.u32 %v1443, 16
        %v1761 = vrot.slane %v1759, 5
        %v1762 = vor.u32 %v1758, %v1761
        %v1763 = vrot.slane %v1762, 4
        %v1765 = vshll.u32 %v1444, 16
        %v1767 = vrot.slane %v1765, 5
        %v1768 = vsel %vm239, %v1763, %v1767
        %v1769 = vshrl.u32 %v1444, 16
        %v1771 = vrot.slane %v1769, 4
        %v1772 = vor.u32 %v1771, %v1767
        %v1773 = vrot.slane %v1772, 4
        %v1775 = vshll.u32 %v1463, 16
        %v1777 = vrot.slane %v1775, 5
        %v1778 = vsel %vm239, %v1773, %v1777
        %v1780 = vshrl.u32 %v1445, 16
        %v1782 = vrot.slane %v1780, 4
        %v1783 = vshll.u32 %v1445, 16
        %v1785 = vrot.slane %v1783, 5
        %v1786 = vor.u32 %v1782, %v1785
        %v1787 = vrot.slane %v1786, 4
        %v1789 = vshll.u32 %v1446, 16
        %v1791 = vrot.slane %v1789, 5
        %v1792 = vsel %vm239, %v1787, %v1791
        %v1793 = vshrl.u32 %v1446, 16
        %v1795 = vrot.slane %v1793, 4
        %v1796 = vor.u32 %v1795, %v1791
        %v1797 = vrot.slane %v1796, 4
        %v1799 = vshll.u32 %v1464, 16
        %v1801 = vrot.slane %v1799, 5
        %v1802 = vsel %vm239, %v1797, %v1801
        %v1804 = vshrl.u32 %v1447, 16
        %v1806 = vrot.slane %v1804, 4
        %v1807 = vshll.u32 %v1447, 16
        %v1809 = vrot.slane %v1807, 5
        %v1810 = vor.u32 %v1806, %v1809
        %v1811 = vrot.slane %v1810, 4
        %v1813 = vshll.u32 %v1448, 16
        %v1815 = vrot.slane %v1813, 5
        %v1816 = vsel %vm239, %v1811, %v1815
        %v1817 = vshrl.u32 %v1448, 16
        %v1819 = vrot.slane %v1817, 4
        %v1820 = vor.u32 %v1819, %v1815
        %v1821 = vrot.slane %v1820, 4
        %v1823 = vshll.u32 %v1465, 16
        %v1825 = vrot.slane %v1823, 5
        %v1826 = vsel %vm239, %v1821, %v1825
        %v1828 = vshrl.u32 %v1449, 16
        %v1830 = vrot.slane %v1828, 4
        %v1831 = vshll.u32 %v1449, 16
        %v1833 = vrot.slane %v1831, 5
        %v1834 = vor.u32 %v1830, %v1833
        %v1835 = vrot.slane %v1834, 4
        %v1837 = vshll.u32 %v1450, 16
        %v1839 = vrot.slane %v1837, 5
        %v1840 = vsel %vm239, %v1835, %v1839
        %v1841 = vshrl.u32 %v1450, 16
        %v1843 = vrot.slane %v1841, 4
        %v1844 = vor.u32 %v1843, %v1839
        %v1845 = vrot.slane %v1844, 4
        %v1847 = vshll.u32 %v1466, 16
        %v1849 = vrot.slane %v1847, 5
        %v1850 = vsel %vm239, %v1845, %v1849
        %v1851 = vld [vmem:[%s1418] sm:$0xe]
        %v1852 = vld [vmem:[%s1418 + $0xc] sm:$0xe]
        %v1853 = vld [vmem:[%s1418 + $0x18] sm:$0xe]
        %v1854 = vld [vmem:[%s1418 + $0x24] sm:$0xe]
        %v1855 = vld [vmem:[%s1418 + $0x30] sm:$0xe]
        %v1856 = vld [vmem:[%s1418 + $0x3c] sm:$0xe]
        %v1857 = vld [vmem:[%s1418 + $0x48] sm:$0xe]
        %v1858 = vld [vmem:[%s1418 + $0x54] sm:$0xe]
        %v1859 = vld [vmem:[%s1418 + $0x60] sm:$0xe]
        %v1860 = vld [vmem:[%s1418 + $0x6c] sm:$0xe]
        %v1861 = vld [vmem:[%s1418 + $0x78] sm:$0xe]
        %v1862 = vld [vmem:[%s1418 + $0x84] sm:$0xe]
        %v1863 = vld [vmem:[%s1418 + $0x90] sm:$0xe]
        %v1864 = vld [vmem:[%s1418 + $0x9c] sm:$0xe]
        %v1865 = vld [vmem:[%s1418 + $0xa8] sm:$0xe]
        %v1866 = vld [vmem:[%s1418 + $0xb4] sm:$0xe]
        %v1915 = vrot.slane %v1851, 5
        %v1916 = vrot.slane %v1915, 4
        %v1917 = vrot.slane %v1420, 5
        %v1918 = vsel %vm690, %v1916, %v1917
        %v1919 = vrot.slane %v1917, 4
        %v1920 = vrot.slane %v1451, 5
        %v1921 = vsel %vm690, %v1919, %v1920
        %v1922 = vrot.slane %v1852, 5
        %v1923 = vrot.slane %v1922, 4
        %v1924 = vrot.slane %v1422, 5
        %v1925 = vsel %vm690, %v1923, %v1924
        %v1926 = vrot.slane %v1924, 4
        %v1927 = vrot.slane %v1452, 5
        %v1928 = vsel %vm690, %v1926, %v1927
        %v1929 = vrot.slane %v1853, 5
        %v1930 = vrot.slane %v1929, 4
        %v1931 = vrot.slane %v1424, 5
        %v1932 = vsel %vm690, %v1930, %v1931
        %v1933 = vrot.slane %v1931, 4
        %v1934 = vrot.slane %v1453, 5
        %v1935 = vsel %vm690, %v1933, %v1934
        %v1936 = vrot.slane %v1854, 5
        %v1937 = vrot.slane %v1936, 4
        %v1938 = vrot.slane %v1426, 5
        %v1939 = vsel %vm690, %v1937, %v1938
        %v1940 = vrot.slane %v1938, 4
        %v1941 = vrot.slane %v1454, 5
        %v1942 = vsel %vm690, %v1940, %v1941
        %v1943 = vrot.slane %v1855, 5
        %v1944 = vrot.slane %v1943, 4
        %v1945 = vrot.slane %v1428, 5
        %v1946 = vsel %vm690, %v1944, %v1945
        %v1947 = vrot.slane %v1945, 4
        %v1948 = vrot.slane %v1455, 5
        %v1949 = vsel %vm690, %v1947, %v1948
        %v1950 = vrot.slane %v1856, 5
        %v1951 = vrot.slane %v1950, 4
        %v1952 = vrot.slane %v1430, 5
        %v1953 = vsel %vm690, %v1951, %v1952
        %v1954 = vrot.slane %v1952, 4
        %v1955 = vrot.slane %v1456, 5
        %v1956 = vsel %vm690, %v1954, %v1955
        %v1957 = vrot.slane %v1857, 5
        %v1958 = vrot.slane %v1957, 4
        %v1959 = vrot.slane %v1432, 5
        %v1960 = vsel %vm690, %v1958, %v1959
        %v1961 = vrot.slane %v1959, 4
        %v1962 = vrot.slane %v1457, 5
        %v1963 = vsel %vm690, %v1961, %v1962
        %v1964 = vrot.slane %v1858, 5
        %v1965 = vrot.slane %v1964, 4
        %v1966 = vrot.slane %v1434, 5
        %v1967 = vsel %vm690, %v1965, %v1966
        %v1968 = vrot.slane %v1966, 4
        %v1969 = vrot.slane %v1458, 5
        %v1970 = vsel %vm690, %v1968, %v1969
        %v1971 = vrot.slane %v1859, 5
        %v1972 = vrot.slane %v1971, 4
        %v1973 = vrot.slane %v1436, 5
        %v1974 = vsel %vm690, %v1972, %v1973
        %v1975 = vrot.slane %v1973, 4
        %v1976 = vrot.slane %v1459, 5
        %v1977 = vsel %vm690, %v1975, %v1976
        %v1978 = vrot.slane %v1860, 5
        %v1979 = vrot.slane %v1978, 4
        %v1980 = vrot.slane %v1438, 5
        %v1981 = vsel %vm690, %v1979, %v1980
        %v1982 = vrot.slane %v1980, 4
        %v1983 = vrot.slane %v1460, 5
        %v1984 = vsel %vm690, %v1982, %v1983
        %v1985 = vrot.slane %v1861, 5
        %v1986 = vrot.slane %v1985, 4
        %v1987 = vrot.slane %v1440, 5
        %v1988 = vsel %vm690, %v1986, %v1987
        %v1989 = vrot.slane %v1987, 4
        %v1990 = vrot.slane %v1461, 5
        %v1991 = vsel %vm690, %v1989, %v1990
        %v1992 = vrot.slane %v1862, 5
        %v1993 = vrot.slane %v1992, 4
        %v1994 = vrot.slane %v1442, 5
        %v1995 = vsel %vm690, %v1993, %v1994
        %v1996 = vrot.slane %v1994, 4
        %v1997 = vrot.slane %v1462, 5
        %v1998 = vsel %vm690, %v1996, %v1997
        %v1999 = vrot.slane %v1863, 5
        %v2000 = vrot.slane %v1999, 4
        %v2001 = vrot.slane %v1444, 5
        %v2002 = vsel %vm690, %v2000, %v2001
        %v2003 = vrot.slane %v2001, 4
        %v2004 = vrot.slane %v1463, 5
        %v2005 = vsel %vm690, %v2003, %v2004
        %v2006 = vrot.slane %v1864, 5
        %v2007 = vrot.slane %v2006, 4
        %v2008 = vrot.slane %v1446, 5
        %v2009 = vsel %vm690, %v2007, %v2008
        %v2010 = vrot.slane %v2008, 4
        %v2011 = vrot.slane %v1464, 5
        %v2012 = vsel %vm690, %v2010, %v2011
        %v2013 = vrot.slane %v1865, 5
        %v2014 = vrot.slane %v2013, 4
        %v2015 = vrot.slane %v1448, 5
        %v2016 = vsel %vm690, %v2014, %v2015
        %v2017 = vrot.slane %v2015, 4
        %v2018 = vrot.slane %v1465, 5
        %v2019 = vsel %vm690, %v2017, %v2018
        %v2020 = vrot.slane %v1866, 5
        %v2021 = vrot.slane %v2020, 4
        %v2022 = vrot.slane %v1450, 5
        %v2023 = vsel %vm690, %v2021, %v2022
        %v2024 = vrot.slane %v2022, 4
        %v2025 = vrot.slane %v1466, 5
        %v2026 = vsel %vm690, %v2024, %v2025
        %v2043 = vunpack.c.l.b16 %v189
        %v2044 = vunpack.c.l.b16 %v190
        %v2045 = vunpack.c.l.b16 %v191
        %v2046 = vunpack.c.l.b16 %v192
        %v2047 = vunpack.c.l.b16 %v193
        %v2048 = vunpack.c.l.b16 %v194
        %v2049 = vunpack.c.l.b16 %v195
        %v2050 = vunpack.c.l.b16 %v196
        %v2051 = vunpack.c.l.b16 %v197
        %v2052 = vunpack.c.l.b16 %v198
        %v2053 = vunpack.c.l.b16 %v199
        %v2054 = vunpack.c.l.b16 %v200
        %v2055 = vunpack.c.l.b16 %v201
        %v2056 = vunpack.c.l.b16 %v202
        %v2057 = vunpack.c.l.b16 %v203
        %v2058 = vunpack.c.l.b16 %v204
        %v2059 = vunpack.c.l.b16 %v205
        %v2060 = vunpack.c.l.b16 %v206
        %v2061 = vunpack.c.l.b16 %v207
        %v2062 = vunpack.c.l.b16 %v208
        %v2063 = vunpack.c.l.b16 %v209
        %v2064 = vunpack.c.l.b16 %v210
        %v2065 = vunpack.c.l.b16 %v211
        %v2066 = vunpack.c.l.b16 %v212
        %v2067 = vunpack.c.l.b16 %v213
        %v2068 = vunpack.c.l.b16 %v214
        %v2069 = vunpack.c.l.b16 %v215
        %v2070 = vunpack.c.l.b16 %v216
        %v2071 = vunpack.c.l.b16 %v217
        %v2072 = vunpack.c.l.b16 %v218
        %v2073 = vunpack.c.l.b16 %v219
        %v2074 = vunpack.c.l.b16 %v220
        %v2075 = vpack.c.b16 %v2044, %v2043
        %v2076 = vpack.c.b16 %v2046, %v2045
        %v2077 = vpack.c.b16 %v2048, %v2047
        %v2078 = vpack.c.b16 %v2050, %v2049
        %v2079 = vpack.c.b16 %v2052, %v2051
        %v2080 = vpack.c.b16 %v2054, %v2053
        %v2081 = vpack.c.b16 %v2056, %v2055
        %v2082 = vpack.c.b16 %v2058, %v2057
        %v2083 = vpack.c.b16 %v2060, %v2059
        %v2084 = vpack.c.b16 %v2062, %v2061
        %v2085 = vpack.c.b16 %v2064, %v2063
        %v2086 = vpack.c.b16 %v2066, %v2065
        %v2087 = vpack.c.b16 %v2068, %v2067
        %v2088 = vpack.c.b16 %v2070, %v2069
        %v2089 = vpack.c.b16 %v2072, %v2071
        %v2090 = vpack.c.b16 %v2074, %v2073
        %v2091 = vunpack.c.l.b16 %v253
        %v2092 = vunpack.c.l.b16 %v263
        %v2093 = vunpack.c.l.b16 %v277
        %v2094 = vunpack.c.l.b16 %v287
        %v2095 = vunpack.c.l.b16 %v301
        %v2096 = vunpack.c.l.b16 %v311
        %v2097 = vunpack.c.l.b16 %v325
        %v2098 = vunpack.c.l.b16 %v335
        %v2099 = vunpack.c.l.b16 %v349
        %v2100 = vunpack.c.l.b16 %v359
        %v2101 = vunpack.c.l.b16 %v373
        %v2102 = vunpack.c.l.b16 %v383
        %v2103 = vunpack.c.l.b16 %v397
        %v2104 = vunpack.c.l.b16 %v407
        %v2105 = vunpack.c.l.b16 %v421
        %v2106 = vunpack.c.l.b16 %v431
        %v2107 = vunpack.c.l.b16 %v445
        %v2108 = vunpack.c.l.b16 %v455
        %v2109 = vunpack.c.l.b16 %v469
        %v2110 = vunpack.c.l.b16 %v479
        %v2111 = vunpack.c.l.b16 %v493
        %v2112 = vunpack.c.l.b16 %v503
        %v2113 = vunpack.c.l.b16 %v517
        %v2114 = vunpack.c.l.b16 %v527
        %v2115 = vunpack.c.l.b16 %v541
        %v2116 = vunpack.c.l.b16 %v551
        %v2117 = vunpack.c.l.b16 %v565
        %v2118 = vunpack.c.l.b16 %v575
        %v2119 = vunpack.c.l.b16 %v589
        %v2120 = vunpack.c.l.b16 %v599
        %v2121 = vunpack.c.l.b16 %v613
        %v2122 = vunpack.c.l.b16 %v623
        %v2123 = vpack.c.b16 %v2092, %v2091
        %v2124 = vpack.c.b16 %v2094, %v2093
        %v2125 = vpack.c.b16 %v2096, %v2095
        %v2126 = vpack.c.b16 %v2098, %v2097
        %v2127 = vpack.c.b16 %v2100, %v2099
        %v2128 = vpack.c.b16 %v2102, %v2101
        %v2129 = vpack.c.b16 %v2104, %v2103
        %v2130 = vpack.c.b16 %v2106, %v2105
        %v2131 = vpack.c.b16 %v2108, %v2107
        %v2132 = vpack.c.b16 %v2110, %v2109
        %v2133 = vpack.c.b16 %v2112, %v2111
        %v2134 = vpack.c.b16 %v2114, %v2113
        %v2135 = vpack.c.b16 %v2116, %v2115
        %v2136 = vpack.c.b16 %v2118, %v2117
        %v2137 = vpack.c.b16 %v2120, %v2119
        %v2138 = vpack.c.b16 %v2122, %v2121
        %2139 = vrot.lane.b32.xlu0 %v2123, 4
        %v2140 = vpop.permute.xlu0 %2139
        %2141 = vrot.lane.b32.xlu0 %v2124, 4
        %v2142 = vpop.permute.xlu0 %2141
        %2143 = vrot.lane.b32.xlu0 %v2125, 4
        %v2144 = vpop.permute.xlu0 %2143
        %2145 = vrot.lane.b32.xlu0 %v2126, 4
        %v2146 = vpop.permute.xlu0 %2145
        %2147 = vrot.lane.b32.xlu0 %v2127, 4
        %v2148 = vpop.permute.xlu0 %2147
        %2149 = vrot.lane.b32.xlu0 %v2128, 4
        %v2150 = vpop.permute.xlu0 %2149
        %2151 = vrot.lane.b32.xlu0 %v2129, 4
        %v2152 = vpop.permute.xlu0 %2151
        %2153 = vrot.lane.b32.xlu0 %v2130, 4
        %v2154 = vpop.permute.xlu0 %2153
        %2155 = vrot.lane.b32.xlu0 %v2131, 4
        %v2156 = vpop.permute.xlu0 %2155
        %2157 = vrot.lane.b32.xlu0 %v2132, 4
        %v2158 = vpop.permute.xlu0 %2157
        %2159 = vrot.lane.b32.xlu0 %v2133, 4
        %v2160 = vpop.permute.xlu0 %2159
        %2161 = vrot.lane.b32.xlu0 %v2134, 4
        %v2162 = vpop.permute.xlu0 %2161
        %2163 = vrot.lane.b32.xlu0 %v2135, 4
        %v2164 = vpop.permute.xlu0 %2163
        %2165 = vrot.lane.b32.xlu0 %v2136, 4
        %v2166 = vpop.permute.xlu0 %2165
        %2167 = vrot.lane.b32.xlu0 %v2137, 4
        %v2168 = vpop.permute.xlu0 %2167
        %2169 = vrot.lane.b32.xlu0 %v2138, 4
        %v2170 = vpop.permute.xlu0 %2169
        %v2171 = vunpack.c.l.b16 %v694
        %v2172 = vunpack.c.l.b16 %v697
        %v2173 = vunpack.c.l.b16 %v701
        %v2174 = vunpack.c.l.b16 %v704
        %v2175 = vunpack.c.l.b16 %v708
        %v2176 = vunpack.c.l.b16 %v711
        %v2177 = vunpack.c.l.b16 %v715
        %v2178 = vunpack.c.l.b16 %v718
        %v2179 = vunpack.c.l.b16 %v722
        %v2180 = vunpack.c.l.b16 %v725
        %v2181 = vunpack.c.l.b16 %v729
        %v2182 = vunpack.c.l.b16 %v732
        %v2183 = vunpack.c.l.b16 %v736
        %v2184 = vunpack.c.l.b16 %v739
        %v2185 = vunpack.c.l.b16 %v743
        %v2186 = vunpack.c.l.b16 %v746
        %v2187 = vunpack.c.l.b16 %v750
        %v2188 = vunpack.c.l.b16 %v753
        %v2189 = vunpack.c.l.b16 %v757
        %v2190 = vunpack.c.l.b16 %v760
        %v2191 = vunpack.c.l.b16 %v764
        %v2192 = vunpack.c.l.b16 %v767
        %v2193 = vunpack.c.l.b16 %v771
        %v2194 = vunpack.c.l.b16 %v774
        %v2195 = vunpack.c.l.b16 %v778
        %v2196 = vunpack.c.l.b16 %v781
        %v2197 = vunpack.c.l.b16 %v785
        %v2198 = vunpack.c.l.b16 %v788
        %v2199 = vunpack.c.l.b16 %v792
        %v2200 = vunpack.c.l.b16 %v795
        %v2201 = vunpack.c.l.b16 %v799
        %v2202 = vunpack.c.l.b16 %v802
        %v2203 = vpack.c.b16 %v2172, %v2171
        %v2204 = vpack.c.b16 %v2174, %v2173
        %v2205 = vpack.c.b16 %v2176, %v2175
        %v2206 = vpack.c.b16 %v2178, %v2177
        %v2207 = vpack.c.b16 %v2180, %v2179
        %v2208 = vpack.c.b16 %v2182, %v2181
        %v2209 = vpack.c.b16 %v2184, %v2183
        %v2210 = vpack.c.b16 %v2186, %v2185
        %v2211 = vpack.c.b16 %v2188, %v2187
        %v2212 = vpack.c.b16 %v2190, %v2189
        %v2213 = vpack.c.b16 %v2192, %v2191
        %v2214 = vpack.c.b16 %v2194, %v2193
        %v2215 = vpack.c.b16 %v2196, %v2195
        %v2216 = vpack.c.b16 %v2198, %v2197
        %v2217 = vpack.c.b16 %v2200, %v2199
        %v2218 = vpack.c.b16 %v2202, %v2201
        %2219 = vrot.lane.b32.xlu0 %v2203, 8
        %v2220 = vpop.permute.xlu0 %2219
        %2221 = vrot.lane.b32.xlu0 %v2204, 8
        %v2222 = vpop.permute.xlu0 %2221
        %2223 = vrot.lane.b32.xlu0 %v2205, 8
        %v2224 = vpop.permute.xlu0 %2223
        %2225 = vrot.lane.b32.xlu0 %v2206, 8
        %v2226 = vpop.permute.xlu0 %2225
        %2227 = vrot.lane.b32.xlu0 %v2207, 8
        %v2228 = vpop.permute.xlu0 %2227
        %2229 = vrot.lane.b32.xlu0 %v2208, 8
        %v2230 = vpop.permute.xlu0 %2229
        %2231 = vrot.lane.b32.xlu0 %v2209, 8
        %v2232 = vpop.permute.xlu0 %2231
        %2233 = vrot.lane.b32.xlu0 %v2210, 8
        %v2234 = vpop.permute.xlu0 %2233
        %2235 = vrot.lane.b32.xlu0 %v2211, 8
        %v2236 = vpop.permute.xlu0 %2235
        %2237 = vrot.lane.b32.xlu0 %v2212, 8
        %v2238 = vpop.permute.xlu0 %2237
        %2239 = vrot.lane.b32.xlu0 %v2213, 8
        %v2240 = vpop.permute.xlu0 %2239
        %2241 = vrot.lane.b32.xlu0 %v2214, 8
        %v2242 = vpop.permute.xlu0 %2241
        %2243 = vrot.lane.b32.xlu0 %v2215, 8
        %v2244 = vpop.permute.xlu0 %2243
        %2245 = vrot.lane.b32.xlu0 %v2216, 8
        %v2246 = vpop.permute.xlu0 %2245
        %2247 = vrot.lane.b32.xlu0 %v2217, 8
        %v2248 = vpop.permute.xlu0 %2247
        %2249 = vrot.lane.b32.xlu0 %v2218, 8
        %v2250 = vpop.permute.xlu0 %2249
        %v2267 = vunpack.c.l.b16 %v807
        %v2268 = vunpack.c.l.b16 %v808
        %v2269 = vunpack.c.l.b16 %v809
        %v2270 = vunpack.c.l.b16 %v810
        %v2271 = vunpack.c.l.b16 %v811
        %v2272 = vunpack.c.l.b16 %v812
        %v2273 = vunpack.c.l.b16 %v813
        %v2274 = vunpack.c.l.b16 %v814
        %v2275 = vunpack.c.l.b16 %v815
        %v2276 = vunpack.c.l.b16 %v816
        %v2277 = vunpack.c.l.b16 %v817
        %v2278 = vunpack.c.l.b16 %v818
        %v2279 = vunpack.c.l.b16 %v819
        %v2280 = vunpack.c.l.b16 %v820
        %v2281 = vunpack.c.l.b16 %v821
        %v2282 = vunpack.c.l.b16 %v822
        %v2283 = vunpack.c.l.b16 %v823
        %v2284 = vunpack.c.l.b16 %v824
        %v2285 = vunpack.c.l.b16 %v825
        %v2286 = vunpack.c.l.b16 %v826
        %v2287 = vunpack.c.l.b16 %v827
        %v2288 = vunpack.c.l.b16 %v828
        %v2289 = vunpack.c.l.b16 %v829
        %v2290 = vunpack.c.l.b16 %v830
        %v2291 = vunpack.c.l.b16 %v831
        %v2292 = vunpack.c.l.b16 %v832
        %v2293 = vunpack.c.l.b16 %v833
        %v2294 = vunpack.c.l.b16 %v834
        %v2295 = vunpack.c.l.b16 %v835
        %v2296 = vunpack.c.l.b16 %v836
        %v2297 = vunpack.c.l.b16 %v837
        %v2298 = vunpack.c.l.b16 %v838
        %v2299 = vpack.c.b16 %v2268, %v2267
        %v2300 = vpack.c.b16 %v2270, %v2269
        %v2301 = vpack.c.b16 %v2272, %v2271
        %v2302 = vpack.c.b16 %v2274, %v2273
        %v2303 = vpack.c.b16 %v2276, %v2275
        %v2304 = vpack.c.b16 %v2278, %v2277
        %v2305 = vpack.c.b16 %v2280, %v2279
        %v2306 = vpack.c.b16 %v2282, %v2281
        %v2307 = vpack.c.b16 %v2284, %v2283
        %v2308 = vpack.c.b16 %v2286, %v2285
        %v2309 = vpack.c.b16 %v2288, %v2287
        %v2310 = vpack.c.b16 %v2290, %v2289
        %v2311 = vpack.c.b16 %v2292, %v2291
        %v2312 = vpack.c.b16 %v2294, %v2293
        %v2313 = vpack.c.b16 %v2296, %v2295
        %v2314 = vpack.c.b16 %v2298, %v2297
        %2315 = vrot.lane.b32.xlu0 %v2299, 12
        %v2316 = vpop.permute.xlu0 %2315
        %2317 = vrot.lane.b32.xlu0 %v2300, 12
        %v2318 = vpop.permute.xlu0 %2317
        %2319 = vrot.lane.b32.xlu0 %v2301, 12
        %v2320 = vpop.permute.xlu0 %2319
        %2321 = vrot.lane.b32.xlu0 %v2302, 12
        %v2322 = vpop.permute.xlu0 %2321
        %2323 = vrot.lane.b32.xlu0 %v2303, 12
        %v2324 = vpop.permute.xlu0 %2323
        %2325 = vrot.lane.b32.xlu0 %v2304, 12
        %v2326 = vpop.permute.xlu0 %2325
        %2327 = vrot.lane.b32.xlu0 %v2305, 12
        %v2328 = vpop.permute.xlu0 %2327
        %2329 = vrot.lane.b32.xlu0 %v2306, 12
        %v2330 = vpop.permute.xlu0 %2329
        %2331 = vrot.lane.b32.xlu0 %v2307, 12
        %v2332 = vpop.permute.xlu0 %2331
        %2333 = vrot.lane.b32.xlu0 %v2308, 12
        %v2334 = vpop.permute.xlu0 %2333
        %2335 = vrot.lane.b32.xlu0 %v2309, 12
        %v2336 = vpop.permute.xlu0 %2335
        %2337 = vrot.lane.b32.xlu0 %v2310, 12
        %v2338 = vpop.permute.xlu0 %2337
        %2339 = vrot.lane.b32.xlu0 %v2311, 12
        %v2340 = vpop.permute.xlu0 %2339
        %2341 = vrot.lane.b32.xlu0 %v2312, 12
        %v2342 = vpop.permute.xlu0 %2341
        %2343 = vrot.lane.b32.xlu0 %v2313, 12
        %v2344 = vpop.permute.xlu0 %2343
        %2345 = vrot.lane.b32.xlu0 %v2314, 12
        %v2346 = vpop.permute.xlu0 %2345
        %v2347 = vunpack.c.l.b16 %v868
        %v2348 = vunpack.c.l.b16 %v878
        %v2349 = vunpack.c.l.b16 %v892
        %v2350 = vunpack.c.l.b16 %v902
        %v2351 = vunpack.c.l.b16 %v916
        %v2352 = vunpack.c.l.b16 %v926
        %v2353 = vunpack.c.l.b16 %v940
        %v2354 = vunpack.c.l.b16 %v950
        %v2355 = vunpack.c.l.b16 %v964
        %v2356 = vunpack.c.l.b16 %v974
        %v2357 = vunpack.c.l.b16 %v988
        %v2358 = vunpack.c.l.b16 %v998
        %v2359 = vunpack.c.l.b16 %v1012
        %v2360 = vunpack.c.l.b16 %v1022
        %v2361 = vunpack.c.l.b16 %v1036
        %v2362 = vunpack.c.l.b16 %v1046
        %v2363 = vunpack.c.l.b16 %v1060
        %v2364 = vunpack.c.l.b16 %v1070
        %v2365 = vunpack.c.l.b16 %v1084
        %v2366 = vunpack.c.l.b16 %v1094
        %v2367 = vunpack.c.l.b16 %v1108
        %v2368 = vunpack.c.l.b16 %v1118
        %v2369 = vunpack.c.l.b16 %v1132
        %v2370 = vunpack.c.l.b16 %v1142
        %v2371 = vunpack.c.l.b16 %v1156
        %v2372 = vunpack.c.l.b16 %v1166
        %v2373 = vunpack.c.l.b16 %v1180
        %v2374 = vunpack.c.l.b16 %v1190
        %v2375 = vunpack.c.l.b16 %v1204
        %v2376 = vunpack.c.l.b16 %v1214
        %v2377 = vunpack.c.l.b16 %v1228
        %v2378 = vunpack.c.l.b16 %v1238
        %v2379 = vpack.c.b16 %v2348, %v2347
        %v2380 = vpack.c.b16 %v2350, %v2349
        %v2381 = vpack.c.b16 %v2352, %v2351
        %v2382 = vpack.c.b16 %v2354, %v2353
        %v2383 = vpack.c.b16 %v2356, %v2355
        %v2384 = vpack.c.b16 %v2358, %v2357
        %v2385 = vpack.c.b16 %v2360, %v2359
        %v2386 = vpack.c.b16 %v2362, %v2361
        %v2387 = vpack.c.b16 %v2364, %v2363
        %v2388 = vpack.c.b16 %v2366, %v2365
        %v2389 = vpack.c.b16 %v2368, %v2367
        %v2390 = vpack.c.b16 %v2370, %v2369
        %v2391 = vpack.c.b16 %v2372, %v2371
        %v2392 = vpack.c.b16 %v2374, %v2373
        %v2393 = vpack.c.b16 %v2376, %v2375
        %v2394 = vpack.c.b16 %v2378, %v2377
        %2395 = vrot.lane.b32.xlu0 %v2379, 16
        %v2396 = vpop.permute.xlu0 %2395
        %2397 = vrot.lane.b32.xlu0 %v2380, 16
        %v2398 = vpop.permute.xlu0 %2397
        %2399 = vrot.lane.b32.xlu0 %v2381, 16
        %v2400 = vpop.permute.xlu0 %2399
        %2401 = vrot.lane.b32.xlu0 %v2382, 16
        %v2402 = vpop.permute.xlu0 %2401
        %2403 = vrot.lane.b32.xlu0 %v2383, 16
        %v2404 = vpop.permute.xlu0 %2403
        %2405 = vrot.lane.b32.xlu0 %v2384, 16
        %v2406 = vpop.permute.xlu0 %2405
        %2407 = vrot.lane.b32.xlu0 %v2385, 16
        %v2408 = vpop.permute.xlu0 %2407
        %2409 = vrot.lane.b32.xlu0 %v2386, 16
        %v2410 = vpop.permute.xlu0 %2409
        %2411 = vrot.lane.b32.xlu0 %v2387, 16
        %v2412 = vpop.permute.xlu0 %2411
        %2413 = vrot.lane.b32.xlu0 %v2388, 16
        %v2414 = vpop.permute.xlu0 %2413
        %2415 = vrot.lane.b32.xlu0 %v2389, 16
        %v2416 = vpop.permute.xlu0 %2415
        %2417 = vrot.lane.b32.xlu0 %v2390, 16
        %v2418 = vpop.permute.xlu0 %2417
        %2419 = vrot.lane.b32.xlu0 %v2391, 16
        %v2420 = vpop.permute.xlu0 %2419
        %2421 = vrot.lane.b32.xlu0 %v2392, 16
        %v2422 = vpop.permute.xlu0 %2421
        %2423 = vrot.lane.b32.xlu0 %v2393, 16
        %v2424 = vpop.permute.xlu0 %2423
        %2425 = vrot.lane.b32.xlu0 %v2394, 16
        %v2426 = vpop.permute.xlu0 %2425
        %v2427 = vunpack.c.l.b16 %v1306
        %v2428 = vunpack.c.l.b16 %v1309
        %v2429 = vunpack.c.l.b16 %v1313
        %v2430 = vunpack.c.l.b16 %v1316
        %v2431 = vunpack.c.l.b16 %v1320
        %v2432 = vunpack.c.l.b16 %v1323
        %v2433 = vunpack.c.l.b16 %v1327
        %v2434 = vunpack.c.l.b16 %v1330
        %v2435 = vunpack.c.l.b16 %v1334
        %v2436 = vunpack.c.l.b16 %v1337
        %v2437 = vunpack.c.l.b16 %v1341
        %v2438 = vunpack.c.l.b16 %v1344
        %v2439 = vunpack.c.l.b16 %v1348
        %v2440 = vunpack.c.l.b16 %v1351
        %v2441 = vunpack.c.l.b16 %v1355
        %v2442 = vunpack.c.l.b16 %v1358
        %v2443 = vunpack.c.l.b16 %v1362
        %v2444 = vunpack.c.l.b16 %v1365
        %v2445 = vunpack.c.l.b16 %v1369
        %v2446 = vunpack.c.l.b16 %v1372
        %v2447 = vunpack.c.l.b16 %v1376
        %v2448 = vunpack.c.l.b16 %v1379
        %v2449 = vunpack.c.l.b16 %v1383
        %v2450 = vunpack.c.l.b16 %v1386
        %v2451 = vunpack.c.l.b16 %v1390
        %v2452 = vunpack.c.l.b16 %v1393
        %v2453 = vunpack.c.l.b16 %v1397
        %v2454 = vunpack.c.l.b16 %v1400
        %v2455 = vunpack.c.l.b16 %v1404
        %v2456 = vunpack.c.l.b16 %v1407
        %v2457 = vunpack.c.l.b16 %v1411
        %v2458 = vunpack.c.l.b16 %v1414
        %v2459 = vpack.c.b16 %v2428, %v2427
        %v2460 = vpack.c.b16 %v2430, %v2429
        %v2461 = vpack.c.b16 %v2432, %v2431
        %v2462 = vpack.c.b16 %v2434, %v2433
        %v2463 = vpack.c.b16 %v2436, %v2435
        %v2464 = vpack.c.b16 %v2438, %v2437
        %v2465 = vpack.c.b16 %v2440, %v2439
        %v2466 = vpack.c.b16 %v2442, %v2441
        %v2467 = vpack.c.b16 %v2444, %v2443
        %v2468 = vpack.c.b16 %v2446, %v2445
        %v2469 = vpack.c.b16 %v2448, %v2447
        %v2470 = vpack.c.b16 %v2450, %v2449
        %v2471 = vpack.c.b16 %v2452, %v2451
        %v2472 = vpack.c.b16 %v2454, %v2453
        %v2473 = vpack.c.b16 %v2456, %v2455
        %v2474 = vpack.c.b16 %v2458, %v2457
        %2475 = vrot.lane.b32.xlu0 %v2459, 20
        %v2476 = vpop.permute.xlu0 %2475
        %2477 = vrot.lane.b32.xlu0 %v2460, 20
        %v2478 = vpop.permute.xlu0 %2477
        %2479 = vrot.lane.b32.xlu0 %v2461, 20
        %v2480 = vpop.permute.xlu0 %2479
        %2481 = vrot.lane.b32.xlu0 %v2462, 20
        %v2482 = vpop.permute.xlu0 %2481
        %2483 = vrot.lane.b32.xlu0 %v2463, 20
        %v2484 = vpop.permute.xlu0 %2483
        %2485 = vrot.lane.b32.xlu0 %v2464, 20
        %v2486 = vpop.permute.xlu0 %2485
        %2487 = vrot.lane.b32.xlu0 %v2465, 20
        %v2488 = vpop.permute.xlu0 %2487
        %2489 = vrot.lane.b32.xlu0 %v2466, 20
        %v2490 = vpop.permute.xlu0 %2489
        %2491 = vrot.lane.b32.xlu0 %v2467, 20
        %v2492 = vpop.permute.xlu0 %2491
        %2493 = vrot.lane.b32.xlu0 %v2468, 20
        %v2494 = vpop.permute.xlu0 %2493
        %2495 = vrot.lane.b32.xlu0 %v2469, 20
        %v2496 = vpop.permute.xlu0 %2495
        %2497 = vrot.lane.b32.xlu0 %v2470, 20
        %v2498 = vpop.permute.xlu0 %2497
        %2499 = vrot.lane.b32.xlu0 %v2471, 20
        %v2500 = vpop.permute.xlu0 %2499
        %2501 = vrot.lane.b32.xlu0 %v2472, 20
        %v2502 = vpop.permute.xlu0 %2501
        %2503 = vrot.lane.b32.xlu0 %v2473, 20
        %v2504 = vpop.permute.xlu0 %2503
        %2505 = vrot.lane.b32.xlu0 %v2474, 20
        %v2506 = vpop.permute.xlu0 %2505
        %v2523 = vunpack.c.l.b16 %v1419
        %v2524 = vunpack.c.l.b16 %v1420
        %v2525 = vunpack.c.l.b16 %v1421
        %v2526 = vunpack.c.l.b16 %v1422
        %v2527 = vunpack.c.l.b16 %v1423
        %v2528 = vunpack.c.l.b16 %v1424
        %v2529 = vunpack.c.l.b16 %v1425
        %v2530 = vunpack.c.l.b16 %v1426
        %v2531 = vunpack.c.l.b16 %v1427
        %v2532 = vunpack.c.l.b16 %v1428
        %v2533 = vunpack.c.l.b16 %v1429
        %v2534 = vunpack.c.l.b16 %v1430
        %v2535 = vunpack.c.l.b16 %v1431
        %v2536 = vunpack.c.l.b16 %v1432
        %v2537 = vunpack.c.l.b16 %v1433
        %v2538 = vunpack.c.l.b16 %v1434
        %v2539 = vunpack.c.l.b16 %v1435
        %v2540 = vunpack.c.l.b16 %v1436
        %v2541 = vunpack.c.l.b16 %v1437
        %v2542 = vunpack.c.l.b16 %v1438
        %v2543 = vunpack.c.l.b16 %v1439
        %v2544 = vunpack.c.l.b16 %v1440
        %v2545 = vunpack.c.l.b16 %v1441
        %v2546 = vunpack.c.l.b16 %v1442
        %v2547 = vunpack.c.l.b16 %v1443
        %v2548 = vunpack.c.l.b16 %v1444
        %v2549 = vunpack.c.l.b16 %v1445
        %v2550 = vunpack.c.l.b16 %v1446
        %v2551 = vunpack.c.l.b16 %v1447
        %v2552 = vunpack.c.l.b16 %v1448
        %v2553 = vunpack.c.l.b16 %v1449
        %v2554 = vunpack.c.l.b16 %v1450
        %v2555 = vpack.c.b16 %v2524, %v2523
        %v2556 = vpack.c.b16 %v2526, %v2525
        %v2557 = vpack.c.b16 %v2528, %v2527
        %v2558 = vpack.c.b16 %v2530, %v2529
        %v2559 = vpack.c.b16 %v2532, %v2531
        %v2560 = vpack.c.b16 %v2534, %v2533
        %v2561 = vpack.c.b16 %v2536, %v2535
        %v2562 = vpack.c.b16 %v2538, %v2537
        %v2563 = vpack.c.b16 %v2540, %v2539
        %v2564 = vpack.c.b16 %v2542, %v2541
        %v2565 = vpack.c.b16 %v2544, %v2543
        %v2566 = vpack.c.b16 %v2546, %v2545
        %v2567 = vpack.c.b16 %v2548, %v2547
        %v2568 = vpack.c.b16 %v2550, %v2549
        %v2569 = vpack.c.b16 %v2552, %v2551
        %v2570 = vpack.c.b16 %v2554, %v2553
        %2571 = vrot.lane.b32.xlu0 %v2555, 24
        %v2572 = vpop.permute.xlu0 %2571
        %2573 = vrot.lane.b32.xlu0 %v2556, 24
        %v2574 = vpop.permute.xlu0 %2573
        %2575 = vrot.lane.b32.xlu0 %v2557, 24
        %v2576 = vpop.permute.xlu0 %2575
        %2577 = vrot.lane.b32.xlu0 %v2558, 24
        %v2578 = vpop.permute.xlu0 %2577
        %2579 = vrot.lane.b32.xlu0 %v2559, 24
        %v2580 = vpop.permute.xlu0 %2579
        %2581 = vrot.lane.b32.xlu0 %v2560, 24
        %v2582 = vpop.permute.xlu0 %2581
        %2583 = vrot.lane.b32.xlu0 %v2561, 24
        %v2584 = vpop.permute.xlu0 %2583
        %2585 = vrot.lane.b32.xlu0 %v2562, 24
        %v2586 = vpop.permute.xlu0 %2585
        %2587 = vrot.lane.b32.xlu0 %v2563, 24
        %v2588 = vpop.permute.xlu0 %2587
        %2589 = vrot.lane.b32.xlu0 %v2564, 24
        %v2590 = vpop.permute.xlu0 %2589
        %2591 = vrot.lane.b32.xlu0 %v2565, 24
        %v2592 = vpop.permute.xlu0 %2591
        %2593 = vrot.lane.b32.xlu0 %v2566, 24
        %v2594 = vpop.permute.xlu0 %2593
        %2595 = vrot.lane.b32.xlu0 %v2567, 24
        %v2596 = vpop.permute.xlu0 %2595
        %2597 = vrot.lane.b32.xlu0 %v2568, 24
        %v2598 = vpop.permute.xlu0 %2597
        %2599 = vrot.lane.b32.xlu0 %v2569, 24
        %v2600 = vpop.permute.xlu0 %2599
        %2601 = vrot.lane.b32.xlu0 %v2570, 24
        %v2602 = vpop.permute.xlu0 %2601
        %v2603 = vunpack.c.l.b16 %v1480
        %v2604 = vunpack.c.l.b16 %v1490
        %v2605 = vunpack.c.l.b16 %v1504
        %v2606 = vunpack.c.l.b16 %v1514
        %v2607 = vunpack.c.l.b16 %v1528
        %v2608 = vunpack.c.l.b16 %v1538
        %v2609 = vunpack.c.l.b16 %v1552
        %v2610 = vunpack.c.l.b16 %v1562
        %v2611 = vunpack.c.l.b16 %v1576
        %v2612 = vunpack.c.l.b16 %v1586
        %v2613 = vunpack.c.l.b16 %v1600
        %v2614 = vunpack.c.l.b16 %v1610
        %v2615 = vunpack.c.l.b16 %v1624
        %v2616 = vunpack.c.l.b16 %v1634
        %v2617 = vunpack.c.l.b16 %v1648
        %v2618 = vunpack.c.l.b16 %v1658
        %v2619 = vunpack.c.l.b16 %v1672
        %v2620 = vunpack.c.l.b16 %v1682
        %v2621 = vunpack.c.l.b16 %v1696
        %v2622 = vunpack.c.l.b16 %v1706
        %v2623 = vunpack.c.l.b16 %v1720
        %v2624 = vunpack.c.l.b16 %v1730
        %v2625 = vunpack.c.l.b16 %v1744
        %v2626 = vunpack.c.l.b16 %v1754
        %v2627 = vunpack.c.l.b16 %v1768
        %v2628 = vunpack.c.l.b16 %v1778
        %v2629 = vunpack.c.l.b16 %v1792
        %v2630 = vunpack.c.l.b16 %v1802
        %v2631 = vunpack.c.l.b16 %v1816
        %v2632 = vunpack.c.l.b16 %v1826
        %v2633 = vunpack.c.l.b16 %v1840
        %v2634 = vunpack.c.l.b16 %v1850
        %v2635 = vpack.c.b16 %v2604, %v2603
        %v2636 = vpack.c.b16 %v2606, %v2605
        %v2637 = vpack.c.b16 %v2608, %v2607
        %v2638 = vpack.c.b16 %v2610, %v2609
        %v2639 = vpack.c.b16 %v2612, %v2611
        %v2640 = vpack.c.b16 %v2614, %v2613
        %v2641 = vpack.c.b16 %v2616, %v2615
        %v2642 = vpack.c.b16 %v2618, %v2617
        %v2643 = vpack.c.b16 %v2620, %v2619
        %v2644 = vpack.c.b16 %v2622, %v2621
        %v2645 = vpack.c.b16 %v2624, %v2623
        %v2646 = vpack.c.b16 %v2626, %v2625
        %v2647 = vpack.c.b16 %v2628, %v2627
        %v2648 = vpack.c.b16 %v2630, %v2629
        %v2649 = vpack.c.b16 %v2632, %v2631
        %v2650 = vpack.c.b16 %v2634, %v2633
        %2651 = vrot.lane.b32.xlu0 %v2635, 28
        %v2652 = vpop.permute.xlu0 %2651
        %2653 = vrot.lane.b32.xlu0 %v2636, 28
        %v2654 = vpop.permute.xlu0 %2653
        %2655 = vrot.lane.b32.xlu0 %v2637, 28
        %v2656 = vpop.permute.xlu0 %2655
        %2657 = vrot.lane.b32.xlu0 %v2638, 28
        %v2658 = vpop.permute.xlu0 %2657
        %2659 = vrot.lane.b32.xlu0 %v2639, 28
        %v2660 = vpop.permute.xlu0 %2659
        %2661 = vrot.lane.b32.xlu0 %v2640, 28
        %v2662 = vpop.permute.xlu0 %2661
        %2663 = vrot.lane.b32.xlu0 %v2641, 28
        %v2664 = vpop.permute.xlu0 %2663
        %2665 = vrot.lane.b32.xlu0 %v2642, 28
        %v2666 = vpop.permute.xlu0 %2665
        %2667 = vrot.lane.b32.xlu0 %v2643, 28
        %v2668 = vpop.permute.xlu0 %2667
        %2669 = vrot.lane.b32.xlu0 %v2644, 28
        %v2670 = vpop.permute.xlu0 %2669
        %2671 = vrot.lane.b32.xlu0 %v2645, 28
        %v2672 = vpop.permute.xlu0 %2671
        %2673 = vrot.lane.b32.xlu0 %v2646, 28
        %v2674 = vpop.permute.xlu0 %2673
        %2675 = vrot.lane.b32.xlu0 %v2647, 28
        %v2676 = vpop.permute.xlu0 %2675
        %2677 = vrot.lane.b32.xlu0 %v2648, 28
        %v2678 = vpop.permute.xlu0 %2677
        %2679 = vrot.lane.b32.xlu0 %v2649, 28
        %v2680 = vpop.permute.xlu0 %2679
        %2681 = vrot.lane.b32.xlu0 %v2650, 28
        %v2682 = vpop.permute.xlu0 %2681
        %v2683 = vunpack.c.l.b16 %v1918
        %v2684 = vunpack.c.l.b16 %v1921
        %v2685 = vunpack.c.l.b16 %v1925
        %v2686 = vunpack.c.l.b16 %v1928
        %v2687 = vunpack.c.l.b16 %v1932
        %v2688 = vunpack.c.l.b16 %v1935
        %v2689 = vunpack.c.l.b16 %v1939
        %v2690 = vunpack.c.l.b16 %v1942
        %v2691 = vunpack.c.l.b16 %v1946
        %v2692 = vunpack.c.l.b16 %v1949
        %v2693 = vunpack.c.l.b16 %v1953
        %v2694 = vunpack.c.l.b16 %v1956
        %v2695 = vunpack.c.l.b16 %v1960
        %v2696 = vunpack.c.l.b16 %v1963
        %v2697 = vunpack.c.l.b16 %v1967
        %v2698 = vunpack.c.l.b16 %v1970
        %v2699 = vunpack.c.l.b16 %v1974
        %v2700 = vunpack.c.l.b16 %v1977
        %v2701 = vunpack.c.l.b16 %v1981
        %v2702 = vunpack.c.l.b16 %v1984
        %v2703 = vunpack.c.l.b16 %v1988
        %v2704 = vunpack.c.l.b16 %v1991
        %v2705 = vunpack.c.l.b16 %v1995
        %v2706 = vunpack.c.l.b16 %v1998
        %v2707 = vunpack.c.l.b16 %v2002
        %v2708 = vunpack.c.l.b16 %v2005
        %v2709 = vunpack.c.l.b16 %v2009
        %v2710 = vunpack.c.l.b16 %v2012
        %v2711 = vunpack.c.l.b16 %v2016
        %v2712 = vunpack.c.l.b16 %v2019
        %v2713 = vunpack.c.l.b16 %v2023
        %v2714 = vunpack.c.l.b16 %v2026
        %v2715 = vpack.c.b16 %v2684, %v2683
        %v2716 = vpack.c.b16 %v2686, %v2685
        %v2717 = vpack.c.b16 %v2688, %v2687
        %v2718 = vpack.c.b16 %v2690, %v2689
        %v2719 = vpack.c.b16 %v2692, %v2691
        %v2720 = vpack.c.b16 %v2694, %v2693
        %v2721 = vpack.c.b16 %v2696, %v2695
        %v2722 = vpack.c.b16 %v2698, %v2697
        %v2723 = vpack.c.b16 %v2700, %v2699
        %v2724 = vpack.c.b16 %v2702, %v2701
        %v2725 = vpack.c.b16 %v2704, %v2703
        %v2726 = vpack.c.b16 %v2706, %v2705
        %v2727 = vpack.c.b16 %v2708, %v2707
        %v2728 = vpack.c.b16 %v2710, %v2709
        %v2729 = vpack.c.b16 %v2712, %v2711
        %v2730 = vpack.c.b16 %v2714, %v2713
        %2731 = vrot.lane.b32.xlu0 %v2715, 32
        %v2732 = vpop.permute.xlu0 %2731
        %2733 = vrot.lane.b32.xlu0 %v2716, 32
        %v2734 = vpop.permute.xlu0 %2733
        %2735 = vrot.lane.b32.xlu0 %v2717, 32
        %v2736 = vpop.permute.xlu0 %2735
        %2737 = vrot.lane.b32.xlu0 %v2718, 32
        %v2738 = vpop.permute.xlu0 %2737
        %2739 = vrot.lane.b32.xlu0 %v2719, 32
        %v2740 = vpop.permute.xlu0 %2739
        %2741 = vrot.lane.b32.xlu0 %v2720, 32
        %v2742 = vpop.permute.xlu0 %2741
        %2743 = vrot.lane.b32.xlu0 %v2721, 32
        %v2744 = vpop.permute.xlu0 %2743
        %2745 = vrot.lane.b32.xlu0 %v2722, 32
        %v2746 = vpop.permute.xlu0 %2745
        %2747 = vrot.lane.b32.xlu0 %v2723, 32
        %v2748 = vpop.permute.xlu0 %2747
        %2749 = vrot.lane.b32.xlu0 %v2724, 32
        %v2750 = vpop.permute.xlu0 %2749
        %2751 = vrot.lane.b32.xlu0 %v2725, 32
        %v2752 = vpop.permute.xlu0 %2751
        %2753 = vrot.lane.b32.xlu0 %v2726, 32
        %v2754 = vpop.permute.xlu0 %2753
        %2755 = vrot.lane.b32.xlu0 %v2727, 32
        %v2756 = vpop.permute.xlu0 %2755
        %2757 = vrot.lane.b32.xlu0 %v2728, 32
        %v2758 = vpop.permute.xlu0 %2757
        %2759 = vrot.lane.b32.xlu0 %v2729, 32
        %v2760 = vpop.permute.xlu0 %2759
        %2761 = vrot.lane.b32.xlu0 %v2730, 32
        %v2762 = vpop.permute.xlu0 %2761
        %vm2763 = vcmask 31744
        %v2766 = vsel %vm2763, %v2075, %v2140
        %v2769 = vsel %vm2763, %v2076, %v2142
        %v2772 = vsel %vm2763, %v2077, %v2144
        %v2775 = vsel %vm2763, %v2078, %v2146
        %v2778 = vsel %vm2763, %v2079, %v2148
        %v2781 = vsel %vm2763, %v2080, %v2150
        %v2784 = vsel %vm2763, %v2081, %v2152
        %v2787 = vsel %vm2763, %v2082, %v2154
        %v2790 = vsel %vm2763, %v2083, %v2156
        %v2793 = vsel %vm2763, %v2084, %v2158
        %v2796 = vsel %vm2763, %v2085, %v2160
        %v2799 = vsel %vm2763, %v2086, %v2162
        %v2802 = vsel %vm2763, %v2087, %v2164
        %v2805 = vsel %vm2763, %v2088, %v2166
        %v2808 = vsel %vm2763, %v2089, %v2168
        %v2811 = vsel %vm2763, %v2090, %v2170
        %vm2812 = vcmask 64512
        %v2814 = vsel %vm2812, %v2766, %v2220
        %v2816 = vsel %vm2812, %v2769, %v2222
        %v2818 = vsel %vm2812, %v2772, %v2224
        %v2820 = vsel %vm2812, %v2775, %v2226
        %v2822 = vsel %vm2812, %v2778, %v2228
        %v2824 = vsel %vm2812, %v2781, %v2230
        %v2826 = vsel %vm2812, %v2784, %v2232
        %v2828 = vsel %vm2812, %v2787, %v2234
        %v2830 = vsel %vm2812, %v2790, %v2236
        %v2832 = vsel %vm2812, %v2793, %v2238
        %v2834 = vsel %vm2812, %v2796, %v2240
        %v2836 = vsel %vm2812, %v2799, %v2242
        %v2838 = vsel %vm2812, %v2802, %v2244
        %v2840 = vsel %vm2812, %v2805, %v2246
        %v2842 = vsel %vm2812, %v2808, %v2248
        %v2844 = vsel %vm2812, %v2811, %v2250
        %vm2845 = vcmask 97280
        %v2847 = vsel %vm2845, %v2814, %v2316
        %v2849 = vsel %vm2845, %v2816, %v2318
        %v2851 = vsel %vm2845, %v2818, %v2320
        %v2853 = vsel %vm2845, %v2820, %v2322
        %v2855 = vsel %vm2845, %v2822, %v2324
        %v2857 = vsel %vm2845, %v2824, %v2326
        %v2859 = vsel %vm2845, %v2826, %v2328
        %v2861 = vsel %vm2845, %v2828, %v2330
        %v2863 = vsel %vm2845, %v2830, %v2332
        %v2865 = vsel %vm2845, %v2832, %v2334
        %v2867 = vsel %vm2845, %v2834, %v2336
        %v2869 = vsel %vm2845, %v2836, %v2338
        %v2871 = vsel %vm2845, %v2838, %v2340
        %v2873 = vsel %vm2845, %v2840, %v2342
        %v2875 = vsel %vm2845, %v2842, %v2344
        %v2877 = vsel %vm2845, %v2844, %v2346
        %vm2878 = vcmask 130048
        %v2880 = vsel %vm2878, %v2847, %v2396
        %v2882 = vsel %vm2878, %v2849, %v2398
        %v2884 = vsel %vm2878, %v2851, %v2400
        %v2886 = vsel %vm2878, %v2853, %v2402
        %v2888 = vsel %vm2878, %v2855, %v2404
        %v2890 = vsel %vm2878, %v2857, %v2406
        %v2892 = vsel %vm2878, %v2859, %v2408
        %v2894 = vsel %vm2878, %v2861, %v2410
        %v2896 = vsel %vm2878, %v2863, %v2412
        %v2898 = vsel %vm2878, %v2865, %v2414
        %v2900 = vsel %vm2878, %v2867, %v2416
        %v2902 = vsel %vm2878, %v2869, %v2418
        %v2904 = vsel %vm2878, %v2871, %v2420
        %v2906 = vsel %vm2878, %v2873, %v2422
        %v2908 = vsel %vm2878, %v2875, %v2424
        %v2910 = vsel %vm2878, %v2877, %v2426
        %vm2911 = vcmask 162816
        %v2913 = vsel %vm2911, %v2880, %v2476
        %v2915 = vsel %vm2911, %v2882, %v2478
        %v2917 = vsel %vm2911, %v2884, %v2480
        %v2919 = vsel %vm2911, %v2886, %v2482
        %v2921 = vsel %vm2911, %v2888, %v2484
        %v2923 = vsel %vm2911, %v2890, %v2486
        %v2925 = vsel %vm2911, %v2892, %v2488
        %v2927 = vsel %vm2911, %v2894, %v2490
        %v2929 = vsel %vm2911, %v2896, %v2492
        %v2931 = vsel %vm2911, %v2898, %v2494
        %v2933 = vsel %vm2911, %v2900, %v2496
        %v2935 = vsel %vm2911, %v2902, %v2498
        %v2937 = vsel %vm2911, %v2904, %v2500
        %v2939 = vsel %vm2911, %v2906, %v2502
        %v2941 = vsel %vm2911, %v2908, %v2504
        %v2943 = vsel %vm2911, %v2910, %v2506
        %vm2944 = vcmask 195584
        %v2946 = vsel %vm2944, %v2913, %v2572
        %v2948 = vsel %vm2944, %v2915, %v2574
        %v2950 = vsel %vm2944, %v2917, %v2576
        %v2952 = vsel %vm2944, %v2919, %v2578
        %v2954 = vsel %vm2944, %v2921, %v2580
        %v2956 = vsel %vm2944, %v2923, %v2582
        %v2958 = vsel %vm2944, %v2925, %v2584
        %v2960 = vsel %vm2944, %v2927, %v2586
        %v2962 = vsel %vm2944, %v2929, %v2588
        %v2964 = vsel %vm2944, %v2931, %v2590
        %v2966 = vsel %vm2944, %v2933, %v2592
        %v2968 = vsel %vm2944, %v2935, %v2594
        %v2970 = vsel %vm2944, %v2937, %v2596
        %v2972 = vsel %vm2944, %v2939, %v2598
        %v2974 = vsel %vm2944, %v2941, %v2600
        %v2976 = vsel %vm2944, %v2943, %v2602
        %vm2977 = vcmask 228352
        %v2979 = vsel %vm2977, %v2946, %v2652
        %v2981 = vsel %vm2977, %v2948, %v2654
        %v2983 = vsel %vm2977, %v2950, %v2656
        %v2985 = vsel %vm2977, %v2952, %v2658
        %v2987 = vsel %vm2977, %v2954, %v2660
        %v2989 = vsel %vm2977, %v2956, %v2662
        %v2991 = vsel %vm2977, %v2958, %v2664
        %v2993 = vsel %vm2977, %v2960, %v2666
        %v2995 = vsel %vm2977, %v2962, %v2668
        %v2997 = vsel %vm2977, %v2964, %v2670
        %v2999 = vsel %vm2977, %v2966, %v2672
        %v3001 = vsel %vm2977, %v2968, %v2674
        %v3003 = vsel %vm2977, %v2970, %v2676
        %v3005 = vsel %vm2977, %v2972, %v2678
        %v3007 = vsel %vm2977, %v2974, %v2680
        %v3009 = vsel %vm2977, %v2976, %v2682
        %vm3010 = vcmask 261120
        %v3012 = vsel %vm3010, %v2979, %v2732
        %v3014 = vsel %vm3010, %v2981, %v2734
        %v3016 = vsel %vm3010, %v2983, %v2736
        %v3018 = vsel %vm3010, %v2985, %v2738
        %v3020 = vsel %vm3010, %v2987, %v2740
        %v3022 = vsel %vm3010, %v2989, %v2742
        %v3024 = vsel %vm3010, %v2991, %v2744
        %v3026 = vsel %vm3010, %v2993, %v2746
        %v3028 = vsel %vm3010, %v2995, %v2748
        %v3030 = vsel %vm3010, %v2997, %v2750
        %v3032 = vsel %vm3010, %v2999, %v2752
        %v3034 = vsel %vm3010, %v3001, %v2754
        %v3036 = vsel %vm3010, %v3003, %v2756
        %v3038 = vsel %vm3010, %v3005, %v2758
        %v3040 = vsel %vm3010, %v3007, %v2760
        %v3042 = vsel %vm3010, %v3009, %v2762
        %v3043 = vld [vmem:[%s1] sm:$0xf]
        %v3044 = vld [vmem:[%s1 + $0x4] sm:$0xf]
        %v3045 = vld [vmem:[%s1 + $0x8] sm:$0xf]
        %v3046 = vld [vmem:[%s1 + $0xc] sm:$0xf]
        %v3047 = vld [vmem:[%s1 + $0x10] sm:$0x3]
        %v3048 = vld [vmem:[%s2] sm:$0x1]
        %v3050 = vlaneseq
        %v3051 = vshrl.u32 %v3050, 7
        %v3052 = vsub.s32 0, %v3051
        %v3053 = vrot.slane %v3048, %v3052
        %v3060 = vunpack.c.l.b16 %v3043
        %v3061 = vunpack.c.l.b16 %v3044
        %v3062 = vunpack.c.l.b16 %v3045
        %v3063 = vunpack.c.l.b16 %v3046
        %v3064 = vunpack.c.l.b16 %v3047
        %v3065 = vpack.c.b16 %v3061, %v3060
        %v3066 = vpack.c.b16 %v3063, %v3062
        %v3067 = vpack.c.b16 %v3064, %v3064
        %vm3070 = vcmask 293888
        %v3071 = vsel %vm3070, %v3012, 0
        %v3073 = vsel %vm3070, %v3014, 0
        %v3075 = vsel %vm3070, %v3016, 0
        %v3077 = vsel %vm3070, %v3018, 0
        %v3079 = vsel %vm3070, %v3020, 0
        %v3081 = vsel %vm3070, %v3022, 0
        %v3083 = vsel %vm3070, %v3024, 0
        %v3085 = vsel %vm3070, %v3026, 0
        %v3087 = vsel %vm3070, %v3028, 0
        %v3089 = vsel %vm3070, %v3030, 0
        %v3091 = vsel %vm3070, %v3032, 0
        %v3093 = vsel %vm3070, %v3034, 0
        %v3095 = vsel %vm3070, %v3036, 0
        %v3097 = vsel %vm3070, %v3038, 0
        %v3099 = vsel %vm3070, %v3040, 0
        %v3101 = vsel %vm3070, %v3042, 0
        %vm3103 = vcmask 1041408
        %v3105 = vsel %vm3103, %v3067, 0
        %3107 = vmatprep.subr.bf16.mxu0 0
        %3108 = vmatpush1.bf16.msra.mxu0 0
        %3109 = vmatprep.subr.bf16.mxu0 0
        %3110 = vmatpush1.bf16.msra.mxu0 0
        %3111 = vmatprep.subr.bf16.mxu0 0
        %3112 = vmatpush1.bf16.msra.mxu0 0
        %3113 = vmatprep.subr.bf16.mxu0 0
        %3114 = vmatpush1.bf16.msra.mxu0 0
        %3115 = vmatprep.subr.bf16.mxu0 0
        %3116 = vmatpush1.bf16.msra.mxu0 0
        %3117 = vmatprep.subr.bf16.mxu0 0
        %3118 = vmatpush1.bf16.msra.mxu0 %v3105
        %3119 = vmatprep.subr.bf16.mxu0 0
        %3120 = vmatpush1.bf16.msra.mxu0 %v3066
        %3121 = vmatprep.subr.bf16.mxu0 0
        %3122 = vmatpush1.bf16.msra.mxu0 %v3065
        %3123 = vmatprep.subr.bf16.mxu0 0
        %3124 = vmatpush2.bf16.msra.mxu0 0
        %3125 = vmatprep.subr.bf16.mxu0 0
        %3126 = vmatpush2.bf16.msra.mxu0 0
        %3127 = vmatprep.subr.bf16.mxu0 0
        %3128 = vmatpush2.bf16.msra.mxu0 0
        %3129 = vmatprep.subr.bf16.mxu0 0
        %3130 = vmatpush2.bf16.msra.mxu0 0
        %3131 = vmatprep.subr.bf16.mxu0 0
        %3132 = vmatpush2.bf16.msra.mxu0 0
        %3133 = vmatprep.subr.bf16.mxu0 0
        %3134 = vmatpush2.bf16.msra.mxu0 0
        %3135 = vmatprep.subr.bf16.mxu0 0
        %3136 = vmatpush2.bf16.msra.mxu0 0
        %3137 = vmatprep.subr.bf16.mxu0 0
        %3138 = vmatpush2.bf16.msra.mxu0 0
        %3139 = vmatprep.mubr.bf16.mxu0 0
        %3140 = vmatmul.mubr.bf16.gmra.mxu0 %v3071
        %v3141 = vpop.f32.mrf.mxu0
        %v3142 = vadd.f32 %v3053, %v3141
        %v3143 = vpop.f32.mrf.mxu0
        %v3144 = vpop.f32.mrf.mxu0
        %v3145 = vadd.f32 %v3053, %v3144
        %v3146 = vpop.f32.mrf.mxu0
        %3147 = vmatprep.mubr.bf16.mxu0 0
        %3148 = vmatmul.mubr.bf16.gmra.mxu0 %v3073
        %v3149 = vpop.f32.mrf.mxu0
        %v3150 = vadd.f32 %v3053, %v3149
        %v3151 = vpop.f32.mrf.mxu0
        %v3152 = vpop.f32.mrf.mxu0
        %v3153 = vadd.f32 %v3053, %v3152
        %v3154 = vpop.f32.mrf.mxu0
        %3155 = vmatprep.mubr.bf16.mxu0 0
        %3156 = vmatmul.mubr.bf16.gmra.mxu0 %v3075
        %v3157 = vpop.f32.mrf.mxu0
        %v3158 = vadd.f32 %v3053, %v3157
        %v3159 = vpop.f32.mrf.mxu0
        %v3160 = vpop.f32.mrf.mxu0
        %v3161 = vadd.f32 %v3053, %v3160
        %v3162 = vpop.f32.mrf.mxu0
        %3163 = vmatprep.mubr.bf16.mxu0 0
        %3164 = vmatmul.mubr.bf16.gmra.mxu0 %v3077
        %v3165 = vpop.f32.mrf.mxu0
        %v3166 = vadd.f32 %v3053, %v3165
        %v3167 = vpop.f32.mrf.mxu0
        %v3168 = vpop.f32.mrf.mxu0
        %v3169 = vadd.f32 %v3053, %v3168
        %v3170 = vpop.f32.mrf.mxu0
        %3171 = vmatprep.mubr.bf16.mxu0 0
        %3172 = vmatmul.mubr.bf16.gmra.mxu0 %v3079
        %v3173 = vpop.f32.mrf.mxu0
        %v3174 = vadd.f32 %v3053, %v3173
        %v3175 = vpop.f32.mrf.mxu0
        %v3176 = vpop.f32.mrf.mxu0
        %v3177 = vadd.f32 %v3053, %v3176
        %v3178 = vpop.f32.mrf.mxu0
        %3179 = vmatprep.mubr.bf16.mxu0 0
        %3180 = vmatmul.mubr.bf16.gmra.mxu0 %v3081
        %v3181 = vpop.f32.mrf.mxu0
        %v3182 = vadd.f32 %v3053, %v3181
        %v3183 = vpop.f32.mrf.mxu0
        %v3184 = vpop.f32.mrf.mxu0
        %v3185 = vadd.f32 %v3053, %v3184
        %v3186 = vpop.f32.mrf.mxu0
        %3187 = vmatprep.mubr.bf16.mxu0 0
        %3188 = vmatmul.mubr.bf16.gmra.mxu0 %v3083
        %v3189 = vpop.f32.mrf.mxu0
        %v3190 = vadd.f32 %v3053, %v3189
        %v3191 = vpop.f32.mrf.mxu0
        %v3192 = vpop.f32.mrf.mxu0
        %v3193 = vadd.f32 %v3053, %v3192
        %v3194 = vpop.f32.mrf.mxu0
        %3195 = vmatprep.mubr.bf16.mxu0 0
        %3196 = vmatmul.mubr.bf16.gmra.mxu0 %v3085
        %v3197 = vpop.f32.mrf.mxu0
        %v3198 = vadd.f32 %v3053, %v3197
        %v3199 = vpop.f32.mrf.mxu0
        %v3200 = vpop.f32.mrf.mxu0
        %v3201 = vadd.f32 %v3053, %v3200
        %v3202 = vpop.f32.mrf.mxu0
        %3203 = vmatprep.mubr.bf16.mxu0 0
        %3204 = vmatmul.mubr.bf16.gmra.mxu0 %v3087
        %v3205 = vpop.f32.mrf.mxu0
        %v3206 = vadd.f32 %v3053, %v3205
        %v3207 = vpop.f32.mrf.mxu0
        %v3208 = vpop.f32.mrf.mxu0
        %v3209 = vadd.f32 %v3053, %v3208
        %v3210 = vpop.f32.mrf.mxu0
        %3211 = vmatprep.mubr.bf16.mxu0 0
        %3212 = vmatmul.mubr.bf16.gmra.mxu0 %v3089
        %v3213 = vpop.f32.mrf.mxu0
        %v3214 = vadd.f32 %v3053, %v3213
        %v3215 = vpop.f32.mrf.mxu0
        %v3216 = vpop.f32.mrf.mxu0
        %v3217 = vadd.f32 %v3053, %v3216
        %v3218 = vpop.f32.mrf.mxu0
        %3219 = vmatprep.mubr.bf16.mxu0 0
        %3220 = vmatmul.mubr.bf16.gmra.mxu0 %v3091
        %v3221 = vpop.f32.mrf.mxu0
        %v3222 = vadd.f32 %v3053, %v3221
        %v3223 = vpop.f32.mrf.mxu0
        %v3224 = vpop.f32.mrf.mxu0
        %v3225 = vadd.f32 %v3053, %v3224
        %v3226 = vpop.f32.mrf.mxu0
        %3227 = vmatprep.mubr.bf16.mxu0 0
        %3228 = vmatmul.mubr.bf16.gmra.mxu0 %v3093
        %v3229 = vpop.f32.mrf.mxu0
        %v3230 = vadd.f32 %v3053, %v3229
        %v3231 = vpop.f32.mrf.mxu0
        %v3232 = vpop.f32.mrf.mxu0
        %v3233 = vadd.f32 %v3053, %v3232
        %v3234 = vpop.f32.mrf.mxu0
        %3235 = vmatprep.mubr.bf16.mxu0 0
        %3236 = vmatmul.mubr.bf16.gmra.mxu0 %v3095
        %v3237 = vpop.f32.mrf.mxu0
        %v3238 = vadd.f32 %v3053, %v3237
        %v3239 = vpop.f32.mrf.mxu0
        %v3240 = vpop.f32.mrf.mxu0
        %v3241 = vadd.f32 %v3053, %v3240
        %v3242 = vpop.f32.mrf.mxu0
        %3243 = vmatprep.mubr.bf16.mxu0 0
        %3244 = vmatmul.mubr.bf16.gmra.mxu0 %v3097
        %v3245 = vpop.f32.mrf.mxu0
        %v3246 = vadd.f32 %v3053, %v3245
        %v3247 = vpop.f32.mrf.mxu0
        %v3248 = vpop.f32.mrf.mxu0
        %v3249 = vadd.f32 %v3053, %v3248
        %v3250 = vpop.f32.mrf.mxu0
        %3251 = vmatprep.mubr.bf16.mxu0 0
        %3252 = vmatmul.mubr.bf16.gmra.mxu0 %v3099
        %v3253 = vpop.f32.mrf.mxu0
        %v3254 = vadd.f32 %v3053, %v3253
        %v3255 = vpop.f32.mrf.mxu0
        %v3256 = vpop.f32.mrf.mxu0
        %v3257 = vadd.f32 %v3053, %v3256
        %v3258 = vpop.f32.mrf.mxu0
        %3259 = vmatprep.mubr.bf16.mxu0 0
        %3260 = vmatmul.mubr.bf16.gmra.mxu0 %v3101
        %v3261 = vpop.f32.mrf.mxu0
        %v3262 = vadd.f32 %v3053, %v3261
        %v3263 = vpop.f32.mrf.mxu0
        %v3264 = vpop.f32.mrf.mxu0
        %v3265 = vadd.f32 %v3053, %v3264
        %v3266 = vpop.f32.mrf.mxu0
        %3267 = vdwg.mxu0
        %3268 = vst [vmem:[%s177] sm:$0xff] %v3142
        %3269 = vst [vmem:[%s177 + $0x8] sm:$0xff] %v3145
        %3270 = vst [vmem:[%s177 + $0x10] sm:$0xff] %v3150
        %3271 = vst [vmem:[%s177 + $0x18] sm:$0xff] %v3153
        %3272 = vst [vmem:[%s177 + $0x20] sm:$0xff] %v3158
        %3273 = vst [vmem:[%s177 + $0x28] sm:$0xff] %v3161
        %3274 = vst [vmem:[%s177 + $0x30] sm:$0xff] %v3166
        %3275 = vst [vmem:[%s177 + $0x38] sm:$0xff] %v3169
        %3276 = vst [vmem:[%s177 + $0x40] sm:$0xff] %v3174
        %3277 = vst [vmem:[%s177 + $0x48] sm:$0xff] %v3177
        %3278 = vst [vmem:[%s177 + $0x50] sm:$0xff] %v3182
        %3279 = vst [vmem:[%s177 + $0x58] sm:$0xff] %v3185
        %3280 = vst [vmem:[%s177 + $0x60] sm:$0xff] %v3190
        %3281 = vst [vmem:[%s177 + $0x68] sm:$0xff] %v3193
        %3282 = vst [vmem:[%s177 + $0x70] sm:$0xff] %v3198
        %3283 = vst [vmem:[%s177 + $0x78] sm:$0xff] %v3201
        %3284 = vst [vmem:[%s177 + $0x80] sm:$0xff] %v3206
        %3285 = vst [vmem:[%s177 + $0x88] sm:$0xff] %v3209
        %3286 = vst [vmem:[%s177 + $0x90] sm:$0xff] %v3214
        %3287 = vst [vmem:[%s177 + $0x98] sm:$0xff] %v3217
        %3288 = vst [vmem:[%s177 + $0xa0] sm:$0xff] %v3222
        %3289 = vst [vmem:[%s177 + $0xa8] sm:$0xff] %v3225
        %3290 = vst [vmem:[%s177 + $0xb0] sm:$0xff] %v3230
        %3291 = vst [vmem:[%s177 + $0xb8] sm:$0xff] %v3233
        %3292 = vst [vmem:[%s177 + $0xc0] sm:$0xff] %v3238
        %3293 = vst [vmem:[%s177 + $0xc8] sm:$0xff] %v3241
        %3294 = vst [vmem:[%s177 + $0xd0] sm:$0xff] %v3246
        %3295 = vst [vmem:[%s177 + $0xd8] sm:$0xff] %v3249
        %3296 = vst [vmem:[%s177 + $0xe0] sm:$0xff] %v3254
        %3297 = vst [vmem:[%s177 + $0xe8] sm:$0xff] %v3257
        %3298 = vst [vmem:[%s177 + $0xf0] sm:$0xff] %v3262
        %3299 = vst [vmem:[%s177 + $0xf8] sm:$0xff] %v3265
        %s3300 = sand.u32 %s107, 1
        %s3301 = scalar_lea.sflag [#allocation3], %s3300
        %s3302 = sand.u32 %s107, 1
        %s3303 = smul.addr %s3302, 256
        %s3304 = scalar_lea.vmem [#allocation2], %s3303
        // Predicated region
        $region33: #{tpu_custom_call.1} parent=31 // pred_check
          %p3305 = pneg %p117
        $region34: #{tpu_custom_call.1} parent=31 // pred_check_branch
          %3307 = sbr.rel (%p3305) target = $region36
        $region35: #{tpu_custom_call.1} parent=31 // pred_region
          %s3308 = smul.u32 32, %s22
          %s3310 = ssub.s32 4096, 4096
          %3311 = vsyncadd %s3301, %s3310
          %s3312 = smul.addr %s21, 32
          %s3313 = sadd.s32 %s3308, %s3312
          %s3314 = smul.addr %s3313, 128
          %s3315 = scalar_lea.hbm %s3, %s3314
          %s3316 = sshll.u32 %s3304, 4
          %s3317 = int_to_ptr.vmem [resolvable:$true] %s3316
          %3322 = dma.vmem_to_hbm [thread:$0]  %s3317, 4096, %s3315, %s3301, 128, 128, 8
        $region36: #{tpu_custom_call.1} parent=31 // pred_fallthru
          _
      $region32: #{tpu_custom_call.1} parent=5 // pred_fallthru
        _
      %p3323 = scmp.le.s32.totalorder 2, %s12
      // Predicated region
      $region37: #{tpu_custom_call.1} parent=5 // pred_check
        %p3324 = pneg %p3323
      $region38: #{tpu_custom_call.1} parent=5 // pred_check_branch
        %3326 = sbr.rel (%p3324) target = $region40
      $region39: #{tpu_custom_call.1} parent=5 // pred_region
        %s3327 = ssub.s32 %s12, 2
        // Predicated region
        $region41: #{tpu_custom_call.1} parent=39 // pred_check
          %p3328 = pneg %p123
        $region42: #{tpu_custom_call.1} parent=39 // pred_check_branch
          %3330 = sbr.rel (%p3328) target = $region44
        $region43: #{tpu_custom_call.1} parent=39 // pred_region
          %s3331 = sand.u32 %s108, 1
          %s3332 = scalar_lea.sflag [#allocation3], %s3331
          %s3333 = sand.u32 %s108, 1
          %s3334 = smul.addr %s3333, 256
          %s3335 = scalar_lea.vmem [#allocation2], %s3334
          %3336 = dma.done %s3332, 4096
        $region44: #{tpu_custom_call.1} parent=39 // pred_fallthru
          _
      $region40: #{tpu_custom_call.1} parent=5 // pred_fallthru
        _
    $region6: #{tpu_custom_call.1} parent=1 // loop_footer
      %s16 = sadd.s32 1, %s12
    $region7: #{tpu_custom_call.1} parent=1 // loop_footer_branch
      %11 = sbr.rel target = $region3
    $region8: #{tpu_custom_call.1} parent=1 // loop_exit
      _
    %3337 = vsyncpa [#allocation3], 1
    %s3338 = scalar_lea.sflag [#allocation3], 1
    %3339 = vsyncpa %s3338, 1

// kernel: tpu_custom_call.1
$region0: #{tpu_custom_call.1}
  #allocation0 [shape = 'u32[]', space=smem, size = 0x4, offset = 0x4, fixed_abs, tag = 'smem constant byte address 0x4 - core index']
  #allocation1 [shape = 'u32[144,128]{1,0:T(1,128)}', space=vmem, size = 0x12000, scoped, tag = 'internal scratch']
  %s0 = inlined_call_operand.vmem [shape: bf16[2,18,18,4], index: 0, kind: input, shape index: {}]
  %s1 = inlined_call_operand.vmem [shape: bf16[36,128], index: 1, kind: input, shape index: {}]
  %s2 = inlined_call_operand.vmem [shape: f32[1,128], index: 2, kind: input, shape index: {}]
  %s3 = inlined_call_operand.hbm [shape: f32[2,256,128], index: 3, kind: output, shape index: {}]
  %s4 = sld [smem:[#allocation0]]
  $region45: #{tpu_custom_call.1} parent=0
    _
  %s6 = ssub.s32 1, %s4
  %s7 = scalar_select 0, %s6, %s4
  $region1: #{tpu_custom_call.1} parent=0
    #allocation2 [shape = 'u8[262144]{0}', space=vmem, size = 0x40000, scoped, tag = 'output window, operand 0']
    #allocation3 [shape = 's32[2]{0}', space=sflag, size = 0x8, scoped, tag = 'scoped memory for tpu_custom_call.1']
    %8 = vsyncpa [#allocation3], 0
    %s9 = scalar_lea.sflag [#allocation3], 1
    %10 = vsyncpa %s9, 0
    loop: start=0, step=1, limit=4
    $region2: #{tpu_custom_call.1} parent=1 // loop_pre_header
      _
    $region3: #{tpu_custom_call.1} parent=1 // loop_header
      %s12 = sphi 0, %s16
      %p13 = scmp.ge.s32.totalorder %s12, 4
      %s19 = sphi 0, %s31
      %s20 = sphi 0, %s27
      %s21 = sphi 0, %s19
      %s22 = sphi 0, %s20
      %s23 = sphi 0, %s21
      %s24 = sphi 0, %s22
      %s34 = sphi 0, %s36
      %s37 = sphi 0, %s34
      %s38 = sphi 0, %s37
      %s54 = sphi 0, %s38
      %s58 = sphi 0, %s58
      %s60 = sphi 0, %s58
      %s61 = sphi 0, %s60
      %s75 = sphi 0, %s61
      %s79 = sphi 0, %s79
      %s81 = sphi 0, %s79
      %s82 = sphi 0, %s81
      %s96 = sphi 0, %s82
      %s104 = sphi 0, %s106
      %s107 = sphi 0, %s104
      %s108 = sphi 0, %s107
      %s124 = sphi 0, %s108
    $region4: #{tpu_custom_call.1} parent=1 // loop_header_branch
      %15 = sbr.rel (%p13) target = $region8
    $region5: #{tpu_custom_call.1} parent=1 // loop_body
      %s17 = ssub.s32 %s12, 1
      %s18 = ssub.s32 %s12, 2
      %s25 = sadd.s32 1, %s20
      %p26 = scmp.ge.s32.totalorder %s25, 1
      %s27 = scalar_select %p26, 0, %s25
      %s28 = sadd.s32 1, %s19
      %s29 = scalar_select %p26, %s28, %s19
      %p30 = scmp.ge.s32.totalorder %s29, 2
      %s31 = scalar_select %p30, 0, %s29
      %s32 = ssub.s32 %s19, %s31
      %p33 = scmp.eq.s32.totalorder %s32, 0
      %s35 = sadd.s32 %s34, 1
      %s36 = scalar_select %p33, %s34, %s35
      %p39 = pneg %p33
      %p40 = scmp.eq.s32.totalorder %s12, 1
      %p41 = por %p39, %p40
      %p42 = scmp.ne.s32.totalorder %s34, %s37
      %p43 = scmp.eq.s32.totalorder %s12, 0
      %p44 = por %p42, %p43
      %p45 = scmp.ne.s32.totalorder %s34, %s37
      %p46 = scmp.eq.s32.totalorder %s17, 1
      %p47 = por %p45, %p46
      %p48 = scmp.ne.s32.totalorder %s37, %s38
      %p49 = scmp.eq.s32.totalorder %s17, 0
      %p50 = por %p48, %p49
      %p51 = scmp.ne.s32.totalorder %s37, %s38
      %p52 = scmp.eq.s32.totalorder %s18, 1
      %p53 = por %p51, %p52
      %p55 = scmp.ne.s32.totalorder %s38, %s54
      %p56 = scmp.eq.s32.totalorder %s18, 0
      %p57 = por %p55, %p56
      %s59 = sadd.s32 %s58, 1
      %p62 = scmp.eq.s32.totalorder %s12, 1
      %p63 = scmp.ne.s32.totalorder %s58, %s60
      %p64 = scmp.eq.s32.totalorder %s12, 0
      %p65 = por %p63, %p64
      %p66 = scmp.ne.s32.totalorder %s58, %s60
      %p67 = scmp.eq.s32.totalorder %s17, 1
      %p68 = por %p66, %p67
      %p69 = scmp.ne.s32.totalorder %s60, %s61
      %p70 = scmp.eq.s32.totalorder %s17, 0
      %p71 = por %p69, %p70
      %p72 = scmp.ne.s32.totalorder %s60, %s61
      %p73 = scmp.eq.s32.totalorder %s18, 1
      %p74 = por %p72, %p73
      %p76 = scmp.ne.s32.totalorder %s61, %s75
      %p77 = scmp.eq.s32.totalorder %s18, 0
      %p78 = por %p76, %p77
      %s80 = sadd.s32 %s79, 1
      %p83 = scmp.eq.s32.totalorder %s12, 1
      %p84 = scmp.ne.s32.totalorder %s79, %s81
      %p85 = scmp.eq.s32.totalorder %s12, 0
      %p86 = por %p84, %p85
      %p87 = scmp.ne.s32.totalorder %s79, %s81
      %p88 = scmp.eq.s32.totalorder %s17, 1
      %p89 = por %p87, %p88
      %p90 = scmp.ne.s32.totalorder %s81, %s82
      %p91 = scmp.eq.s32.totalorder %s17, 0
      %p92 = por %p90, %p91
      %p93 = scmp.ne.s32.totalorder %s81, %s82
      %p94 = scmp.eq.s32.totalorder %s18, 1
      %p95 = por %p93, %p94
      %p97 = scmp.ne.s32.totalorder %s82, %s96
      %p98 = scmp.eq.s32.totalorder %s18, 0
      %p99 = por %p97, %p98
      %s100 = ssub.s32 %s19, %s31
      %s101 = ssub.s32 %s20, %s27
      %s102 = sor.u32 %s100, %s101
      %p103 = scmp.eq.s32.totalorder %s102, 0
      %s105 = sadd.s32 %s104, 1
      %s106 = scalar_select %p103, %s104, %s105
      %p109 = pneg %p103
      %p110 = scmp.eq.s32.totalorder %s12, 1
      %p111 = por %p109, %p110
      %p112 = scmp.ne.s32.totalorder %s104, %s107
      %p113 = scmp.eq.s32.totalorder %s12, 0
      %p114 = por %p112, %p113
      %p115 = scmp.ne.s32.totalorder %s104, %s107
      %p116 = scmp.eq.s32.totalorder %s17, 1
      %p117 = por %p115, %p116
      %p118 = scmp.ne.s32.totalorder %s107, %s108
      %p119 = scmp.eq.s32.totalorder %s17, 0
      %p120 = por %p118, %p119
      %p121 = scmp.ne.s32.totalorder %s107, %s108
      %p122 = scmp.eq.s32.totalorder %s18, 1
      %p123 = por %p121, %p122
      %p125 = scmp.ne.s32.totalorder %s108, %s124
      %p126 = scmp.eq.s32.totalorder %s18, 0
      %p127 = por %p125, %p126
      %p128 = scmp.le.s32.totalorder 1, %s12
      %p129 = scmp.lt.s32.totalorder %s12, 3
      %p130 = pnand %p128, %p129
      %p131 = pneg %p130
      // Predicated region
      $region9: #{tpu_custom_call.1} parent=5 // pred_check
        _
      $region10: #{tpu_custom_call.1} parent=5 // pred_check_branch
        %133 = sbr.rel (%p130) target = $region12
      $region11: #{tpu_custom_call.1} parent=5 // pred_region
        %s134 = ssub.s32 %s12, 1
        // Predicated region
        $region13: #{tpu_custom_call.1} parent=11 // pred_check
          %p135 = pneg %p71
        $region14: #{tpu_custom_call.1} parent=11 // pred_check_branch
          %137 = sbr.rel (%p135) target = $region16
        $region15: #{tpu_custom_call.1} parent=11 // pred_region
          _
        $region16: #{tpu_custom_call.1} parent=11 // pred_fallthru
          _
        // Predicated region
        $region17: #{tpu_custom_call.1} parent=11 // pred_check
          %p138 = pneg %p92
        $region18: #{tpu_custom_call.1} parent=11 // pred_check_branch
          %140 = sbr.rel (%p138) target = $region20
        $region19: #{tpu_custom_call.1} parent=11 // pred_region
          _
        $region20: #{tpu_custom_call.1} parent=11 // pred_fallthru
          _
      $region12: #{tpu_custom_call.1} parent=5 // pred_fallthru
        _
      %p141 = scmp.lt.s32.totalorder %s12, 2
      // Predicated region
      $region21: #{tpu_custom_call.1} parent=5 // pred_check
        %p142 = pneg %p141
      $region22: #{tpu_custom_call.1} parent=5 // pred_check_branch
        %144 = sbr.rel (%p142) target = $region24
      $region23: #{tpu_custom_call.1} parent=5 // pred_region
        // Predicated region
        $region25: #{tpu_custom_call.1} parent=23 // pred_check
          %p145 = pneg %p44
        $region26: #{tpu_custom_call.1} parent=23 // pred_check_branch
          %147 = sbr.rel (%p145) target = $region28
        $region27: #{tpu_custom_call.1} parent=23 // pred_region
          %p148 = scmp.lt.s32.totalorder %s19, 1
          %s149 = scalar_select %p148, %s19, 1
          %s150 = smul.addr %s149, 54
          %s151 = smul.addr %s150, 4
          %s152 = scalar_lea.vmem %s0, %s151
        $region28: #{tpu_custom_call.1} parent=23 // pred_fallthru
          _
      $region24: #{tpu_custom_call.1} parent=5 // pred_fallthru
        _
      %p153 = scmp.le.s32.totalorder 1, %s12
      %p154 = scmp.lt.s32.totalorder %s12, 3
      %p155 = pnand %p153, %p154
      %p156 = pneg %p155
      // Predicated region
      $region29: #{tpu_custom_call.1} parent=5 // pred_check
        _
      $region30: #{tpu_custom_call.1} parent=5 // pred_check_branch
        %158 = sbr.rel (%p155) target = $region32
      $region31: #{tpu_custom_call.1} parent=5 // pred_region
        %s159 = ssub.s32 %s12, 1
        %p160 = scmp.lt.s32.totalorder %s21, 1
        %s161 = scalar_select %p160, %s21, 1
        %s162 = smul.addr %s161, 54
        %s163 = smul.addr %s162, 4
        %s164 = scalar_lea.vmem %s0, %s163
        %p165 = pneg %p50
        %p166 = pneg %p47
        %p167 = pneg %p71
        %p168 = pneg %p68
        %p169 = pneg %p92
        %p170 = pneg %p89
        %p171 = pneg %p120
        %p172 = pneg %p117
        %s173 = sand.u32 %s107, 1
        %s174 = scalar_lea.sflag [#allocation3], %s173
        %s175 = sand.u32 %s107, 1
        %s176 = smul.addr %s175, 256
        %s177 = scalar_lea.vmem [#allocation2], %s176
        %p178 = scmp.lt.s32.totalorder %s21, 1
        %s179 = scalar_select %p178, %s21, 1
        %s180 = smul.addr %s179, 54
        %s181 = smul.addr %s180, 4
        %s182 = scalar_lea.vmem %s0, %s181
        %s183 = smul.u32 32, %s22
        %v185 = vld [vmem:[%s2] sm:$0x1]
        %v187 = vlaneseq
        %v188 = vshrl.u32 %v187, 7
        %v189 = vsub.s32 0, %v188
        %v190 = vrot.slane %v185, %v189
        %s192 = smul.u32 %s22, 16
        %s193 = smul.u32 %s192, 3
        %s194 = smul.addr %s193, 4
        %s195 = scalar_lea.vmem %s182, %s194
        %v196 = vld [vmem:[%s195] sm:$0xf]
        %v197 = vld [vmem:[%s195 + $0x4] sm:$0xf]
        %v198 = vld [vmem:[%s195 + $0xc] sm:$0xf]
        %v199 = vld [vmem:[%s195 + $0x10] sm:$0xf]
        %v200 = vld [vmem:[%s195 + $0x18] sm:$0xf]
        %v201 = vld [vmem:[%s195 + $0x1c] sm:$0xf]
        %v202 = vld [vmem:[%s195 + $0x24] sm:$0xf]
        %v203 = vld [vmem:[%s195 + $0x28] sm:$0xf]
        %v204 = vld [vmem:[%s195 + $0x30] sm:$0xf]
        %v205 = vld [vmem:[%s195 + $0x34] sm:$0xf]
        %v206 = vld [vmem:[%s195 + $0x3c] sm:$0xf]
        %v207 = vld [vmem:[%s195 + $0x40] sm:$0xf]
        %v208 = vld [vmem:[%s195 + $0x48] sm:$0xf]
        %v209 = vld [vmem:[%s195 + $0x4c] sm:$0xf]
        %v210 = vld [vmem:[%s195 + $0x54] sm:$0xf]
        %v211 = vld [vmem:[%s195 + $0x58] sm:$0xf]
        %v212 = vld [vmem:[%s195 + $0x60] sm:$0xf]
        %v213 = vld [vmem:[%s195 + $0x64] sm:$0xf]
        %v214 = vld [vmem:[%s195 + $0x6c] sm:$0xf]
        %v215 = vld [vmem:[%s195 + $0x70] sm:$0xf]
        %v216 = vld [vmem:[%s195 + $0x78] sm:$0xf]
        %v217 = vld [vmem:[%s195 + $0x7c] sm:$0xf]
        %v218 = vld [vmem:[%s195 + $0x84] sm:$0xf]
        %v219 = vld [vmem:[%s195 + $0x88] sm:$0xf]
        %v220 = vld [vmem:[%s195 + $0x90] sm:$0xf]
        %v221 = vld [vmem:[%s195 + $0x94] sm:$0xf]
        %v222 = vld [vmem:[%s195 + $0x9c] sm:$0xf]
        %v223 = vld [vmem:[%s195 + $0xa0] sm:$0xf]
        %v224 = vld [vmem:[%s195 + $0xa8] sm:$0xf]
        %v225 = vld [vmem:[%s195 + $0xac] sm:$0xf]
        %v226 = vld [vmem:[%s195 + $0xb4] sm:$0xf]
        %v227 = vld [vmem:[%s195 + $0xb8] sm:$0xf]
        %v228 = vld [vmem:[%s1] sm:$0x3]
        %v261 = vunpack.c.l.b16 %v196
        %v262 = vunpack.c.l.b16 %v197
        %v263 = vunpack.c.l.b16 %v198
        %v264 = vunpack.c.l.b16 %v199
        %v265 = vunpack.c.l.b16 %v200
        %v266 = vunpack.c.l.b16 %v201
        %v267 = vunpack.c.l.b16 %v202
        %v268 = vunpack.c.l.b16 %v203
        %v269 = vunpack.c.l.b16 %v204
        %v270 = vunpack.c.l.b16 %v205
        %v271 = vunpack.c.l.b16 %v206
        %v272 = vunpack.c.l.b16 %v207
        %v273 = vunpack.c.l.b16 %v208
        %v274 = vunpack.c.l.b16 %v209
        %v275 = vunpack.c.l.b16 %v210
        %v276 = vunpack.c.l.b16 %v211
        %v277 = vunpack.c.l.b16 %v212
        %v278 = vunpack.c.l.b16 %v213
        %v279 = vunpack.c.l.b16 %v214
        %v280 = vunpack.c.l.b16 %v215
        %v281 = vunpack.c.l.b16 %v216
        %v282 = vunpack.c.l.b16 %v217
        %v283 = vunpack.c.l.b16 %v218
        %v284 = vunpack.c.l.b16 %v219
        %v285 = vunpack.c.l.b16 %v220
        %v286 = vunpack.c.l.b16 %v221
        %v287 = vunpack.c.l.b16 %v222
        %v288 = vunpack.c.l.b16 %v223
        %v289 = vunpack.c.l.b16 %v224
        %v290 = vunpack.c.l.b16 %v225
        %v291 = vunpack.c.l.b16 %v226
        %v292 = vunpack.c.l.b16 %v227
        %v293 = vpack.c.b16 %v262, %v261
        %v294 = vpack.c.b16 %v264, %v263
        %v295 = vpack.c.b16 %v266, %v265
        %v296 = vpack.c.b16 %v268, %v267
        %v297 = vpack.c.b16 %v270, %v269
        %v298 = vpack.c.b16 %v272, %v271
        %v299 = vpack.c.b16 %v274, %v273
        %v300 = vpack.c.b16 %v276, %v275
        %v301 = vpack.c.b16 %v278, %v277
        %v302 = vpack.c.b16 %v280, %v279
        %v303 = vpack.c.b16 %v282, %v281
        %v304 = vpack.c.b16 %v284, %v283
        %v305 = vpack.c.b16 %v286, %v285
        %v306 = vpack.c.b16 %v288, %v287
        %v307 = vpack.c.b16 %v290, %v289
        %v308 = vpack.c.b16 %v292, %v291
        %vm309 = vcmask 31744
        %v311 = vsel %vm309, %v293, 0
        %v314 = vsel %vm309, %v294, 0
        %v317 = vsel %vm309, %v295, 0
        %v320 = vsel %vm309, %v296, 0
        %v323 = vsel %vm309, %v297, 0
        %v326 = vsel %vm309, %v298, 0
        %v329 = vsel %vm309, %v299, 0
        %v332 = vsel %vm309, %v300, 0
        %v335 = vsel %vm309, %v301, 0
        %v338 = vsel %vm309, %v302, 0
        %v341 = vsel %vm309, %v303, 0
        %v344 = vsel %vm309, %v304, 0
        %v347 = vsel %vm309, %v305, 0
        %v350 = vsel %vm309, %v306, 0
        %v353 = vsel %vm309, %v307, 0
        %v356 = vsel %vm309, %v308, 0
        %vm358 = vcmask 1041408
        %v360 = vsel %vm358, %v228, 0
        %362 = vmatprep.subr.bf16.mxu0 0
        %363 = vmatpush1.bf16.msra.mxu0 0
        %364 = vmatprep.subr.bf16.mxu0 0
        %365 = vmatpush1.bf16.msra.mxu0 0
        %366 = vmatprep.subr.bf16.mxu0 0
        %367 = vmatpush1.bf16.msra.mxu0 0
        %368 = vmatprep.subr.bf16.mxu0 0
        %369 = vmatpush1.bf16.msra.mxu0 0
        %370 = vmatprep.subr.bf16.mxu0 0
        %371 = vmatpush1.bf16.msra.mxu0 0
        %372 = vmatprep.subr.bf16.mxu0 0
        %373 = vmatpush1.bf16.msra.mxu0 0
        %374 = vmatprep.subr.bf16.mxu0 0
        %375 = vmatpush1.bf16.msra.mxu0 0
        %376 = vmatprep.subr.bf16.mxu0 0
        %377 = vmatpush1.bf16.msra.mxu0 %v360
        %378 = vmatprep.subr.bf16.mxu0 0
        %379 = vmatpush2.bf16.msra.mxu0 0
        %380 = vmatprep.subr.bf16.mxu0 0
        %381 = vmatpush2.bf16.msra.mxu0 0
        %382 = vmatprep.subr.bf16.mxu0 0
        %383 = vmatpush2.bf16.msra.mxu0 0
        %384 = vmatprep.subr.bf16.mxu0 0
        %385 = vmatpush2.bf16.msra.mxu0 0
        %386 = vmatprep.subr.bf16.mxu0 0
        %387 = vmatpush2.bf16.msra.mxu0 0
        %388 = vmatprep.subr.bf16.mxu0 0
        %389 = vmatpush2.bf16.msra.mxu0 0
        %390 = vmatprep.subr.bf16.mxu0 0
        %391 = vmatpush2.bf16.msra.mxu0 0
        %392 = vmatprep.subr.bf16.mxu0 0
        %393 = vmatpush2.bf16.msra.mxu0 0
        %394 = vmatprep.mubr.bf16.mxu0 0
        %395 = vmatmul.mubr.bf16.gmra.mxu0 %v311
        %v396 = vpop.f32.mrf.mxu0
        %v397 = vadd.f32 0.0, %v396
        %v398 = vpop.f32.mrf.mxu0
        %v399 = vpop.f32.mrf.mxu0
        %v400 = vadd.f32 0.0, %v399
        %v401 = vpop.f32.mrf.mxu0
        %402 = vmatprep.mubr.bf16.mxu0 0
        %403 = vmatmul.mubr.bf16.gmra.mxu0 %v314
        %v404 = vpop.f32.mrf.mxu0
        %v405 = vadd.f32 0.0, %v404
        %v406 = vpop.f32.mrf.mxu0
        %v407 = vpop.f32.mrf.mxu0
        %v408 = vadd.f32 0.0, %v407
        %v409 = vpop.f32.mrf.mxu0
        %410 = vmatprep.mubr.bf16.mxu0 0
        %411 = vmatmul.mubr.bf16.gmra.mxu0 %v317
        %v412 = vpop.f32.mrf.mxu0
        %v413 = vadd.f32 0.0, %v412
        %v414 = vpop.f32.mrf.mxu0
        %v415 = vpop.f32.mrf.mxu0
        %v416 = vadd.f32 0.0, %v415
        %v417 = vpop.f32.mrf.mxu0
        %418 = vmatprep.mubr.bf16.mxu0 0
        %419 = vmatmul.mubr.bf16.gmra.mxu0 %v320
        %v420 = vpop.f32.mrf.mxu0
        %v421 = vadd.f32 0.0, %v420
        %v422 = vpop.f32.mrf.mxu0
        %v423 = vpop.f32.mrf.mxu0
        %v424 = vadd.f32 0.0, %v423
        %v425 = vpop.f32.mrf.mxu0
        %426 = vmatprep.mubr.bf16.mxu0 0
        %427 = vmatmul.mubr.bf16.gmra.mxu0 %v323
        %v428 = vpop.f32.mrf.mxu0
        %v429 = vadd.f32 0.0, %v428
        %v430 = vpop.f32.mrf.mxu0
        %v431 = vpop.f32.mrf.mxu0
        %v432 = vadd.f32 0.0, %v431
        %v433 = vpop.f32.mrf.mxu0
        %434 = vmatprep.mubr.bf16.mxu0 0
        %435 = vmatmul.mubr.bf16.gmra.mxu0 %v326
        %v436 = vpop.f32.mrf.mxu0
        %v437 = vadd.f32 0.0, %v436
        %v438 = vpop.f32.mrf.mxu0
        %v439 = vpop.f32.mrf.mxu0
        %v440 = vadd.f32 0.0, %v439
        %v441 = vpop.f32.mrf.mxu0
        %442 = vmatprep.mubr.bf16.mxu0 0
        %443 = vmatmul.mubr.bf16.gmra.mxu0 %v329
        %v444 = vpop.f32.mrf.mxu0
        %v445 = vadd.f32 0.0, %v444
        %v446 = vpop.f32.mrf.mxu0
        %v447 = vpop.f32.mrf.mxu0
        %v448 = vadd.f32 0.0, %v447
        %v449 = vpop.f32.mrf.mxu0
        %450 = vmatprep.mubr.bf16.mxu0 0
        %451 = vmatmul.mubr.bf16.gmra.mxu0 %v332
        %v452 = vpop.f32.mrf.mxu0
        %v453 = vadd.f32 0.0, %v452
        %v454 = vpop.f32.mrf.mxu0
        %v455 = vpop.f32.mrf.mxu0
        %v456 = vadd.f32 0.0, %v455
        %v457 = vpop.f32.mrf.mxu0
        %458 = vmatprep.mubr.bf16.mxu0 0
        %459 = vmatmul.mubr.bf16.gmra.mxu0 %v335
        %v460 = vpop.f32.mrf.mxu0
        %v461 = vadd.f32 0.0, %v460
        %v462 = vpop.f32.mrf.mxu0
        %v463 = vpop.f32.mrf.mxu0
        %v464 = vadd.f32 0.0, %v463
        %v465 = vpop.f32.mrf.mxu0
        %466 = vmatprep.mubr.bf16.mxu0 0
        %467 = vmatmul.mubr.bf16.gmra.mxu0 %v338
        %v468 = vpop.f32.mrf.mxu0
        %v469 = vadd.f32 0.0, %v468
        %v470 = vpop.f32.mrf.mxu0
        %v471 = vpop.f32.mrf.mxu0
        %v472 = vadd.f32 0.0, %v471
        %v473 = vpop.f32.mrf.mxu0
        %474 = vmatprep.mubr.bf16.mxu0 0
        %475 = vmatmul.mubr.bf16.gmra.mxu0 %v341
        %v476 = vpop.f32.mrf.mxu0
        %v477 = vadd.f32 0.0, %v476
        %v478 = vpop.f32.mrf.mxu0
        %v479 = vpop.f32.mrf.mxu0
        %v480 = vadd.f32 0.0, %v479
        %v481 = vpop.f32.mrf.mxu0
        %482 = vmatprep.mubr.bf16.mxu0 0
        %483 = vmatmul.mubr.bf16.gmra.mxu0 %v344
        %v484 = vpop.f32.mrf.mxu0
        %v485 = vadd.f32 0.0, %v484
        %v486 = vpop.f32.mrf.mxu0
        %v487 = vpop.f32.mrf.mxu0
        %v488 = vadd.f32 0.0, %v487
        %v489 = vpop.f32.mrf.mxu0
        %490 = vmatprep.mubr.bf16.mxu0 0
        %491 = vmatmul.mubr.bf16.gmra.mxu0 %v347
        %v492 = vpop.f32.mrf.mxu0
        %v493 = vadd.f32 0.0, %v492
        %v494 = vpop.f32.mrf.mxu0
        %v495 = vpop.f32.mrf.mxu0
        %v496 = vadd.f32 0.0, %v495
        %v497 = vpop.f32.mrf.mxu0
        %498 = vmatprep.mubr.bf16.mxu0 0
        %499 = vmatmul.mubr.bf16.gmra.mxu0 %v350
        %v500 = vpop.f32.mrf.mxu0
        %v501 = vadd.f32 0.0, %v500
        %v502 = vpop.f32.mrf.mxu0
        %v503 = vpop.f32.mrf.mxu0
        %v504 = vadd.f32 0.0, %v503
        %v505 = vpop.f32.mrf.mxu0
        %506 = vmatprep.mubr.bf16.mxu0 0
        %507 = vmatmul.mubr.bf16.gmra.mxu0 %v353
        %v508 = vpop.f32.mrf.mxu0
        %v509 = vadd.f32 0.0, %v508
        %v510 = vpop.f32.mrf.mxu0
        %v511 = vpop.f32.mrf.mxu0
        %v512 = vadd.f32 0.0, %v511
        %v513 = vpop.f32.mrf.mxu0
        %514 = vmatprep.mubr.bf16.mxu0 0
        %515 = vmatmul.mubr.bf16.gmra.mxu0 %v356
        %v516 = vpop.f32.mrf.mxu0
        %v517 = vadd.f32 0.0, %v516
        %v518 = vpop.f32.mrf.mxu0
        %v519 = vpop.f32.mrf.mxu0
        %v520 = vadd.f32 0.0, %v519
        %v521 = vpop.f32.mrf.mxu0
        %522 = vdwg.mxu0
        %v523 = vadd.f32 %v190, %v397
        %v524 = vadd.f32 %v190, %v400
        %v525 = vadd.f32 %v190, %v405
        %v526 = vadd.f32 %v190, %v408
        %v527 = vadd.f32 %v190, %v413
        %v528 = vadd.f32 %v190, %v416
        %v529 = vadd.f32 %v190, %v421
        %v530 = vadd.f32 %v190, %v424
        %v531 = vadd.f32 %v190, %v429
        %v532 = vadd.f32 %v190, %v432
        %v533 = vadd.f32 %v190, %v437
        %v534 = vadd.f32 %v190, %v440
        %v535 = vadd.f32 %v190, %v445
        %v536 = vadd.f32 %v190, %v448
        %v537 = vadd.f32 %v190, %v453
        %v538 = vadd.f32 %v190, %v456
        %v539 = vadd.f32 %v190, %v461
        %v540 = vadd.f32 %v190, %v464
        %v541 = vadd.f32 %v190, %v469
        %v542 = vadd.f32 %v190, %v472
        %v543 = vadd.f32 %v190, %v477
        %v544 = vadd.f32 %v190, %v480
        %v545 = vadd.f32 %v190, %v485
        %v546 = vadd.f32 %v190, %v488
        %v547 = vadd.f32 %v190, %v493
        %v548 = vadd.f32 %v190, %v496
        %v549 = vadd.f32 %v190, %v501
        %v550 = vadd.f32 %v190, %v504
        %v551 = vadd.f32 %v190, %v509
        %v552 = vadd.f32 %v190, %v512
        %v553 = vadd.f32 %v190, %v517
        %v554 = vadd.f32 %v190, %v520
        %v555 = vld [vmem:[%s195] sm:$0xf]
        %v556 = vld [vmem:[%s195 + $0x4] sm:$0xf]
        %v557 = vld [vmem:[%s195 + $0x8] sm:$0x1]
        %v558 = vld [vmem:[%s195 + $0xc] sm:$0xf]
        %v559 = vld [vmem:[%s195 + $0x10] sm:$0xf]
        %v560 = vld [vmem:[%s195 + $0x14] sm:$0x1]
        %v561 = vld [vmem:[%s195 + $0x18] sm:$0xf]
        %v562 = vld [vmem:[%s195 + $0x1c] sm:$0xf]
        %v563 = vld [vmem:[%s195 + $0x20] sm:$0x1]
        %v564 = vld [vmem:[%s195 + $0x24] sm:$0xf]
        %v565 = vld [vmem:[%s195 + $0x28] sm:$0xf]
        %v566 = vld [vmem:[%s195 + $0x2c] sm:$0x1]
        %v567 = vld [vmem:[%s195 + $0x30] sm:$0xf]
        %v568 = vld [vmem:[%s195 + $0x34] sm:$0xf]
        %v569 = vld [vmem:[%s195 + $0x38] sm:$0x1]
        %v570 = vld [vmem:[%s195 + $0x3c] sm:$0xf]
        %v571 = vld [vmem:[%s195 + $0x40] sm:$0xf]
        %v572 = vld [vmem:[%s195 + $0x44] sm:$0x1]
        %v573 = vld [vmem:[%s195 + $0x48] sm:$0xf]
        %v574 = vld [vmem:[%s195 + $0x4c] sm:$0xf]
        %v575 = vld [vmem:[%s195 + $0x50] sm:$0x1]
        %v576 = vld [vmem:[%s195 + $0x54] sm:$0xf]
        %v577 = vld [vmem:[%s195 + $0x58] sm:$0xf]
        %v578 = vld [vmem:[%s195 + $0x5c] sm:$0x1]
        %v579 = vld [vmem:[%s195 + $0x60] sm:$0xf]
        %v580 = vld [vmem:[%s195 + $0x64] sm:$0xf]
        %v581 = vld [vmem:[%s195 + $0x68] sm:$0x1]
        %v582 = vld [vmem:[%s195 + $0x6c] sm:$0xf]
        %v583 = vld [vmem:[%s195 + $0x70] sm:$0xf]
        %v584 = vld [vmem:[%s195 + $0x74] sm:$0x1]
        %v585 = vld [vmem:[%s195 + $0x78] sm:$0xf]
        %v586 = vld [vmem:[%s195 + $0x7c] sm:$0xf]
        %v587 = vld [vmem:[%s195 + $0x80] sm:$0x1]
        %v588 = vld [vmem:[%s195 + $0x84] sm:$0xf]
        %v589 = vld [vmem:[%s195 + $0x88] sm:$0xf]
        %v590 = vld [vmem:[%s195 + $0x8c] sm:$0x1]
        %v591 = vld [vmem:[%s195 + $0x90] sm:$0xf]
        %v592 = vld [vmem:[%s195 + $0x94] sm:$0xf]
        %v593 = vld [vmem:[%s195 + $0x98] sm:$0x1]
        %v594 = vld [vmem:[%s195 + $0x9c] sm:$0xf]
        %v595 = vld [vmem:[%s195 + $0xa0] sm:$0xf]
        %v596 = vld [vmem:[%s195 + $0xa4] sm:$0x1]
        %v597 = vld [vmem:[%s195 + $0xa8] sm:$0xf]
        %v598 = vld [vmem:[%s195 + $0xac] sm:$0xf]
        %v599 = vld [vmem:[%s195 + $0xb0] sm:$0x1]
        %v600 = vld [vmem:[%s195 + $0xb4] sm:$0xf]
        %v601 = vld [vmem:[%s195 + $0xb8] sm:$0xf]
        %v602 = vld [vmem:[%s195 + $0xbc] sm:$0x1]
        %vm603 = vsmask.f32 3328
        %vm604 = vsmask.f32 7440
        %vm605 = vmor %vm603, %vm604
        %v607 = vshrl.u32 %v555, 16
        %v609 = vrot.slane %v607, 4
        %v610 = vshll.u32 %v555, 16
        %v612 = vrot.slane %v610, 5
        %v613 = vor.u32 %v609, %v612
        %v614 = vrot.slane %v613, 4
        %v616 = vshll.u32 %v556, 16
        %v618 = vrot.slane %v616, 5
        %v619 = vsel %vm605, %v614, %v618
        %v620 = vshrl.u32 %v556, 16
        %v622 = vrot.slane %v620, 4
        %v623 = vor.u32 %v622, %v618
        %v624 = vrot.slane %v623, 4
        %v626 = vshll.u32 %v557, 16
        %v628 = vrot.slane %v626, 5
        %v629 = vsel %vm605, %v624, %v628
        %v631 = vshrl.u32 %v558, 16
        %v633 = vrot.slane %v631, 4
        %v634 = vshll.u32 %v558, 16
        %v636 = vrot.slane %v634, 5
        %v637 = vor.u32 %v633, %v636
        %v638 = vrot.slane %v637, 4
        %v640 = vshll.u32 %v559, 16
        %v642 = vrot.slane %v640, 5
        %v643 = vsel %vm605, %v638, %v642
        %v644 = vshrl.u32 %v559, 16
        %v646 = vrot.slane %v644, 4
        %v647 = vor.u32 %v646, %v642
        %v648 = vrot.slane %v647, 4
        %v650 = vshll.u32 %v560, 16
        %v652 = vrot.slane %v650, 5
        %v653 = vsel %vm605, %v648, %v652
        %v655 = vshrl.u32 %v561, 16
        %v657 = vrot.slane %v655, 4
        %v658 = vshll.u32 %v561, 16
        %v660 = vrot.slane %v658, 5
        %v661 = vor.u32 %v657, %v660
        %v662 = vrot.slane %v661, 4
        %v664 = vshll.u32 %v562, 16
        %v666 = vrot.slane %v664, 5
        %v667 = vsel %vm605, %v662, %v666
        %v668 = vshrl.u32 %v562, 16
        %v670 = vrot.slane %v668, 4
        %v671 = vor.u32 %v670, %v666
        %v672 = vrot.slane %v671, 4
        %v674 = vshll.u32 %v563, 16
        %v676 = vrot.slane %v674, 5
        %v677 = vsel %vm605, %v672, %v676
        %v679 = vshrl.u32 %v564, 16
        %v681 = vrot.slane %v679, 4
        %v682 = vshll.u32 %v564, 16
        %v684 = vrot.slane %v682, 5
        %v685 = vor.u32 %v681, %v684
        %v686 = vrot.slane %v685, 4
        %v688 = vshll.u32 %v565, 16
        %v690 = vrot.slane %v688, 5
        %v691 = vsel %vm605, %v686, %v690
        %v692 = vshrl.u32 %v565, 16
        %v694 = vrot.slane %v692, 4
        %v695 = vor.u32 %v694, %v690
        %v696 = vrot.slane %v695, 4
        %v698 = vshll.u32 %v566, 16
        %v700 = vrot.slane %v698, 5
        %v701 = vsel %vm605, %v696, %v700
        %v703 = vshrl.u32 %v567, 16
        %v705 = vrot.slane %v703, 4
        %v706 = vshll.u32 %v567, 16
        %v708 = vrot.slane %v706, 5
        %v709 = vor.u32 %v705, %v708
        %v710 = vrot.slane %v709, 4
        %v712 = vshll.u32 %v568, 16
        %v714 = vrot.slane %v712, 5
        %v715 = vsel %vm605, %v710, %v714
        %v716 = vshrl.u32 %v568, 16
        %v718 = vrot.slane %v716, 4
        %v719 = vor.u32 %v718, %v714
        %v720 = vrot.slane %v719, 4
        %v722 = vshll.u32 %v569, 16
        %v724 = vrot.slane %v722, 5
        %v725 = vsel %vm605, %v720, %v724
        %v727 = vshrl.u32 %v570, 16
        %v729 = vrot.slane %v727, 4
        %v730 = vshll.u32 %v570, 16
        %v732 = vrot.slane %v730, 5
        %v733 = vor.u32 %v729, %v732
        %v734 = vrot.slane %v733, 4
        %v736 = vshll.u32 %v571, 16
        %v738 = vrot.slane %v736, 5
        %v739 = vsel %vm605, %v734, %v738
        %v740 = vshrl.u32 %v571, 16
        %v742 = vrot.slane %v740, 4
        %v743 = vor.u32 %v742, %v738
        %v744 = vrot.slane %v743, 4
        %v746 = vshll.u32 %v572, 16
        %v748 = vrot.slane %v746, 5
        %v749 = vsel %vm605, %v744, %v748
        %v751 = vshrl.u32 %v573, 16
        %v753 = vrot.slane %v751, 4
        %v754 = vshll.u32 %v573, 16
        %v756 = vrot.slane %v754, 5
        %v757 = vor.u32 %v753, %v756
        %v758 = vrot.slane %v757, 4
        %v760 = vshll.u32 %v574, 16
        %v762 = vrot.slane %v760, 5
        %v763 = vsel %vm605, %v758, %v762
        %v764 = vshrl.u32 %v574, 16
        %v766 = vrot.slane %v764, 4
        %v767 = vor.u32 %v766, %v762
        %v768 = vrot.slane %v767, 4
        %v770 = vshll.u32 %v575, 16
        %v772 = vrot.slane %v770, 5
        %v773 = vsel %vm605, %v768, %v772
        %v775 = vshrl.u32 %v576, 16
        %v777 = vrot.slane %v775, 4
        %v778 = vshll.u32 %v576, 16
        %v780 = vrot.slane %v778, 5
        %v781 = vor.u32 %v777, %v780
        %v782 = vrot.slane %v781, 4
        %v784 = vshll.u32 %v577, 16
        %v786 = vrot.slane %v784, 5
        %v787 = vsel %vm605, %v782, %v786
        %v788 = vshrl.u32 %v577, 16
        %v790 = vrot.slane %v788, 4
        %v791 = vor.u32 %v790, %v786
        %v792 = vrot.slane %v791, 4
        %v794 = vshll.u32 %v578, 16
        %v796 = vrot.slane %v794, 5
        %v797 = vsel %vm605, %v792, %v796
        %v799 = vshrl.u32 %v579, 16
        %v801 = vrot.slane %v799, 4
        %v802 = vshll.u32 %v579, 16
        %v804 = vrot.slane %v802, 5
        %v805 = vor.u32 %v801, %v804
        %v806 = vrot.slane %v805, 4
        %v808 = vshll.u32 %v580, 16
        %v810 = vrot.slane %v808, 5
        %v811 = vsel %vm605, %v806, %v810
        %v812 = vshrl.u32 %v580, 16
        %v814 = vrot.slane %v812, 4
        %v815 = vor.u32 %v814, %v810
        %v816 = vrot.slane %v815, 4
        %v818 = vshll.u32 %v581, 16
        %v820 = vrot.slane %v818, 5
        %v821 = vsel %vm605, %v816, %v820
        %v823 = vshrl.u32 %v582, 16
        %v825 = vrot.slane %v823, 4
        %v826 = vshll.u32 %v582, 16
        %v828 = vrot.slane %v826, 5
        %v829 = vor.u32 %v825, %v828
        %v830 = vrot.slane %v829, 4
        %v832 = vshll.u32 %v583, 16
        %v834 = vrot.slane %v832, 5
        %v835 = vsel %vm605, %v830, %v834
        %v836 = vshrl.u32 %v583, 16
        %v838 = vrot.slane %v836, 4
        %v839 = vor.u32 %v838, %v834
        %v840 = vrot.slane %v839, 4
        %v842 = vshll.u32 %v584, 16
        %v844 = vrot.slane %v842, 5
        %v845 = vsel %vm605, %v840, %v844
        %v847 = vshrl.u32 %v585, 16
        %v849 = vrot.slane %v847, 4
        %v850 = vshll.u32 %v585, 16
        %v852 = vrot.slane %v850, 5
        %v853 = vor.u32 %v849, %v852
        %v854 = vrot.slane %v853, 4
        %v856 = vshll.u32 %v586, 16
        %v858 = vrot.slane %v856, 5
        %v859 = vsel %vm605, %v854, %v858
        %v860 = vshrl.u32 %v586, 16
        %v862 = vrot.slane %v860, 4
        %v863 = vor.u32 %v862, %v858
        %v864 = vrot.slane %v863, 4
        %v866 = vshll.u32 %v587, 16
        %v868 = vrot.slane %v866, 5
        %v869 = vsel %vm605, %v864, %v868
        %v871 = vshrl.u32 %v588, 16
        %v873 = vrot.slane %v871, 4
        %v874 = vshll.u32 %v588, 16
        %v876 = vrot.slane %v874, 5
        %v877 = vor.u32 %v873, %v876
        %v878 = vrot.slane %v877, 4
        %v880 = vshll.u32 %v589, 16
        %v882 = vrot.slane %v880, 5
        %v883 = vsel %vm605, %v878, %v882
        %v884 = vshrl.u32 %v589, 16
        %v886 = vrot.slane %v884, 4
        %v887 = vor.u32 %v886, %v882
        %v888 = vrot.slane %v887, 4
        %v890 = vshll.u32 %v590, 16
        %v892 = vrot.slane %v890, 5
        %v893 = vsel %vm605, %v888, %v892
        %v895 = vshrl.u32 %v591, 16
        %v897 = vrot.slane %v895, 4
        %v898 = vshll.u32 %v591, 16
        %v900 = vrot.slane %v898, 5
        %v901 = vor.u32 %v897, %v900
        %v902 = vrot.slane %v901, 4
        %v904 = vshll.u32 %v592, 16
        %v906 = vrot.slane %v904, 5
        %v907 = vsel %vm605, %v902, %v906
        %v908 = vshrl.u32 %v592, 16
        %v910 = vrot.slane %v908, 4
        %v911 = vor.u32 %v910, %v906
        %v912 = vrot.slane %v911, 4
        %v914 = vshll.u32 %v593, 16
        %v916 = vrot.slane %v914, 5
        %v917 = vsel %vm605, %v912, %v916
        %v919 = vshrl.u32 %v594, 16
        %v921 = vrot.slane %v919, 4
        %v922 = vshll.u32 %v594, 16
        %v924 = vrot.slane %v922, 5
        %v925 = vor.u32 %v921, %v924
        %v926 = vrot.slane %v925, 4
        %v928 = vshll.u32 %v595, 16
        %v930 = vrot.slane %v928, 5
        %v931 = vsel %vm605, %v926, %v930
        %v932 = vshrl.u32 %v595, 16
        %v934 = vrot.slane %v932, 4
        %v935 = vor.u32 %v934, %v930
        %v936 = vrot.slane %v935, 4
        %v938 = vshll.u32 %v596, 16
        %v940 = vrot.slane %v938, 5
        %v941 = vsel %vm605, %v936, %v940
        %v943 = vshrl.u32 %v597, 16
        %v945 = vrot.slane %v943, 4
        %v946 = vshll.u32 %v597, 16
        %v948 = vrot.slane %v946, 5
        %v949 = vor.u32 %v945, %v948
        %v950 = vrot.slane %v949, 4
        %v952 = vshll.u32 %v598, 16
        %v954 = vrot.slane %v952, 5
        %v955 = vsel %vm605, %v950, %v954
        %v956 = vshrl.u32 %v598, 16
        %v958 = vrot.slane %v956, 4
        %v959 = vor.u32 %v958, %v954
        %v960 = vrot.slane %v959, 4
        %v962 = vshll.u32 %v599, 16
        %v964 = vrot.slane %v962, 5
        %v965 = vsel %vm605, %v960, %v964
        %v967 = vshrl.u32 %v600, 16
        %v969 = vrot.slane %v967, 4
        %v970 = vshll.u32 %v600, 16
        %v972 = vrot.slane %v970, 5
        %v973 = vor.u32 %v969, %v972
        %v974 = vrot.slane %v973, 4
        %v976 = vshll.u32 %v601, 16
        %v978 = vrot.slane %v976, 5
        %v979 = vsel %vm605, %v974, %v978
        %v980 = vshrl.u32 %v601, 16
        %v982 = vrot.slane %v980, 4
        %v983 = vor.u32 %v982, %v978
        %v984 = vrot.slane %v983, 4
        %v986 = vshll.u32 %v602, 16
        %v988 = vrot.slane %v986, 5
        %v989 = vsel %vm605, %v984, %v988
        %v990 = vld [vmem:[%s1] sm:$0xc]
        %v991 = vunpack.c.l.b16 %v619
        %v992 = vunpack.c.l.b16 %v629
        %v993 = vunpack.c.l.b16 %v643
        %v994 = vunpack.c.l.b16 %v653
        %v995 = vunpack.c.l.b16 %v667
        %v996 = vunpack.c.l.b16 %v677
        %v997 = vunpack.c.l.b16 %v691
        %v998 = vunpack.c.l.b16 %v701
        %v999 = vunpack.c.l.b16 %v715
        %v1000 = vunpack.c.l.b16 %v725
        %v1001 = vunpack.c.l.b16 %v739
        %v1002 = vunpack.c.l.b16 %v749
        %v1003 = vunpack.c.l.b16 %v763
        %v1004 = vunpack.c.l.b16 %v773
        %v1005 = vunpack.c.l.b16 %v787
        %v1006 = vunpack.c.l.b16 %v797
        %v1007 = vunpack.c.l.b16 %v811
        %v1008 = vunpack.c.l.b16 %v821
        %v1009 = vunpack.c.l.b16 %v835
        %v1010 = vunpack.c.l.b16 %v845
        %v1011 = vunpack.c.l.b16 %v859
        %v1012 = vunpack.c.l.b16 %v869
        %v1013 = vunpack.c.l.b16 %v883
        %v1014 = vunpack.c.l.b16 %v893
        %v1015 = vunpack.c.l.b16 %v907
        %v1016 = vunpack.c.l.b16 %v917
        %v1017 = vunpack.c.l.b16 %v931
        %v1018 = vunpack.c.l.b16 %v941
        %v1019 = vunpack.c.l.b16 %v955
        %v1020 = vunpack.c.l.b16 %v965
        %v1021 = vunpack.c.l.b16 %v979
        %v1022 = vunpack.c.l.b16 %v989
        %v1023 = vpack.c.b16 %v992, %v991
        %v1024 = vpack.c.b16 %v994, %v993
        %v1025 = vpack.c.b16 %v996, %v995
        %v1026 = vpack.c.b16 %v998, %v997
        %v1027 = vpack.c.b16 %v1000, %v999
        %v1028 = vpack.c.b16 %v1002, %v1001
        %v1029 = vpack.c.b16 %v1004, %v1003
        %v1030 = vpack.c.b16 %v1006, %v1005
        %v1031 = vpack.c.b16 %v1008, %v1007
        %v1032 = vpack.c.b16 %v1010, %v1009
        %v1033 = vpack.c.b16 %v1012, %v1011
        %v1034 = vpack.c.b16 %v1014, %v1013
        %v1035 = vpack.c.b16 %v1016, %v1015
        %v1036 = vpack.c.b16 %v1018, %v1017
        %v1037 = vpack.c.b16 %v1020, %v1019
        %v1038 = vpack.c.b16 %v1022, %v1021
        %v1040 = vunpack.c.l.b16 %v990
        %v1041 = vpack.c.b16 %v1040, %v1040
        %v1042 = vrot.slane %v1041, 2
        %v1044 = vsel %vm309, %v1023, 0
        %v1047 = vsel %vm309, %v1024, 0
        %v1050 = vsel %vm309, %v1025, 0
        %v1053 = vsel %vm309, %v1026, 0
        %v1056 = vsel %vm309, %v1027, 0
        %v1059 = vsel %vm309, %v1028, 0
        %v1062 = vsel %vm309, %v1029, 0
        %v1065 = vsel %vm309, %v1030, 0
        %v1068 = vsel %vm309, %v1031, 0
        %v1071 = vsel %vm309, %v1032, 0
        %v1074 = vsel %vm309, %v1033, 0
        %v1077 = vsel %vm309, %v1034, 0
        %v1080 = vsel %vm309, %v1035, 0
        %v1083 = vsel %vm309, %v1036, 0
        %v1086 = vsel %vm309, %v1037, 0
        %v1089 = vsel %vm309, %v1038, 0
        %v1092 = vsel %vm358, %v1042, 0
        %1094 = vmatprep.subr.bf16.mxu0 0
        %1095 = vmatpush1.bf16.msra.mxu0 0
        %1096 = vmatprep.subr.bf16.mxu0 0
        %1097 = vmatpush1.bf16.msra.mxu0 0
        %1098 = vmatprep.subr.bf16.mxu0 0
        %1099 = vmatpush1.bf16.msra.mxu0 0
        %1100 = vmatprep.subr.bf16.mxu0 0
        %1101 = vmatpush1.bf16.msra.mxu0 0
        %1102 = vmatprep.subr.bf16.mxu0 0
        %1103 = vmatpush1.bf16.msra.mxu0 0
        %1104 = vmatprep.subr.bf16.mxu0 0
        %1105 = vmatpush1.bf16.msra.mxu0 0
        %1106 = vmatprep.subr.bf16.mxu0 0
        %1107 = vmatpush1.bf16.msra.mxu0 0
        %1108 = vmatprep.subr.bf16.mxu0 0
        %1109 = vmatpush1.bf16.msra.mxu0 %v1092
        %1110 = vmatprep.subr.bf16.mxu0 0
        %1111 = vmatpush2.bf16.msra.mxu0 0
        %1112 = vmatprep.subr.bf16.mxu0 0
        %1113 = vmatpush2.bf16.msra.mxu0 0
        %1114 = vmatprep.subr.bf16.mxu0 0
        %1115 = vmatpush2.bf16.msra.mxu0 0
        %1116 = vmatprep.subr.bf16.mxu0 0
        %1117 = vmatpush2.bf16.msra.mxu0 0
        %1118 = vmatprep.subr.bf16.mxu0 0
        %1119 = vmatpush2.bf16.msra.mxu0 0
        %1120 = vmatprep.subr.bf16.mxu0 0
        %1121 = vmatpush2.bf16.msra.mxu0 0
        %1122 = vmatprep.subr.bf16.mxu0 0
        %1123 = vmatpush2.bf16.msra.mxu0 0
        %1124 = vmatprep.subr.bf16.mxu0 0
        %1125 = vmatpush2.bf16.msra.mxu0 0
        %1126 = vmatprep.mubr.bf16.mxu0 0
        %1127 = vmatmul.mubr.bf16.gmra.mxu0 %v1044
        %v1128 = vpop.f32.mrf.mxu0
        %v1129 = vadd.f32 0.0, %v1128
        %v1130 = vpop.f32.mrf.mxu0
        %v1131 = vpop.f32.mrf.mxu0
        %v1132 = vadd.f32 0.0, %v1131
        %v1133 = vpop.f32.mrf.mxu0
        %1134 = vmatprep.mubr.bf16.mxu0 0
        %1135 = vmatmul.mubr.bf16.gmra.mxu0 %v1047
        %v1136 = vpop.f32.mrf.mxu0
        %v1137 = vadd.f32 0.0, %v1136
        %v1138 = vpop.f32.mrf.mxu0
        %v1139 = vpop.f32.mrf.mxu0
        %v1140 = vadd.f32 0.0, %v1139
        %v1141 = vpop.f32.mrf.mxu0
        %1142 = vmatprep.mubr.bf16.mxu0 0
        %1143 = vmatmul.mubr.bf16.gmra.mxu0 %v1050
        %v1144 = vpop.f32.mrf.mxu0
        %v1145 = vadd.f32 0.0, %v1144
        %v1146 = vpop.f32.mrf.mxu0
        %v1147 = vpop.f32.mrf.mxu0
        %v1148 = vadd.f32 0.0, %v1147
        %v1149 = vpop.f32.mrf.mxu0
        %1150 = vmatprep.mubr.bf16.mxu0 0
        %1151 = vmatmul.mubr.bf16.gmra.mxu0 %v1053
        %v1152 = vpop.f32.mrf.mxu0
        %v1153 = vadd.f32 0.0, %v1152
        %v1154 = vpop.f32.mrf.mxu0
        %v1155 = vpop.f32.mrf.mxu0
        %v1156 = vadd.f32 0.0, %v1155
        %v1157 = vpop.f32.mrf.mxu0
        %1158 = vmatprep.mubr.bf16.mxu0 0
        %1159 = vmatmul.mubr.bf16.gmra.mxu0 %v1056
        %v1160 = vpop.f32.mrf.mxu0
        %v1161 = vadd.f32 0.0, %v1160
        %v1162 = vpop.f32.mrf.mxu0
        %v1163 = vpop.f32.mrf.mxu0
        %v1164 = vadd.f32 0.0, %v1163
        %v1165 = vpop.f32.mrf.mxu0
        %1166 = vmatprep.mubr.bf16.mxu0 0
        %1167 = vmatmul.mubr.bf16.gmra.mxu0 %v1059
        %v1168 = vpop.f32.mrf.mxu0
        %v1169 = vadd.f32 0.0, %v1168
        %v1170 = vpop.f32.mrf.mxu0
        %v1171 = vpop.f32.mrf.mxu0
        %v1172 = vadd.f32 0.0, %v1171
        %v1173 = vpop.f32.mrf.mxu0
        %1174 = vmatprep.mubr.bf16.mxu0 0
        %1175 = vmatmul.mubr.bf16.gmra.mxu0 %v1062
        %v1176 = vpop.f32.mrf.mxu0
        %v1177 = vadd.f32 0.0, %v1176
        %v1178 = vpop.f32.mrf.mxu0
        %v1179 = vpop.f32.mrf.mxu0
        %v1180 = vadd.f32 0.0, %v1179
        %v1181 = vpop.f32.mrf.mxu0
        %1182 = vmatprep.mubr.bf16.mxu0 0
        %1183 = vmatmul.mubr.bf16.gmra.mxu0 %v1065
        %v1184 = vpop.f32.mrf.mxu0
        %v1185 = vadd.f32 0.0, %v1184
        %v1186 = vpop.f32.mrf.mxu0
        %v1187 = vpop.f32.mrf.mxu0
        %v1188 = vadd.f32 0.0, %v1187
        %v1189 = vpop.f32.mrf.mxu0
        %1190 = vmatprep.mubr.bf16.mxu0 0
        %1191 = vmatmul.mubr.bf16.gmra.mxu0 %v1068
        %v1192 = vpop.f32.mrf.mxu0
        %v1193 = vadd.f32 0.0, %v1192
        %v1194 = vpop.f32.mrf.mxu0
        %v1195 = vpop.f32.mrf.mxu0
        %v1196 = vadd.f32 0.0, %v1195
        %v1197 = vpop.f32.mrf.mxu0
        %1198 = vmatprep.mubr.bf16.mxu0 0
        %1199 = vmatmul.mubr.bf16.gmra.mxu0 %v1071
        %v1200 = vpop.f32.mrf.mxu0
        %v1201 = vadd.f32 0.0, %v1200
        %v1202 = vpop.f32.mrf.mxu0
        %v1203 = vpop.f32.mrf.mxu0
        %v1204 = vadd.f32 0.0, %v1203
        %v1205 = vpop.f32.mrf.mxu0
        %1206 = vmatprep.mubr.bf16.mxu0 0
        %1207 = vmatmul.mubr.bf16.gmra.mxu0 %v1074
        %v1208 = vpop.f32.mrf.mxu0
        %v1209 = vadd.f32 0.0, %v1208
        %v1210 = vpop.f32.mrf.mxu0
        %v1211 = vpop.f32.mrf.mxu0
        %v1212 = vadd.f32 0.0, %v1211
        %v1213 = vpop.f32.mrf.mxu0
        %1214 = vmatprep.mubr.bf16.mxu0 0
        %1215 = vmatmul.mubr.bf16.gmra.mxu0 %v1077
        %v1216 = vpop.f32.mrf.mxu0
        %v1217 = vadd.f32 0.0, %v1216
        %v1218 = vpop.f32.mrf.mxu0
        %v1219 = vpop.f32.mrf.mxu0
        %v1220 = vadd.f32 0.0, %v1219
        %v1221 = vpop.f32.mrf.mxu0
        %1222 = vmatprep.mubr.bf16.mxu0 0
        %1223 = vmatmul.mubr.bf16.gmra.mxu0 %v1080
        %v1224 = vpop.f32.mrf.mxu0
        %v1225 = vadd.f32 0.0, %v1224
        %v1226 = vpop.f32.mrf.mxu0
        %v1227 = vpop.f32.mrf.mxu0
        %v1228 = vadd.f32 0.0, %v1227
        %v1229 = vpop.f32.mrf.mxu0
        %1230 = vmatprep.mubr.bf16.mxu0 0
        %1231 = vmatmul.mubr.bf16.gmra.mxu0 %v1083
        %v1232 = vpop.f32.mrf.mxu0
        %v1233 = vadd.f32 0.0, %v1232
        %v1234 = vpop.f32.mrf.mxu0
        %v1235 = vpop.f32.mrf.mxu0
        %v1236 = vadd.f32 0.0, %v1235
        %v1237 = vpop.f32.mrf.mxu0
        %1238 = vmatprep.mubr.bf16.mxu0 0
        %1239 = vmatmul.mubr.bf16.gmra.mxu0 %v1086
        %v1240 = vpop.f32.mrf.mxu0
        %v1241 = vadd.f32 0.0, %v1240
        %v1242 = vpop.f32.mrf.mxu0
        %v1243 = vpop.f32.mrf.mxu0
        %v1244 = vadd.f32 0.0, %v1243
        %v1245 = vpop.f32.mrf.mxu0
        %1246 = vmatprep.mubr.bf16.mxu0 0
        %1247 = vmatmul.mubr.bf16.gmra.mxu0 %v1089
        %v1248 = vpop.f32.mrf.mxu0
        %v1249 = vadd.f32 0.0, %v1248
        %v1250 = vpop.f32.mrf.mxu0
        %v1251 = vpop.f32.mrf.mxu0
        %v1252 = vadd.f32 0.0, %v1251
        %v1253 = vpop.f32.mrf.mxu0
        %1254 = vdwg.mxu0
        %v1255 = vadd.f32 %v523, %v1129
        %v1256 = vadd.f32 %v524, %v1132
        %v1257 = vadd.f32 %v525, %v1137
        %v1258 = vadd.f32 %v526, %v1140
        %v1259 = vadd.f32 %v527, %v1145
        %v1260 = vadd.f32 %v528, %v1148
        %v1261 = vadd.f32 %v529, %v1153
        %v1262 = vadd.f32 %v530, %v1156
        %v1263 = vadd.f32 %v531, %v1161
        %v1264 = vadd.f32 %v532, %v1164
        %v1265 = vadd.f32 %v533, %v1169
        %v1266 = vadd.f32 %v534, %v1172
        %v1267 = vadd.f32 %v535, %v1177
        %v1268 = vadd.f32 %v536, %v1180
        %v1269 = vadd.f32 %v537, %v1185
        %v1270 = vadd.f32 %v538, %v1188
        %v1271 = vadd.f32 %v539, %v1193
        %v1272 = vadd.f32 %v540, %v1196
        %v1273 = vadd.f32 %v541, %v1201
        %v1274 = vadd.f32 %v542, %v1204
        %v1275 = vadd.f32 %v543, %v1209
        %v1276 = vadd.f32 %v544, %v1212
        %v1277 = vadd.f32 %v545, %v1217
        %v1278 = vadd.f32 %v546, %v1220
        %v1279 = vadd.f32 %v547, %v1225
        %v1280 = vadd.f32 %v548, %v1228
        %v1281 = vadd.f32 %v549, %v1233
        %v1282 = vadd.f32 %v550, %v1236
        %v1283 = vadd.f32 %v551, %v1241
        %v1284 = vadd.f32 %v552, %v1244
        %v1285 = vadd.f32 %v553, %v1249
        %v1286 = vadd.f32 %v554, %v1252
        %v1287 = vld [vmem:[%s195] sm:$0xe]
        %v1288 = vld [vmem:[%s195 + $0xc] sm:$0xe]
        %v1289 = vld [vmem:[%s195 + $0x18] sm:$0xe]
        %v1290 = vld [vmem:[%s195 + $0x24] sm:$0xe]
        %v1291 = vld [vmem:[%s195 + $0x30] sm:$0xe]
        %v1292 = vld [vmem:[%s195 + $0x3c] sm:$0xe]
        %v1293 = vld [vmem:[%s195 + $0x48] sm:$0xe]
        %v1294 = vld [vmem:[%s195 + $0x54] sm:$0xe]
        %v1295 = vld [vmem:[%s195 + $0x60] sm:$0xe]
        %v1296 = vld [vmem:[%s195 + $0x6c] sm:$0xe]
        %v1297 = vld [vmem:[%s195 + $0x78] sm:$0xe]
        %v1298 = vld [vmem:[%s195 + $0x84] sm:$0xe]
        %v1299 = vld [vmem:[%s195 + $0x90] sm:$0xe]
        %v1300 = vld [vmem:[%s195 + $0x9c] sm:$0xe]
        %v1301 = vld [vmem:[%s195 + $0xa8] sm:$0xe]
        %v1302 = vld [vmem:[%s195 + $0xb4] sm:$0xe]
        %vm1351 = vcmask 1042432
        %vm1352 = vcmask 1046532
        %vm1353 = vmor %vm1351, %vm1352
        %v1354 = vrot.slane %v1287, 5
        %v1355 = vrot.slane %v1354, 4
        %v1356 = vrot.slane %v556, 5
        %v1357 = vsel %vm1353, %v1355, %v1356
        %v1358 = vrot.slane %v1356, 4
        %v1359 = vrot.slane %v557, 5
        %v1360 = vsel %vm1353, %v1358, %v1359
        %v1361 = vrot.slane %v1288, 5
        %v1362 = vrot.slane %v1361, 4
        %v1363 = vrot.slane %v559, 5
        %v1364 = vsel %vm1353, %v1362, %v1363
        %v1365 = vrot.slane %v1363, 4
        %v1366 = vrot.slane %v560, 5
        %v1367 = vsel %vm1353, %v1365, %v1366
        %v1368 = vrot.slane %v1289, 5
        %v1369 = vrot.slane %v1368, 4
        %v1370 = vrot.slane %v562, 5
        %v1371 = vsel %vm1353, %v1369, %v1370
        %v1372 = vrot.slane %v1370, 4
        %v1373 = vrot.slane %v563, 5
        %v1374 = vsel %vm1353, %v1372, %v1373
        %v1375 = vrot.slane %v1290, 5
        %v1376 = vrot.slane %v1375, 4
        %v1377 = vrot.slane %v565, 5
        %v1378 = vsel %vm1353, %v1376, %v1377
        %v1379 = vrot.slane %v1377, 4
        %v1380 = vrot.slane %v566, 5
        %v1381 = vsel %vm1353, %v1379, %v1380
        %v1382 = vrot.slane %v1291, 5
        %v1383 = vrot.slane %v1382, 4
        %v1384 = vrot.slane %v568, 5
        %v1385 = vsel %vm1353, %v1383, %v1384
        %v1386 = vrot.slane %v1384, 4
        %v1387 = vrot.slane %v569, 5
        %v1388 = vsel %vm1353, %v1386, %v1387
        %v1389 = vrot.slane %v1292, 5
        %v1390 = vrot.slane %v1389, 4
        %v1391 = vrot.slane %v571, 5
        %v1392 = vsel %vm1353, %v1390, %v1391
        %v1393 = vrot.slane %v1391, 4
        %v1394 = vrot.slane %v572, 5
        %v1395 = vsel %vm1353, %v1393, %v1394
        %v1396 = vrot.slane %v1293, 5
        %v1397 = vrot.slane %v1396, 4
        %v1398 = vrot.slane %v574, 5
        %v1399 = vsel %vm1353, %v1397, %v1398
        %v1400 = vrot.slane %v1398, 4
        %v1401 = vrot.slane %v575, 5
        %v1402 = vsel %vm1353, %v1400, %v1401
        %v1403 = vrot.slane %v1294, 5
        %v1404 = vrot.slane %v1403, 4
        %v1405 = vrot.slane %v577, 5
        %v1406 = vsel %vm1353, %v1404, %v1405
        %v1407 = vrot.slane %v1405, 4
        %v1408 = vrot.slane %v578, 5
        %v1409 = vsel %vm1353, %v1407, %v1408
        %v1410 = vrot.slane %v1295, 5
        %v1411 = vrot.slane %v1410, 4
        %v1412 = vrot.slane %v580, 5
        %v1413 = vsel %vm1353, %v1411, %v1412
        %v1414 = vrot.slane %v1412, 4
        %v1415 = vrot.slane %v581, 5
        %v1416 = vsel %vm1353, %v1414, %v1415
        %v1417 = vrot.slane %v1296, 5
        %v1418 = vrot.slane %v1417, 4
        %v1419 = vrot.slane %v583, 5
        %v1420 = vsel %vm1353, %v1418, %v1419
        %v1421 = vrot.slane %v1419, 4
        %v1422 = vrot.slane %v584, 5
        %v1423 = vsel %vm1353, %v1421, %v1422
        %v1424 = vrot.slane %v1297, 5
        %v1425 = vrot.slane %v1424, 4
        %v1426 = vrot.slane %v586, 5
        %v1427 = vsel %vm1353, %v1425, %v1426
        %v1428 = vrot.slane %v1426, 4
        %v1429 = vrot.slane %v587, 5
        %v1430 = vsel %vm1353, %v1428, %v1429
        %v1431 = vrot.slane %v1298, 5
        %v1432 = vrot.slane %v1431, 4
        %v1433 = vrot.slane %v589, 5
        %v1434 = vsel %vm1353, %v1432, %v1433
        %v1435 = vrot.slane %v1433, 4
        %v1436 = vrot.slane %v590, 5
        %v1437 = vsel %vm1353, %v1435, %v1436
        %v1438 = vrot.slane %v1299, 5
        %v1439 = vrot.slane %v1438, 4
        %v1440 = vrot.slane %v592, 5
        %v1441 = vsel %vm1353, %v1439, %v1440
        %v1442 = vrot.slane %v1440, 4
        %v1443 = vrot.slane %v593, 5
        %v1444 = vsel %vm1353, %v1442, %v1443
        %v1445 = vrot.slane %v1300, 5
        %v1446 = vrot.slane %v1445, 4
        %v1447 = vrot.slane %v595, 5
        %v1448 = vsel %vm1353, %v1446, %v1447
        %v1449 = vrot.slane %v1447, 4
        %v1450 = vrot.slane %v596, 5
        %v1451 = vsel %vm1353, %v1449, %v1450
        %v1452 = vrot.slane %v1301, 5
        %v1453 = vrot.slane %v1452, 4
        %v1454 = vrot.slane %v598, 5
        %v1455 = vsel %vm1353, %v1453, %v1454
        %v1456 = vrot.slane %v1454, 4
        %v1457 = vrot.slane %v599, 5
        %v1458 = vsel %vm1353, %v1456, %v1457
        %v1459 = vrot.slane %v1302, 5
        %v1460 = vrot.slane %v1459, 4
        %v1461 = vrot.slane %v601, 5
        %v1462 = vsel %vm1353, %v1460, %v1461
        %v1463 = vrot.slane %v1461, 4
        %v1464 = vrot.slane %v602, 5
        %v1465 = vsel %vm1353, %v1463, %v1464
        %v1466 = vld [vmem:[%s1 + $0x4] sm:$0x3]
        %v1467 = vunpack.c.l.b16 %v1357
        %v1468 = vunpack.c.l.b16 %v1360
        %v1469 = vunpack.c.l.b16 %v1364
        %v1470 = vunpack.c.l.b16 %v1367
        %v1471 = vunpack.c.l.b16 %v1371
        %v1472 = vunpack.c.l.b16 %v1374
        %v1473 = vunpack.c.l.b16 %v1378
        %v1474 = vunpack.c.l.b16 %v1381
        %v1475 = vunpack.c.l.b16 %v1385
        %v1476 = vunpack.c.l.b16 %v1388
        %v1477 = vunpack.c.l.b16 %v1392
        %v1478 = vunpack.c.l.b16 %v1395
        %v1479 = vunpack.c.l.b16 %v1399
        %v1480 = vunpack.c.l.b16 %v1402
        %v1481 = vunpack.c.l.b16 %v1406
        %v1482 = vunpack.c.l.b16 %v1409
        %v1483 = vunpack.c.l.b16 %v1413
        %v1484 = vunpack.c.l.b16 %v1416
        %v1485 = vunpack.c.l.b16 %v1420
        %v1486 = vunpack.c.l.b16 %v1423
        %v1487 = vunpack.c.l.b16 %v1427
        %v1488 = vunpack.c.l.b16 %v1430
        %v1489 = vunpack.c.l.b16 %v1434
        %v1490 = vunpack.c.l.b16 %v1437
        %v1491 = vunpack.c.l.b16 %v1441
        %v1492 = vunpack.c.l.b16 %v1444
        %v1493 = vunpack.c.l.b16 %v1448
        %v1494 = vunpack.c.l.b16 %v1451
        %v1495 = vunpack.c.l.b16 %v1455
        %v1496 = vunpack.c.l.b16 %v1458
        %v1497 = vunpack.c.l.b16 %v1462
        %v1498 = vunpack.c.l.b16 %v1465
        %v1499 = vpack.c.b16 %v1468, %v1467
        %v1500 = vpack.c.b16 %v1470, %v1469
        %v1501 = vpack.c.b16 %v1472, %v1471
        %v1502 = vpack.c.b16 %v1474, %v1473
        %v1503 = vpack.c.b16 %v1476, %v1475
        %v1504 = vpack.c.b16 %v1478, %v1477
        %v1505 = vpack.c.b16 %v1480, %v1479
        %v1506 = vpack.c.b16 %v1482, %v1481
        %v1507 = vpack.c.b16 %v1484, %v1483
        %v1508 = vpack.c.b16 %v1486, %v1485
        %v1509 = vpack.c.b16 %v1488, %v1487
        %v1510 = vpack.c.b16 %v1490, %v1489
        %v1511 = vpack.c.b16 %v1492, %v1491
        %v1512 = vpack.c.b16 %v1494, %v1493
        %v1513 = vpack.c.b16 %v1496, %v1495
        %v1514 = vpack.c.b16 %v1498, %v1497
        %v1516 = vsel %vm309, %v1499, 0
        %v1519 = vsel %vm309, %v1500, 0
        %v1522 = vsel %vm309, %v1501, 0
        %v1525 = vsel %vm309, %v1502, 0
        %v1528 = vsel %vm309, %v1503, 0
        %v1531 = vsel %vm309, %v1504, 0
        %v1534 = vsel %vm309, %v1505, 0
        %v1537 = vsel %vm309, %v1506, 0
        %v1540 = vsel %vm309, %v1507, 0
        %v1543 = vsel %vm309, %v1508, 0
        %v1546 = vsel %vm309, %v1509, 0
        %v1549 = vsel %vm309, %v1510, 0
        %v1552 = vsel %vm309, %v1511, 0
        %v1555 = vsel %vm309, %v1512, 0
        %v1558 = vsel %vm309, %v1513, 0
        %v1561 = vsel %vm309, %v1514, 0
        %v1564 = vsel %vm358, %v1466, 0
        %1566 = vmatprep.subr.bf16.mxu0 0
        %1567 = vmatpush1.bf16.msra.mxu0 0
        %1568 = vmatprep.subr.bf16.mxu0 0
        %1569 = vmatpush1.bf16.msra.mxu0 0
        %1570 = vmatprep.subr.bf16.mxu0 0
        %1571 = vmatpush1.bf16.msra.mxu0 0
        %1572 = vmatprep.subr.bf16.mxu0 0
        %1573 = vmatpush1.bf16.msra.mxu0 0
        %1574 = vmatprep.subr.bf16.mxu0 0
        %1575 = vmatpush1.bf16.msra.mxu0 0
        %1576 = vmatprep.subr.bf16.mxu0 0
        %1577 = vmatpush1.bf16.msra.mxu0 0
        %1578 = vmatprep.subr.bf16.mxu0 0
        %1579 = vmatpush1.bf16.msra.mxu0 0
        %1580 = vmatprep.subr.bf16.mxu0 0
        %1581 = vmatpush1.bf16.msra.mxu0 %v1564
        %1582 = vmatprep.subr.bf16.mxu0 0
        %1583 = vmatpush2.bf16.msra.mxu0 0
        %1584 = vmatprep.subr.bf16.mxu0 0
        %1585 = vmatpush2.bf16.msra.mxu0 0
        %1586 = vmatprep.subr.bf16.mxu0 0
        %1587 = vmatpush2.bf16.msra.mxu0 0
        %1588 = vmatprep.subr.bf16.mxu0 0
        %1589 = vmatpush2.bf16.msra.mxu0 0
        %1590 = vmatprep.subr.bf16.mxu0 0
        %1591 = vmatpush2.bf16.msra.mxu0 0
        %1592 = vmatprep.subr.bf16.mxu0 0
        %1593 = vmatpush2.bf16.msra.mxu0 0
        %1594 = vmatprep.subr.bf16.mxu0 0
        %1595 = vmatpush2.bf16.msra.mxu0 0
        %1596 = vmatprep.subr.bf16.mxu0 0
        %1597 = vmatpush2.bf16.msra.mxu0 0
        %1598 = vmatprep.mubr.bf16.mxu0 0
        %1599 = vmatmul.mubr.bf16.gmra.mxu0 %v1516
        %v1600 = vpop.f32.mrf.mxu0
        %v1601 = vadd.f32 0.0, %v1600
        %v1602 = vpop.f32.mrf.mxu0
        %v1603 = vpop.f32.mrf.mxu0
        %v1604 = vadd.f32 0.0, %v1603
        %v1605 = vpop.f32.mrf.mxu0
        %1606 = vmatprep.mubr.bf16.mxu0 0
        %1607 = vmatmul.mubr.bf16.gmra.mxu0 %v1519
        %v1608 = vpop.f32.mrf.mxu0
        %v1609 = vadd.f32 0.0, %v1608
        %v1610 = vpop.f32.mrf.mxu0
        %v1611 = vpop.f32.mrf.mxu0
        %v1612 = vadd.f32 0.0, %v1611
        %v1613 = vpop.f32.mrf.mxu0
        %1614 = vmatprep.mubr.bf16.mxu0 0
        %1615 = vmatmul.mubr.bf16.gmra.mxu0 %v1522
        %v1616 = vpop.f32.mrf.mxu0
        %v1617 = vadd.f32 0.0, %v1616
        %v1618 = vpop.f32.mrf.mxu0
        %v1619 = vpop.f32.mrf.mxu0
        %v1620 = vadd.f32 0.0, %v1619
        %v1621 = vpop.f32.mrf.mxu0
        %1622 = vmatprep.mubr.bf16.mxu0 0
        %1623 = vmatmul.mubr.bf16.gmra.mxu0 %v1525
        %v1624 = vpop.f32.mrf.mxu0
        %v1625 = vadd.f32 0.0, %v1624
        %v1626 = vpop.f32.mrf.mxu0
        %v1627 = vpop.f32.mrf.mxu0
        %v1628 = vadd.f32 0.0, %v1627
        %v1629 = vpop.f32.mrf.mxu0
        %1630 = vmatprep.mubr.bf16.mxu0 0
        %1631 = vmatmul.mubr.bf16.gmra.mxu0 %v1528
        %v1632 = vpop.f32.mrf.mxu0
        %v1633 = vadd.f32 0.0, %v1632
        %v1634 = vpop.f32.mrf.mxu0
        %v1635 = vpop.f32.mrf.mxu0
        %v1636 = vadd.f32 0.0, %v1635
        %v1637 = vpop.f32.mrf.mxu0
        %1638 = vmatprep.mubr.bf16.mxu0 0
        %1639 = vmatmul.mubr.bf16.gmra.mxu0 %v1531
        %v1640 = vpop.f32.mrf.mxu0
        %v1641 = vadd.f32 0.0, %v1640
        %v1642 = vpop.f32.mrf.mxu0
        %v1643 = vpop.f32.mrf.mxu0
        %v1644 = vadd.f32 0.0, %v1643
        %v1645 = vpop.f32.mrf.mxu0
        %1646 = vmatprep.mubr.bf16.mxu0 0
        %1647 = vmatmul.mubr.bf16.gmra.mxu0 %v1534
        %v1648 = vpop.f32.mrf.mxu0
        %v1649 = vadd.f32 0.0, %v1648
        %v1650 = vpop.f32.mrf.mxu0
        %v1651 = vpop.f32.mrf.mxu0
        %v1652 = vadd.f32 0.0, %v1651
        %v1653 = vpop.f32.mrf.mxu0
        %1654 = vmatprep.mubr.bf16.mxu0 0
        %1655 = vmatmul.mubr.bf16.gmra.mxu0 %v1537
        %v1656 = vpop.f32.mrf.mxu0
        %v1657 = vadd.f32 0.0, %v1656
        %v1658 = vpop.f32.mrf.mxu0
        %v1659 = vpop.f32.mrf.mxu0
        %v1660 = vadd.f32 0.0, %v1659
        %v1661 = vpop.f32.mrf.mxu0
        %1662 = vmatprep.mubr.bf16.mxu0 0
        %1663 = vmatmul.mubr.bf16.gmra.mxu0 %v1540
        %v1664 = vpop.f32.mrf.mxu0
        %v1665 = vadd.f32 0.0, %v1664
        %v1666 = vpop.f32.mrf.mxu0
        %v1667 = vpop.f32.mrf.mxu0
        %v1668 = vadd.f32 0.0, %v1667
        %v1669 = vpop.f32.mrf.mxu0
        %1670 = vmatprep.mubr.bf16.mxu0 0
        %1671 = vmatmul.mubr.bf16.gmra.mxu0 %v1543
        %v1672 = vpop.f32.mrf.mxu0
        %v1673 = vadd.f32 0.0, %v1672
        %v1674 = vpop.f32.mrf.mxu0
        %v1675 = vpop.f32.mrf.mxu0
        %v1676 = vadd.f32 0.0, %v1675
        %v1677 = vpop.f32.mrf.mxu0
        %1678 = vmatprep.mubr.bf16.mxu0 0
        %1679 = vmatmul.mubr.bf16.gmra.mxu0 %v1546
        %v1680 = vpop.f32.mrf.mxu0
        %v1681 = vadd.f32 0.0, %v1680
        %v1682 = vpop.f32.mrf.mxu0
        %v1683 = vpop.f32.mrf.mxu0
        %v1684 = vadd.f32 0.0, %v1683
        %v1685 = vpop.f32.mrf.mxu0
        %1686 = vmatprep.mubr.bf16.mxu0 0
        %1687 = vmatmul.mubr.bf16.gmra.mxu0 %v1549
        %v1688 = vpop.f32.mrf.mxu0
        %v1689 = vadd.f32 0.0, %v1688
        %v1690 = vpop.f32.mrf.mxu0
        %v1691 = vpop.f32.mrf.mxu0
        %v1692 = vadd.f32 0.0, %v1691
        %v1693 = vpop.f32.mrf.mxu0
        %1694 = vmatprep.mubr.bf16.mxu0 0
        %1695 = vmatmul.mubr.bf16.gmra.mxu0 %v1552
        %v1696 = vpop.f32.mrf.mxu0
        %v1697 = vadd.f32 0.0, %v1696
        %v1698 = vpop.f32.mrf.mxu0
        %v1699 = vpop.f32.mrf.mxu0
        %v1700 = vadd.f32 0.0, %v1699
        %v1701 = vpop.f32.mrf.mxu0
        %1702 = vmatprep.mubr.bf16.mxu0 0
        %1703 = vmatmul.mubr.bf16.gmra.mxu0 %v1555
        %v1704 = vpop.f32.mrf.mxu0
        %v1705 = vadd.f32 0.0, %v1704
        %v1706 = vpop.f32.mrf.mxu0
        %v1707 = vpop.f32.mrf.mxu0
        %v1708 = vadd.f32 0.0, %v1707
        %v1709 = vpop.f32.mrf.mxu0
        %1710 = vmatprep.mubr.bf16.mxu0 0
        %1711 = vmatmul.mubr.bf16.gmra.mxu0 %v1558
        %v1712 = vpop.f32.mrf.mxu0
        %v1713 = vadd.f32 0.0, %v1712
        %v1714 = vpop.f32.mrf.mxu0
        %v1715 = vpop.f32.mrf.mxu0
        %v1716 = vadd.f32 0.0, %v1715
        %v1717 = vpop.f32.mrf.mxu0
        %1718 = vmatprep.mubr.bf16.mxu0 0
        %1719 = vmatmul.mubr.bf16.gmra.mxu0 %v1561
        %v1720 = vpop.f32.mrf.mxu0
        %v1721 = vadd.f32 0.0, %v1720
        %v1722 = vpop.f32.mrf.mxu0
        %v1723 = vpop.f32.mrf.mxu0
        %v1724 = vadd.f32 0.0, %v1723
        %v1725 = vpop.f32.mrf.mxu0
        %1726 = vdwg.mxu0
        %v1727 = vadd.f32 %v1255, %v1601
        %v1728 = vadd.f32 %v1256, %v1604
        %v1729 = vadd.f32 %v1257, %v1609
        %v1730 = vadd.f32 %v1258, %v1612
        %v1731 = vadd.f32 %v1259, %v1617
        %v1732 = vadd.f32 %v1260, %v1620
        %v1733 = vadd.f32 %v1261, %v1625
        %v1734 = vadd.f32 %v1262, %v1628
        %v1735 = vadd.f32 %v1263, %v1633
        %v1736 = vadd.f32 %v1264, %v1636
        %v1737 = vadd.f32 %v1265, %v1641
        %v1738 = vadd.f32 %v1266, %v1644
        %v1739 = vadd.f32 %v1267, %v1649
        %v1740 = vadd.f32 %v1268, %v1652
        %v1741 = vadd.f32 %v1269, %v1657
        %v1742 = vadd.f32 %v1270, %v1660
        %v1743 = vadd.f32 %v1271, %v1665
        %v1744 = vadd.f32 %v1272, %v1668
        %v1745 = vadd.f32 %v1273, %v1673
        %v1746 = vadd.f32 %v1274, %v1676
        %v1747 = vadd.f32 %v1275, %v1681
        %v1748 = vadd.f32 %v1276, %v1684
        %v1749 = vadd.f32 %v1277, %v1689
        %v1750 = vadd.f32 %v1278, %v1692
        %v1751 = vadd.f32 %v1279, %v1697
        %v1752 = vadd.f32 %v1280, %v1700
        %v1753 = vadd.f32 %v1281, %v1705
        %v1754 = vadd.f32 %v1282, %v1708
        %v1755 = vadd.f32 %v1283, %v1713
        %v1756 = vadd.f32 %v1284, %v1716
        %v1757 = vadd.f32 %v1285, %v1721
        %v1758 = vadd.f32 %v1286, %v1724
        %s1759 = sadd.s32 %s192, 1
        %s1760 = smul.u32 %s1759, 3
        %s1761 = smul.addr %s1760, 4
        %s1762 = scalar_lea.vmem %s182, %s1761
        %v1763 = vld [vmem:[%s1762] sm:$0xf]
        %v1764 = vld [vmem:[%s1762 + $0x4] sm:$0xf]
        %v1765 = vld [vmem:[%s1762 + $0xc] sm:$0xf]
        %v1766 = vld [vmem:[%s1762 + $0x10] sm:$0xf]
        %v1767 = vld [vmem:[%s1762 + $0x18] sm:$0xf]
        %v1768 = vld [vmem:[%s1762 + $0x1c] sm:$0xf]
        %v1769 = vld [vmem:[%s1762 + $0x24] sm:$0xf]
        %v1770 = vld [vmem:[%s1762 + $0x28] sm:$0xf]
        %v1771 = vld [vmem:[%s1762 + $0x30] sm:$0xf]
        %v1772 = vld [vmem:[%s1762 + $0x34] sm:$0xf]
        %v1773 = vld [vmem:[%s1762 + $0x3c] sm:$0xf]
        %v1774 = vld [vmem:[%s1762 + $0x40] sm:$0xf]
        %v1775 = vld [vmem:[%s1762 + $0x48] sm:$0xf]
        %v1776 = vld [vmem:[%s1762 + $0x4c] sm:$0xf]
        %v1777 = vld [vmem:[%s1762 + $0x54] sm:$0xf]
        %v1778 = vld [vmem:[%s1762 + $0x58] sm:$0xf]
        %v1779 = vld [vmem:[%s1762 + $0x60] sm:$0xf]
        %v1780 = vld [vmem:[%s1762 + $0x64] sm:$0xf]
        %v1781 = vld [vmem:[%s1762 + $0x6c] sm:$0xf]
        %v1782 = vld [vmem:[%s1762 + $0x70] sm:$0xf]
        %v1783 = vld [vmem:[%s1762 + $0x78] sm:$0xf]
        %v1784 = vld [vmem:[%s1762 + $0x7c] sm:$0xf]
        %v1785 = vld [vmem:[%s1762 + $0x84] sm:$0xf]
        %v1786 = vld [vmem:[%s1762 + $0x88] sm:$0xf]
        %v1787 = vld [vmem:[%s1762 + $0x90] sm:$0xf]
        %v1788 = vld [vmem:[%s1762 + $0x94] sm:$0xf]
        %v1789 = vld [vmem:[%s1762 + $0x9c] sm:$0xf]
        %v1790 = vld [vmem:[%s1762 + $0xa0] sm:$0xf]
        %v1791 = vld [vmem:[%s1762 + $0xa8] sm:$0xf]
        %v1792 = vld [vmem:[%s1762 + $0xac] sm:$0xf]
        %v1793 = vld [vmem:[%s1762 + $0xb4] sm:$0xf]
        %v1794 = vld [vmem:[%s1762 + $0xb8] sm:$0xf]
        %v1795 = vld [vmem:[%s1 + $0x4] sm:$0xc]
        %v1828 = vunpack.c.l.b16 %v1763
        %v1829 = vunpack.c.l.b16 %v1764
        %v1830 = vunpack.c.l.b16 %v1765
        %v1831 = vunpack.c.l.b16 %v1766
        %v1832 = vunpack.c.l.b16 %v1767
        %v1833 = vunpack.c.l.b16 %v1768
        %v1834 = vunpack.c.l.b16 %v1769
        %v1835 = vunpack.c.l.b16 %v1770
        %v1836 = vunpack.c.l.b16 %v1771
        %v1837 = vunpack.c.l.b16 %v1772
        %v1838 = vunpack.c.l.b16 %v1773
        %v1839 = vunpack.c.l.b16 %v1774
        %v1840 = vunpack.c.l.b16 %v1775
        %v1841 = vunpack.c.l.b16 %v1776
        %v1842 = vunpack.c.l.b16 %v1777
        %v1843 = vunpack.c.l.b16 %v1778
        %v1844 = vunpack.c.l.b16 %v1779
        %v1845 = vunpack.c.l.b16 %v1780
        %v1846 = vunpack.c.l.b16 %v1781
        %v1847 = vunpack.c.l.b16 %v1782
        %v1848 = vunpack.c.l.b16 %v1783
        %v1849 = vunpack.c.l.b16 %v1784
        %v1850 = vunpack.c.l.b16 %v1785
        %v1851 = vunpack.c.l.b16 %v1786
        %v1852 = vunpack.c.l.b16 %v1787
        %v1853 = vunpack.c.l.b16 %v1788
        %v1854 = vunpack.c.l.b16 %v1789
        %v1855 = vunpack.c.l.b16 %v1790
        %v1856 = vunpack.c.l.b16 %v1791
        %v1857 = vunpack.c.l.b16 %v1792
        %v1858 = vunpack.c.l.b16 %v1793
        %v1859 = vunpack.c.l.b16 %v1794
        %v1860 = vpack.c.b16 %v1829, %v1828
        %v1861 = vpack.c.b16 %v1831, %v1830
        %v1862 = vpack.c.b16 %v1833, %v1832
        %v1863 = vpack.c.b16 %v1835, %v1834
        %v1864 = vpack.c.b16 %v1837, %v1836
        %v1865 = vpack.c.b16 %v1839, %v1838
        %v1866 = vpack.c.b16 %v1841, %v1840
        %v1867 = vpack.c.b16 %v1843, %v1842
        %v1868 = vpack.c.b16 %v1845, %v1844
        %v1869 = vpack.c.b16 %v1847, %v1846
        %v1870 = vpack.c.b16 %v1849, %v1848
        %v1871 = vpack.c.b16 %v1851, %v1850
        %v1872 = vpack.c.b16 %v1853, %v1852
        %v1873 = vpack.c.b16 %v1855, %v1854
        %v1874 = vpack.c.b16 %v1857, %v1856
        %v1875 = vpack.c.b16 %v1859, %v1858
        %v1877 = vunpack.c.l.b16 %v1795
        %v1878 = vpack.c.b16 %v1877, %v1877
        %v1879 = vrot.slane %v1878, 2
        %v1881 = vsel %vm309, %v1860, 0
        %v1884 = vsel %vm309, %v1861, 0
        %v1887 = vsel %vm309, %v1862, 0
        %v1890 = vsel %vm309, %v1863, 0
        %v1893 = vsel %vm309, %v1864, 0
        %v1896 = vsel %vm309, %v1865, 0
        %v1899 = vsel %vm309, %v1866, 0
        %v1902 = vsel %vm309, %v1867, 0
        %v1905 = vsel %vm309, %v1868, 0
        %v1908 = vsel %vm309, %v1869, 0
        %v1911 = vsel %vm309, %v1870, 0
        %v1914 = vsel %vm309, %v1871, 0
        %v1917 = vsel %vm309, %v1872, 0
        %v1920 = vsel %vm309, %v1873, 0
        %v1923 = vsel %vm309, %v1874, 0
        %v1926 = vsel %vm309, %v1875, 0
        %v1929 = vsel %vm358, %v1879, 0
        %1931 = vmatprep.subr.bf16.mxu0 0
        %1932 = vmatpush1.bf16.msra.mxu0 0
        %1933 = vmatprep.subr.bf16.mxu0 0
        %1934 = vmatpush1.bf16.msra.mxu0 0
        %1935 = vmatprep.subr.bf16.mxu0 0
        %1936 = vmatpush1.bf16.msra.mxu0 0
        %1937 = vmatprep.subr.bf16.mxu0 0
        %1938 = vmatpush1.bf16.msra.mxu0 0
        %1939 = vmatprep.subr.bf16.mxu0 0
        %1940 = vmatpush1.bf16.msra.mxu0 0
        %1941 = vmatprep.subr.bf16.mxu0 0
        %1942 = vmatpush1.bf16.msra.mxu0 0
        %1943 = vmatprep.subr.bf16.mxu0 0
        %1944 = vmatpush1.bf16.msra.mxu0 0
        %1945 = vmatprep.subr.bf16.mxu0 0
        %1946 = vmatpush1.bf16.msra.mxu0 %v1929
        %1947 = vmatprep.subr.bf16.mxu0 0
        %1948 = vmatpush2.bf16.msra.mxu0 0
        %1949 = vmatprep.subr.bf16.mxu0 0
        %1950 = vmatpush2.bf16.msra.mxu0 0
        %1951 = vmatprep.subr.bf16.mxu0 0
        %1952 = vmatpush2.bf16.msra.mxu0 0
        %1953 = vmatprep.subr.bf16.mxu0 0
        %1954 = vmatpush2.bf16.msra.mxu0 0
        %1955 = vmatprep.subr.bf16.mxu0 0
        %1956 = vmatpush2.bf16.msra.mxu0 0
        %1957 = vmatprep.subr.bf16.mxu0 0
        %1958 = vmatpush2.bf16.msra.mxu0 0
        %1959 = vmatprep.subr.bf16.mxu0 0
        %1960 = vmatpush2.bf16.msra.mxu0 0
        %1961 = vmatprep.subr.bf16.mxu0 0
        %1962 = vmatpush2.bf16.msra.mxu0 0
        %1963 = vmatprep.mubr.bf16.mxu0 0
        %1964 = vmatmul.mubr.bf16.gmra.mxu0 %v1881
        %v1965 = vpop.f32.mrf.mxu0
        %v1966 = vadd.f32 0.0, %v1965
        %v1967 = vpop.f32.mrf.mxu0
        %v1968 = vpop.f32.mrf.mxu0
        %v1969 = vadd.f32 0.0, %v1968
        %v1970 = vpop.f32.mrf.mxu0
        %1971 = vmatprep.mubr.bf16.mxu0 0
        %1972 = vmatmul.mubr.bf16.gmra.mxu0 %v1884
        %v1973 = vpop.f32.mrf.mxu0
        %v1974 = vadd.f32 0.0, %v1973
        %v1975 = vpop.f32.mrf.mxu0
        %v1976 = vpop.f32.mrf.mxu0
        %v1977 = vadd.f32 0.0, %v1976
        %v1978 = vpop.f32.mrf.mxu0
        %1979 = vmatprep.mubr.bf16.mxu0 0
        %1980 = vmatmul.mubr.bf16.gmra.mxu0 %v1887
        %v1981 = vpop.f32.mrf.mxu0
        %v1982 = vadd.f32 0.0, %v1981
        %v1983 = vpop.f32.mrf.mxu0
        %v1984 = vpop.f32.mrf.mxu0
        %v1985 = vadd.f32 0.0, %v1984
        %v1986 = vpop.f32.mrf.mxu0
        %1987 = vmatprep.mubr.bf16.mxu0 0
        %1988 = vmatmul.mubr.bf16.gmra.mxu0 %v1890
        %v1989 = vpop.f32.mrf.mxu0
        %v1990 = vadd.f32 0.0, %v1989
        %v1991 = vpop.f32.mrf.mxu0
        %v1992 = vpop.f32.mrf.mxu0
        %v1993 = vadd.f32 0.0, %v1992
        %v1994 = vpop.f32.mrf.mxu0
        %1995 = vmatprep.mubr.bf16.mxu0 0
        %1996 = vmatmul.mubr.bf16.gmra.mxu0 %v1893
        %v1997 = vpop.f32.mrf.mxu0
        %v1998 = vadd.f32 0.0, %v1997
        %v1999 = vpop.f32.mrf.mxu0
        %v2000 = vpop.f32.mrf.mxu0
        %v2001 = vadd.f32 0.0, %v2000
        %v2002 = vpop.f32.mrf.mxu0
        %2003 = vmatprep.mubr.bf16.mxu0 0
        %2004 = vmatmul.mubr.bf16.gmra.mxu0 %v1896
        %v2005 = vpop.f32.mrf.mxu0
        %v2006 = vadd.f32 0.0, %v2005
        %v2007 = vpop.f32.mrf.mxu0
        %v2008 = vpop.f32.mrf.mxu0
        %v2009 = vadd.f32 0.0, %v2008
        %v2010 = vpop.f32.mrf.mxu0
        %2011 = vmatprep.mubr.bf16.mxu0 0
        %2012 = vmatmul.mubr.bf16.gmra.mxu0 %v1899
        %v2013 = vpop.f32.mrf.mxu0
        %v2014 = vadd.f32 0.0, %v2013
        %v2015 = vpop.f32.mrf.mxu0
        %v2016 = vpop.f32.mrf.mxu0
        %v2017 = vadd.f32 0.0, %v2016
        %v2018 = vpop.f32.mrf.mxu0
        %2019 = vmatprep.mubr.bf16.mxu0 0
        %2020 = vmatmul.mubr.bf16.gmra.mxu0 %v1902
        %v2021 = vpop.f32.mrf.mxu0
        %v2022 = vadd.f32 0.0, %v2021
        %v2023 = vpop.f32.mrf.mxu0
        %v2024 = vpop.f32.mrf.mxu0
        %v2025 = vadd.f32 0.0, %v2024
        %v2026 = vpop.f32.mrf.mxu0
        %2027 = vmatprep.mubr.bf16.mxu0 0
        %2028 = vmatmul.mubr.bf16.gmra.mxu0 %v1905
        %v2029 = vpop.f32.mrf.mxu0
        %v2030 = vadd.f32 0.0, %v2029
        %v2031 = vpop.f32.mrf.mxu0
        %v2032 = vpop.f32.mrf.mxu0
        %v2033 = vadd.f32 0.0, %v2032
        %v2034 = vpop.f32.mrf.mxu0
        %2035 = vmatprep.mubr.bf16.mxu0 0
        %2036 = vmatmul.mubr.bf16.gmra.mxu0 %v1908
        %v2037 = vpop.f32.mrf.mxu0
        %v2038 = vadd.f32 0.0, %v2037
        %v2039 = vpop.f32.mrf.mxu0
        %v2040 = vpop.f32.mrf.mxu0
        %v2041 = vadd.f32 0.0, %v2040
        %v2042 = vpop.f32.mrf.mxu0
        %2043 = vmatprep.mubr.bf16.mxu0 0
        %2044 = vmatmul.mubr.bf16.gmra.mxu0 %v1911
        %v2045 = vpop.f32.mrf.mxu0
        %v2046 = vadd.f32 0.0, %v2045
        %v2047 = vpop.f32.mrf.mxu0
        %v2048 = vpop.f32.mrf.mxu0
        %v2049 = vadd.f32 0.0, %v2048
        %v2050 = vpop.f32.mrf.mxu0
        %2051 = vmatprep.mubr.bf16.mxu0 0
        %2052 = vmatmul.mubr.bf16.gmra.mxu0 %v1914
        %v2053 = vpop.f32.mrf.mxu0
        %v2054 = vadd.f32 0.0, %v2053
        %v2055 = vpop.f32.mrf.mxu0
        %v2056 = vpop.f32.mrf.mxu0
        %v2057 = vadd.f32 0.0, %v2056
        %v2058 = vpop.f32.mrf.mxu0
        %2059 = vmatprep.mubr.bf16.mxu0 0
        %2060 = vmatmul.mubr.bf16.gmra.mxu0 %v1917
        %v2061 = vpop.f32.mrf.mxu0
        %v2062 = vadd.f32 0.0, %v2061
        %v2063 = vpop.f32.mrf.mxu0
        %v2064 = vpop.f32.mrf.mxu0
        %v2065 = vadd.f32 0.0, %v2064
        %v2066 = vpop.f32.mrf.mxu0
        %2067 = vmatprep.mubr.bf16.mxu0 0
        %2068 = vmatmul.mubr.bf16.gmra.mxu0 %v1920
        %v2069 = vpop.f32.mrf.mxu0
        %v2070 = vadd.f32 0.0, %v2069
        %v2071 = vpop.f32.mrf.mxu0
        %v2072 = vpop.f32.mrf.mxu0
        %v2073 = vadd.f32 0.0, %v2072
        %v2074 = vpop.f32.mrf.mxu0
        %2075 = vmatprep.mubr.bf16.mxu0 0
        %2076 = vmatmul.mubr.bf16.gmra.mxu0 %v1923
        %v2077 = vpop.f32.mrf.mxu0
        %v2078 = vadd.f32 0.0, %v2077
        %v2079 = vpop.f32.mrf.mxu0
        %v2080 = vpop.f32.mrf.mxu0
        %v2081 = vadd.f32 0.0, %v2080
        %v2082 = vpop.f32.mrf.mxu0
        %2083 = vmatprep.mubr.bf16.mxu0 0
        %2084 = vmatmul.mubr.bf16.gmra.mxu0 %v1926
        %v2085 = vpop.f32.mrf.mxu0
        %v2086 = vadd.f32 0.0, %v2085
        %v2087 = vpop.f32.mrf.mxu0
        %v2088 = vpop.f32.mrf.mxu0
        %v2089 = vadd.f32 0.0, %v2088
        %v2090 = vpop.f32.mrf.mxu0
        %2091 = vdwg.mxu0
        %v2092 = vadd.f32 %v1727, %v1966
        %v2093 = vadd.f32 %v1728, %v1969
        %v2094 = vadd.f32 %v1729, %v1974
        %v2095 = vadd.f32 %v1730, %v1977
        %v2096 = vadd.f32 %v1731, %v1982
        %v2097 = vadd.f32 %v1732, %v1985
        %v2098 = vadd.f32 %v1733, %v1990
        %v2099 = vadd.f32 %v1734, %v1993
        %v2100 = vadd.f32 %v1735, %v1998
        %v2101 = vadd.f32 %v1736, %v2001
        %v2102 = vadd.f32 %v1737, %v2006
        %v2103 = vadd.f32 %v1738, %v2009
        %v2104 = vadd.f32 %v1739, %v2014
        %v2105 = vadd.f32 %v1740, %v2017
        %v2106 = vadd.f32 %v1741, %v2022
        %v2107 = vadd.f32 %v1742, %v2025
        %v2108 = vadd.f32 %v1743, %v2030
        %v2109 = vadd.f32 %v1744, %v2033
        %v2110 = vadd.f32 %v1745, %v2038
        %v2111 = vadd.f32 %v1746, %v2041
        %v2112 = vadd.f32 %v1747, %v2046
        %v2113 = vadd.f32 %v1748, %v2049
        %v2114 = vadd.f32 %v1749, %v2054
        %v2115 = vadd.f32 %v1750, %v2057
        %v2116 = vadd.f32 %v1751, %v2062
        %v2117 = vadd.f32 %v1752, %v2065
        %v2118 = vadd.f32 %v1753, %v2070
        %v2119 = vadd.f32 %v1754, %v2073
        %v2120 = vadd.f32 %v1755, %v2078
        %v2121 = vadd.f32 %v1756, %v2081
        %v2122 = vadd.f32 %v1757, %v2086
        %v2123 = vadd.f32 %v1758, %v2089
        %v2124 = vld [vmem:[%s1762] sm:$0xf]
        %v2125 = vld [vmem:[%s1762 + $0x4] sm:$0xf]
        %v2126 = vld [vmem:[%s1762 + $0x8] sm:$0x1]
        %v2127 = vld [vmem:[%s1762 + $0xc] sm:$0xf]
        %v2128 = vld [vmem:[%s1762 + $0x10] sm:$0xf]
        %v2129 = vld [vmem:[%s1762 + $0x14] sm:$0x1]
        %v2130 = vld [vmem:[%s1762 + $0x18] sm:$0xf]
        %v2131 = vld [vmem:[%s1762 + $0x1c] sm:$0xf]
        %v2132 = vld [vmem:[%s1762 + $0x20] sm:$0x1]
        %v2133 = vld [vmem:[%s1762 + $0x24] sm:$0xf]
        %v2134 = vld [vmem:[%s1762 + $0x28] sm:$0xf]
        %v2135 = vld [vmem:[%s1762 + $0x2c] sm:$0x1]
        %v2136 = vld [vmem:[%s1762 + $0x30] sm:$0xf]
        %v2137 = vld [vmem:[%s1762 + $0x34] sm:$0xf]
        %v2138 = vld [vmem:[%s1762 + $0x38] sm:$0x1]
        %v2139 = vld [vmem:[%s1762 + $0x3c] sm:$0xf]
        %v2140 = vld [vmem:[%s1762 + $0x40] sm:$0xf]
        %v2141 = vld [vmem:[%s1762 + $0x44] sm:$0x1]
        %v2142 = vld [vmem:[%s1762 + $0x48] sm:$0xf]
        %v2143 = vld [vmem:[%s1762 + $0x4c] sm:$0xf]
        %v2144 = vld [vmem:[%s1762 + $0x50] sm:$0x1]
        %v2145 = vld [vmem:[%s1762 + $0x54] sm:$0xf]
        %v2146 = vld [vmem:[%s1762 + $0x58] sm:$0xf]
        %v2147 = vld [vmem:[%s1762 + $0x5c] sm:$0x1]
        %v2148 = vld [vmem:[%s1762 + $0x60] sm:$0xf]
        %v2149 = vld [vmem:[%s1762 + $0x64] sm:$0xf]
        %v2150 = vld [vmem:[%s1762 + $0x68] sm:$0x1]
        %v2151 = vld [vmem:[%s1762 + $0x6c] sm:$0xf]
        %v2152 = vld [vmem:[%s1762 + $0x70] sm:$0xf]
        %v2153 = vld [vmem:[%s1762 + $0x74] sm:$0x1]
        %v2154 = vld [vmem:[%s1762 + $0x78] sm:$0xf]
        %v2155 = vld [vmem:[%s1762 + $0x7c] sm:$0xf]
        %v2156 = vld [vmem:[%s1762 + $0x80] sm:$0x1]
        %v2157 = vld [vmem:[%s1762 + $0x84] sm:$0xf]
        %v2158 = vld [vmem:[%s1762 + $0x88] sm:$0xf]
        %v2159 = vld [vmem:[%s1762 + $0x8c] sm:$0x1]
        %v2160 = vld [vmem:[%s1762 + $0x90] sm:$0xf]
        %v2161 = vld [vmem:[%s1762 + $0x94] sm:$0xf]
        %v2162 = vld [vmem:[%s1762 + $0x98] sm:$0x1]
        %v2163 = vld [vmem:[%s1762 + $0x9c] sm:$0xf]
        %v2164 = vld [vmem:[%s1762 + $0xa0] sm:$0xf]
        %v2165 = vld [vmem:[%s1762 + $0xa4] sm:$0x1]
        %v2166 = vld [vmem:[%s1762 + $0xa8] sm:$0xf]
        %v2167 = vld [vmem:[%s1762 + $0xac] sm:$0xf]
        %v2168 = vld [vmem:[%s1762 + $0xb0] sm:$0x1]
        %v2169 = vld [vmem:[%s1762 + $0xb4] sm:$0xf]
        %v2170 = vld [vmem:[%s1762 + $0xb8] sm:$0xf]
        %v2171 = vld [vmem:[%s1762 + $0xbc] sm:$0x1]
        %v2173 = vshrl.u32 %v2124, 16
        %v2175 = vrot.slane %v2173, 4
        %v2176 = vshll.u32 %v2124, 16
        %v2178 = vrot.slane %v2176, 5
        %v2179 = vor.u32 %v2175, %v2178
        %v2180 = vrot.slane %v2179, 4
        %v2182 = vshll.u32 %v2125, 16
        %v2184 = vrot.slane %v2182, 5
        %v2185 = vsel %vm605, %v2180, %v2184
        %v2186 = vshrl.u32 %v2125, 16
        %v2188 = vrot.slane %v2186, 4
        %v2189 = vor.u32 %v2188, %v2184
        %v2190 = vrot.slane %v2189, 4
        %v2192 = vshll.u32 %v2126, 16
        %v2194 = vrot.slane %v2192, 5
        %v2195 = vsel %vm605, %v2190, %v2194
        %v2197 = vshrl.u32 %v2127, 16
        %v2199 = vrot.slane %v2197, 4
        %v2200 = vshll.u32 %v2127, 16
        %v2202 = vrot.slane %v2200, 5
        %v2203 = vor.u32 %v2199, %v2202
        %v2204 = vrot.slane %v2203, 4
        %v2206 = vshll.u32 %v2128, 16
        %v2208 = vrot.slane %v2206, 5
        %v2209 = vsel %vm605, %v2204, %v2208
        %v2210 = vshrl.u32 %v2128, 16
        %v2212 = vrot.slane %v2210, 4
        %v2213 = vor.u32 %v2212, %v2208
        %v2214 = vrot.slane %v2213, 4
        %v2216 = vshll.u32 %v2129, 16
        %v2218 = vrot.slane %v2216, 5
        %v2219 = vsel %vm605, %v2214, %v2218
        %v2221 = vshrl.u32 %v2130, 16
        %v2223 = vrot.slane %v2221, 4
        %v2224 = vshll.u32 %v2130, 16
        %v2226 = vrot.slane %v2224, 5
        %v2227 = vor.u32 %v2223, %v2226
        %v2228 = vrot.slane %v2227, 4
        %v2230 = vshll.u32 %v2131, 16
        %v2232 = vrot.slane %v2230, 5
        %v2233 = vsel %vm605, %v2228, %v2232
        %v2234 = vshrl.u32 %v2131, 16
        %v2236 = vrot.slane %v2234, 4
        %v2237 = vor.u32 %v2236, %v2232
        %v2238 = vrot.slane %v2237, 4
        %v2240 = vshll.u32 %v2132, 16
        %v2242 = vrot.slane %v2240, 5
        %v2243 = vsel %vm605, %v2238, %v2242
        %v2245 = vshrl.u32 %v2133, 16
        %v2247 = vrot.slane %v2245, 4
        %v2248 = vshll.u32 %v2133, 16
        %v2250 = vrot.slane %v2248, 5
        %v2251 = vor.u32 %v2247, %v2250
        %v2252 = vrot.slane %v2251, 4
        %v2254 = vshll.u32 %v2134, 16
        %v2256 = vrot.slane %v2254, 5
        %v2257 = vsel %vm605, %v2252, %v2256
        %v2258 = vshrl.u32 %v2134, 16
        %v2260 = vrot.slane %v2258, 4
        %v2261 = vor.u32 %v2260, %v2256
        %v2262 = vrot.slane %v2261, 4
        %v2264 = vshll.u32 %v2135, 16
        %v2266 = vrot.slane %v2264, 5
        %v2267 = vsel %vm605, %v2262, %v2266
        %v2269 = vshrl.u32 %v2136, 16
        %v2271 = vrot.slane %v2269, 4
        %v2272 = vshll.u32 %v2136, 16
        %v2274 = vrot.slane %v2272, 5
        %v2275 = vor.u32 %v2271, %v2274
        %v2276 = vrot.slane %v2275, 4
        %v2278 = vshll.u32 %v2137, 16
        %v2280 = vrot.slane %v2278, 5
        %v2281 = vsel %vm605, %v2276, %v2280
        %v2282 = vshrl.u32 %v2137, 16
        %v2284 = vrot.slane %v2282, 4
        %v2285 = vor.u32 %v2284, %v2280
        %v2286 = vrot.slane %v2285, 4
        %v2288 = vshll.u32 %v2138, 16
        %v2290 = vrot.slane %v2288, 5
        %v2291 = vsel %vm605, %v2286, %v2290
        %v2293 = vshrl.u32 %v2139, 16
        %v2295 = vrot.slane %v2293, 4
        %v2296 = vshll.u32 %v2139, 16
        %v2298 = vrot.slane %v2296, 5
        %v2299 = vor.u32 %v2295, %v2298
        %v2300 = vrot.slane %v2299, 4
        %v2302 = vshll.u32 %v2140, 16
        %v2304 = vrot.slane %v2302, 5
        %v2305 = vsel %vm605, %v2300, %v2304
        %v2306 = vshrl.u32 %v2140, 16
        %v2308 = vrot.slane %v2306, 4
        %v2309 = vor.u32 %v2308, %v2304
        %v2310 = vrot.slane %v2309, 4
        %v2312 = vshll.u32 %v2141, 16
        %v2314 = vrot.slane %v2312, 5
        %v2315 = vsel %vm605, %v2310, %v2314
        %v2317 = vshrl.u32 %v2142, 16
        %v2319 = vrot.slane %v2317, 4
        %v2320 = vshll.u32 %v2142, 16
        %v2322 = vrot.slane %v2320, 5
        %v2323 = vor.u32 %v2319, %v2322
        %v2324 = vrot.slane %v2323, 4
        %v2326 = vshll.u32 %v2143, 16
        %v2328 = vrot.slane %v2326, 5
        %v2329 = vsel %vm605, %v2324, %v2328
        %v2330 = vshrl.u32 %v2143, 16
        %v2332 = vrot.slane %v2330, 4
        %v2333 = vor.u32 %v2332, %v2328
        %v2334 = vrot.slane %v2333, 4
        %v2336 = vshll.u32 %v2144, 16
        %v2338 = vrot.slane %v2336, 5
        %v2339 = vsel %vm605, %v2334, %v2338
        %v2341 = vshrl.u32 %v2145, 16
        %v2343 = vrot.slane %v2341, 4
        %v2344 = vshll.u32 %v2145, 16
        %v2346 = vrot.slane %v2344, 5
        %v2347 = vor.u32 %v2343, %v2346
        %v2348 = vrot.slane %v2347, 4
        %v2350 = vshll.u32 %v2146, 16
        %v2352 = vrot.slane %v2350, 5
        %v2353 = vsel %vm605, %v2348, %v2352
        %v2354 = vshrl.u32 %v2146, 16
        %v2356 = vrot.slane %v2354, 4
        %v2357 = vor.u32 %v2356, %v2352
        %v2358 = vrot.slane %v2357, 4
        %v2360 = vshll.u32 %v2147, 16
        %v2362 = vrot.slane %v2360, 5
        %v2363 = vsel %vm605, %v2358, %v2362
        %v2365 = vshrl.u32 %v2148, 16
        %v2367 = vrot.slane %v2365, 4
        %v2368 = vshll.u32 %v2148, 16
        %v2370 = vrot.slane %v2368, 5
        %v2371 = vor.u32 %v2367, %v2370
        %v2372 = vrot.slane %v2371, 4
        %v2374 = vshll.u32 %v2149, 16
        %v2376 = vrot.slane %v2374, 5
        %v2377 = vsel %vm605, %v2372, %v2376
        %v2378 = vshrl.u32 %v2149, 16
        %v2380 = vrot.slane %v2378, 4
        %v2381 = vor.u32 %v2380, %v2376
        %v2382 = vrot.slane %v2381, 4
        %v2384 = vshll.u32 %v2150, 16
        %v2386 = vrot.slane %v2384, 5
        %v2387 = vsel %vm605, %v2382, %v2386
        %v2389 = vshrl.u32 %v2151, 16
        %v2391 = vrot.slane %v2389, 4
        %v2392 = vshll.u32 %v2151, 16
        %v2394 = vrot.slane %v2392, 5
        %v2395 = vor.u32 %v2391, %v2394
        %v2396 = vrot.slane %v2395, 4
        %v2398 = vshll.u32 %v2152, 16
        %v2400 = vrot.slane %v2398, 5
        %v2401 = vsel %vm605, %v2396, %v2400
        %v2402 = vshrl.u32 %v2152, 16
        %v2404 = vrot.slane %v2402, 4
        %v2405 = vor.u32 %v2404, %v2400
        %v2406 = vrot.slane %v2405, 4
        %v2408 = vshll.u32 %v2153, 16
        %v2410 = vrot.slane %v2408, 5
        %v2411 = vsel %vm605, %v2406, %v2410
        %v2413 = vshrl.u32 %v2154, 16
        %v2415 = vrot.slane %v2413, 4
        %v2416 = vshll.u32 %v2154, 16
        %v2418 = vrot.slane %v2416, 5
        %v2419 = vor.u32 %v2415, %v2418
        %v2420 = vrot.slane %v2419, 4
        %v2422 = vshll.u32 %v2155, 16
        %v2424 = vrot.slane %v2422, 5
        %v2425 = vsel %vm605, %v2420, %v2424
        %v2426 = vshrl.u32 %v2155, 16
        %v2428 = vrot.slane %v2426, 4
        %v2429 = vor.u32 %v2428, %v2424
        %v2430 = vrot.slane %v2429, 4
        %v2432 = vshll.u32 %v2156, 16
        %v2434 = vrot.slane %v2432, 5
        %v2435 = vsel %vm605, %v2430, %v2434
        %v2437 = vshrl.u32 %v2157, 16
        %v2439 = vrot.slane %v2437, 4
        %v2440 = vshll.u32 %v2157, 16
        %v2442 = vrot.slane %v2440, 5
        %v2443 = vor.u32 %v2439, %v2442
        %v2444 = vrot.slane %v2443, 4
        %v2446 = vshll.u32 %v2158, 16
        %v2448 = vrot.slane %v2446, 5
        %v2449 = vsel %vm605, %v2444, %v2448
        %v2450 = vshrl.u32 %v2158, 16
        %v2452 = vrot.slane %v2450, 4
        %v2453 = vor.u32 %v2452, %v2448
        %v2454 = vrot.slane %v2453, 4
        %v2456 = vshll.u32 %v2159, 16
        %v2458 = vrot.slane %v2456, 5
        %v2459 = vsel %vm605, %v2454, %v2458
        %v2461 = vshrl.u32 %v2160, 16
        %v2463 = vrot.slane %v2461, 4
        %v2464 = vshll.u32 %v2160, 16
        %v2466 = vrot.slane %v2464, 5
        %v2467 = vor.u32 %v2463, %v2466
        %v2468 = vrot.slane %v2467, 4
        %v2470 = vshll.u32 %v2161, 16
        %v2472 = vrot.slane %v2470, 5
        %v2473 = vsel %vm605, %v2468, %v2472
        %v2474 = vshrl.u32 %v2161, 16
        %v2476 = vrot.slane %v2474, 4
        %v2477 = vor.u32 %v2476, %v2472
        %v2478 = vrot.slane %v2477, 4
        %v2480 = vshll.u32 %v2162, 16
        %v2482 = vrot.slane %v2480, 5
        %v2483 = vsel %vm605, %v2478, %v2482
        %v2485 = vshrl.u32 %v2163, 16
        %v2487 = vrot.slane %v2485, 4
        %v2488 = vshll.u32 %v2163, 16
        %v2490 = vrot.slane %v2488, 5
        %v2491 = vor.u32 %v2487, %v2490
        %v2492 = vrot.slane %v2491, 4
        %v2494 = vshll.u32 %v2164, 16
        %v2496 = vrot.slane %v2494, 5
        %v2497 = vsel %vm605, %v2492, %v2496
        %v2498 = vshrl.u32 %v2164, 16
        %v2500 = vrot.slane %v2498, 4
        %v2501 = vor.u32 %v2500, %v2496
        %v2502 = vrot.slane %v2501, 4
        %v2504 = vshll.u32 %v2165, 16
        %v2506 = vrot.slane %v2504, 5
        %v2507 = vsel %vm605, %v2502, %v2506
        %v2509 = vshrl.u32 %v2166, 16
        %v2511 = vrot.slane %v2509, 4
        %v2512 = vshll.u32 %v2166, 16
        %v2514 = vrot.slane %v2512, 5
        %v2515 = vor.u32 %v2511, %v2514
        %v2516 = vrot.slane %v2515, 4
        %v2518 = vshll.u32 %v2167, 16
        %v2520 = vrot.slane %v2518, 5
        %v2521 = vsel %vm605, %v2516, %v2520
        %v2522 = vshrl.u32 %v2167, 16
        %v2524 = vrot.slane %v2522, 4
        %v2525 = vor.u32 %v2524, %v2520
        %v2526 = vrot.slane %v2525, 4
        %v2528 = vshll.u32 %v2168, 16
        %v2530 = vrot.slane %v2528, 5
        %v2531 = vsel %vm605, %v2526, %v2530
        %v2533 = vshrl.u32 %v2169, 16
        %v2535 = vrot.slane %v2533, 4
        %v2536 = vshll.u32 %v2169, 16
        %v2538 = vrot.slane %v2536, 5
        %v2539 = vor.u32 %v2535, %v2538
        %v2540 = vrot.slane %v2539, 4
        %v2542 = vshll.u32 %v2170, 16
        %v2544 = vrot.slane %v2542, 5
        %v2545 = vsel %vm605, %v2540, %v2544
        %v2546 = vshrl.u32 %v2170, 16
        %v2548 = vrot.slane %v2546, 4
        %v2549 = vor.u32 %v2548, %v2544
        %v2550 = vrot.slane %v2549, 4
        %v2552 = vshll.u32 %v2171, 16
        %v2554 = vrot.slane %v2552, 5
        %v2555 = vsel %vm605, %v2550, %v2554
        %v2556 = vld [vmem:[%s1 + $0x8] sm:$0x3]
        %v2557 = vunpack.c.l.b16 %v2185
        %v2558 = vunpack.c.l.b16 %v2195
        %v2559 = vunpack.c.l.b16 %v2209
        %v2560 = vunpack.c.l.b16 %v2219
        %v2561 = vunpack.c.l.b16 %v2233
        %v2562 = vunpack.c.l.b16 %v2243
        %v2563 = vunpack.c.l.b16 %v2257
        %v2564 = vunpack.c.l.b16 %v2267
        %v2565 = vunpack.c.l.b16 %v2281
        %v2566 = vunpack.c.l.b16 %v2291
        %v2567 = vunpack.c.l.b16 %v2305
        %v2568 = vunpack.c.l.b16 %v2315
        %v2569 = vunpack.c.l.b16 %v2329
        %v2570 = vunpack.c.l.b16 %v2339
        %v2571 = vunpack.c.l.b16 %v2353
        %v2572 = vunpack.c.l.b16 %v2363
        %v2573 = vunpack.c.l.b16 %v2377
        %v2574 = vunpack.c.l.b16 %v2387
        %v2575 = vunpack.c.l.b16 %v2401
        %v2576 = vunpack.c.l.b16 %v2411
        %v2577 = vunpack.c.l.b16 %v2425
        %v2578 = vunpack.c.l.b16 %v2435
        %v2579 = vunpack.c.l.b16 %v2449
        %v2580 = vunpack.c.l.b16 %v2459
        %v2581 = vunpack.c.l.b16 %v2473
        %v2582 = vunpack.c.l.b16 %v2483
        %v2583 = vunpack.c.l.b16 %v2497
        %v2584 = vunpack.c.l.b16 %v2507
        %v2585 = vunpack.c.l.b16 %v2521
        %v2586 = vunpack.c.l.b16 %v2531
        %v2587 = vunpack.c.l.b16 %v2545
        %v2588 = vunpack.c.l.b16 %v2555
        %v2589 = vpack.c.b16 %v2558, %v2557
        %v2590 = vpack.c.b16 %v2560, %v2559
        %v2591 = vpack.c.b16 %v2562, %v2561
        %v2592 = vpack.c.b16 %v2564, %v2563
        %v2593 = vpack.c.b16 %v2566, %v2565
        %v2594 = vpack.c.b16 %v2568, %v2567
        %v2595 = vpack.c.b16 %v2570, %v2569
        %v2596 = vpack.c.b16 %v2572, %v2571
        %v2597 = vpack.c.b16 %v2574, %v2573
        %v2598 = vpack.c.b16 %v2576, %v2575
        %v2599 = vpack.c.b16 %v2578, %v2577
        %v2600 = vpack.c.b16 %v2580, %v2579
        %v2601 = vpack.c.b16 %v2582, %v2581
        %v2602 = vpack.c.b16 %v2584, %v2583
        %v2603 = vpack.c.b16 %v2586, %v2585
        %v2604 = vpack.c.b16 %v2588, %v2587
        %v2606 = vsel %vm309, %v2589, 0
        %v2609 = vsel %vm309, %v2590, 0
        %v2612 = vsel %vm309, %v2591, 0
        %v2615 = vsel %vm309, %v2592, 0
        %v2618 = vsel %vm309, %v2593, 0
        %v2621 = vsel %vm309, %v2594, 0
        %v2624 = vsel %vm309, %v2595, 0
        %v2627 = vsel %vm309, %v2596, 0
        %v2630 = vsel %vm309, %v2597, 0
        %v2633 = vsel %vm309, %v2598, 0
        %v2636 = vsel %vm309, %v2599, 0
        %v2639 = vsel %vm309, %v2600, 0
        %v2642 = vsel %vm309, %v2601, 0
        %v2645 = vsel %vm309, %v2602, 0
        %v2648 = vsel %vm309, %v2603, 0
        %v2651 = vsel %vm309, %v2604, 0
        %v2654 = vsel %vm358, %v2556, 0
        %2656 = vmatprep.subr.bf16.mxu0 0
        %2657 = vmatpush1.bf16.msra.mxu0 0
        %2658 = vmatprep.subr.bf16.mxu0 0
        %2659 = vmatpush1.bf16.msra.mxu0 0
        %2660 = vmatprep.subr.bf16.mxu0 0
        %2661 = vmatpush1.bf16.msra.mxu0 0
        %2662 = vmatprep.subr.bf16.mxu0 0
        %2663 = vmatpush1.bf16.msra.mxu0 0
        %2664 = vmatprep.subr.bf16.mxu0 0
        %2665 = vmatpush1.bf16.msra.mxu0 0
        %2666 = vmatprep.subr.bf16.mxu0 0
        %2667 = vmatpush1.bf16.msra.mxu0 0
        %2668 = vmatprep.subr.bf16.mxu0 0
        %2669 = vmatpush1.bf16.msra.mxu0 0
        %2670 = vmatprep.subr.bf16.mxu0 0
        %2671 = vmatpush1.bf16.msra.mxu0 %v2654
        %2672 = vmatprep.subr.bf16.mxu0 0
        %2673 = vmatpush2.bf16.msra.mxu0 0
        %2674 = vmatprep.subr.bf16.mxu0 0
        %2675 = vmatpush2.bf16.msra.mxu0 0
        %2676 = vmatprep.subr.bf16.mxu0 0
        %2677 = vmatpush2.bf16.msra.mxu0 0
        %2678 = vmatprep.subr.bf16.mxu0 0
        %2679 = vmatpush2.bf16.msra.mxu0 0
        %2680 = vmatprep.subr.bf16.mxu0 0
        %2681 = vmatpush2.bf16.msra.mxu0 0
        %2682 = vmatprep.subr.bf16.mxu0 0
        %2683 = vmatpush2.bf16.msra.mxu0 0
        %2684 = vmatprep.subr.bf16.mxu0 0
        %2685 = vmatpush2.bf16.msra.mxu0 0
        %2686 = vmatprep.subr.bf16.mxu0 0
        %2687 = vmatpush2.bf16.msra.mxu0 0
        %2688 = vmatprep.mubr.bf16.mxu0 0
        %2689 = vmatmul.mubr.bf16.gmra.mxu0 %v2606
        %v2690 = vpop.f32.mrf.mxu0
        %v2691 = vadd.f32 0.0, %v2690
        %v2692 = vpop.f32.mrf.mxu0
        %v2693 = vpop.f32.mrf.mxu0
        %v2694 = vadd.f32 0.0, %v2693
        %v2695 = vpop.f32.mrf.mxu0
        %2696 = vmatprep.mubr.bf16.mxu0 0
        %2697 = vmatmul.mubr.bf16.gmra.mxu0 %v2609
        %v2698 = vpop.f32.mrf.mxu0
        %v2699 = vadd.f32 0.0, %v2698
        %v2700 = vpop.f32.mrf.mxu0
        %v2701 = vpop.f32.mrf.mxu0
        %v2702 = vadd.f32 0.0, %v2701
        %v2703 = vpop.f32.mrf.mxu0
        %2704 = vmatprep.mubr.bf16.mxu0 0
        %2705 = vmatmul.mubr.bf16.gmra.mxu0 %v2612
        %v2706 = vpop.f32.mrf.mxu0
        %v2707 = vadd.f32 0.0, %v2706
        %v2708 = vpop.f32.mrf.mxu0
        %v2709 = vpop.f32.mrf.mxu0
        %v2710 = vadd.f32 0.0, %v2709
        %v2711 = vpop.f32.mrf.mxu0
        %2712 = vmatprep.mubr.bf16.mxu0 0
        %2713 = vmatmul.mubr.bf16.gmra.mxu0 %v2615
        %v2714 = vpop.f32.mrf.mxu0
        %v2715 = vadd.f32 0.0, %v2714
        %v2716 = vpop.f32.mrf.mxu0
        %v2717 = vpop.f32.mrf.mxu0
        %v2718 = vadd.f32 0.0, %v2717
        %v2719 = vpop.f32.mrf.mxu0
        %2720 = vmatprep.mubr.bf16.mxu0 0
        %2721 = vmatmul.mubr.bf16.gmra.mxu0 %v2618
        %v2722 = vpop.f32.mrf.mxu0
        %v2723 = vadd.f32 0.0, %v2722
        %v2724 = vpop.f32.mrf.mxu0
        %v2725 = vpop.f32.mrf.mxu0
        %v2726 = vadd.f32 0.0, %v2725
        %v2727 = vpop.f32.mrf.mxu0
        %2728 = vmatprep.mubr.bf16.mxu0 0
        %2729 = vmatmul.mubr.bf16.gmra.mxu0 %v2621
        %v2730 = vpop.f32.mrf.mxu0
        %v2731 = vadd.f32 0.0, %v2730
        %v2732 = vpop.f32.mrf.mxu0
        %v2733 = vpop.f32.mrf.mxu0
        %v2734 = vadd.f32 0.0, %v2733
        %v2735 = vpop.f32.mrf.mxu0
        %2736 = vmatprep.mubr.bf16.mxu0 0
        %2737 = vmatmul.mubr.bf16.gmra.mxu0 %v2624
        %v2738 = vpop.f32.mrf.mxu0
        %v2739 = vadd.f32 0.0, %v2738
        %v2740 = vpop.f32.mrf.mxu0
        %v2741 = vpop.f32.mrf.mxu0
        %v2742 = vadd.f32 0.0, %v2741
        %v2743 = vpop.f32.mrf.mxu0
        %2744 = vmatprep.mubr.bf16.mxu0 0
        %2745 = vmatmul.mubr.bf16.gmra.mxu0 %v2627
        %v2746 = vpop.f32.mrf.mxu0
        %v2747 = vadd.f32 0.0, %v2746
        %v2748 = vpop.f32.mrf.mxu0
        %v2749 = vpop.f32.mrf.mxu0
        %v2750 = vadd.f32 0.0, %v2749
        %v2751 = vpop.f32.mrf.mxu0
        %2752 = vmatprep.mubr.bf16.mxu0 0
        %2753 = vmatmul.mubr.bf16.gmra.mxu0 %v2630
        %v2754 = vpop.f32.mrf.mxu0
        %v2755 = vadd.f32 0.0, %v2754
        %v2756 = vpop.f32.mrf.mxu0
        %v2757 = vpop.f32.mrf.mxu0
        %v2758 = vadd.f32 0.0, %v2757
        %v2759 = vpop.f32.mrf.mxu0
        %2760 = vmatprep.mubr.bf16.mxu0 0
        %2761 = vmatmul.mubr.bf16.gmra.mxu0 %v2633
        %v2762 = vpop.f32.mrf.mxu0
        %v2763 = vadd.f32 0.0, %v2762
        %v2764 = vpop.f32.mrf.mxu0
        %v2765 = vpop.f32.mrf.mxu0
        %v2766 = vadd.f32 0.0, %v2765
        %v2767 = vpop.f32.mrf.mxu0
        %2768 = vmatprep.mubr.bf16.mxu0 0
        %2769 = vmatmul.mubr.bf16.gmra.mxu0 %v2636
        %v2770 = vpop.f32.mrf.mxu0
        %v2771 = vadd.f32 0.0, %v2770
        %v2772 = vpop.f32.mrf.mxu0
        %v2773 = vpop.f32.mrf.mxu0
        %v2774 = vadd.f32 0.0, %v2773
        %v2775 = vpop.f32.mrf.mxu0
        %2776 = vmatprep.mubr.bf16.mxu0 0
        %2777 = vmatmul.mubr.bf16.gmra.mxu0 %v2639
        %v2778 = vpop.f32.mrf.mxu0
        %v2779 = vadd.f32 0.0, %v2778
        %v2780 = vpop.f32.mrf.mxu0
        %v2781 = vpop.f32.mrf.mxu0
        %v2782 = vadd.f32 0.0, %v2781
        %v2783 = vpop.f32.mrf.mxu0
        %2784 = vmatprep.mubr.bf16.mxu0 0
        %2785 = vmatmul.mubr.bf16.gmra.mxu0 %v2642
        %v2786 = vpop.f32.mrf.mxu0
        %v2787 = vadd.f32 0.0, %v2786
        %v2788 = vpop.f32.mrf.mxu0
        %v2789 = vpop.f32.mrf.mxu0
        %v2790 = vadd.f32 0.0, %v2789
        %v2791 = vpop.f32.mrf.mxu0
        %2792 = vmatprep.mubr.bf16.mxu0 0
        %2793 = vmatmul.mubr.bf16.gmra.mxu0 %v2645
        %v2794 = vpop.f32.mrf.mxu0
        %v2795 = vadd.f32 0.0, %v2794
        %v2796 = vpop.f32.mrf.mxu0
        %v2797 = vpop.f32.mrf.mxu0
        %v2798 = vadd.f32 0.0, %v2797
        %v2799 = vpop.f32.mrf.mxu0
        %2800 = vmatprep.mubr.bf16.mxu0 0
        %2801 = vmatmul.mubr.bf16.gmra.mxu0 %v2648
        %v2802 = vpop.f32.mrf.mxu0
        %v2803 = vadd.f32 0.0, %v2802
        %v2804 = vpop.f32.mrf.mxu0
        %v2805 = vpop.f32.mrf.mxu0
        %v2806 = vadd.f32 0.0, %v2805
        %v2807 = vpop.f32.mrf.mxu0
        %2808 = vmatprep.mubr.bf16.mxu0 0
        %2809 = vmatmul.mubr.bf16.gmra.mxu0 %v2651
        %v2810 = vpop.f32.mrf.mxu0
        %v2811 = vadd.f32 0.0, %v2810
        %v2812 = vpop.f32.mrf.mxu0
        %v2813 = vpop.f32.mrf.mxu0
        %v2814 = vadd.f32 0.0, %v2813
        %v2815 = vpop.f32.mrf.mxu0
        %2816 = vdwg.mxu0
        %v2817 = vadd.f32 %v2092, %v2691
        %v2818 = vadd.f32 %v2093, %v2694
        %v2819 = vadd.f32 %v2094, %v2699
        %v2820 = vadd.f32 %v2095, %v2702
        %v2821 = vadd.f32 %v2096, %v2707
        %v2822 = vadd.f32 %v2097, %v2710
        %v2823 = vadd.f32 %v2098, %v2715
        %v2824 = vadd.f32 %v2099, %v2718
        %v2825 = vadd.f32 %v2100, %v2723
        %v2826 = vadd.f32 %v2101, %v2726
        %v2827 = vadd.f32 %v2102, %v2731
        %v2828 = vadd.f32 %v2103, %v2734
        %v2829 = vadd.f32 %v2104, %v2739
        %v2830 = vadd.f32 %v2105, %v2742
        %v2831 = vadd.f32 %v2106, %v2747
        %v2832 = vadd.f32 %v2107, %v2750
        %v2833 = vadd.f32 %v2108, %v2755
        %v2834 = vadd.f32 %v2109, %v2758
        %v2835 = vadd.f32 %v2110, %v2763
        %v2836 = vadd.f32 %v2111, %v2766
        %v2837 = vadd.f32 %v2112, %v2771
        %v2838 = vadd.f32 %v2113, %v2774
        %v2839 = vadd.f32 %v2114, %v2779
        %v2840 = vadd.f32 %v2115, %v2782
        %v2841 = vadd.f32 %v2116, %v2787
        %v2842 = vadd.f32 %v2117, %v2790
        %v2843 = vadd.f32 %v2118, %v2795
        %v2844 = vadd.f32 %v2119, %v2798
        %v2845 = vadd.f32 %v2120, %v2803
        %v2846 = vadd.f32 %v2121, %v2806
        %v2847 = vadd.f32 %v2122, %v2811
        %v2848 = vadd.f32 %v2123, %v2814
        %v2849 = vld [vmem:[%s1762] sm:$0xe]
        %v2850 = vld [vmem:[%s1762 + $0xc] sm:$0xe]
        %v2851 = vld [vmem:[%s1762 + $0x18] sm:$0xe]
        %v2852 = vld [vmem:[%s1762 + $0x24] sm:$0xe]
        %v2853 = vld [vmem:[%s1762 + $0x30] sm:$0xe]
        %v2854 = vld [vmem:[%s1762 + $0x3c] sm:$0xe]
        %v2855 = vld [vmem:[%s1762 + $0x48] sm:$0xe]
        %v2856 = vld [vmem:[%s1762 + $0x54] sm:$0xe]
        %v2857 = vld [vmem:[%s1762 + $0x60] sm:$0xe]
        %v2858 = vld [vmem:[%s1762 + $0x6c] sm:$0xe]
        %v2859 = vld [vmem:[%s1762 + $0x78] sm:$0xe]
        %v2860 = vld [vmem:[%s1762 + $0x84] sm:$0xe]
        %v2861 = vld [vmem:[%s1762 + $0x90] sm:$0xe]
        %v2862 = vld [vmem:[%s1762 + $0x9c] sm:$0xe]
        %v2863 = vld [vmem:[%s1762 + $0xa8] sm:$0xe]
        %v2864 = vld [vmem:[%s1762 + $0xb4] sm:$0xe]
        %v2913 = vrot.slane %v2849, 5
        %v2914 = vrot.slane %v2913, 4
        %v2915 = vrot.slane %v2125, 5
        %v2916 = vsel %vm1353, %v2914, %v2915
        %v2917 = vrot.slane %v2915, 4
        %v2918 = vrot.slane %v2126, 5
        %v2919 = vsel %vm1353, %v2917, %v2918
        %v2920 = vrot.slane %v2850, 5
        %v2921 = vrot.slane %v2920, 4
        %v2922 = vrot.slane %v2128, 5
        %v2923 = vsel %vm1353, %v2921, %v2922
        %v2924 = vrot.slane %v2922, 4
        %v2925 = vrot.slane %v2129, 5
        %v2926 = vsel %vm1353, %v2924, %v2925
        %v2927 = vrot.slane %v2851, 5
        %v2928 = vrot.slane %v2927, 4
        %v2929 = vrot.slane %v2131, 5
        %v2930 = vsel %vm1353, %v2928, %v2929
        %v2931 = vrot.slane %v2929, 4
        %v2932 = vrot.slane %v2132, 5
        %v2933 = vsel %vm1353, %v2931, %v2932
        %v2934 = vrot.slane %v2852, 5
        %v2935 = vrot.slane %v2934, 4
        %v2936 = vrot.slane %v2134, 5
        %v2937 = vsel %vm1353, %v2935, %v2936
        %v2938 = vrot.slane %v2936, 4
        %v2939 = vrot.slane %v2135, 5
        %v2940 = vsel %vm1353, %v2938, %v2939
        %v2941 = vrot.slane %v2853, 5
        %v2942 = vrot.slane %v2941, 4
        %v2943 = vrot.slane %v2137, 5
        %v2944 = vsel %vm1353, %v2942, %v2943
        %v2945 = vrot.slane %v2943, 4
        %v2946 = vrot.slane %v2138, 5
        %v2947 = vsel %vm1353, %v2945, %v2946
        %v2948 = vrot.slane %v2854, 5
        %v2949 = vrot.slane %v2948, 4
        %v2950 = vrot.slane %v2140, 5
        %v2951 = vsel %vm1353, %v2949, %v2950
        %v2952 = vrot.slane %v2950, 4
        %v2953 = vrot.slane %v2141, 5
        %v2954 = vsel %vm1353, %v2952, %v2953
        %v2955 = vrot.slane %v2855, 5
        %v2956 = vrot.slane %v2955, 4
        %v2957 = vrot.slane %v2143, 5
        %v2958 = vsel %vm1353, %v2956, %v2957
        %v2959 = vrot.slane %v2957, 4
        %v2960 = vrot.slane %v2144, 5
        %v2961 = vsel %vm1353, %v2959, %v2960
        %v2962 = vrot.slane %v2856, 5
        %v2963 = vrot.slane %v2962, 4
        %v2964 = vrot.slane %v2146, 5
        %v2965 = vsel %vm1353, %v2963, %v2964
        %v2966 = vrot.slane %v2964, 4
        %v2967 = vrot.slane %v2147, 5
        %v2968 = vsel %vm1353, %v2966, %v2967
        %v2969 = vrot.slane %v2857, 5
        %v2970 = vrot.slane %v2969, 4
        %v2971 = vrot.slane %v2149, 5
        %v2972 = vsel %vm1353, %v2970, %v2971
        %v2973 = vrot.slane %v2971, 4
        %v2974 = vrot.slane %v2150, 5
        %v2975 = vsel %vm1353, %v2973, %v2974
        %v2976 = vrot.slane %v2858, 5
        %v2977 = vrot.slane %v2976, 4
        %v2978 = vrot.slane %v2152, 5
        %v2979 = vsel %vm1353, %v2977, %v2978
        %v2980 = vrot.slane %v2978, 4
        %v2981 = vrot.slane %v2153, 5
        %v2982 = vsel %vm1353, %v2980, %v2981
        %v2983 = vrot.slane %v2859, 5
        %v2984 = vrot.slane %v2983, 4
        %v2985 = vrot.slane %v2155, 5
        %v2986 = vsel %vm1353, %v2984, %v2985
        %v2987 = vrot.slane %v2985, 4
        %v2988 = vrot.slane %v2156, 5
        %v2989 = vsel %vm1353, %v2987, %v2988
        %v2990 = vrot.slane %v2860, 5
        %v2991 = vrot.slane %v2990, 4
        %v2992 = vrot.slane %v2158, 5
        %v2993 = vsel %vm1353, %v2991, %v2992
        %v2994 = vrot.slane %v2992, 4
        %v2995 = vrot.slane %v2159, 5
        %v2996 = vsel %vm1353, %v2994, %v2995
        %v2997 = vrot.slane %v2861, 5
        %v2998 = vrot.slane %v2997, 4
        %v2999 = vrot.slane %v2161, 5
        %v3000 = vsel %vm1353, %v2998, %v2999
        %v3001 = vrot.slane %v2999, 4
        %v3002 = vrot.slane %v2162, 5
        %v3003 = vsel %vm1353, %v3001, %v3002
        %v3004 = vrot.slane %v2862, 5
        %v3005 = vrot.slane %v3004, 4
        %v3006 = vrot.slane %v2164, 5
        %v3007 = vsel %vm1353, %v3005, %v3006
        %v3008 = vrot.slane %v3006, 4
        %v3009 = vrot.slane %v2165, 5
        %v3010 = vsel %vm1353, %v3008, %v3009
        %v3011 = vrot.slane %v2863, 5
        %v3012 = vrot.slane %v3011, 4
        %v3013 = vrot.slane %v2167, 5
        %v3014 = vsel %vm1353, %v3012, %v3013
        %v3015 = vrot.slane %v3013, 4
        %v3016 = vrot.slane %v2168, 5
        %v3017 = vsel %vm1353, %v3015, %v3016
        %v3018 = vrot.slane %v2864, 5
        %v3019 = vrot.slane %v3018, 4
        %v3020 = vrot.slane %v2170, 5
        %v3021 = vsel %vm1353, %v3019, %v3020
        %v3022 = vrot.slane %v3020, 4
        %v3023 = vrot.slane %v2171, 5
        %v3024 = vsel %vm1353, %v3022, %v3023
        %v3025 = vld [vmem:[%s1 + $0x8] sm:$0xc]
        %v3026 = vunpack.c.l.b16 %v2916
        %v3027 = vunpack.c.l.b16 %v2919
        %v3028 = vunpack.c.l.b16 %v2923
        %v3029 = vunpack.c.l.b16 %v2926
        %v3030 = vunpack.c.l.b16 %v2930
        %v3031 = vunpack.c.l.b16 %v2933
        %v3032 = vunpack.c.l.b16 %v2937
        %v3033 = vunpack.c.l.b16 %v2940
        %v3034 = vunpack.c.l.b16 %v2944
        %v3035 = vunpack.c.l.b16 %v2947
        %v3036 = vunpack.c.l.b16 %v2951
        %v3037 = vunpack.c.l.b16 %v2954
        %v3038 = vunpack.c.l.b16 %v2958
        %v3039 = vunpack.c.l.b16 %v2961
        %v3040 = vunpack.c.l.b16 %v2965
        %v3041 = vunpack.c.l.b16 %v2968
        %v3042 = vunpack.c.l.b16 %v2972
        %v3043 = vunpack.c.l.b16 %v2975
        %v3044 = vunpack.c.l.b16 %v2979
        %v3045 = vunpack.c.l.b16 %v2982
        %v3046 = vunpack.c.l.b16 %v2986
        %v3047 = vunpack.c.l.b16 %v2989
        %v3048 = vunpack.c.l.b16 %v2993
        %v3049 = vunpack.c.l.b16 %v2996
        %v3050 = vunpack.c.l.b16 %v3000
        %v3051 = vunpack.c.l.b16 %v3003
        %v3052 = vunpack.c.l.b16 %v3007
        %v3053 = vunpack.c.l.b16 %v3010
        %v3054 = vunpack.c.l.b16 %v3014
        %v3055 = vunpack.c.l.b16 %v3017
        %v3056 = vunpack.c.l.b16 %v3021
        %v3057 = vunpack.c.l.b16 %v3024
        %v3058 = vpack.c.b16 %v3027, %v3026
        %v3059 = vpack.c.b16 %v3029, %v3028
        %v3060 = vpack.c.b16 %v3031, %v3030
        %v3061 = vpack.c.b16 %v3033, %v3032
        %v3062 = vpack.c.b16 %v3035, %v3034
        %v3063 = vpack.c.b16 %v3037, %v3036
        %v3064 = vpack.c.b16 %v3039, %v3038
        %v3065 = vpack.c.b16 %v3041, %v3040
        %v3066 = vpack.c.b16 %v3043, %v3042
        %v3067 = vpack.c.b16 %v3045, %v3044
        %v3068 = vpack.c.b16 %v3047, %v3046
        %v3069 = vpack.c.b16 %v3049, %v3048
        %v3070 = vpack.c.b16 %v3051, %v3050
        %v3071 = vpack.c.b16 %v3053, %v3052
        %v3072 = vpack.c.b16 %v3055, %v3054
        %v3073 = vpack.c.b16 %v3057, %v3056
        %v3075 = vunpack.c.l.b16 %v3025
        %v3076 = vpack.c.b16 %v3075, %v3075
        %v3077 = vrot.slane %v3076, 2
        %v3079 = vsel %vm309, %v3058, 0
        %v3082 = vsel %vm309, %v3059, 0
        %v3085 = vsel %vm309, %v3060, 0
        %v3088 = vsel %vm309, %v3061, 0
        %v3091 = vsel %vm309, %v3062, 0
        %v3094 = vsel %vm309, %v3063, 0
        %v3097 = vsel %vm309, %v3064, 0
        %v3100 = vsel %vm309, %v3065, 0
        %v3103 = vsel %vm309, %v3066, 0
        %v3106 = vsel %vm309, %v3067, 0
        %v3109 = vsel %vm309, %v3068, 0
        %v3112 = vsel %vm309, %v3069, 0
        %v3115 = vsel %vm309, %v3070, 0
        %v3118 = vsel %vm309, %v3071, 0
        %v3121 = vsel %vm309, %v3072, 0
        %v3124 = vsel %vm309, %v3073, 0
        %v3127 = vsel %vm358, %v3077, 0
        %3129 = vmatprep.subr.bf16.mxu0 0
        %3130 = vmatpush1.bf16.msra.mxu0 0
        %3131 = vmatprep.subr.bf16.mxu0 0
        %3132 = vmatpush1.bf16.msra.mxu0 0
        %3133 = vmatprep.subr.bf16.mxu0 0
        %3134 = vmatpush1.bf16.msra.mxu0 0
        %3135 = vmatprep.subr.bf16.mxu0 0
        %3136 = vmatpush1.bf16.msra.mxu0 0
        %3137 = vmatprep.subr.bf16.mxu0 0
        %3138 = vmatpush1.bf16.msra.mxu0 0
        %3139 = vmatprep.subr.bf16.mxu0 0
        %3140 = vmatpush1.bf16.msra.mxu0 0
        %3141 = vmatprep.subr.bf16.mxu0 0
        %3142 = vmatpush1.bf16.msra.mxu0 0
        %3143 = vmatprep.subr.bf16.mxu0 0
        %3144 = vmatpush1.bf16.msra.mxu0 %v3127
        %3145 = vmatprep.subr.bf16.mxu0 0
        %3146 = vmatpush2.bf16.msra.mxu0 0
        %3147 = vmatprep.subr.bf16.mxu0 0
        %3148 = vmatpush2.bf16.msra.mxu0 0
        %3149 = vmatprep.subr.bf16.mxu0 0
        %3150 = vmatpush2.bf16.msra.mxu0 0
        %3151 = vmatprep.subr.bf16.mxu0 0
        %3152 = vmatpush2.bf16.msra.mxu0 0
        %3153 = vmatprep.subr.bf16.mxu0 0
        %3154 = vmatpush2.bf16.msra.mxu0 0
        %3155 = vmatprep.subr.bf16.mxu0 0
        %3156 = vmatpush2.bf16.msra.mxu0 0
        %3157 = vmatprep.subr.bf16.mxu0 0
        %3158 = vmatpush2.bf16.msra.mxu0 0
        %3159 = vmatprep.subr.bf16.mxu0 0
        %3160 = vmatpush2.bf16.msra.mxu0 0
        %3161 = vmatprep.mubr.bf16.mxu0 0
        %3162 = vmatmul.mubr.bf16.gmra.mxu0 %v3079
        %v3163 = vpop.f32.mrf.mxu0
        %v3164 = vadd.f32 0.0, %v3163
        %v3165 = vpop.f32.mrf.mxu0
        %v3166 = vpop.f32.mrf.mxu0
        %v3167 = vadd.f32 0.0, %v3166
        %v3168 = vpop.f32.mrf.mxu0
        %3169 = vmatprep.mubr.bf16.mxu0 0
        %3170 = vmatmul.mubr.bf16.gmra.mxu0 %v3082
        %v3171 = vpop.f32.mrf.mxu0
        %v3172 = vadd.f32 0.0, %v3171
        %v3173 = vpop.f32.mrf.mxu0
        %v3174 = vpop.f32.mrf.mxu0
        %v3175 = vadd.f32 0.0, %v3174
        %v3176 = vpop.f32.mrf.mxu0
        %3177 = vmatprep.mubr.bf16.mxu0 0
        %3178 = vmatmul.mubr.bf16.gmra.mxu0 %v3085
        %v3179 = vpop.f32.mrf.mxu0
        %v3180 = vadd.f32 0.0, %v3179
        %v3181 = vpop.f32.mrf.mxu0
        %v3182 = vpop.f32.mrf.mxu0
        %v3183 = vadd.f32 0.0, %v3182
        %v3184 = vpop.f32.mrf.mxu0
        %3185 = vmatprep.mubr.bf16.mxu0 0
        %3186 = vmatmul.mubr.bf16.gmra.mxu0 %v3088
        %v3187 = vpop.f32.mrf.mxu0
        %v3188 = vadd.f32 0.0, %v3187
        %v3189 = vpop.f32.mrf.mxu0
        %v3190 = vpop.f32.mrf.mxu0
        %v3191 = vadd.f32 0.0, %v3190
        %v3192 = vpop.f32.mrf.mxu0
        %3193 = vmatprep.mubr.bf16.mxu0 0
        %3194 = vmatmul.mubr.bf16.gmra.mxu0 %v3091
        %v3195 = vpop.f32.mrf.mxu0
        %v3196 = vadd.f32 0.0, %v3195
        %v3197 = vpop.f32.mrf.mxu0
        %v3198 = vpop.f32.mrf.mxu0
        %v3199 = vadd.f32 0.0, %v3198
        %v3200 = vpop.f32.mrf.mxu0
        %3201 = vmatprep.mubr.bf16.mxu0 0
        %3202 = vmatmul.mubr.bf16.gmra.mxu0 %v3094
        %v3203 = vpop.f32.mrf.mxu0
        %v3204 = vadd.f32 0.0, %v3203
        %v3205 = vpop.f32.mrf.mxu0
        %v3206 = vpop.f32.mrf.mxu0
        %v3207 = vadd.f32 0.0, %v3206
        %v3208 = vpop.f32.mrf.mxu0
        %3209 = vmatprep.mubr.bf16.mxu0 0
        %3210 = vmatmul.mubr.bf16.gmra.mxu0 %v3097
        %v3211 = vpop.f32.mrf.mxu0
        %v3212 = vadd.f32 0.0, %v3211
        %v3213 = vpop.f32.mrf.mxu0
        %v3214 = vpop.f32.mrf.mxu0
        %v3215 = vadd.f32 0.0, %v3214
        %v3216 = vpop.f32.mrf.mxu0
        %3217 = vmatprep.mubr.bf16.mxu0 0
        %3218 = vmatmul.mubr.bf16.gmra.mxu0 %v3100
        %v3219 = vpop.f32.mrf.mxu0
        %v3220 = vadd.f32 0.0, %v3219
        %v3221 = vpop.f32.mrf.mxu0
        %v3222 = vpop.f32.mrf.mxu0
        %v3223 = vadd.f32 0.0, %v3222
        %v3224 = vpop.f32.mrf.mxu0
        %3225 = vmatprep.mubr.bf16.mxu0 0
        %3226 = vmatmul.mubr.bf16.gmra.mxu0 %v3103
        %v3227 = vpop.f32.mrf.mxu0
        %v3228 = vadd.f32 0.0, %v3227
        %v3229 = vpop.f32.mrf.mxu0
        %v3230 = vpop.f32.mrf.mxu0
        %v3231 = vadd.f32 0.0, %v3230
        %v3232 = vpop.f32.mrf.mxu0
        %3233 = vmatprep.mubr.bf16.mxu0 0
        %3234 = vmatmul.mubr.bf16.gmra.mxu0 %v3106
        %v3235 = vpop.f32.mrf.mxu0
        %v3236 = vadd.f32 0.0, %v3235
        %v3237 = vpop.f32.mrf.mxu0
        %v3238 = vpop.f32.mrf.mxu0
        %v3239 = vadd.f32 0.0, %v3238
        %v3240 = vpop.f32.mrf.mxu0
        %3241 = vmatprep.mubr.bf16.mxu0 0
        %3242 = vmatmul.mubr.bf16.gmra.mxu0 %v3109
        %v3243 = vpop.f32.mrf.mxu0
        %v3244 = vadd.f32 0.0, %v3243
        %v3245 = vpop.f32.mrf.mxu0
        %v3246 = vpop.f32.mrf.mxu0
        %v3247 = vadd.f32 0.0, %v3246
        %v3248 = vpop.f32.mrf.mxu0
        %3249 = vmatprep.mubr.bf16.mxu0 0
        %3250 = vmatmul.mubr.bf16.gmra.mxu0 %v3112
        %v3251 = vpop.f32.mrf.mxu0
        %v3252 = vadd.f32 0.0, %v3251
        %v3253 = vpop.f32.mrf.mxu0
        %v3254 = vpop.f32.mrf.mxu0
        %v3255 = vadd.f32 0.0, %v3254
        %v3256 = vpop.f32.mrf.mxu0
        %3257 = vmatprep.mubr.bf16.mxu0 0
        %3258 = vmatmul.mubr.bf16.gmra.mxu0 %v3115
        %v3259 = vpop.f32.mrf.mxu0
        %v3260 = vadd.f32 0.0, %v3259
        %v3261 = vpop.f32.mrf.mxu0
        %v3262 = vpop.f32.mrf.mxu0
        %v3263 = vadd.f32 0.0, %v3262
        %v3264 = vpop.f32.mrf.mxu0
        %3265 = vmatprep.mubr.bf16.mxu0 0
        %3266 = vmatmul.mubr.bf16.gmra.mxu0 %v3118
        %v3267 = vpop.f32.mrf.mxu0
        %v3268 = vadd.f32 0.0, %v3267
        %v3269 = vpop.f32.mrf.mxu0
        %v3270 = vpop.f32.mrf.mxu0
        %v3271 = vadd.f32 0.0, %v3270
        %v3272 = vpop.f32.mrf.mxu0
        %3273 = vmatprep.mubr.bf16.mxu0 0
        %3274 = vmatmul.mubr.bf16.gmra.mxu0 %v3121
        %v3275 = vpop.f32.mrf.mxu0
        %v3276 = vadd.f32 0.0, %v3275
        %v3277 = vpop.f32.mrf.mxu0
        %v3278 = vpop.f32.mrf.mxu0
        %v3279 = vadd.f32 0.0, %v3278
        %v3280 = vpop.f32.mrf.mxu0
        %3281 = vmatprep.mubr.bf16.mxu0 0
        %3282 = vmatmul.mubr.bf16.gmra.mxu0 %v3124
        %v3283 = vpop.f32.mrf.mxu0
        %v3284 = vadd.f32 0.0, %v3283
        %v3285 = vpop.f32.mrf.mxu0
        %v3286 = vpop.f32.mrf.mxu0
        %v3287 = vadd.f32 0.0, %v3286
        %v3288 = vpop.f32.mrf.mxu0
        %3289 = vdwg.mxu0
        %v3290 = vadd.f32 %v2817, %v3164
        %v3291 = vadd.f32 %v2818, %v3167
        %v3292 = vadd.f32 %v2819, %v3172
        %v3293 = vadd.f32 %v2820, %v3175
        %v3294 = vadd.f32 %v2821, %v3180
        %v3295 = vadd.f32 %v2822, %v3183
        %v3296 = vadd.f32 %v2823, %v3188
        %v3297 = vadd.f32 %v2824, %v3191
        %v3298 = vadd.f32 %v2825, %v3196
        %v3299 = vadd.f32 %v2826, %v3199
        %v3300 = vadd.f32 %v2827, %v3204
        %v3301 = vadd.f32 %v2828, %v3207
        %v3302 = vadd.f32 %v2829, %v3212
        %v3303 = vadd.f32 %v2830, %v3215
        %v3304 = vadd.f32 %v2831, %v3220
        %v3305 = vadd.f32 %v2832, %v3223
        %v3306 = vadd.f32 %v2833, %v3228
        %v3307 = vadd.f32 %v2834, %v3231
        %v3308 = vadd.f32 %v2835, %v3236
        %v3309 = vadd.f32 %v2836, %v3239
        %v3310 = vadd.f32 %v2837, %v3244
        %v3311 = vadd.f32 %v2838, %v3247
        %v3312 = vadd.f32 %v2839, %v3252
        %v3313 = vadd.f32 %v2840, %v3255
        %v3314 = vadd.f32 %v2841, %v3260
        %v3315 = vadd.f32 %v2842, %v3263
        %v3316 = vadd.f32 %v2843, %v3268
        %v3317 = vadd.f32 %v2844, %v3271
        %v3318 = vadd.f32 %v2845, %v3276
        %v3319 = vadd.f32 %v2846, %v3279
        %v3320 = vadd.f32 %v2847, %v3284
        %v3321 = vadd.f32 %v2848, %v3287
        %s3322 = sadd.s32 %s192, 2
        %s3323 = smul.u32 %s3322, 3
        %s3324 = smul.addr %s3323, 4
        %s3325 = scalar_lea.vmem %s182, %s3324
        %v3326 = vld [vmem:[%s3325] sm:$0xf]
        %v3327 = vld [vmem:[%s3325 + $0x4] sm:$0xf]
        %v3328 = vld [vmem:[%s3325 + $0xc] sm:$0xf]
        %v3329 = vld [vmem:[%s3325 + $0x10] sm:$0xf]
        %v3330 = vld [vmem:[%s3325 + $0x18] sm:$0xf]
        %v3331 = vld [vmem:[%s3325 + $0x1c] sm:$0xf]
        %v3332 = vld [vmem:[%s3325 + $0x24] sm:$0xf]
        %v3333 = vld [vmem:[%s3325 + $0x28] sm:$0xf]
        %v3334 = vld [vmem:[%s3325 + $0x30] sm:$0xf]
        %v3335 = vld [vmem:[%s3325 + $0x34] sm:$0xf]
        %v3336 = vld [vmem:[%s3325 + $0x3c] sm:$0xf]
        %v3337 = vld [vmem:[%s3325 + $0x40] sm:$0xf]
        %v3338 = vld [vmem:[%s3325 + $0x48] sm:$0xf]
        %v3339 = vld [vmem:[%s3325 + $0x4c] sm:$0xf]
        %v3340 = vld [vmem:[%s3325 + $0x54] sm:$0xf]
        %v3341 = vld [vmem:[%s3325 + $0x58] sm:$0xf]
        %v3342 = vld [vmem:[%s3325 + $0x60] sm:$0xf]
        %v3343 = vld [vmem:[%s3325 + $0x64] sm:$0xf]
        %v3344 = vld [vmem:[%s3325 + $0x6c] sm:$0xf]
        %v3345 = vld [vmem:[%s3325 + $0x70] sm:$0xf]
        %v3346 = vld [vmem:[%s3325 + $0x78] sm:$0xf]
        %v3347 = vld [vmem:[%s3325 + $0x7c] sm:$0xf]
        %v3348 = vld [vmem:[%s3325 + $0x84] sm:$0xf]
        %v3349 = vld [vmem:[%s3325 + $0x88] sm:$0xf]
        %v3350 = vld [vmem:[%s3325 + $0x90] sm:$0xf]
        %v3351 = vld [vmem:[%s3325 + $0x94] sm:$0xf]
        %v3352 = vld [vmem:[%s3325 + $0x9c] sm:$0xf]
        %v3353 = vld [vmem:[%s3325 + $0xa0] sm:$0xf]
        %v3354 = vld [vmem:[%s3325 + $0xa8] sm:$0xf]
        %v3355 = vld [vmem:[%s3325 + $0xac] sm:$0xf]
        %v3356 = vld [vmem:[%s3325 + $0xb4] sm:$0xf]
        %v3357 = vld [vmem:[%s3325 + $0xb8] sm:$0xf]
        %v3358 = vld [vmem:[%s1 + $0xc] sm:$0x3]
        %v3391 = vunpack.c.l.b16 %v3326
        %v3392 = vunpack.c.l.b16 %v3327
        %v3393 = vunpack.c.l.b16 %v3328
        %v3394 = vunpack.c.l.b16 %v3329
        %v3395 = vunpack.c.l.b16 %v3330
        %v3396 = vunpack.c.l.b16 %v3331
        %v3397 = vunpack.c.l.b16 %v3332
        %v3398 = vunpack.c.l.b16 %v3333
        %v3399 = vunpack.c.l.b16 %v3334
        %v3400 = vunpack.c.l.b16 %v3335
        %v3401 = vunpack.c.l.b16 %v3336
        %v3402 = vunpack.c.l.b16 %v3337
        %v3403 = vunpack.c.l.b16 %v3338
        %v3404 = vunpack.c.l.b16 %v3339
        %v3405 = vunpack.c.l.b16 %v3340
        %v3406 = vunpack.c.l.b16 %v3341
        %v3407 = vunpack.c.l.b16 %v3342
        %v3408 = vunpack.c.l.b16 %v3343
        %v3409 = vunpack.c.l.b16 %v3344
        %v3410 = vunpack.c.l.b16 %v3345
        %v3411 = vunpack.c.l.b16 %v3346
        %v3412 = vunpack.c.l.b16 %v3347
        %v3413 = vunpack.c.l.b16 %v3348
        %v3414 = vunpack.c.l.b16 %v3349
        %v3415 = vunpack.c.l.b16 %v3350
        %v3416 = vunpack.c.l.b16 %v3351
        %v3417 = vunpack.c.l.b16 %v3352
        %v3418 = vunpack.c.l.b16 %v3353
        %v3419 = vunpack.c.l.b16 %v3354
        %v3420 = vunpack.c.l.b16 %v3355
        %v3421 = vunpack.c.l.b16 %v3356
        %v3422 = vunpack.c.l.b16 %v3357
        %v3423 = vpack.c.b16 %v3392, %v3391
        %v3424 = vpack.c.b16 %v3394, %v3393
        %v3425 = vpack.c.b16 %v3396, %v3395
        %v3426 = vpack.c.b16 %v3398, %v3397
        %v3427 = vpack.c.b16 %v3400, %v3399
        %v3428 = vpack.c.b16 %v3402, %v3401
        %v3429 = vpack.c.b16 %v3404, %v3403
        %v3430 = vpack.c.b16 %v3406, %v3405
        %v3431 = vpack.c.b16 %v3408, %v3407
        %v3432 = vpack.c.b16 %v3410, %v3409
        %v3433 = vpack.c.b16 %v3412, %v3411
        %v3434 = vpack.c.b16 %v3414, %v3413
        %v3435 = vpack.c.b16 %v3416, %v3415
        %v3436 = vpack.c.b16 %v3418, %v3417
        %v3437 = vpack.c.b16 %v3420, %v3419
        %v3438 = vpack.c.b16 %v3422, %v3421
        %v3440 = vsel %vm309, %v3423, 0
        %v3443 = vsel %vm309, %v3424, 0
        %v3446 = vsel %vm309, %v3425, 0
        %v3449 = vsel %vm309, %v3426, 0
        %v3452 = vsel %vm309, %v3427, 0
        %v3455 = vsel %vm309, %v3428, 0
        %v3458 = vsel %vm309, %v3429, 0
        %v3461 = vsel %vm309, %v3430, 0
        %v3464 = vsel %vm309, %v3431, 0
        %v3467 = vsel %vm309, %v3432, 0
        %v3470 = vsel %vm309, %v3433, 0
        %v3473 = vsel %vm309, %v3434, 0
        %v3476 = vsel %vm309, %v3435, 0
        %v3479 = vsel %vm309, %v3436, 0
        %v3482 = vsel %vm309, %v3437, 0
        %v3485 = vsel %vm309, %v3438, 0
        %v3488 = vsel %vm358, %v3358, 0
        %3490 = vmatprep.subr.bf16.mxu0 0
        %3491 = vmatpush1.bf16.msra.mxu0 0
        %3492 = vmatprep.subr.bf16.mxu0 0
        %3493 = vmatpush1.bf16.msra.mxu0 0
        %3494 = vmatprep.subr.bf16.mxu0 0
        %3495 = vmatpush1.bf16.msra.mxu0 0
        %3496 = vmatprep.subr.bf16.mxu0 0
        %3497 = vmatpush1.bf16.msra.mxu0 0
        %3498 = vmatprep.subr.bf16.mxu0 0
        %3499 = vmatpush1.bf16.msra.mxu0 0
        %3500 = vmatprep.subr.bf16.mxu0 0
        %3501 = vmatpush1.bf16.msra.mxu0 0
        %3502 = vmatprep.subr.bf16.mxu0 0
        %3503 = vmatpush1.bf16.msra.mxu0 0
        %3504 = vmatprep.subr.bf16.mxu0 0
        %3505 = vmatpush1.bf16.msra.mxu0 %v3488
        %3506 = vmatprep.subr.bf16.mxu0 0
        %3507 = vmatpush2.bf16.msra.mxu0 0
        %3508 = vmatprep.subr.bf16.mxu0 0
        %3509 = vmatpush2.bf16.msra.mxu0 0
        %3510 = vmatprep.subr.bf16.mxu0 0
        %3511 = vmatpush2.bf16.msra.mxu0 0
        %3512 = vmatprep.subr.bf16.mxu0 0
        %3513 = vmatpush2.bf16.msra.mxu0 0
        %3514 = vmatprep.subr.bf16.mxu0 0
        %3515 = vmatpush2.bf16.msra.mxu0 0
        %3516 = vmatprep.subr.bf16.mxu0 0
        %3517 = vmatpush2.bf16.msra.mxu0 0
        %3518 = vmatprep.subr.bf16.mxu0 0
        %3519 = vmatpush2.bf16.msra.mxu0 0
        %3520 = vmatprep.subr.bf16.mxu0 0
        %3521 = vmatpush2.bf16.msra.mxu0 0
        %3522 = vmatprep.mubr.bf16.mxu0 0
        %3523 = vmatmul.mubr.bf16.gmra.mxu0 %v3440
        %v3524 = vpop.f32.mrf.mxu0
        %v3525 = vadd.f32 0.0, %v3524
        %v3526 = vpop.f32.mrf.mxu0
        %v3527 = vpop.f32.mrf.mxu0
        %v3528 = vadd.f32 0.0, %v3527
        %v3529 = vpop.f32.mrf.mxu0
        %3530 = vmatprep.mubr.bf16.mxu0 0
        %3531 = vmatmul.mubr.bf16.gmra.mxu0 %v3443
        %v3532 = vpop.f32.mrf.mxu0
        %v3533 = vadd.f32 0.0, %v3532
        %v3534 = vpop.f32.mrf.mxu0
        %v3535 = vpop.f32.mrf.mxu0
        %v3536 = vadd.f32 0.0, %v3535
        %v3537 = vpop.f32.mrf.mxu0
        %3538 = vmatprep.mubr.bf16.mxu0 0
        %3539 = vmatmul.mubr.bf16.gmra.mxu0 %v3446
        %v3540 = vpop.f32.mrf.mxu0
        %v3541 = vadd.f32 0.0, %v3540
        %v3542 = vpop.f32.mrf.mxu0
        %v3543 = vpop.f32.mrf.mxu0
        %v3544 = vadd.f32 0.0, %v3543
        %v3545 = vpop.f32.mrf.mxu0
        %3546 = vmatprep.mubr.bf16.mxu0 0
        %3547 = vmatmul.mubr.bf16.gmra.mxu0 %v3449
        %v3548 = vpop.f32.mrf.mxu0
        %v3549 = vadd.f32 0.0, %v3548
        %v3550 = vpop.f32.mrf.mxu0
        %v3551 = vpop.f32.mrf.mxu0
        %v3552 = vadd.f32 0.0, %v3551
        %v3553 = vpop.f32.mrf.mxu0
        %3554 = vmatprep.mubr.bf16.mxu0 0
        %3555 = vmatmul.mubr.bf16.gmra.mxu0 %v3452
        %v3556 = vpop.f32.mrf.mxu0
        %v3557 = vadd.f32 0.0, %v3556
        %v3558 = vpop.f32.mrf.mxu0
        %v3559 = vpop.f32.mrf.mxu0
        %v3560 = vadd.f32 0.0, %v3559
        %v3561 = vpop.f32.mrf.mxu0
        %3562 = vmatprep.mubr.bf16.mxu0 0
        %3563 = vmatmul.mubr.bf16.gmra.mxu0 %v3455
        %v3564 = vpop.f32.mrf.mxu0
        %v3565 = vadd.f32 0.0, %v3564
        %v3566 = vpop.f32.mrf.mxu0
        %v3567 = vpop.f32.mrf.mxu0
        %v3568 = vadd.f32 0.0, %v3567
        %v3569 = vpop.f32.mrf.mxu0
        %3570 = vmatprep.mubr.bf16.mxu0 0
        %3571 = vmatmul.mubr.bf16.gmra.mxu0 %v3458
        %v3572 = vpop.f32.mrf.mxu0
        %v3573 = vadd.f32 0.0, %v3572
        %v3574 = vpop.f32.mrf.mxu0
        %v3575 = vpop.f32.mrf.mxu0
        %v3576 = vadd.f32 0.0, %v3575
        %v3577 = vpop.f32.mrf.mxu0
        %3578 = vmatprep.mubr.bf16.mxu0 0
        %3579 = vmatmul.mubr.bf16.gmra.mxu0 %v3461
        %v3580 = vpop.f32.mrf.mxu0
        %v3581 = vadd.f32 0.0, %v3580
        %v3582 = vpop.f32.mrf.mxu0
        %v3583 = vpop.f32.mrf.mxu0
        %v3584 = vadd.f32 0.0, %v3583
        %v3585 = vpop.f32.mrf.mxu0
        %3586 = vmatprep.mubr.bf16.mxu0 0
        %3587 = vmatmul.mubr.bf16.gmra.mxu0 %v3464
        %v3588 = vpop.f32.mrf.mxu0
        %v3589 = vadd.f32 0.0, %v3588
        %v3590 = vpop.f32.mrf.mxu0
        %v3591 = vpop.f32.mrf.mxu0
        %v3592 = vadd.f32 0.0, %v3591
        %v3593 = vpop.f32.mrf.mxu0
        %3594 = vmatprep.mubr.bf16.mxu0 0
        %3595 = vmatmul.mubr.bf16.gmra.mxu0 %v3467
        %v3596 = vpop.f32.mrf.mxu0
        %v3597 = vadd.f32 0.0, %v3596
        %v3598 = vpop.f32.mrf.mxu0
        %v3599 = vpop.f32.mrf.mxu0
        %v3600 = vadd.f32 0.0, %v3599
        %v3601 = vpop.f32.mrf.mxu0
        %3602 = vmatprep.mubr.bf16.mxu0 0
        %3603 = vmatmul.mubr.bf16.gmra.mxu0 %v3470
        %v3604 = vpop.f32.mrf.mxu0
        %v3605 = vadd.f32 0.0, %v3604
        %v3606 = vpop.f32.mrf.mxu0
        %v3607 = vpop.f32.mrf.mxu0
        %v3608 = vadd.f32 0.0, %v3607
        %v3609 = vpop.f32.mrf.mxu0
        %3610 = vmatprep.mubr.bf16.mxu0 0
        %3611 = vmatmul.mubr.bf16.gmra.mxu0 %v3473
        %v3612 = vpop.f32.mrf.mxu0
        %v3613 = vadd.f32 0.0, %v3612
        %v3614 = vpop.f32.mrf.mxu0
        %v3615 = vpop.f32.mrf.mxu0
        %v3616 = vadd.f32 0.0, %v3615
        %v3617 = vpop.f32.mrf.mxu0
        %3618 = vmatprep.mubr.bf16.mxu0 0
        %3619 = vmatmul.mubr.bf16.gmra.mxu0 %v3476
        %v3620 = vpop.f32.mrf.mxu0
        %v3621 = vadd.f32 0.0, %v3620
        %v3622 = vpop.f32.mrf.mxu0
        %v3623 = vpop.f32.mrf.mxu0
        %v3624 = vadd.f32 0.0, %v3623
        %v3625 = vpop.f32.mrf.mxu0
        %3626 = vmatprep.mubr.bf16.mxu0 0
        %3627 = vmatmul.mubr.bf16.gmra.mxu0 %v3479
        %v3628 = vpop.f32.mrf.mxu0
        %v3629 = vadd.f32 0.0, %v3628
        %v3630 = vpop.f32.mrf.mxu0
        %v3631 = vpop.f32.mrf.mxu0
        %v3632 = vadd.f32 0.0, %v3631
        %v3633 = vpop.f32.mrf.mxu0
        %3634 = vmatprep.mubr.bf16.mxu0 0
        %3635 = vmatmul.mubr.bf16.gmra.mxu0 %v3482
        %v3636 = vpop.f32.mrf.mxu0
        %v3637 = vadd.f32 0.0, %v3636
        %v3638 = vpop.f32.mrf.mxu0
        %v3639 = vpop.f32.mrf.mxu0
        %v3640 = vadd.f32 0.0, %v3639
        %v3641 = vpop.f32.mrf.mxu0
        %3642 = vmatprep.mubr.bf16.mxu0 0
        %3643 = vmatmul.mubr.bf16.gmra.mxu0 %v3485
        %v3644 = vpop.f32.mrf.mxu0
        %v3645 = vadd.f32 0.0, %v3644
        %v3646 = vpop.f32.mrf.mxu0
        %v3647 = vpop.f32.mrf.mxu0
        %v3648 = vadd.f32 0.0, %v3647
        %v3649 = vpop.f32.mrf.mxu0
        %3650 = vdwg.mxu0
        %v3651 = vadd.f32 %v3290, %v3525
        %v3652 = vadd.f32 %v3291, %v3528
        %v3653 = vadd.f32 %v3292, %v3533
        %v3654 = vadd.f32 %v3293, %v3536
        %v3655 = vadd.f32 %v3294, %v3541
        %v3656 = vadd.f32 %v3295, %v3544
        %v3657 = vadd.f32 %v3296, %v3549
        %v3658 = vadd.f32 %v3297, %v3552
        %v3659 = vadd.f32 %v3298, %v3557
        %v3660 = vadd.f32 %v3299, %v3560
        %v3661 = vadd.f32 %v3300, %v3565
        %v3662 = vadd.f32 %v3301, %v3568
        %v3663 = vadd.f32 %v3302, %v3573
        %v3664 = vadd.f32 %v3303, %v3576
        %v3665 = vadd.f32 %v3304, %v3581
        %v3666 = vadd.f32 %v3305, %v3584
        %v3667 = vadd.f32 %v3306, %v3589
        %v3668 = vadd.f32 %v3307, %v3592
        %v3669 = vadd.f32 %v3308, %v3597
        %v3670 = vadd.f32 %v3309, %v3600
        %v3671 = vadd.f32 %v3310, %v3605
        %v3672 = vadd.f32 %v3311, %v3608
        %v3673 = vadd.f32 %v3312, %v3613
        %v3674 = vadd.f32 %v3313, %v3616
        %v3675 = vadd.f32 %v3314, %v3621
        %v3676 = vadd.f32 %v3315, %v3624
        %v3677 = vadd.f32 %v3316, %v3629
        %v3678 = vadd.f32 %v3317, %v3632
        %v3679 = vadd.f32 %v3318, %v3637
        %v3680 = vadd.f32 %v3319, %v3640
        %v3681 = vadd.f32 %v3320, %v3645
        %v3682 = vadd.f32 %v3321, %v3648
        %v3683 = vld [vmem:[%s3325] sm:$0xf]
        %v3684 = vld [vmem:[%s3325 + $0x4] sm:$0xf]
        %v3685 = vld [vmem:[%s3325 + $0x8] sm:$0x1]
        %v3686 = vld [vmem:[%s3325 + $0xc] sm:$0xf]
        %v3687 = vld [vmem:[%s3325 + $0x10] sm:$0xf]
        %v3688 = vld [vmem:[%s3325 + $0x14] sm:$0x1]
        %v3689 = vld [vmem:[%s3325 + $0x18] sm:$0xf]
        %v3690 = vld [vmem:[%s3325 + $0x1c] sm:$0xf]
        %v3691 = vld [vmem:[%s3325 + $0x20] sm:$0x1]
        %v3692 = vld [vmem:[%s3325 + $0x24] sm:$0xf]
        %v3693 = vld [vmem:[%s3325 + $0x28] sm:$0xf]
        %v3694 = vld [vmem:[%s3325 + $0x2c] sm:$0x1]
        %v3695 = vld [vmem:[%s3325 + $0x30] sm:$0xf]
        %v3696 = vld [vmem:[%s3325 + $0x34] sm:$0xf]
        %v3697 = vld [vmem:[%s3325 + $0x38] sm:$0x1]
        %v3698 = vld [vmem:[%s3325 + $0x3c] sm:$0xf]
        %v3699 = vld [vmem:[%s3325 + $0x40] sm:$0xf]
        %v3700 = vld [vmem:[%s3325 + $0x44] sm:$0x1]
        %v3701 = vld [vmem:[%s3325 + $0x48] sm:$0xf]
        %v3702 = vld [vmem:[%s3325 + $0x4c] sm:$0xf]
        %v3703 = vld [vmem:[%s3325 + $0x50] sm:$0x1]
        %v3704 = vld [vmem:[%s3325 + $0x54] sm:$0xf]
        %v3705 = vld [vmem:[%s3325 + $0x58] sm:$0xf]
        %v3706 = vld [vmem:[%s3325 + $0x5c] sm:$0x1]
        %v3707 = vld [vmem:[%s3325 + $0x60] sm:$0xf]
        %v3708 = vld [vmem:[%s3325 + $0x64] sm:$0xf]
        %v3709 = vld [vmem:[%s3325 + $0x68] sm:$0x1]
        %v3710 = vld [vmem:[%s3325 + $0x6c] sm:$0xf]
        %v3711 = vld [vmem:[%s3325 + $0x70] sm:$0xf]
        %v3712 = vld [vmem:[%s3325 + $0x74] sm:$0x1]
        %v3713 = vld [vmem:[%s3325 + $0x78] sm:$0xf]
        %v3714 = vld [vmem:[%s3325 + $0x7c] sm:$0xf]
        %v3715 = vld [vmem:[%s3325 + $0x80] sm:$0x1]
        %v3716 = vld [vmem:[%s3325 + $0x84] sm:$0xf]
        %v3717 = vld [vmem:[%s3325 + $0x88] sm:$0xf]
        %v3718 = vld [vmem:[%s3325 + $0x8c] sm:$0x1]
        %v3719 = vld [vmem:[%s3325 + $0x90] sm:$0xf]
        %v3720 = vld [vmem:[%s3325 + $0x94] sm:$0xf]
        %v3721 = vld [vmem:[%s3325 + $0x98] sm:$0x1]
        %v3722 = vld [vmem:[%s3325 + $0x9c] sm:$0xf]
        %v3723 = vld [vmem:[%s3325 + $0xa0] sm:$0xf]
        %v3724 = vld [vmem:[%s3325 + $0xa4] sm:$0x1]
        %v3725 = vld [vmem:[%s3325 + $0xa8] sm:$0xf]
        %v3726 = vld [vmem:[%s3325 + $0xac] sm:$0xf]
        %v3727 = vld [vmem:[%s3325 + $0xb0] sm:$0x1]
        %v3728 = vld [vmem:[%s3325 + $0xb4] sm:$0xf]
        %v3729 = vld [vmem:[%s3325 + $0xb8] sm:$0xf]
        %v3730 = vld [vmem:[%s3325 + $0xbc] sm:$0x1]
        %v3732 = vshrl.u32 %v3683, 16
        %v3734 = vrot.slane %v3732, 4
        %v3735 = vshll.u32 %v3683, 16
        %v3737 = vrot.slane %v3735, 5
        %v3738 = vor.u32 %v3734, %v3737
        %v3739 = vrot.slane %v3738, 4
        %v3741 = vshll.u32 %v3684, 16
        %v3743 = vrot.slane %v3741, 5
        %v3744 = vsel %vm605, %v3739, %v3743
        %v3745 = vshrl.u32 %v3684, 16
        %v3747 = vrot.slane %v3745, 4
        %v3748 = vor.u32 %v3747, %v3743
        %v3749 = vrot.slane %v3748, 4
        %v3751 = vshll.u32 %v3685, 16
        %v3753 = vrot.slane %v3751, 5
        %v3754 = vsel %vm605, %v3749, %v3753
        %v3756 = vshrl.u32 %v3686, 16
        %v3758 = vrot.slane %v3756, 4
        %v3759 = vshll.u32 %v3686, 16
        %v3761 = vrot.slane %v3759, 5
        %v3762 = vor.u32 %v3758, %v3761
        %v3763 = vrot.slane %v3762, 4
        %v3765 = vshll.u32 %v3687, 16
        %v3767 = vrot.slane %v3765, 5
        %v3768 = vsel %vm605, %v3763, %v3767
        %v3769 = vshrl.u32 %v3687, 16
        %v3771 = vrot.slane %v3769, 4
        %v3772 = vor.u32 %v3771, %v3767
        %v3773 = vrot.slane %v3772, 4
        %v3775 = vshll.u32 %v3688, 16
        %v3777 = vrot.slane %v3775, 5
        %v3778 = vsel %vm605, %v3773, %v3777
        %v3780 = vshrl.u32 %v3689, 16
        %v3782 = vrot.slane %v3780, 4
        %v3783 = vshll.u32 %v3689, 16
        %v3785 = vrot.slane %v3783, 5
        %v3786 = vor.u32 %v3782, %v3785
        %v3787 = vrot.slane %v3786, 4
        %v3789 = vshll.u32 %v3690, 16
        %v3791 = vrot.slane %v3789, 5
        %v3792 = vsel %vm605, %v3787, %v3791
        %v3793 = vshrl.u32 %v3690, 16
        %v3795 = vrot.slane %v3793, 4
        %v3796 = vor.u32 %v3795, %v3791
        %v3797 = vrot.slane %v3796, 4
        %v3799 = vshll.u32 %v3691, 16
        %v3801 = vrot.slane %v3799, 5
        %v3802 = vsel %vm605, %v3797, %v3801
        %v3804 = vshrl.u32 %v3692, 16
        %v3806 = vrot.slane %v3804, 4
        %v3807 = vshll.u32 %v3692, 16
        %v3809 = vrot.slane %v3807, 5
        %v3810 = vor.u32 %v3806, %v3809
        %v3811 = vrot.slane %v3810, 4
        %v3813 = vshll.u32 %v3693, 16
        %v3815 = vrot.slane %v3813, 5
        %v3816 = vsel %vm605, %v3811, %v3815
        %v3817 = vshrl.u32 %v3693, 16
        %v3819 = vrot.slane %v3817, 4
        %v3820 = vor.u32 %v3819, %v3815
        %v3821 = vrot.slane %v3820, 4
        %v3823 = vshll.u32 %v3694, 16
        %v3825 = vrot.slane %v3823, 5
        %v3826 = vsel %vm605, %v3821, %v3825
        %v3828 = vshrl.u32 %v3695, 16
        %v3830 = vrot.slane %v3828, 4
        %v3831 = vshll.u32 %v3695, 16
        %v3833 = vrot.slane %v3831, 5
        %v3834 = vor.u32 %v3830, %v3833
        %v3835 = vrot.slane %v3834, 4
        %v3837 = vshll.u32 %v3696, 16
        %v3839 = vrot.slane %v3837, 5
        %v3840 = vsel %vm605, %v3835, %v3839
        %v3841 = vshrl.u32 %v3696, 16
        %v3843 = vrot.slane %v3841, 4
        %v3844 = vor.u32 %v3843, %v3839
        %v3845 = vrot.slane %v3844, 4
        %v3847 = vshll.u32 %v3697, 16
        %v3849 = vrot.slane %v3847, 5
        %v3850 = vsel %vm605, %v3845, %v3849
        %v3852 = vshrl.u32 %v3698, 16
        %v3854 = vrot.slane %v3852, 4
        %v3855 = vshll.u32 %v3698, 16
        %v3857 = vrot.slane %v3855, 5
        %v3858 = vor.u32 %v3854, %v3857
        %v3859 = vrot.slane %v3858, 4
        %v3861 = vshll.u32 %v3699, 16
        %v3863 = vrot.slane %v3861, 5
        %v3864 = vsel %vm605, %v3859, %v3863
        %v3865 = vshrl.u32 %v3699, 16
        %v3867 = vrot.slane %v3865, 4
        %v3868 = vor.u32 %v3867, %v3863
        %v3869 = vrot.slane %v3868, 4
        %v3871 = vshll.u32 %v3700, 16
        %v3873 = vrot.slane %v3871, 5
        %v3874 = vsel %vm605, %v3869, %v3873
        %v3876 = vshrl.u32 %v3701, 16
        %v3878 = vrot.slane %v3876, 4
        %v3879 = vshll.u32 %v3701, 16
        %v3881 = vrot.slane %v3879, 5
        %v3882 = vor.u32 %v3878, %v3881
        %v3883 = vrot.slane %v3882, 4
        %v3885 = vshll.u32 %v3702, 16
        %v3887 = vrot.slane %v3885, 5
        %v3888 = vsel %vm605, %v3883, %v3887
        %v3889 = vshrl.u32 %v3702, 16
        %v3891 = vrot.slane %v3889, 4
        %v3892 = vor.u32 %v3891, %v3887
        %v3893 = vrot.slane %v3892, 4
        %v3895 = vshll.u32 %v3703, 16
        %v3897 = vrot.slane %v3895, 5
        %v3898 = vsel %vm605, %v3893, %v3897
        %v3900 = vshrl.u32 %v3704, 16
        %v3902 = vrot.slane %v3900, 4
        %v3903 = vshll.u32 %v3704, 16
        %v3905 = vrot.slane %v3903, 5
        %v3906 = vor.u32 %v3902, %v3905
        %v3907 = vrot.slane %v3906, 4
        %v3909 = vshll.u32 %v3705, 16
        %v3911 = vrot.slane %v3909, 5
        %v3912 = vsel %vm605, %v3907, %v3911
        %v3913 = vshrl.u32 %v3705, 16
        %v3915 = vrot.slane %v3913, 4
        %v3916 = vor.u32 %v3915, %v3911
        %v3917 = vrot.slane %v3916, 4
        %v3919 = vshll.u32 %v3706, 16
        %v3921 = vrot.slane %v3919, 5
        %v3922 = vsel %vm605, %v3917, %v3921
        %v3924 = vshrl.u32 %v3707, 16
        %v3926 = vrot.slane %v3924, 4
        %v3927 = vshll.u32 %v3707, 16
        %v3929 = vrot.slane %v3927, 5
        %v3930 = vor.u32 %v3926, %v3929
        %v3931 = vrot.slane %v3930, 4
        %v3933 = vshll.u32 %v3708, 16
        %v3935 = vrot.slane %v3933, 5
        %v3936 = vsel %vm605, %v3931, %v3935
        %v3937 = vshrl.u32 %v3708, 16
        %v3939 = vrot.slane %v3937, 4
        %v3940 = vor.u32 %v3939, %v3935
        %v3941 = vrot.slane %v3940, 4
        %v3943 = vshll.u32 %v3709, 16
        %v3945 = vrot.slane %v3943, 5
        %v3946 = vsel %vm605, %v3941, %v3945
        %v3948 = vshrl.u32 %v3710, 16
        %v3950 = vrot.slane %v3948, 4
        %v3951 = vshll.u32 %v3710, 16
        %v3953 = vrot.slane %v3951, 5
        %v3954 = vor.u32 %v3950, %v3953
        %v3955 = vrot.slane %v3954, 4
        %v3957 = vshll.u32 %v3711, 16
        %v3959 = vrot.slane %v3957, 5
        %v3960 = vsel %vm605, %v3955, %v3959
        %v3961 = vshrl.u32 %v3711, 16
        %v3963 = vrot.slane %v3961, 4
        %v3964 = vor.u32 %v3963, %v3959
        %v3965 = vrot.slane %v3964, 4
        %v3967 = vshll.u32 %v3712, 16
        %v3969 = vrot.slane %v3967, 5
        %v3970 = vsel %vm605, %v3965, %v3969
        %v3972 = vshrl.u32 %v3713, 16
        %v3974 = vrot.slane %v3972, 4
        %v3975 = vshll.u32 %v3713, 16
        %v3977 = vrot.slane %v3975, 5
        %v3978 = vor.u32 %v3974, %v3977
        %v3979 = vrot.slane %v3978, 4
        %v3981 = vshll.u32 %v3714, 16
        %v3983 = vrot.slane %v3981, 5
        %v3984 = vsel %vm605, %v3979, %v3983
        %v3985 = vshrl.u32 %v3714, 16
        %v3987 = vrot.slane %v3985, 4
        %v3988 = vor.u32 %v3987, %v3983
        %v3989 = vrot.slane %v3988, 4
        %v3991 = vshll.u32 %v3715, 16
        %v3993 = vrot.slane %v3991, 5
        %v3994 = vsel %vm605, %v3989, %v3993
        %v3996 = vshrl.u32 %v3716, 16
        %v3998 = vrot.slane %v3996, 4
        %v3999 = vshll.u32 %v3716, 16
        %v4001 = vrot.slane %v3999, 5
        %v4002 = vor.u32 %v3998, %v4001
        %v4003 = vrot.slane %v4002, 4
        %v4005 = vshll.u32 %v3717, 16
        %v4007 = vrot.slane %v4005, 5
        %v4008 = vsel %vm605, %v4003, %v4007
        %v4009 = vshrl.u32 %v3717, 16
        %v4011 = vrot.slane %v4009, 4
        %v4012 = vor.u32 %v4011, %v4007
        %v4013 = vrot.slane %v4012, 4
        %v4015 = vshll.u32 %v3718, 16
        %v4017 = vrot.slane %v4015, 5
        %v4018 = vsel %vm605, %v4013, %v4017
        %v4020 = vshrl.u32 %v3719, 16
        %v4022 = vrot.slane %v4020, 4
        %v4023 = vshll.u32 %v3719, 16
        %v4025 = vrot.slane %v4023, 5
        %v4026 = vor.u32 %v4022, %v4025
        %v4027 = vrot.slane %v4026, 4
        %v4029 = vshll.u32 %v3720, 16
        %v4031 = vrot.slane %v4029, 5
        %v4032 = vsel %vm605, %v4027, %v4031
        %v4033 = vshrl.u32 %v3720, 16
        %v4035 = vrot.slane %v4033, 4
        %v4036 = vor.u32 %v4035, %v4031
        %v4037 = vrot.slane %v4036, 4
        %v4039 = vshll.u32 %v3721, 16
        %v4041 = vrot.slane %v4039, 5
        %v4042 = vsel %vm605, %v4037, %v4041
        %v4044 = vshrl.u32 %v3722, 16
        %v4046 = vrot.slane %v4044, 4
        %v4047 = vshll.u32 %v3722, 16
        %v4049 = vrot.slane %v4047, 5
        %v4050 = vor.u32 %v4046, %v4049
        %v4051 = vrot.slane %v4050, 4
        %v4053 = vshll.u32 %v3723, 16
        %v4055 = vrot.slane %v4053, 5
        %v4056 = vsel %vm605, %v4051, %v4055
        %v4057 = vshrl.u32 %v3723, 16
        %v4059 = vrot.slane %v4057, 4
        %v4060 = vor.u32 %v4059, %v4055
        %v4061 = vrot.slane %v4060, 4
        %v4063 = vshll.u32 %v3724, 16
        %v4065 = vrot.slane %v4063, 5
        %v4066 = vsel %vm605, %v4061, %v4065
        %v4068 = vshrl.u32 %v3725, 16
        %v4070 = vrot.slane %v4068, 4
        %v4071 = vshll.u32 %v3725, 16
        %v4073 = vrot.slane %v4071, 5
        %v4074 = vor.u32 %v4070, %v4073
        %v4075 = vrot.slane %v4074, 4
        %v4077 = vshll.u32 %v3726, 16
        %v4079 = vrot.slane %v4077, 5
        %v4080 = vsel %vm605, %v4075, %v4079
        %v4081 = vshrl.u32 %v3726, 16
        %v4083 = vrot.slane %v4081, 4
        %v4084 = vor.u32 %v4083, %v4079
        %v4085 = vrot.slane %v4084, 4
        %v4087 = vshll.u32 %v3727, 16
        %v4089 = vrot.slane %v4087, 5
        %v4090 = vsel %vm605, %v4085, %v4089
        %v4092 = vshrl.u32 %v3728, 16
        %v4094 = vrot.slane %v4092, 4
        %v4095 = vshll.u32 %v3728, 16
        %v4097 = vrot.slane %v4095, 5
        %v4098 = vor.u32 %v4094, %v4097
        %v4099 = vrot.slane %v4098, 4
        %v4101 = vshll.u32 %v3729, 16
        %v4103 = vrot.slane %v4101, 5
        %v4104 = vsel %vm605, %v4099, %v4103
        %v4105 = vshrl.u32 %v3729, 16
        %v4107 = vrot.slane %v4105, 4
        %v4108 = vor.u32 %v4107, %v4103
        %v4109 = vrot.slane %v4108, 4
        %v4111 = vshll.u32 %v3730, 16
        %v4113 = vrot.slane %v4111, 5
        %v4114 = vsel %vm605, %v4109, %v4113
        %v4115 = vld [vmem:[%s1 + $0xc] sm:$0xc]
        %v4116 = vunpack.c.l.b16 %v3744
        %v4117 = vunpack.c.l.b16 %v3754
        %v4118 = vunpack.c.l.b16 %v3768
        %v4119 = vunpack.c.l.b16 %v3778
        %v4120 = vunpack.c.l.b16 %v3792
        %v4121 = vunpack.c.l.b16 %v3802
        %v4122 = vunpack.c.l.b16 %v3816
        %v4123 = vunpack.c.l.b16 %v3826
        %v4124 = vunpack.c.l.b16 %v3840
        %v4125 = vunpack.c.l.b16 %v3850
        %v4126 = vunpack.c.l.b16 %v3864
        %v4127 = vunpack.c.l.b16 %v3874
        %v4128 = vunpack.c.l.b16 %v3888
        %v4129 = vunpack.c.l.b16 %v3898
        %v4130 = vunpack.c.l.b16 %v3912
        %v4131 = vunpack.c.l.b16 %v3922
        %v4132 = vunpack.c.l.b16 %v3936
        %v4133 = vunpack.c.l.b16 %v3946
        %v4134 = vunpack.c.l.b16 %v3960
        %v4135 = vunpack.c.l.b16 %v3970
        %v4136 = vunpack.c.l.b16 %v3984
        %v4137 = vunpack.c.l.b16 %v3994
        %v4138 = vunpack.c.l.b16 %v4008
        %v4139 = vunpack.c.l.b16 %v4018
        %v4140 = vunpack.c.l.b16 %v4032
        %v4141 = vunpack.c.l.b16 %v4042
        %v4142 = vunpack.c.l.b16 %v4056
        %v4143 = vunpack.c.l.b16 %v4066
        %v4144 = vunpack.c.l.b16 %v4080
        %v4145 = vunpack.c.l.b16 %v4090
        %v4146 = vunpack.c.l.b16 %v4104
        %v4147 = vunpack.c.l.b16 %v4114
        %v4148 = vpack.c.b16 %v4117, %v4116
        %v4149 = vpack.c.b16 %v4119, %v4118
        %v4150 = vpack.c.b16 %v4121, %v4120
        %v4151 = vpack.c.b16 %v4123, %v4122
        %v4152 = vpack.c.b16 %v4125, %v4124
        %v4153 = vpack.c.b16 %v4127, %v4126
        %v4154 = vpack.c.b16 %v4129, %v4128
        %v4155 = vpack.c.b16 %v4131, %v4130
        %v4156 = vpack.c.b16 %v4133, %v4132
        %v4157 = vpack.c.b16 %v4135, %v4134
        %v4158 = vpack.c.b16 %v4137, %v4136
        %v4159 = vpack.c.b16 %v4139, %v4138
        %v4160 = vpack.c.b16 %v4141, %v4140
        %v4161 = vpack.c.b16 %v4143, %v4142
        %v4162 = vpack.c.b16 %v4145, %v4144
        %v4163 = vpack.c.b16 %v4147, %v4146
        %v4165 = vunpack.c.l.b16 %v4115
        %v4166 = vpack.c.b16 %v4165, %v4165
        %v4167 = vrot.slane %v4166, 2
        %v4169 = vsel %vm309, %v4148, 0
        %v4172 = vsel %vm309, %v4149, 0
        %v4175 = vsel %vm309, %v4150, 0
        %v4178 = vsel %vm309, %v4151, 0
        %v4181 = vsel %vm309, %v4152, 0
        %v4184 = vsel %vm309, %v4153, 0
        %v4187 = vsel %vm309, %v4154, 0
        %v4190 = vsel %vm309, %v4155, 0
        %v4193 = vsel %vm309, %v4156, 0
        %v4196 = vsel %vm309, %v4157, 0
        %v4199 = vsel %vm309, %v4158, 0
        %v4202 = vsel %vm309, %v4159, 0
        %v4205 = vsel %vm309, %v4160, 0
        %v4208 = vsel %vm309, %v4161, 0
        %v4211 = vsel %vm309, %v4162, 0
        %v4214 = vsel %vm309, %v4163, 0
        %v4217 = vsel %vm358, %v4167, 0
        %4219 = vmatprep.subr.bf16.mxu0 0
        %4220 = vmatpush1.bf16.msra.mxu0 0
        %4221 = vmatprep.subr.bf16.mxu0 0
        %4222 = vmatpush1.bf16.msra.mxu0 0
        %4223 = vmatprep.subr.bf16.mxu0 0
        %4224 = vmatpush1.bf16.msra.mxu0 0
        %4225 = vmatprep.subr.bf16.mxu0 0
        %4226 = vmatpush1.bf16.msra.mxu0 0
        %4227 = vmatprep.subr.bf16.mxu0 0
        %4228 = vmatpush1.bf16.msra.mxu0 0
        %4229 = vmatprep.subr.bf16.mxu0 0
        %4230 = vmatpush1.bf16.msra.mxu0 0
        %4231 = vmatprep.subr.bf16.mxu0 0
        %4232 = vmatpush1.bf16.msra.mxu0 0
        %4233 = vmatprep.subr.bf16.mxu0 0
        %4234 = vmatpush1.bf16.msra.mxu0 %v4217
        %4235 = vmatprep.subr.bf16.mxu0 0
        %4236 = vmatpush2.bf16.msra.mxu0 0
        %4237 = vmatprep.subr.bf16.mxu0 0
        %4238 = vmatpush2.bf16.msra.mxu0 0
        %4239 = vmatprep.subr.bf16.mxu0 0
        %4240 = vmatpush2.bf16.msra.mxu0 0
        %4241 = vmatprep.subr.bf16.mxu0 0
        %4242 = vmatpush2.bf16.msra.mxu0 0
        %4243 = vmatprep.subr.bf16.mxu0 0
        %4244 = vmatpush2.bf16.msra.mxu0 0
        %4245 = vmatprep.subr.bf16.mxu0 0
        %4246 = vmatpush2.bf16.msra.mxu0 0
        %4247 = vmatprep.subr.bf16.mxu0 0
        %4248 = vmatpush2.bf16.msra.mxu0 0
        %4249 = vmatprep.subr.bf16.mxu0 0
        %4250 = vmatpush2.bf16.msra.mxu0 0
        %4251 = vmatprep.mubr.bf16.mxu0 0
        %4252 = vmatmul.mubr.bf16.gmra.mxu0 %v4169
        %v4253 = vpop.f32.mrf.mxu0
        %v4254 = vadd.f32 0.0, %v4253
        %v4255 = vpop.f32.mrf.mxu0
        %v4256 = vpop.f32.mrf.mxu0
        %v4257 = vadd.f32 0.0, %v4256
        %v4258 = vpop.f32.mrf.mxu0
        %4259 = vmatprep.mubr.bf16.mxu0 0
        %4260 = vmatmul.mubr.bf16.gmra.mxu0 %v4172
        %v4261 = vpop.f32.mrf.mxu0
        %v4262 = vadd.f32 0.0, %v4261
        %v4263 = vpop.f32.mrf.mxu0
        %v4264 = vpop.f32.mrf.mxu0
        %v4265 = vadd.f32 0.0, %v4264
        %v4266 = vpop.f32.mrf.mxu0
        %4267 = vmatprep.mubr.bf16.mxu0 0
        %4268 = vmatmul.mubr.bf16.gmra.mxu0 %v4175
        %v4269 = vpop.f32.mrf.mxu0
        %v4270 = vadd.f32 0.0, %v4269
        %v4271 = vpop.f32.mrf.mxu0
        %v4272 = vpop.f32.mrf.mxu0
        %v4273 = vadd.f32 0.0, %v4272
        %v4274 = vpop.f32.mrf.mxu0
        %4275 = vmatprep.mubr.bf16.mxu0 0
        %4276 = vmatmul.mubr.bf16.gmra.mxu0 %v4178
        %v4277 = vpop.f32.mrf.mxu0
        %v4278 = vadd.f32 0.0, %v4277
        %v4279 = vpop.f32.mrf.mxu0
        %v4280 = vpop.f32.mrf.mxu0
        %v4281 = vadd.f32 0.0, %v4280
        %v4282 = vpop.f32.mrf.mxu0
        %4283 = vmatprep.mubr.bf16.mxu0 0
        %4284 = vmatmul.mubr.bf16.gmra.mxu0 %v4181
        %v4285 = vpop.f32.mrf.mxu0
        %v4286 = vadd.f32 0.0, %v4285
        %v4287 = vpop.f32.mrf.mxu0
        %v4288 = vpop.f32.mrf.mxu0
        %v4289 = vadd.f32 0.0, %v4288
        %v4290 = vpop.f32.mrf.mxu0
        %4291 = vmatprep.mubr.bf16.mxu0 0
        %4292 = vmatmul.mubr.bf16.gmra.mxu0 %v4184
        %v4293 = vpop.f32.mrf.mxu0
        %v4294 = vadd.f32 0.0, %v4293
        %v4295 = vpop.f32.mrf.mxu0
        %v4296 = vpop.f32.mrf.mxu0
        %v4297 = vadd.f32 0.0, %v4296
        %v4298 = vpop.f32.mrf.mxu0
        %4299 = vmatprep.mubr.bf16.mxu0 0
        %4300 = vmatmul.mubr.bf16.gmra.mxu0 %v4187
        %v4301 = vpop.f32.mrf.mxu0
        %v4302 = vadd.f32 0.0, %v4301
        %v4303 = vpop.f32.mrf.mxu0
        %v4304 = vpop.f32.mrf.mxu0
        %v4305 = vadd.f32 0.0, %v4304
        %v4306 = vpop.f32.mrf.mxu0
        %4307 = vmatprep.mubr.bf16.mxu0 0
        %4308 = vmatmul.mubr.bf16.gmra.mxu0 %v4190
        %v4309 = vpop.f32.mrf.mxu0
        %v4310 = vadd.f32 0.0, %v4309
        %v4311 = vpop.f32.mrf.mxu0
        %v4312 = vpop.f32.mrf.mxu0
        %v4313 = vadd.f32 0.0, %v4312
        %v4314 = vpop.f32.mrf.mxu0
        %4315 = vmatprep.mubr.bf16.mxu0 0
        %4316 = vmatmul.mubr.bf16.gmra.mxu0 %v4193
        %v4317 = vpop.f32.mrf.mxu0
        %v4318 = vadd.f32 0.0, %v4317
        %v4319 = vpop.f32.mrf.mxu0
        %v4320 = vpop.f32.mrf.mxu0
        %v4321 = vadd.f32 0.0, %v4320
        %v4322 = vpop.f32.mrf.mxu0
        %4323 = vmatprep.mubr.bf16.mxu0 0
        %4324 = vmatmul.mubr.bf16.gmra.mxu0 %v4196
        %v4325 = vpop.f32.mrf.mxu0
        %v4326 = vadd.f32 0.0, %v4325
        %v4327 = vpop.f32.mrf.mxu0
        %v4328 = vpop.f32.mrf.mxu0
        %v4329 = vadd.f32 0.0, %v4328
        %v4330 = vpop.f32.mrf.mxu0
        %4331 = vmatprep.mubr.bf16.mxu0 0
        %4332 = vmatmul.mubr.bf16.gmra.mxu0 %v4199
        %v4333 = vpop.f32.mrf.mxu0
        %v4334 = vadd.f32 0.0, %v4333
        %v4335 = vpop.f32.mrf.mxu0
        %v4336 = vpop.f32.mrf.mxu0
        %v4337 = vadd.f32 0.0, %v4336
        %v4338 = vpop.f32.mrf.mxu0
        %4339 = vmatprep.mubr.bf16.mxu0 0
        %4340 = vmatmul.mubr.bf16.gmra.mxu0 %v4202
        %v4341 = vpop.f32.mrf.mxu0
        %v4342 = vadd.f32 0.0, %v4341
        %v4343 = vpop.f32.mrf.mxu0
        %v4344 = vpop.f32.mrf.mxu0
        %v4345 = vadd.f32 0.0, %v4344
        %v4346 = vpop.f32.mrf.mxu0
        %4347 = vmatprep.mubr.bf16.mxu0 0
        %4348 = vmatmul.mubr.bf16.gmra.mxu0 %v4205
        %v4349 = vpop.f32.mrf.mxu0
        %v4350 = vadd.f32 0.0, %v4349
        %v4351 = vpop.f32.mrf.mxu0
        %v4352 = vpop.f32.mrf.mxu0
        %v4353 = vadd.f32 0.0, %v4352
        %v4354 = vpop.f32.mrf.mxu0
        %4355 = vmatprep.mubr.bf16.mxu0 0
        %4356 = vmatmul.mubr.bf16.gmra.mxu0 %v4208
        %v4357 = vpop.f32.mrf.mxu0
        %v4358 = vadd.f32 0.0, %v4357
        %v4359 = vpop.f32.mrf.mxu0
        %v4360 = vpop.f32.mrf.mxu0
        %v4361 = vadd.f32 0.0, %v4360
        %v4362 = vpop.f32.mrf.mxu0
        %4363 = vmatprep.mubr.bf16.mxu0 0
        %4364 = vmatmul.mubr.bf16.gmra.mxu0 %v4211
        %v4365 = vpop.f32.mrf.mxu0
        %v4366 = vadd.f32 0.0, %v4365
        %v4367 = vpop.f32.mrf.mxu0
        %v4368 = vpop.f32.mrf.mxu0
        %v4369 = vadd.f32 0.0, %v4368
        %v4370 = vpop.f32.mrf.mxu0
        %4371 = vmatprep.mubr.bf16.mxu0 0
        %4372 = vmatmul.mubr.bf16.gmra.mxu0 %v4214
        %v4373 = vpop.f32.mrf.mxu0
        %v4374 = vadd.f32 0.0, %v4373
        %v4375 = vpop.f32.mrf.mxu0
        %v4376 = vpop.f32.mrf.mxu0
        %v4377 = vadd.f32 0.0, %v4376
        %v4378 = vpop.f32.mrf.mxu0
        %4379 = vdwg.mxu0
        %v4380 = vadd.f32 %v3651, %v4254
        %v4381 = vadd.f32 %v3652, %v4257
        %v4382 = vadd.f32 %v3653, %v4262
        %v4383 = vadd.f32 %v3654, %v4265
        %v4384 = vadd.f32 %v3655, %v4270
        %v4385 = vadd.f32 %v3656, %v4273
        %v4386 = vadd.f32 %v3657, %v4278
        %v4387 = vadd.f32 %v3658, %v4281
        %v4388 = vadd.f32 %v3659, %v4286
        %v4389 = vadd.f32 %v3660, %v4289
        %v4390 = vadd.f32 %v3661, %v4294
        %v4391 = vadd.f32 %v3662, %v4297
        %v4392 = vadd.f32 %v3663, %v4302
        %v4393 = vadd.f32 %v3664, %v4305
        %v4394 = vadd.f32 %v3665, %v4310
        %v4395 = vadd.f32 %v3666, %v4313
        %v4396 = vadd.f32 %v3667, %v4318
        %v4397 = vadd.f32 %v3668, %v4321
        %v4398 = vadd.f32 %v3669, %v4326
        %v4399 = vadd.f32 %v3670, %v4329
        %v4400 = vadd.f32 %v3671, %v4334
        %v4401 = vadd.f32 %v3672, %v4337
        %v4402 = vadd.f32 %v3673, %v4342
        %v4403 = vadd.f32 %v3674, %v4345
        %v4404 = vadd.f32 %v3675, %v4350
        %v4405 = vadd.f32 %v3676, %v4353
        %v4406 = vadd.f32 %v3677, %v4358
        %v4407 = vadd.f32 %v3678, %v4361
        %v4408 = vadd.f32 %v3679, %v4366
        %v4409 = vadd.f32 %v3680, %v4369
        %v4410 = vadd.f32 %v3681, %v4374
        %v4411 = vadd.f32 %v3682, %v4377
        %v4412 = vld [vmem:[%s3325] sm:$0xe]
        %v4413 = vld [vmem:[%s3325 + $0xc] sm:$0xe]
        %v4414 = vld [vmem:[%s3325 + $0x18] sm:$0xe]
        %v4415 = vld [vmem:[%s3325 + $0x24] sm:$0xe]
        %v4416 = vld [vmem:[%s3325 + $0x30] sm:$0xe]
        %v4417 = vld [vmem:[%s3325 + $0x3c] sm:$0xe]
        %v4418 = vld [vmem:[%s3325 + $0x48] sm:$0xe]
        %v4419 = vld [vmem:[%s3325 + $0x54] sm:$0xe]
        %v4420 = vld [vmem:[%s3325 + $0x60] sm:$0xe]
        %v4421 = vld [vmem:[%s3325 + $0x6c] sm:$0xe]
        %v4422 = vld [vmem:[%s3325 + $0x78] sm:$0xe]
        %v4423 = vld [vmem:[%s3325 + $0x84] sm:$0xe]
        %v4424 = vld [vmem:[%s3325 + $0x90] sm:$0xe]
        %v4425 = vld [vmem:[%s3325 + $0x9c] sm:$0xe]
        %v4426 = vld [vmem:[%s3325 + $0xa8] sm:$0xe]
        %v4427 = vld [vmem:[%s3325 + $0xb4] sm:$0xe]
        %v4476 = vrot.slane %v4412, 5
        %v4477 = vrot.slane %v4476, 4
        %v4478 = vrot.slane %v3684, 5
        %v4479 = vsel %vm1353, %v4477, %v4478
        %v4480 = vrot.slane %v4478, 4
        %v4481 = vrot.slane %v3685, 5
        %v4482 = vsel %vm1353, %v4480, %v4481
        %v4483 = vrot.slane %v4413, 5
        %v4484 = vrot.slane %v4483, 4
        %v4485 = vrot.slane %v3687, 5
        %v4486 = vsel %vm1353, %v4484, %v4485
        %v4487 = vrot.slane %v4485, 4
        %v4488 = vrot.slane %v3688, 5
        %v4489 = vsel %vm1353, %v4487, %v4488
        %v4490 = vrot.slane %v4414, 5
        %v4491 = vrot.slane %v4490, 4
        %v4492 = vrot.slane %v3690, 5
        %v4493 = vsel %vm1353, %v4491, %v4492
        %v4494 = vrot.slane %v4492, 4
        %v4495 = vrot.slane %v3691, 5
        %v4496 = vsel %vm1353, %v4494, %v4495
        %v4497 = vrot.slane %v4415, 5
        %v4498 = vrot.slane %v4497, 4
        %v4499 = vrot.slane %v3693, 5
        %v4500 = vsel %vm1353, %v4498, %v4499
        %v4501 = vrot.slane %v4499, 4
        %v4502 = vrot.slane %v3694, 5
        %v4503 = vsel %vm1353, %v4501, %v4502
        %v4504 = vrot.slane %v4416, 5
        %v4505 = vrot.slane %v4504, 4
        %v4506 = vrot.slane %v3696, 5
        %v4507 = vsel %vm1353, %v4505, %v4506
        %v4508 = vrot.slane %v4506, 4
        %v4509 = vrot.slane %v3697, 5
        %v4510 = vsel %vm1353, %v4508, %v4509
        %v4511 = vrot.slane %v4417, 5
        %v4512 = vrot.slane %v4511, 4
        %v4513 = vrot.slane %v3699, 5
        %v4514 = vsel %vm1353, %v4512, %v4513
        %v4515 = vrot.slane %v4513, 4
        %v4516 = vrot.slane %v3700, 5
        %v4517 = vsel %vm1353, %v4515, %v4516
        %v4518 = vrot.slane %v4418, 5
        %v4519 = vrot.slane %v4518, 4
        %v4520 = vrot.slane %v3702, 5
        %v4521 = vsel %vm1353, %v4519, %v4520
        %v4522 = vrot.slane %v4520, 4
        %v4523 = vrot.slane %v3703, 5
        %v4524 = vsel %vm1353, %v4522, %v4523
        %v4525 = vrot.slane %v4419, 5
        %v4526 = vrot.slane %v4525, 4
        %v4527 = vrot.slane %v3705, 5
        %v4528 = vsel %vm1353, %v4526, %v4527
        %v4529 = vrot.slane %v4527, 4
        %v4530 = vrot.slane %v3706, 5
        %v4531 = vsel %vm1353, %v4529, %v4530
        %v4532 = vrot.slane %v4420, 5
        %v4533 = vrot.slane %v4532, 4
        %v4534 = vrot.slane %v3708, 5
        %v4535 = vsel %vm1353, %v4533, %v4534
        %v4536 = vrot.slane %v4534, 4
        %v4537 = vrot.slane %v3709, 5
        %v4538 = vsel %vm1353, %v4536, %v4537
        %v4539 = vrot.slane %v4421, 5
        %v4540 = vrot.slane %v4539, 4
        %v4541 = vrot.slane %v3711, 5
        %v4542 = vsel %vm1353, %v4540, %v4541
        %v4543 = vrot.slane %v4541, 4
        %v4544 = vrot.slane %v3712, 5
        %v4545 = vsel %vm1353, %v4543, %v4544
        %v4546 = vrot.slane %v4422, 5
        %v4547 = vrot.slane %v4546, 4
        %v4548 = vrot.slane %v3714, 5
        %v4549 = vsel %vm1353, %v4547, %v4548
        %v4550 = vrot.slane %v4548, 4
        %v4551 = vrot.slane %v3715, 5
        %v4552 = vsel %vm1353, %v4550, %v4551
        %v4553 = vrot.slane %v4423, 5
        %v4554 = vrot.slane %v4553, 4
        %v4555 = vrot.slane %v3717, 5
        %v4556 = vsel %vm1353, %v4554, %v4555
        %v4557 = vrot.slane %v4555, 4
        %v4558 = vrot.slane %v3718, 5
        %v4559 = vsel %vm1353, %v4557, %v4558
        %v4560 = vrot.slane %v4424, 5
        %v4561 = vrot.slane %v4560, 4
        %v4562 = vrot.slane %v3720, 5
        %v4563 = vsel %vm1353, %v4561, %v4562
        %v4564 = vrot.slane %v4562, 4
        %v4565 = vrot.slane %v3721, 5
        %v4566 = vsel %vm1353, %v4564, %v4565
        %v4567 = vrot.slane %v4425, 5
        %v4568 = vrot.slane %v4567, 4
        %v4569 = vrot.slane %v3723, 5
        %v4570 = vsel %vm1353, %v4568, %v4569
        %v4571 = vrot.slane %v4569, 4
        %v4572 = vrot.slane %v3724, 5
        %v4573 = vsel %vm1353, %v4571, %v4572
        %v4574 = vrot.slane %v4426, 5
        %v4575 = vrot.slane %v4574, 4
        %v4576 = vrot.slane %v3726, 5
        %v4577 = vsel %vm1353, %v4575, %v4576
        %v4578 = vrot.slane %v4576, 4
        %v4579 = vrot.slane %v3727, 5
        %v4580 = vsel %vm1353, %v4578, %v4579
        %v4581 = vrot.slane %v4427, 5
        %v4582 = vrot.slane %v4581, 4
        %v4583 = vrot.slane %v3729, 5
        %v4584 = vsel %vm1353, %v4582, %v4583
        %v4585 = vrot.slane %v4583, 4
        %v4586 = vrot.slane %v3730, 5
        %v4587 = vsel %vm1353, %v4585, %v4586
        %v4588 = vld [vmem:[%s1 + $0x10] sm:$0x3]
        %v4589 = vunpack.c.l.b16 %v4479
        %v4590 = vunpack.c.l.b16 %v4482
        %v4591 = vunpack.c.l.b16 %v4486
        %v4592 = vunpack.c.l.b16 %v4489
        %v4593 = vunpack.c.l.b16 %v4493
        %v4594 = vunpack.c.l.b16 %v4496
        %v4595 = vunpack.c.l.b16 %v4500
        %v4596 = vunpack.c.l.b16 %v4503
        %v4597 = vunpack.c.l.b16 %v4507
        %v4598 = vunpack.c.l.b16 %v4510
        %v4599 = vunpack.c.l.b16 %v4514
        %v4600 = vunpack.c.l.b16 %v4517
        %v4601 = vunpack.c.l.b16 %v4521
        %v4602 = vunpack.c.l.b16 %v4524
        %v4603 = vunpack.c.l.b16 %v4528
        %v4604 = vunpack.c.l.b16 %v4531
        %v4605 = vunpack.c.l.b16 %v4535
        %v4606 = vunpack.c.l.b16 %v4538
        %v4607 = vunpack.c.l.b16 %v4542
        %v4608 = vunpack.c.l.b16 %v4545
        %v4609 = vunpack.c.l.b16 %v4549
        %v4610 = vunpack.c.l.b16 %v4552
        %v4611 = vunpack.c.l.b16 %v4556
        %v4612 = vunpack.c.l.b16 %v4559
        %v4613 = vunpack.c.l.b16 %v4563
        %v4614 = vunpack.c.l.b16 %v4566
        %v4615 = vunpack.c.l.b16 %v4570
        %v4616 = vunpack.c.l.b16 %v4573
        %v4617 = vunpack.c.l.b16 %v4577
        %v4618 = vunpack.c.l.b16 %v4580
        %v4619 = vunpack.c.l.b16 %v4584
        %v4620 = vunpack.c.l.b16 %v4587
        %v4621 = vpack.c.b16 %v4590, %v4589
        %v4622 = vpack.c.b16 %v4592, %v4591
        %v4623 = vpack.c.b16 %v4594, %v4593
        %v4624 = vpack.c.b16 %v4596, %v4595
        %v4625 = vpack.c.b16 %v4598, %v4597
        %v4626 = vpack.c.b16 %v4600, %v4599
        %v4627 = vpack.c.b16 %v4602, %v4601
        %v4628 = vpack.c.b16 %v4604, %v4603
        %v4629 = vpack.c.b16 %v4606, %v4605
        %v4630 = vpack.c.b16 %v4608, %v4607
        %v4631 = vpack.c.b16 %v4610, %v4609
        %v4632 = vpack.c.b16 %v4612, %v4611
        %v4633 = vpack.c.b16 %v4614, %v4613
        %v4634 = vpack.c.b16 %v4616, %v4615
        %v4635 = vpack.c.b16 %v4618, %v4617
        %v4636 = vpack.c.b16 %v4620, %v4619
        %v4638 = vsel %vm309, %v4621, 0
        %v4641 = vsel %vm309, %v4622, 0
        %v4644 = vsel %vm309, %v4623, 0
        %v4647 = vsel %vm309, %v4624, 0
        %v4650 = vsel %vm309, %v4625, 0
        %v4653 = vsel %vm309, %v4626, 0
        %v4656 = vsel %vm309, %v4627, 0
        %v4659 = vsel %vm309, %v4628, 0
        %v4662 = vsel %vm309, %v4629, 0
        %v4665 = vsel %vm309, %v4630, 0
        %v4668 = vsel %vm309, %v4631, 0
        %v4671 = vsel %vm309, %v4632, 0
        %v4674 = vsel %vm309, %v4633, 0
        %v4677 = vsel %vm309, %v4634, 0
        %v4680 = vsel %vm309, %v4635, 0
        %v4683 = vsel %vm309, %v4636, 0
        %v4686 = vsel %vm358, %v4588, 0
        %4688 = vmatprep.subr.bf16.mxu0 0
        %4689 = vmatpush1.bf16.msra.mxu0 0
        %4690 = vmatprep.subr.bf16.mxu0 0
        %4691 = vmatpush1.bf16.msra.mxu0 0
        %4692 = vmatprep.subr.bf16.mxu0 0
        %4693 = vmatpush1.bf16.msra.mxu0 0
        %4694 = vmatprep.subr.bf16.mxu0 0
        %4695 = vmatpush1.bf16.msra.mxu0 0
        %4696 = vmatprep.subr.bf16.mxu0 0
        %4697 = vmatpush1.bf16.msra.mxu0 0
        %4698 = vmatprep.subr.bf16.mxu0 0
        %4699 = vmatpush1.bf16.msra.mxu0 0
        %4700 = vmatprep.subr.bf16.mxu0 0
        %4701 = vmatpush1.bf16.msra.mxu0 0
        %4702 = vmatprep.subr.bf16.mxu0 0
        %4703 = vmatpush1.bf16.msra.mxu0 %v4686
        %4704 = vmatprep.subr.bf16.mxu0 0
        %4705 = vmatpush2.bf16.msra.mxu0 0
        %4706 = vmatprep.subr.bf16.mxu0 0
        %4707 = vmatpush2.bf16.msra.mxu0 0
        %4708 = vmatprep.subr.bf16.mxu0 0
        %4709 = vmatpush2.bf16.msra.mxu0 0
        %4710 = vmatprep.subr.bf16.mxu0 0
        %4711 = vmatpush2.bf16.msra.mxu0 0
        %4712 = vmatprep.subr.bf16.mxu0 0
        %4713 = vmatpush2.bf16.msra.mxu0 0
        %4714 = vmatprep.subr.bf16.mxu0 0
        %4715 = vmatpush2.bf16.msra.mxu0 0
        %4716 = vmatprep.subr.bf16.mxu0 0
        %4717 = vmatpush2.bf16.msra.mxu0 0
        %4718 = vmatprep.subr.bf16.mxu0 0
        %4719 = vmatpush2.bf16.msra.mxu0 0
        %4720 = vmatprep.mubr.bf16.mxu0 0
        %4721 = vmatmul.mubr.bf16.gmra.mxu0 %v4638
        %v4722 = vpop.f32.mrf.mxu0
        %v4723 = vadd.f32 0.0, %v4722
        %v4724 = vpop.f32.mrf.mxu0
        %v4725 = vpop.f32.mrf.mxu0
        %v4726 = vadd.f32 0.0, %v4725
        %v4727 = vpop.f32.mrf.mxu0
        %4728 = vmatprep.mubr.bf16.mxu0 0
        %4729 = vmatmul.mubr.bf16.gmra.mxu0 %v4641
        %v4730 = vpop.f32.mrf.mxu0
        %v4731 = vadd.f32 0.0, %v4730
        %v4732 = vpop.f32.mrf.mxu0
        %v4733 = vpop.f32.mrf.mxu0
        %v4734 = vadd.f32 0.0, %v4733
        %v4735 = vpop.f32.mrf.mxu0
        %4736 = vmatprep.mubr.bf16.mxu0 0
        %4737 = vmatmul.mubr.bf16.gmra.mxu0 %v4644
        %v4738 = vpop.f32.mrf.mxu0
        %v4739 = vadd.f32 0.0, %v4738
        %v4740 = vpop.f32.mrf.mxu0
        %v4741 = vpop.f32.mrf.mxu0
        %v4742 = vadd.f32 0.0, %v4741
        %v4743 = vpop.f32.mrf.mxu0
        %4744 = vmatprep.mubr.bf16.mxu0 0
        %4745 = vmatmul.mubr.bf16.gmra.mxu0 %v4647
        %v4746 = vpop.f32.mrf.mxu0
        %v4747 = vadd.f32 0.0, %v4746
        %v4748 = vpop.f32.mrf.mxu0
        %v4749 = vpop.f32.mrf.mxu0
        %v4750 = vadd.f32 0.0, %v4749
        %v4751 = vpop.f32.mrf.mxu0
        %4752 = vmatprep.mubr.bf16.mxu0 0
        %4753 = vmatmul.mubr.bf16.gmra.mxu0 %v4650
        %v4754 = vpop.f32.mrf.mxu0
        %v4755 = vadd.f32 0.0, %v4754
        %v4756 = vpop.f32.mrf.mxu0
        %v4757 = vpop.f32.mrf.mxu0
        %v4758 = vadd.f32 0.0, %v4757
        %v4759 = vpop.f32.mrf.mxu0
        %4760 = vmatprep.mubr.bf16.mxu0 0
        %4761 = vmatmul.mubr.bf16.gmra.mxu0 %v4653
        %v4762 = vpop.f32.mrf.mxu0
        %v4763 = vadd.f32 0.0, %v4762
        %v4764 = vpop.f32.mrf.mxu0
        %v4765 = vpop.f32.mrf.mxu0
        %v4766 = vadd.f32 0.0, %v4765
        %v4767 = vpop.f32.mrf.mxu0
        %4768 = vmatprep.mubr.bf16.mxu0 0
        %4769 = vmatmul.mubr.bf16.gmra.mxu0 %v4656
        %v4770 = vpop.f32.mrf.mxu0
        %v4771 = vadd.f32 0.0, %v4770
        %v4772 = vpop.f32.mrf.mxu0
        %v4773 = vpop.f32.mrf.mxu0
        %v4774 = vadd.f32 0.0, %v4773
        %v4775 = vpop.f32.mrf.mxu0
        %4776 = vmatprep.mubr.bf16.mxu0 0
        %4777 = vmatmul.mubr.bf16.gmra.mxu0 %v4659
        %v4778 = vpop.f32.mrf.mxu0
        %v4779 = vadd.f32 0.0, %v4778
        %v4780 = vpop.f32.mrf.mxu0
        %v4781 = vpop.f32.mrf.mxu0
        %v4782 = vadd.f32 0.0, %v4781
        %v4783 = vpop.f32.mrf.mxu0
        %4784 = vmatprep.mubr.bf16.mxu0 0
        %4785 = vmatmul.mubr.bf16.gmra.mxu0 %v4662
        %v4786 = vpop.f32.mrf.mxu0
        %v4787 = vadd.f32 0.0, %v4786
        %v4788 = vpop.f32.mrf.mxu0
        %v4789 = vpop.f32.mrf.mxu0
        %v4790 = vadd.f32 0.0, %v4789
        %v4791 = vpop.f32.mrf.mxu0
        %4792 = vmatprep.mubr.bf16.mxu0 0
        %4793 = vmatmul.mubr.bf16.gmra.mxu0 %v4665
        %v4794 = vpop.f32.mrf.mxu0
        %v4795 = vadd.f32 0.0, %v4794
        %v4796 = vpop.f32.mrf.mxu0
        %v4797 = vpop.f32.mrf.mxu0
        %v4798 = vadd.f32 0.0, %v4797
        %v4799 = vpop.f32.mrf.mxu0
        %4800 = vmatprep.mubr.bf16.mxu0 0
        %4801 = vmatmul.mubr.bf16.gmra.mxu0 %v4668
        %v4802 = vpop.f32.mrf.mxu0
        %v4803 = vadd.f32 0.0, %v4802
        %v4804 = vpop.f32.mrf.mxu0
        %v4805 = vpop.f32.mrf.mxu0
        %v4806 = vadd.f32 0.0, %v4805
        %v4807 = vpop.f32.mrf.mxu0
        %4808 = vmatprep.mubr.bf16.mxu0 0
        %4809 = vmatmul.mubr.bf16.gmra.mxu0 %v4671
        %v4810 = vpop.f32.mrf.mxu0
        %v4811 = vadd.f32 0.0, %v4810
        %v4812 = vpop.f32.mrf.mxu0
        %v4813 = vpop.f32.mrf.mxu0
        %v4814 = vadd.f32 0.0, %v4813
        %v4815 = vpop.f32.mrf.mxu0
        %4816 = vmatprep.mubr.bf16.mxu0 0
        %4817 = vmatmul.mubr.bf16.gmra.mxu0 %v4674
        %v4818 = vpop.f32.mrf.mxu0
        %v4819 = vadd.f32 0.0, %v4818
        %v4820 = vpop.f32.mrf.mxu0
        %v4821 = vpop.f32.mrf.mxu0
        %v4822 = vadd.f32 0.0, %v4821
        %v4823 = vpop.f32.mrf.mxu0
        %4824 = vmatprep.mubr.bf16.mxu0 0
        %4825 = vmatmul.mubr.bf16.gmra.mxu0 %v4677
        %v4826 = vpop.f32.mrf.mxu0
        %v4827 = vadd.f32 0.0, %v4826
        %v4828 = vpop.f32.mrf.mxu0
        %v4829 = vpop.f32.mrf.mxu0
        %v4830 = vadd.f32 0.0, %v4829
        %v4831 = vpop.f32.mrf.mxu0
        %4832 = vmatprep.mubr.bf16.mxu0 0
        %4833 = vmatmul.mubr.bf16.gmra.mxu0 %v4680
        %v4834 = vpop.f32.mrf.mxu0
        %v4835 = vadd.f32 0.0, %v4834
        %v4836 = vpop.f32.mrf.mxu0
        %v4837 = vpop.f32.mrf.mxu0
        %v4838 = vadd.f32 0.0, %v4837
        %v4839 = vpop.f32.mrf.mxu0
        %4840 = vmatprep.mubr.bf16.mxu0 0
        %4841 = vmatmul.mubr.bf16.gmra.mxu0 %v4683
        %v4842 = vpop.f32.mrf.mxu0
        %v4843 = vadd.f32 0.0, %v4842
        %v4844 = vpop.f32.mrf.mxu0
        %v4845 = vpop.f32.mrf.mxu0
        %v4846 = vadd.f32 0.0, %v4845
        %v4847 = vpop.f32.mrf.mxu0
        %4848 = vdwg.mxu0
        %v4849 = vadd.f32 %v4380, %v4723
        %v4850 = vadd.f32 %v4381, %v4726
        %v4851 = vadd.f32 %v4382, %v4731
        %v4852 = vadd.f32 %v4383, %v4734
        %v4853 = vadd.f32 %v4384, %v4739
        %v4854 = vadd.f32 %v4385, %v4742
        %v4855 = vadd.f32 %v4386, %v4747
        %v4856 = vadd.f32 %v4387, %v4750
        %v4857 = vadd.f32 %v4388, %v4755
        %v4858 = vadd.f32 %v4389, %v4758
        %v4859 = vadd.f32 %v4390, %v4763
        %v4860 = vadd.f32 %v4391, %v4766
        %v4861 = vadd.f32 %v4392, %v4771
        %v4862 = vadd.f32 %v4393, %v4774
        %v4863 = vadd.f32 %v4394, %v4779
        %v4864 = vadd.f32 %v4395, %v4782
        %v4865 = vadd.f32 %v4396, %v4787
        %v4866 = vadd.f32 %v4397, %v4790
        %v4867 = vadd.f32 %v4398, %v4795
        %v4868 = vadd.f32 %v4399, %v4798
        %v4869 = vadd.f32 %v4400, %v4803
        %v4870 = vadd.f32 %v4401, %v4806
        %v4871 = vadd.f32 %v4402, %v4811
        %v4872 = vadd.f32 %v4403, %v4814
        %v4873 = vadd.f32 %v4404, %v4819
        %v4874 = vadd.f32 %v4405, %v4822
        %v4875 = vadd.f32 %v4406, %v4827
        %v4876 = vadd.f32 %v4407, %v4830
        %v4877 = vadd.f32 %v4408, %v4835
        %v4878 = vadd.f32 %v4409, %v4838
        %v4879 = vadd.f32 %v4410, %v4843
        %v4880 = vadd.f32 %v4411, %v4846
        %4881 = vst [vmem:[%s177] sm:$0xff] %v4849
        %4882 = vst [vmem:[%s177 + $0x8] sm:$0xff] %v4850
        %4883 = vst [vmem:[%s177 + $0x10] sm:$0xff] %v4851
        %4884 = vst [vmem:[%s177 + $0x18] sm:$0xff] %v4852
        %4885 = vst [vmem:[%s177 + $0x20] sm:$0xff] %v4853
        %4886 = vst [vmem:[%s177 + $0x28] sm:$0xff] %v4854
        %4887 = vst [vmem:[%s177 + $0x30] sm:$0xff] %v4855
        %4888 = vst [vmem:[%s177 + $0x38] sm:$0xff] %v4856
        %4889 = vst [vmem:[%s177 + $0x40] sm:$0xff] %v4857
        %4890 = vst [vmem:[%s177 + $0x48] sm:$0xff] %v4858
        %4891 = vst [vmem:[%s177 + $0x50] sm:$0xff] %v4859
        %4892 = vst [vmem:[%s177 + $0x58] sm:$0xff] %v4860
        %4893 = vst [vmem:[%s177 + $0x60] sm:$0xff] %v4861
        %4894 = vst [vmem:[%s177 + $0x68] sm:$0xff] %v4862
        %4895 = vst [vmem:[%s177 + $0x70] sm:$0xff] %v4863
        %4896 = vst [vmem:[%s177 + $0x78] sm:$0xff] %v4864
        %4897 = vst [vmem:[%s177 + $0x80] sm:$0xff] %v4865
        %4898 = vst [vmem:[%s177 + $0x88] sm:$0xff] %v4866
        %4899 = vst [vmem:[%s177 + $0x90] sm:$0xff] %v4867
        %4900 = vst [vmem:[%s177 + $0x98] sm:$0xff] %v4868
        %4901 = vst [vmem:[%s177 + $0xa0] sm:$0xff] %v4869
        %4902 = vst [vmem:[%s177 + $0xa8] sm:$0xff] %v4870
        %4903 = vst [vmem:[%s177 + $0xb0] sm:$0xff] %v4871
        %4904 = vst [vmem:[%s177 + $0xb8] sm:$0xff] %v4872
        %4905 = vst [vmem:[%s177 + $0xc0] sm:$0xff] %v4873
        %4906 = vst [vmem:[%s177 + $0xc8] sm:$0xff] %v4874
        %4907 = vst [vmem:[%s177 + $0xd0] sm:$0xff] %v4875
        %4908 = vst [vmem:[%s177 + $0xd8] sm:$0xff] %v4876
        %4909 = vst [vmem:[%s177 + $0xe0] sm:$0xff] %v4877
        %4910 = vst [vmem:[%s177 + $0xe8] sm:$0xff] %v4878
        %4911 = vst [vmem:[%s177 + $0xf0] sm:$0xff] %v4879
        %4912 = vst [vmem:[%s177 + $0xf8] sm:$0xff] %v4880
        %s4913 = sand.u32 %s107, 1
        %s4914 = scalar_lea.sflag [#allocation3], %s4913
        %s4915 = sand.u32 %s107, 1
        %s4916 = smul.addr %s4915, 256
        %s4917 = scalar_lea.vmem [#allocation2], %s4916
        // Predicated region
        $region33: #{tpu_custom_call.1} parent=31 // pred_check
          %p4918 = pneg %p117
        $region34: #{tpu_custom_call.1} parent=31 // pred_check_branch
          %4920 = sbr.rel (%p4918) target = $region36
        $region35: #{tpu_custom_call.1} parent=31 // pred_region
          %s4921 = smul.u32 32, %s22
          %s4923 = ssub.s32 4096, 4096
          %4924 = vsyncadd %s4914, %s4923
          %s4925 = smul.addr %s21, 32
          %s4926 = sadd.s32 %s4921, %s4925
          %s4927 = smul.addr %s4926, 128
          %s4928 = scalar_lea.hbm %s3, %s4927
          %s4929 = sshll.u32 %s4917, 4
          %s4930 = int_to_ptr.vmem [resolvable:$true] %s4929
          %4935 = dma.vmem_to_hbm [thread:$0]  %s4930, 4096, %s4928, %s4914, 128, 128, 8
        $region36: #{tpu_custom_call.1} parent=31 // pred_fallthru
          _
      $region32: #{tpu_custom_call.1} parent=5 // pred_fallthru
        _
      %p4936 = scmp.le.s32.totalorder 2, %s12
      // Predicated region
      $region37: #{tpu_custom_call.1} parent=5 // pred_check
        %p4937 = pneg %p4936
      $region38: #{tpu_custom_call.1} parent=5 // pred_check_branch
        %4939 = sbr.rel (%p4937) target = $region40
      $region39: #{tpu_custom_call.1} parent=5 // pred_region
        %s4940 = ssub.s32 %s12, 2
        // Predicated region
        $region41: #{tpu_custom_call.1} parent=39 // pred_check
          %p4941 = pneg %p123
        $region42: #{tpu_custom_call.1} parent=39 // pred_check_branch
          %4943 = sbr.rel (%p4941) target = $region44
        $region43: #{tpu_custom_call.1} parent=39 // pred_region
          %s4944 = sand.u32 %s108, 1
          %s4945 = scalar_lea.sflag [#allocation3], %s4944
          %s4946 = sand.u32 %s108, 1
          %s4947 = smul.addr %s4946, 256
          %s4948 = scalar_lea.vmem [#allocation2], %s4947
          %4949 = dma.done %s4945, 4096
        $region44: #{tpu_custom_call.1} parent=39 // pred_fallthru
          _
      $region40: #{tpu_custom_call.1} parent=5 // pred_fallthru
        _
    $region6: #{tpu_custom_call.1} parent=1 // loop_footer
      %s16 = sadd.s32 1, %s12
    $region7: #{tpu_custom_call.1} parent=1 // loop_footer_branch
      %11 = sbr.rel target = $region3
    $region8: #{tpu_custom_call.1} parent=1 // loop_exit
      _
    %4950 = vsyncpa [#allocation3], 1
    %s4951 = scalar_lea.sflag [#allocation3], 1
    %4952 = vsyncpa %s4951, 1

</llo_original>
